<compile_context>
chip_gen: v5e
topology: v5e:2x2
jax: 0.10.0
libtpu: 0.0.40
codegen_flags: <defaults>
</compile_context>

<pallas_src>
import functools

import jax
import jax.numpy as jnp
from jax.experimental import pallas as pl
from jax.experimental.pallas import tpu as pltpu

_EPS = 1e-5            # BatchNorm1d default eps
_LEAKY_SLOPE = 0.01    # LeakyReLU default negative_slope
_LANE = 128
_SUBLANE = 8

# bf16 x bf16 -> f32 MXU matmul (single native pass).
_bdot = functools.partial(jnp.dot, preferred_element_type=jnp.float32)


def _pad_lanes(d):
    return max(_LANE, ((d + _LANE - 1) // _LANE) * _LANE)


def _pad_sublanes(n):
    return max(_SUBLANE, ((n + _SUBLANE - 1) // _SUBLANE) * _SUBLANE)


def _split_bf16(x):
    # x ~= hi + lo with |x - hi - lo| <= ~2^-16 |x|.
    hi = x.astype(jnp.bfloat16)
    lo = (x - hi.astype(jnp.float32)).astype(jnp.bfloat16)
    return hi, lo


def _dot3(v, w_hi, w_lo):
    # bf16x3 (Precision.HIGH-equivalent) matmul with f32 accumulation:
    # v @ w ~= v_hi@w_hi + v_lo@w_hi + v_hi@w_lo   (dropped lo*lo ~ 2^-16).
    v_hi, v_lo = _split_bf16(v)
    return _bdot(v_hi, w_hi) + _bdot(v_lo, w_hi) + _bdot(v_hi, w_lo)


# ----------------------------------------------------------------------------
# Fused forward math — shared by the Pallas kernel (Refs) and the pure-JAX
# reference (arrays); both support `[a:b, c:d]` slicing, so the code is common.
# ----------------------------------------------------------------------------
def _activation(v, act):
    if act == "relu":
        return jnp.maximum(v, 0.0)
    if act == "leaky":
        return jnp.where(v >= 0.0, v, _LEAKY_SLOPE * v)
    return v


def _batchnorm(v, p_mat, inv_count, row_mask, sel2):
    # Training-mode BatchNorm1d (gamma=1, beta=0), biased variance over
    # (batch, length).  One-pass statistics: [sum; sum_sq] stacked into a
    # [2, D] LHS and pooled per channel by a single precomputed 0/1 matrix
    # P[d, e] = 1 iff lanes d, e belong to the same channel (zero rows/cols at
    # lane padding).  Padded batch rows are excluded via `row_mask`; padded
    # lanes stay exactly zero (their P rows/cols are zero).
    # TODO(synk): running-statistics updates are not modeled (forward-only).
    vm = v * row_mask
    sums = jnp.sum(vm, axis=0, keepdims=True)           # [1, D]
    sumsq = jnp.sum(vm * v, axis=0, keepdims=True)      # [1, D]
    stats = jnp.where(sel2, sums, sumsq)                # [2, D]
    s_hi, s_lo = _split_bf16(stats)
    pooled = (_bdot(s_hi, p_mat) + _bdot(s_lo, p_mat)) * inv_count   # [2, D]
    mu = jnp.sum(jnp.where(sel2, pooled, 0.0), axis=0, keepdims=True)
    ex2 = jnp.sum(jnp.where(sel2, 0.0, pooled), axis=0, keepdims=True)
    var = ex2 - mu * mu
    return (v - mu) * jax.lax.rsqrt(var + _EPS)


def _run_layers(v, layers, segs, bias_buf, n_real, row_mask, sel2, emit):
    for lyr in layers:
        seg = segs[lyr["seg"]]
        off_hi, off_lo, r, c = lyr["m"]
        w_hi = seg[off_hi:off_hi + r, 0:c]
        w_lo = seg[off_lo:off_lo + r, 0:c]
        b_off = lyr["b"]
        y = _dot3(v, w_hi, w_lo) + bias_buf[b_off:b_off + 1, 0:c]
        if lyr["bn"]:
            p_off, dp = lyr["p"]
            p_mat = segs[0][p_off:p_off + dp, 0:dp]
            inv_count = 1.0 / float(n_real * lyr["l_out"])
            if lyr["bn_after_act"]:   # encoder blocks: conv -> LeakyReLU -> BN
                y = _batchnorm(_activation(y, lyr["act"]), p_mat, inv_count,
                               row_mask, sel2)
            else:                     # decoder blocks: tconv -> BN -> ReLU
                y = _activation(_batchnorm(y, p_mat, inv_count, row_mask, sel2),
                                lyr["act"])
        else:
            y = _activation(y, lyr["act"])
        v = y
        if lyr["capture"] is not None:
            emit(lyr["capture"], v)
    return v


# ----------------------------------------------------------------------------
# Pallas kernel + wrappers
# ----------------------------------------------------------------------------
def _make_kernel(plan, n_real, n_pad):
    segments = plan["segments"]

    def kernel(x_ref, bias_ref, seg0_ref, seg1_hbm, seg2_hbm,
               xr_ref, z1_ref, z2_ref, seg1_vmem, seg2_vmem, sem):
        # Prefetch decoder / encoder2 constant slabs while encoder1 computes.
        cp1 = pltpu.make_async_copy(seg1_hbm, seg1_vmem, sem.at[0])
        cp2 = pltpu.make_async_copy(seg2_hbm, seg2_vmem, sem.at[1])
        cp1.start()
        cp2.start()

        row_ids = jax.lax.broadcasted_iota(jnp.int32, (n_pad, 1), 0)
        row_mask = (row_ids < n_real).astype(jnp.float32)
        sel2 = jax.lax.broadcasted_iota(jnp.int32, (2, 1), 0) == 0

        out_map = {"xr": xr_ref, "z1": z1_ref, "z2": z2_ref}

        def emit(name, val):
            out_map[name][...] = val      # write outputs at capture points

        segs = [seg0_ref, seg1_vmem, seg2_vmem]
        v = x_ref[...]
        v = _run_layers(v, segments[0], segs, bias_ref, n_real, row_mask,
                        sel2, emit)
        cp1.wait()
        v = _run_layers(v, segments[1], segs, bias_ref, n_real, row_mask,
                        sel2, emit)
        cp2.wait()
        _run_layers(v, segments[2], segs, bias_ref, n_real, row_mask,
                    sel2, emit)

    return kernel


def _pad_input(x, plan, n_pad):
    n, c, l = x.shape
    d_in = c * l
    assert d_in == plan["d_in"]
    x2d = x.reshape(n, d_in)
    return jnp.pad(x2d, ((0, n_pad - n), (0, plan["d_in_pad"] - d_in)))


def _crop_outputs(plan, n, xr, z1, z2):
    def crop(y, key):
        info = plan["captures"][key]
        return y[:n, :info["c"] * info["l"]].reshape(n, info["c"], info["l"])
    return crop(xr, "xr"), crop(z1, "z1"), crop(z2, "z2")


def generator_forward(consts, plan, x):
    """Fused Generator forward: a single gridless Pallas TPU kernel."""
    bias_buf, seg0, seg1, seg2 = consts
    n = x.shape[0]
    n_pad = _pad_sublanes(n)
    x2d = _pad_input(x, plan, n_pad)

    out_shape = tuple(
        jax.ShapeDtypeStruct((n_pad, plan["captures"][k]["d_pad"]), jnp.float32)
        for k in ("xr", "z1", "z2"))
    vmem = pl.BlockSpec(memory_space=pltpu.MemorySpace.VMEM)
    hbm = pl.BlockSpec(memory_space=pl.ANY)
    xr, z1, z2 = pl.pallas_call(
        _make_kernel(plan, n, n_pad),
        out_shape=out_shape,
        in_specs=[vmem, vmem, vmem, hbm, hbm],
        out_specs=(vmem, vmem, vmem),
        scratch_shapes=[pltpu.VMEM(seg1.shape, jnp.bfloat16),
                        pltpu.VMEM(seg2.shape, jnp.bfloat16),
                        pltpu.SemaphoreType.DMA((2,))],
    )(x2d, bias_buf, seg0, seg1, seg2)
    return _crop_outputs(plan, n, xr, z1, z2)


def generator_forward_ref(consts, plan, x):
    """Pure-JAX reference of the identical fused math (validates the kernel)."""
    bias_buf, seg0, seg1, seg2 = consts
    n = x.shape[0]
    n_pad = _pad_sublanes(n)
    v = _pad_input(x, plan, n_pad)
    row_ids = jax.lax.broadcasted_iota(jnp.int32, (n_pad, 1), 0)
    row_mask = (row_ids < n).astype(jnp.float32)
    sel2 = jax.lax.broadcasted_iota(jnp.int32, (2, 1), 0) == 0
    results = {}

    def emit(name, val):
        results[name] = val

    segs = [seg0, seg1, seg2]
    for layers in plan["segments"]:
        v = _run_layers(v, layers, segs, bias_buf, n, row_mask, sel2, emit)
    return _crop_outputs(plan, n, results["xr"], results["z1"], results["z2"])


# ----------------------------------------------------------------------------
# Precompute (hoisted out of the forward): Toeplitz conv matrices (bf16 hi/lo),
# flattened f32 biases, BN channel-pooling matrices, packed into 4 buffers.
# ----------------------------------------------------------------------------
def conv1d_matrix(w, l_in, stride):
    # w: dense [C_out, C_in, K]; y[n,co,t] = sum_{ci,k} w[co,ci,k] x[n,ci,S*t+k]
    c_out, c_in, k = w.shape
    l_out = (l_in - k) // stride + 1
    i = jnp.arange(l_in)[:, None]
    t = jnp.arange(l_out)[None, :]
    kk = i - stride * t
    valid = (kk >= 0) & (kk < k)
    sel = w[:, :, jnp.clip(kk, 0, k - 1)]            # [C_out, C_in, L_in, L_out]
    sel = jnp.where(valid[None, None], sel, 0.0)
    m = sel.transpose(1, 2, 0, 3).reshape(c_in * l_in, c_out * l_out)
    return m, l_out


def conv_transpose1d_matrix(w, l_in, stride, output_padding):
    # w: [C_in, C_out, K] (PyTorch ConvTranspose1d layout), padding=0
    c_in, c_out, k = w.shape
    l_out = (l_in - 1) * stride + k + output_padding
    i = jnp.arange(l_in)[:, None]
    t = jnp.arange(l_out)[None, :]
    kk = t - stride * i
    valid = (kk >= 0) & (kk < k)
    sel = w[:, :, jnp.clip(kk, 0, k - 1)]            # [C_in, C_out, L_in, L_out]
    sel = jnp.where(valid[None, None], sel, 0.0)
    m = sel.transpose(0, 2, 1, 3).reshape(c_in * l_in, c_out * l_out)
    return m, l_out


def expand_grouped_weight(w, c_in, groups):
    # w: [C_out, C_in//groups, K] -> dense [C_out, C_in, K] (zeros off-group)
    c_out, cpg_in, k = w.shape
    cpg_out = c_out // groups
    dense = jnp.zeros((c_out, c_in, k), jnp.float32)
    for g in range(groups):
        dense = dense.at[g * cpg_out:(g + 1) * cpg_out,
                         g * cpg_in:(g + 1) * cpg_in, :].set(
                             w[g * cpg_out:(g + 1) * cpg_out])
    return dense


class _Packer:
    """Packs 2D blocks into one [rows, cols] slab with aligned row offsets."""

    def __init__(self, dtype, align):
        self.dtype = dtype
        self.align = align
        self.blocks = []
        self.rows = 0
        self.cols = _LANE

    def add(self, arr):
        arr = jnp.asarray(arr, self.dtype)
        off = self.rows
        self.blocks.append((off, arr))
        r = arr.shape[0]
        self.rows = off + ((r + self.align - 1) // self.align) * self.align
        self.cols = max(self.cols, arr.shape[1])
        return off

    def finalize(self):
        rows = ((max(self.rows, self.align) + self.align - 1)
                // self.align) * self.align
        cols = ((self.cols + _LANE - 1) // _LANE) * _LANE
        buf = jnp.zeros((rows, cols), self.dtype)
        for off, arr in self.blocks:
            buf = buf.at[off:off + arr.shape[0], :arr.shape[1]].set(arr)
        return buf


def build_generator_plan(params, in_channels, length):
    # Three bf16 weight slabs (enc1 + BN pooling / decoder / enc2), one f32
    # bias slab.  Weight hi/lo bf16x3 parts are precomputed here.
    w_packers = [_Packer(jnp.bfloat16, 16) for _ in range(3)]
    b_packer = _Packer(jnp.float32, _SUBLANE)
    bn_cache = {}
    captures = {}
    segments = [[], [], []]

    def pooling(c_out, l_out, d_pad):
        # [D_pad, D_pad] 0/1 matrix: 1 iff both lanes belong to the same
        # (valid) channel.  Exact in bf16.  Deduped across all layers and
        # stored in slab 0 (resident from kernel start).
        key = (c_out, l_out, d_pad)
        if key not in bn_cache:
            col = jnp.arange(d_pad)
            ch = col // l_out
            valid = col < (c_out * l_out)
            p = ((ch[:, None] == ch[None, :])
                 & valid[:, None] & valid[None, :]).astype(jnp.float32)
            bn_cache[key] = (w_packers[0].add(p), d_pad)
        return bn_cache[key]

    def add_layer(seg, m, bias, c_out, l_out, d_in_pad, *, act, bn,
                  bn_after_act, capture=None):
        d_out = c_out * l_out
        d_out_pad = _pad_lanes(d_out)
        m = jnp.pad(jnp.asarray(m, jnp.float32),
                    ((0, d_in_pad - m.shape[0]), (0, d_out_pad - d_out)))
        m_hi, m_lo = _split_bf16(m)
        off_hi = w_packers[seg].add(m_hi)
        off_lo = w_packers[seg].add(m_lo)
        b = jnp.pad(jnp.repeat(jnp.asarray(bias, jnp.float32), l_out),
                    (0, d_out_pad - d_out))[None, :]
        b_off = b_packer.add(b)
        entry = dict(seg=seg, m=(off_hi, off_lo, d_in_pad, d_out_pad),
                     b=b_off, act=act, bn=bn, bn_after_act=bn_after_act,
                     l_out=l_out, capture=capture, p=None)
        if bn:
            entry["p"] = pooling(c_out, l_out, d_out_pad)
        segments[seg].append(entry)
        if capture is not None:
            captures[capture] = dict(c=c_out, l=l_out, d=d_out, d_pad=d_out_pad)
        return l_out, d_out_pad

    def encoder(seg, p, c_in, l_in, d_in_pad, capture):
        w1 = expand_grouped_weight(p["w1"], c_in, groups=c_in)
        m, l1 = conv1d_matrix(w1, l_in, stride=4)
        l1, d1 = add_layer(seg, m, p["b1"], 8, l1, d_in_pad,
                           act="leaky", bn=True, bn_after_act=True)
        m, l2 = conv1d_matrix(p["w2"], l1, stride=3)
        l2, d2 = add_layer(seg, m, p["b2"], 4, l2, d1,
                           act="leaky", bn=True, bn_after_act=True)
        m, l3 = conv1d_matrix(p["w3"], l2, stride=2)
        l3, d3 = add_layer(seg, m, p["b3"], 2, l3, d2,
                           act="leaky", bn=True, bn_after_act=True,
                           capture=capture)
        return l3, d3

    def decoder(seg, p, out_channels, l_in, d_in_pad):
        m, l1 = conv_transpose1d_matrix(p["tw1"], l_in, stride=2,
                                        output_padding=1)
        l1, d1 = add_layer(seg, m, p["tb1"], 4, l1, d_in_pad,
                           act="relu", bn=True, bn_after_act=False)
        m, l2 = conv_transpose1d_matrix(p["tw2"], l1, stride=3,
                                        output_padding=2)
        l2, d2 = add_layer(seg, m, p["tb2"], 8, l2, d1,
                           act="relu", bn=True, bn_after_act=False)
        m, l3 = conv_transpose1d_matrix(p["tw3"], l2, stride=4,
                                        output_padding=3)
        l3, d3 = add_layer(seg, m, p["tb3"], 2 * out_channels, l3, d2,
                           act="relu", bn=False, bn_after_act=False)
        m, l4 = conv1d_matrix(p["cw"], l3, stride=1)
        l4, d4 = add_layer(seg, m, p["cb"], out_channels, l4, d3,
                           act="none", bn=False, bn_after_act=False,
                           capture="xr")
        return l4, d4

    d_in = in_channels * length
    d_in_pad = _pad_lanes(d_in)
    lz1, dz1 = encoder(0, params["enc1"], in_channels, length, d_in_pad, "z1")
    lr, dr = decoder(1, params["dec"], in_channels, lz1, dz1)
    encoder(2, params["enc2"], in_channels, lr, dr, "z2")

    consts = (b_packer.finalize(),) + tuple(p.finalize() for p in w_packers)
    plan = dict(segments=segments, captures=captures,
                d_in=d_in, d_in_pad=d_in_pad)
    return consts, plan


# ----------------------------------------------------------------------------
# Parameters (deterministic synthetic init, PyTorch shapes)
# ----------------------------------------------------------------------------
def _unif(key, shape, fan_in):
    bound = 1.0 / (fan_in ** 0.5)
    return jax.random.uniform(key, shape, jnp.float32, -bound, bound)


def init_encoder_params(key, in_channels):
    ks = jax.random.split(key, 6)
    return {
        # conv1: Conv1d(in, 8, k=9, s=4, groups=in) -> weight [8, in//in, 9]
        "w1": _unif(ks[0], (8, 1, 9), 1 * 9),
        "b1": _unif(ks[1], (8,), 1 * 9),
        # conv2: Conv1d(8, 4, k=7, s=3)
        "w2": _unif(ks[2], (4, 8, 7), 8 * 7),
        "b2": _unif(ks[3], (4,), 8 * 7),
        # conv3: Conv1d(4, 2, k=5, s=2)
        "w3": _unif(ks[4], (2, 4, 5), 4 * 5),
        "b3": _unif(ks[5], (2,), 4 * 5),
    }


def init_decoder_params(key, out_channels):
    ks = jax.random.split(key, 8)
    return {
        # tconv1: ConvTranspose1d(2, 4, k=5, s=2, op=1)
        "tw1": _unif(ks[0], (2, 4, 5), 2 * 5),
        "tb1": _unif(ks[1], (4,), 2 * 5),
        # tconv2: ConvTranspose1d(4, 8, k=7, s=3, op=2)
        "tw2": _unif(ks[2], (4, 8, 7), 4 * 7),
        "tb2": _unif(ks[3], (8,), 4 * 7),
        # tconv3: ConvTranspose1d(8, 2*out, k=9, s=4, op=3)
        "tw3": _unif(ks[4], (8, 2 * out_channels, 9), 8 * 9),
        "tb3": _unif(ks[5], (2 * out_channels,), 8 * 9),
        # Conv1d(2*out, out, k=1)
        "cw": _unif(ks[6], (out_channels, 2 * out_channels, 1), 2 * out_channels),
        "cb": _unif(ks[7], (out_channels,), 2 * out_channels),
    }


def init_generator_params(key, in_channels):
    k1, k2, k3 = jax.random.split(key, 3)
    return {
        "enc1": init_encoder_params(k1, in_channels),
        "enc2": init_encoder_params(k2, in_channels),
        "dec": init_decoder_params(k3, in_channels),
    }


# ----------------------------------------------------------------------------
if __name__ == "__main__":
    in_channels = 2
    length = 128          # enc: 128 -> 30 -> 8 -> 2 ; dec: 2 -> 8 -> 30 -> 128
    batch = 2

    key = jax.random.PRNGKey(0)
    pkey, xkey = jax.random.split(key)
    params = init_generator_params(pkey, in_channels)
    x = jax.random.normal(xkey, (batch, in_channels, length), jnp.float32)

    # Precompute all packed constant slabs ONCE (hoisted out of the hot path).
    consts, plan = build_generator_plan(params, in_channels, length)

    fwd = jax.jit(lambda c, xx: generator_forward(c, plan, xx))
    x_reconst, z1, z2 = fwd(consts, x)
    jax.block_until_ready((x_reconst, z1, z2))

    # Validate against a pure-JAX reference of the identical fused math
    # (bf16x3 everywhere); tolerance covers compiler-dependent accumulation
    # order amplified through the BatchNorm rsqrt.
    xr_ref, z1_ref, z2_ref = generator_forward_ref(consts, plan, x)
    assert x_reconst.shape == (batch, in_channels, length)
    assert z1.shape == (batch, 2, plan["captures"]["z1"]["l"])
    assert z2.shape == (batch, 2, plan["captures"]["z2"]["l"])
    assert jnp.allclose(x_reconst, xr_ref, atol=1e-3, rtol=1e-3)
    assert jnp.allclose(z1, z1_ref, atol=1e-3, rtol=1e-3)
    assert jnp.allclose(z2, z2_ref, atol=1e-3, rtol=1e-3)

    print("KERNEL_OK")
</pallas_src>

<mosaic_0001>
module attributes {stable_mosaic.version = 11 : i64} {
  func.func @kernel(%arg0: memref<8x256xf32, #tpu.memory_space<vmem>>, %arg1: memref<80x512xf32, #tpu.memory_space<vmem>>, %arg2: memref<1792x256xbf16, #tpu.memory_space<vmem>>, %arg3: memref<2048x512xbf16, #tpu.memory_space<any>>, %arg4: memref<1280x256xbf16, #tpu.memory_space<any>>, %arg5: memref<8x256xf32, #tpu.memory_space<vmem>>, %arg6: memref<8x128xf32, #tpu.memory_space<vmem>>, %arg7: memref<8x128xf32, #tpu.memory_space<vmem>>, %arg8: memref<2048x512xbf16, #tpu.memory_space<vmem>>, %arg9: memref<1280x256xbf16, #tpu.memory_space<vmem>>, %arg10: memref<2x!tpu.dma_semaphore, #tpu.memory_space<semaphore_mem>>) attributes {dimension_semantics = [], scalar_prefetch = 0 : i64, scratch_operands = 3 : i64, tpu.core_type = #tpu.core_type<tc>} {
    %c0_i32 = arith.constant 0 : i32
    %0 = tpu.memref_slice %arg10[%c0_i32] : memref<2x!tpu.dma_semaphore, #tpu.memory_space<semaphore_mem>> -> memref<1x!tpu.dma_semaphore, #tpu.memory_space<semaphore_mem>>
    %1 = tpu.memref_squeeze %0 : memref<1x!tpu.dma_semaphore, #tpu.memory_space<semaphore_mem>> -> memref<!tpu.dma_semaphore, #tpu.memory_space<semaphore_mem>>
    tpu.enqueue_dma source(%arg3 : memref<2048x512xbf16, #tpu.memory_space<any>>) target(%arg8 : memref<2048x512xbf16, #tpu.memory_space<vmem>>) target_semaphore(%1 : memref<!tpu.dma_semaphore, #tpu.memory_space<semaphore_mem>>)
    %c1_i32 = arith.constant 1 : i32
    %2 = tpu.memref_slice %arg10[%c1_i32] : memref<2x!tpu.dma_semaphore, #tpu.memory_space<semaphore_mem>> -> memref<1x!tpu.dma_semaphore, #tpu.memory_space<semaphore_mem>>
    %3 = tpu.memref_squeeze %2 : memref<1x!tpu.dma_semaphore, #tpu.memory_space<semaphore_mem>> -> memref<!tpu.dma_semaphore, #tpu.memory_space<semaphore_mem>>
    tpu.enqueue_dma source(%arg4 : memref<1280x256xbf16, #tpu.memory_space<any>>) target(%arg9 : memref<1280x256xbf16, #tpu.memory_space<vmem>>) target_semaphore(%3 : memref<!tpu.dma_semaphore, #tpu.memory_space<semaphore_mem>>)
    %4 = tpu.iota {dimensions = array<i32: 0>} : vector<8x1xi32>
    %c2_i32 = arith.constant 2 : i32
    %5 = vector.broadcast %c2_i32 : i32 to vector<8x1xi32>
    %6 = arith.cmpi slt, %4, %5 : vector<8x1xi32>
    %7 = arith.extui %6 : vector<8x1xi1> to vector<8x1xi32>
    %8 = arith.sitofp %7 : vector<8x1xi32> to vector<8x1xf32>
    %9 = tpu.iota {dimensions = array<i32: 0>} : vector<2x1xi32>
    %c0_i32_0 = arith.constant 0 : i32
    %10 = vector.broadcast %c0_i32_0 : i32 to vector<2x1xi32>
    %11 = arith.cmpi eq, %9, %10 : vector<2x1xi32>
    %c0 = arith.constant 0 : index
    %c0_1 = arith.constant 0 : index
    %12 = vector.load %arg0[%c0, %c0_1] : memref<8x256xf32, #tpu.memory_space<vmem>>, vector<8x256xf32>
    %c0_2 = arith.constant 0 : index
    %c0_3 = arith.constant 0 : index
    %13 = vector.load %arg2[%c0_2, %c0_3] : memref<1792x256xbf16, #tpu.memory_space<vmem>>, vector<256x256xbf16>
    %c256 = arith.constant 256 : index
    %c0_4 = arith.constant 0 : index
    %14 = vector.load %arg2[%c256, %c0_4] : memref<1792x256xbf16, #tpu.memory_space<vmem>>, vector<256x256xbf16>
    %15 = arith.truncf %12 : vector<8x256xf32> to vector<8x256xbf16>
    %16 = arith.extf %15 : vector<8x256xbf16> to vector<8x256xf32>
    %17 = arith.subf %12, %16 : vector<8x256xf32>
    %18 = arith.truncf %17 : vector<8x256xf32> to vector<8x256xbf16>
    %cst = arith.constant dense<0.000000e+00> : vector<8x256xf32>
    %19 = tpu.matmul %15, %13, %cst {dimension_numbers = #tpu.dot_dimension_numbers<[1], [0], [0], [1], [0, 0, 1, 1], [], []>} : vector<8x256xbf16>, vector<256x256xbf16>, vector<8x256xf32> -> vector<8x256xf32>
    %cst_5 = arith.constant dense<0.000000e+00> : vector<8x256xf32>
    %20 = tpu.matmul %18, %13, %cst_5 {dimension_numbers = #tpu.dot_dimension_numbers<[1], [0], [0], [1], [0, 0, 1, 1], [], []>} : vector<8x256xbf16>, vector<256x256xbf16>, vector<8x256xf32> -> vector<8x256xf32>
    %21 = arith.addf %19, %20 : vector<8x256xf32>
    %cst_6 = arith.constant dense<0.000000e+00> : vector<8x256xf32>
    %22 = tpu.matmul %15, %14, %cst_6 {dimension_numbers = #tpu.dot_dimension_numbers<[1], [0], [0], [1], [0, 0, 1, 1], [], []>} : vector<8x256xbf16>, vector<256x256xbf16>, vector<8x256xf32> -> vector<8x256xf32>
    %23 = arith.addf %21, %22 : vector<8x256xf32>
    %c0_7 = arith.constant 0 : index
    %c0_8 = arith.constant 0 : index
    %24 = vector.load %arg1[%c0_7, %c0_8] : memref<80x512xf32, #tpu.memory_space<vmem>>, vector<1x256xf32>
    %25 = vector.broadcast %24 : vector<1x256xf32> to vector<8x256xf32>
    %26 = arith.addf %23, %25 : vector<8x256xf32>
    %c512 = arith.constant 512 : index
    %c0_9 = arith.constant 0 : index
    %27 = vector.load %arg2[%c512, %c0_9] : memref<1792x256xbf16, #tpu.memory_space<vmem>>, vector<256x256xbf16>
    %cst_10 = arith.constant 0.000000e+00 : f32
    %28 = vector.broadcast %cst_10 : f32 to vector<8x256xf32>
    %29 = arith.cmpf oge, %26, %28 : vector<8x256xf32>
    %cst_11 = arith.constant 0.00999999977 : f32
    %30 = vector.broadcast %cst_11 : f32 to vector<8x256xf32>
    %31 = arith.mulf %30, %26 : vector<8x256xf32>
    %32 = arith.select %29, %26, %31 : vector<8x256xi1>, vector<8x256xf32>
    %33 = vector.broadcast %8 : vector<8x1xf32> to vector<8x256xf32>
    %34 = arith.mulf %32, %33 : vector<8x256xf32>
    %cst_12 = arith.constant dense<0.000000e+00> : vector<256xf32>
    %35 = vector.multi_reduction <add>, %34, %cst_12 [0] : vector<8x256xf32> to vector<256xf32>
    %36 = vector.shape_cast %35 : vector<256xf32> to vector<1x256xf32>
    %37 = arith.mulf %34, %32 : vector<8x256xf32>
    %cst_13 = arith.constant dense<0.000000e+00> : vector<256xf32>
    %38 = vector.multi_reduction <add>, %37, %cst_13 [0] : vector<8x256xf32> to vector<256xf32>
    %39 = vector.shape_cast %38 : vector<256xf32> to vector<1x256xf32>
    %40 = vector.shape_cast %11 : vector<2x1xi1> to vector<2x1xi1>
    %41 = vector.broadcast %40 : vector<2x1xi1> to vector<2x256xi1>
    %42 = vector.shape_cast %36 : vector<1x256xf32> to vector<1x256xf32>
    %43 = vector.broadcast %42 : vector<1x256xf32> to vector<2x256xf32>
    %44 = vector.shape_cast %39 : vector<1x256xf32> to vector<1x256xf32>
    %45 = vector.broadcast %44 : vector<1x256xf32> to vector<2x256xf32>
    %46 = arith.select %41, %43, %45 : vector<2x256xi1>, vector<2x256xf32>
    %47 = arith.truncf %46 : vector<2x256xf32> to vector<2x256xbf16>
    %48 = arith.extf %47 : vector<2x256xbf16> to vector<2x256xf32>
    %49 = arith.subf %46, %48 : vector<2x256xf32>
    %50 = arith.truncf %49 : vector<2x256xf32> to vector<2x256xbf16>
    %cst_14 = arith.constant dense<0.000000e+00> : vector<2x256xf32>
    %51 = tpu.matmul %47, %27, %cst_14 {dimension_numbers = #tpu.dot_dimension_numbers<[1], [0], [0], [1], [0, 0, 1, 1], [], []>} : vector<2x256xbf16>, vector<256x256xbf16>, vector<2x256xf32> -> vector<2x256xf32>
    %cst_15 = arith.constant dense<0.000000e+00> : vector<2x256xf32>
    %52 = tpu.matmul %50, %27, %cst_15 {dimension_numbers = #tpu.dot_dimension_numbers<[1], [0], [0], [1], [0, 0, 1, 1], [], []>} : vector<2x256xbf16>, vector<256x256xbf16>, vector<2x256xf32> -> vector<2x256xf32>
    %53 = arith.addf %51, %52 : vector<2x256xf32>
    %cst_16 = arith.constant 0.0166666675 : f32
    %54 = vector.broadcast %cst_16 : f32 to vector<2x256xf32>
    %55 = arith.mulf %53, %54 : vector<2x256xf32>
    %cst_17 = arith.constant 0.000000e+00 : f32
    %56 = vector.shape_cast %11 : vector<2x1xi1> to vector<2x1xi1>
    %57 = vector.broadcast %56 : vector<2x1xi1> to vector<2x256xi1>
    %58 = vector.broadcast %cst_17 : f32 to vector<2x256xf32>
    %59 = arith.select %57, %55, %58 : vector<2x256xi1>, vector<2x256xf32>
    %cst_18 = arith.constant dense<0.000000e+00> : vector<256xf32>
    %60 = vector.multi_reduction <add>, %59, %cst_18 [0] : vector<2x256xf32> to vector<256xf32>
    %61 = vector.shape_cast %60 : vector<256xf32> to vector<1x256xf32>
    %cst_19 = arith.constant 0.000000e+00 : f32
    %62 = vector.shape_cast %11 : vector<2x1xi1> to vector<2x1xi1>
    %63 = vector.broadcast %62 : vector<2x1xi1> to vector<2x256xi1>
    %64 = vector.broadcast %cst_19 : f32 to vector<2x256xf32>
    %65 = arith.select %63, %64, %55 : vector<2x256xi1>, vector<2x256xf32>
    %cst_20 = arith.constant dense<0.000000e+00> : vector<256xf32>
    %66 = vector.multi_reduction <add>, %65, %cst_20 [0] : vector<2x256xf32> to vector<256xf32>
    %67 = vector.shape_cast %66 : vector<256xf32> to vector<1x256xf32>
    %68 = arith.mulf %61, %61 : vector<1x256xf32>
    %69 = arith.subf %67, %68 : vector<1x256xf32>
    %70 = vector.broadcast %61 : vector<1x256xf32> to vector<8x256xf32>
    %71 = arith.subf %32, %70 : vector<8x256xf32>
    %cst_21 = arith.constant 9.99999974E-6 : f32
    %72 = vector.broadcast %cst_21 : f32 to vector<1x256xf32>
    %73 = arith.addf %69, %72 : vector<1x256xf32>
    %74 = math.rsqrt %73 : vector<1x256xf32>
    %75 = vector.broadcast %74 : vector<1x256xf32> to vector<8x256xf32>
    %76 = arith.mulf %71, %75 : vector<8x256xf32>
    %c768 = arith.constant 768 : index
    %c0_22 = arith.constant 0 : index
    %77 = vector.load %arg2[%c768, %c0_22] : memref<1792x256xbf16, #tpu.memory_space<vmem>>, vector<256x128xbf16>
    %c1024 = arith.constant 1024 : index
    %c0_23 = arith.constant 0 : index
    %78 = vector.load %arg2[%c1024, %c0_23] : memref<1792x256xbf16, #tpu.memory_space<vmem>>, vector<256x128xbf16>
    %79 = arith.truncf %76 : vector<8x256xf32> to vector<8x256xbf16>
    %80 = arith.extf %79 : vector<8x256xbf16> to vector<8x256xf32>
    %81 = arith.subf %76, %80 : vector<8x256xf32>
    %82 = arith.truncf %81 : vector<8x256xf32> to vector<8x256xbf16>
    %cst_24 = arith.constant dense<0.000000e+00> : vector<8x128xf32>
    %83 = tpu.matmul %79, %77, %cst_24 {dimension_numbers = #tpu.dot_dimension_numbers<[1], [0], [0], [1], [0, 0, 1, 1], [], []>} : vector<8x256xbf16>, vector<256x128xbf16>, vector<8x128xf32> -> vector<8x128xf32>
    %cst_25 = arith.constant dense<0.000000e+00> : vector<8x128xf32>
    %84 = tpu.matmul %82, %77, %cst_25 {dimension_numbers = #tpu.dot_dimension_numbers<[1], [0], [0], [1], [0, 0, 1, 1], [], []>} : vector<8x256xbf16>, vector<256x128xbf16>, vector<8x128xf32> -> vector<8x128xf32>
    %85 = arith.addf %83, %84 : vector<8x128xf32>
    %cst_26 = arith.constant dense<0.000000e+00> : vector<8x128xf32>
    %86 = tpu.matmul %79, %78, %cst_26 {dimension_numbers = #tpu.dot_dimension_numbers<[1], [0], [0], [1], [0, 0, 1, 1], [], []>} : vector<8x256xbf16>, vector<256x128xbf16>, vector<8x128xf32> -> vector<8x128xf32>
    %87 = arith.addf %85, %86 : vector<8x128xf32>
    %c8 = arith.constant 8 : index
    %c0_27 = arith.constant 0 : index
    %88 = vector.load %arg1[%c8, %c0_27] : memref<80x512xf32, #tpu.memory_space<vmem>>, vector<1x128xf32>
    %89 = vector.broadcast %88 : vector<1x128xf32> to vector<8x128xf32>
    %90 = arith.addf %87, %89 : vector<8x128xf32>
    %c1280 = arith.constant 1280 : index
    %c0_28 = arith.constant 0 : index
    %91 = vector.load %arg2[%c1280, %c0_28] : memref<1792x256xbf16, #tpu.memory_space<vmem>>, vector<128x128xbf16>
    %cst_29 = arith.constant 0.000000e+00 : f32
    %92 = vector.broadcast %cst_29 : f32 to vector<8x128xf32>
    %93 = arith.cmpf oge, %90, %92 : vector<8x128xf32>
    %cst_30 = arith.constant 0.00999999977 : f32
    %94 = vector.broadcast %cst_30 : f32 to vector<8x128xf32>
    %95 = arith.mulf %94, %90 : vector<8x128xf32>
    %96 = arith.select %93, %90, %95 : vector<8x128xi1>, vector<8x128xf32>
    %97 = vector.broadcast %8 : vector<8x1xf32> to vector<8x128xf32>
    %98 = arith.mulf %96, %97 : vector<8x128xf32>
    %cst_31 = arith.constant dense<0.000000e+00> : vector<128xf32>
    %99 = vector.multi_reduction <add>, %98, %cst_31 [0] : vector<8x128xf32> to vector<128xf32>
    %100 = vector.shape_cast %99 : vector<128xf32> to vector<1x128xf32>
    %101 = arith.mulf %98, %96 : vector<8x128xf32>
    %cst_32 = arith.constant dense<0.000000e+00> : vector<128xf32>
    %102 = vector.multi_reduction <add>, %101, %cst_32 [0] : vector<8x128xf32> to vector<128xf32>
    %103 = vector.shape_cast %102 : vector<128xf32> to vector<1x128xf32>
    %104 = vector.shape_cast %11 : vector<2x1xi1> to vector<2x1xi1>
    %105 = vector.broadcast %104 : vector<2x1xi1> to vector<2x128xi1>
    %106 = vector.shape_cast %100 : vector<1x128xf32> to vector<1x128xf32>
    %107 = vector.broadcast %106 : vector<1x128xf32> to vector<2x128xf32>
    %108 = vector.shape_cast %103 : vector<1x128xf32> to vector<1x128xf32>
    %109 = vector.broadcast %108 : vector<1x128xf32> to vector<2x128xf32>
    %110 = arith.select %105, %107, %109 : vector<2x128xi1>, vector<2x128xf32>
    %111 = arith.truncf %110 : vector<2x128xf32> to vector<2x128xbf16>
    %112 = arith.extf %111 : vector<2x128xbf16> to vector<2x128xf32>
    %113 = arith.subf %110, %112 : vector<2x128xf32>
    %114 = arith.truncf %113 : vector<2x128xf32> to vector<2x128xbf16>
    %cst_33 = arith.constant dense<0.000000e+00> : vector<2x128xf32>
    %115 = tpu.matmul %111, %91, %cst_33 {dimension_numbers = #tpu.dot_dimension_numbers<[1], [0], [0], [1], [0, 0, 1, 1], [], []>} : vector<2x128xbf16>, vector<128x128xbf16>, vector<2x128xf32> -> vector<2x128xf32>
    %cst_34 = arith.constant dense<0.000000e+00> : vector<2x128xf32>
    %116 = tpu.matmul %114, %91, %cst_34 {dimension_numbers = #tpu.dot_dimension_numbers<[1], [0], [0], [1], [0, 0, 1, 1], [], []>} : vector<2x128xbf16>, vector<128x128xbf16>, vector<2x128xf32> -> vector<2x128xf32>
    %117 = arith.addf %115, %116 : vector<2x128xf32>
    %cst_35 = arith.constant 6.250000e-02 : f32
    %118 = vector.broadcast %cst_35 : f32 to vector<2x128xf32>
    %119 = arith.mulf %117, %118 : vector<2x128xf32>
    %cst_36 = arith.constant 0.000000e+00 : f32
    %120 = vector.shape_cast %11 : vector<2x1xi1> to vector<2x1xi1>
    %121 = vector.broadcast %120 : vector<2x1xi1> to vector<2x128xi1>
    %122 = vector.broadcast %cst_36 : f32 to vector<2x128xf32>
    %123 = arith.select %121, %119, %122 : vector<2x128xi1>, vector<2x128xf32>
    %cst_37 = arith.constant dense<0.000000e+00> : vector<128xf32>
    %124 = vector.multi_reduction <add>, %123, %cst_37 [0] : vector<2x128xf32> to vector<128xf32>
    %125 = vector.shape_cast %124 : vector<128xf32> to vector<1x128xf32>
    %cst_38 = arith.constant 0.000000e+00 : f32
    %126 = vector.shape_cast %11 : vector<2x1xi1> to vector<2x1xi1>
    %127 = vector.broadcast %126 : vector<2x1xi1> to vector<2x128xi1>
    %128 = vector.broadcast %cst_38 : f32 to vector<2x128xf32>
    %129 = arith.select %127, %128, %119 : vector<2x128xi1>, vector<2x128xf32>
    %cst_39 = arith.constant dense<0.000000e+00> : vector<128xf32>
    %130 = vector.multi_reduction <add>, %129, %cst_39 [0] : vector<2x128xf32> to vector<128xf32>
    %131 = vector.shape_cast %130 : vector<128xf32> to vector<1x128xf32>
    %132 = arith.mulf %125, %125 : vector<1x128xf32>
    %133 = arith.subf %131, %132 : vector<1x128xf32>
    %134 = vector.broadcast %125 : vector<1x128xf32> to vector<8x128xf32>
    %135 = arith.subf %96, %134 : vector<8x128xf32>
    %cst_40 = arith.constant 9.99999974E-6 : f32
    %136 = vector.broadcast %cst_40 : f32 to vector<1x128xf32>
    %137 = arith.addf %133, %136 : vector<1x128xf32>
    %138 = math.rsqrt %137 : vector<1x128xf32>
    %139 = vector.broadcast %138 : vector<1x128xf32> to vector<8x128xf32>
    %140 = arith.mulf %135, %139 : vector<8x128xf32>
    %c1408 = arith.constant 1408 : index
    %c0_41 = arith.constant 0 : index
    %141 = vector.load %arg2[%c1408, %c0_41] : memref<1792x256xbf16, #tpu.memory_space<vmem>>, vector<128x128xbf16>
    %c1536 = arith.constant 1536 : index
    %c0_42 = arith.constant 0 : index
    %142 = vector.load %arg2[%c1536, %c0_42] : memref<1792x256xbf16, #tpu.memory_space<vmem>>, vector<128x128xbf16>
    %143 = arith.truncf %140 : vector<8x128xf32> to vector<8x128xbf16>
    %144 = arith.extf %143 : vector<8x128xbf16> to vector<8x128xf32>
    %145 = arith.subf %140, %144 : vector<8x128xf32>
    %146 = arith.truncf %145 : vector<8x128xf32> to vector<8x128xbf16>
    %cst_43 = arith.constant dense<0.000000e+00> : vector<8x128xf32>
    %147 = tpu.matmul %143, %141, %cst_43 {dimension_numbers = #tpu.dot_dimension_numbers<[1], [0], [0], [1], [0, 0, 1, 1], [], []>} : vector<8x128xbf16>, vector<128x128xbf16>, vector<8x128xf32> -> vector<8x128xf32>
    %cst_44 = arith.constant dense<0.000000e+00> : vector<8x128xf32>
    %148 = tpu.matmul %146, %141, %cst_44 {dimension_numbers = #tpu.dot_dimension_numbers<[1], [0], [0], [1], [0, 0, 1, 1], [], []>} : vector<8x128xbf16>, vector<128x128xbf16>, vector<8x128xf32> -> vector<8x128xf32>
    %149 = arith.addf %147, %148 : vector<8x128xf32>
    %cst_45 = arith.constant dense<0.000000e+00> : vector<8x128xf32>
    %150 = tpu.matmul %143, %142, %cst_45 {dimension_numbers = #tpu.dot_dimension_numbers<[1], [0], [0], [1], [0, 0, 1, 1], [], []>} : vector<8x128xbf16>, vector<128x128xbf16>, vector<8x128xf32> -> vector<8x128xf32>
    %151 = arith.addf %149, %150 : vector<8x128xf32>
    %c16 = arith.constant 16 : index
    %c0_46 = arith.constant 0 : index
    %152 = vector.load %arg1[%c16, %c0_46] : memref<80x512xf32, #tpu.memory_space<vmem>>, vector<1x128xf32>
    %153 = vector.broadcast %152 : vector<1x128xf32> to vector<8x128xf32>
    %154 = arith.addf %151, %153 : vector<8x128xf32>
    %c1664 = arith.constant 1664 : index
    %c0_47 = arith.constant 0 : index
    %155 = vector.load %arg2[%c1664, %c0_47] : memref<1792x256xbf16, #tpu.memory_space<vmem>>, vector<128x128xbf16>
    %cst_48 = arith.constant 0.000000e+00 : f32
    %156 = vector.broadcast %cst_48 : f32 to vector<8x128xf32>
    %157 = arith.cmpf oge, %154, %156 : vector<8x128xf32>
    %cst_49 = arith.constant 0.00999999977 : f32
    %158 = vector.broadcast %cst_49 : f32 to vector<8x128xf32>
    %159 = arith.mulf %158, %154 : vector<8x128xf32>
    %160 = arith.select %157, %154, %159 : vector<8x128xi1>, vector<8x128xf32>
    %161 = vector.broadcast %8 : vector<8x1xf32> to vector<8x128xf32>
    %162 = arith.mulf %160, %161 : vector<8x128xf32>
    %cst_50 = arith.constant dense<0.000000e+00> : vector<128xf32>
    %163 = vector.multi_reduction <add>, %162, %cst_50 [0] : vector<8x128xf32> to vector<128xf32>
    %164 = vector.shape_cast %163 : vector<128xf32> to vector<1x128xf32>
    %165 = arith.mulf %162, %160 : vector<8x128xf32>
    %cst_51 = arith.constant dense<0.000000e+00> : vector<128xf32>
    %166 = vector.multi_reduction <add>, %165, %cst_51 [0] : vector<8x128xf32> to vector<128xf32>
    %167 = vector.shape_cast %166 : vector<128xf32> to vector<1x128xf32>
    %168 = vector.shape_cast %11 : vector<2x1xi1> to vector<2x1xi1>
    %169 = vector.broadcast %168 : vector<2x1xi1> to vector<2x128xi1>
    %170 = vector.shape_cast %164 : vector<1x128xf32> to vector<1x128xf32>
    %171 = vector.broadcast %170 : vector<1x128xf32> to vector<2x128xf32>
    %172 = vector.shape_cast %167 : vector<1x128xf32> to vector<1x128xf32>
    %173 = vector.broadcast %172 : vector<1x128xf32> to vector<2x128xf32>
    %174 = arith.select %169, %171, %173 : vector<2x128xi1>, vector<2x128xf32>
    %175 = arith.truncf %174 : vector<2x128xf32> to vector<2x128xbf16>
    %176 = arith.extf %175 : vector<2x128xbf16> to vector<2x128xf32>
    %177 = arith.subf %174, %176 : vector<2x128xf32>
    %178 = arith.truncf %177 : vector<2x128xf32> to vector<2x128xbf16>
    %cst_52 = arith.constant dense<0.000000e+00> : vector<2x128xf32>
    %179 = tpu.matmul %175, %155, %cst_52 {dimension_numbers = #tpu.dot_dimension_numbers<[1], [0], [0], [1], [0, 0, 1, 1], [], []>} : vector<2x128xbf16>, vector<128x128xbf16>, vector<2x128xf32> -> vector<2x128xf32>
    %cst_53 = arith.constant dense<0.000000e+00> : vector<2x128xf32>
    %180 = tpu.matmul %178, %155, %cst_53 {dimension_numbers = #tpu.dot_dimension_numbers<[1], [0], [0], [1], [0, 0, 1, 1], [], []>} : vector<2x128xbf16>, vector<128x128xbf16>, vector<2x128xf32> -> vector<2x128xf32>
    %181 = arith.addf %179, %180 : vector<2x128xf32>
    %cst_54 = arith.constant 2.500000e-01 : f32
    %182 = vector.broadcast %cst_54 : f32 to vector<2x128xf32>
    %183 = arith.mulf %181, %182 : vector<2x128xf32>
    %cst_55 = arith.constant 0.000000e+00 : f32
    %184 = vector.shape_cast %11 : vector<2x1xi1> to vector<2x1xi1>
    %185 = vector.broadcast %184 : vector<2x1xi1> to vector<2x128xi1>
    %186 = vector.broadcast %cst_55 : f32 to vector<2x128xf32>
    %187 = arith.select %185, %183, %186 : vector<2x128xi1>, vector<2x128xf32>
    %cst_56 = arith.constant dense<0.000000e+00> : vector<128xf32>
    %188 = vector.multi_reduction <add>, %187, %cst_56 [0] : vector<2x128xf32> to vector<128xf32>
    %189 = vector.shape_cast %188 : vector<128xf32> to vector<1x128xf32>
    %cst_57 = arith.constant 0.000000e+00 : f32
    %190 = vector.shape_cast %11 : vector<2x1xi1> to vector<2x1xi1>
    %191 = vector.broadcast %190 : vector<2x1xi1> to vector<2x128xi1>
    %192 = vector.broadcast %cst_57 : f32 to vector<2x128xf32>
    %193 = arith.select %191, %192, %183 : vector<2x128xi1>, vector<2x128xf32>
    %cst_58 = arith.constant dense<0.000000e+00> : vector<128xf32>
    %194 = vector.multi_reduction <add>, %193, %cst_58 [0] : vector<2x128xf32> to vector<128xf32>
    %195 = vector.shape_cast %194 : vector<128xf32> to vector<1x128xf32>
    %196 = arith.mulf %189, %189 : vector<1x128xf32>
    %197 = arith.subf %195, %196 : vector<1x128xf32>
    %198 = vector.broadcast %189 : vector<1x128xf32> to vector<8x128xf32>
    %199 = arith.subf %160, %198 : vector<8x128xf32>
    %cst_59 = arith.constant 9.99999974E-6 : f32
    %200 = vector.broadcast %cst_59 : f32 to vector<1x128xf32>
    %201 = arith.addf %197, %200 : vector<1x128xf32>
    %202 = math.rsqrt %201 : vector<1x128xf32>
    %203 = vector.broadcast %202 : vector<1x128xf32> to vector<8x128xf32>
    %204 = arith.mulf %199, %203 : vector<8x128xf32>
    %c0_60 = arith.constant 0 : index
    %c0_61 = arith.constant 0 : index
    %205 = vector.load %arg6[%c0_60, %c0_61] : memref<8x128xf32, #tpu.memory_space<vmem>>, vector<8x128xf32>
    tpu.vector_store %arg6[%c0_60, %c0_61], %204 {strides = array<i32>} : memref<8x128xf32, #tpu.memory_space<vmem>>, vector<8x128xf32>,
    %c0_i32_62 = arith.constant 0 : i32
    %206 = tpu.memref_slice %arg10[%c0_i32_62] : memref<2x!tpu.dma_semaphore, #tpu.memory_space<semaphore_mem>> -> memref<1x!tpu.dma_semaphore, #tpu.memory_space<semaphore_mem>>
    %207 = tpu.memref_squeeze %206 : memref<1x!tpu.dma_semaphore, #tpu.memory_space<semaphore_mem>> -> memref<!tpu.dma_semaphore, #tpu.memory_space<semaphore_mem>>
    tpu.wait_dma2 semaphore(%207 : memref<!tpu.dma_semaphore, #tpu.memory_space<semaphore_mem>>) src(%arg3 : memref<2048x512xbf16, #tpu.memory_space<any>>) dst(%arg8 : memref<2048x512xbf16, #tpu.memory_space<vmem>>)
    %c0_63 = arith.constant 0 : index
    %c0_64 = arith.constant 0 : index
    %208 = vector.load %arg8[%c0_63, %c0_64] : memref<2048x512xbf16, #tpu.memory_space<vmem>>, vector<128x128xbf16>
    %c128 = arith.constant 128 : index
    %c0_65 = arith.constant 0 : index
    %209 = vector.load %arg8[%c128, %c0_65] : memref<2048x512xbf16, #tpu.memory_space<vmem>>, vector<128x128xbf16>
    %210 = arith.truncf %204 : vector<8x128xf32> to vector<8x128xbf16>
    %211 = arith.extf %210 : vector<8x128xbf16> to vector<8x128xf32>
    %212 = arith.subf %204, %211 : vector<8x128xf32>
    %213 = arith.truncf %212 : vector<8x128xf32> to vector<8x128xbf16>
    %cst_66 = arith.constant dense<0.000000e+00> : vector<8x128xf32>
    %214 = tpu.matmul %210, %208, %cst_66 {dimension_numbers = #tpu.dot_dimension_numbers<[1], [0], [0], [1], [0, 0, 1, 1], [], []>} : vector<8x128xbf16>, vector<128x128xbf16>, vector<8x128xf32> -> vector<8x128xf32>
    %cst_67 = arith.constant dense<0.000000e+00> : vector<8x128xf32>
    %215 = tpu.matmul %213, %208, %cst_67 {dimension_numbers = #tpu.dot_dimension_numbers<[1], [0], [0], [1], [0, 0, 1, 1], [], []>} : vector<8x128xbf16>, vector<128x128xbf16>, vector<8x128xf32> -> vector<8x128xf32>
    %216 = arith.addf %214, %215 : vector<8x128xf32>
    %cst_68 = arith.constant dense<0.000000e+00> : vector<8x128xf32>
    %217 = tpu.matmul %210, %209, %cst_68 {dimension_numbers = #tpu.dot_dimension_numbers<[1], [0], [0], [1], [0, 0, 1, 1], [], []>} : vector<8x128xbf16>, vector<128x128xbf16>, vector<8x128xf32> -> vector<8x128xf32>
    %218 = arith.addf %216, %217 : vector<8x128xf32>
    %c24 = arith.constant 24 : index
    %c0_69 = arith.constant 0 : index
    %219 = vector.load %arg1[%c24, %c0_69] : memref<80x512xf32, #tpu.memory_space<vmem>>, vector<1x128xf32>
    %220 = vector.broadcast %219 : vector<1x128xf32> to vector<8x128xf32>
    %221 = arith.addf %218, %220 : vector<8x128xf32>
    %c1280_70 = arith.constant 1280 : index
    %c0_71 = arith.constant 0 : index
    %222 = vector.load %arg2[%c1280_70, %c0_71] : memref<1792x256xbf16, #tpu.memory_space<vmem>>, vector<128x128xbf16>
    %223 = vector.broadcast %8 : vector<8x1xf32> to vector<8x128xf32>
    %224 = arith.mulf %221, %223 : vector<8x128xf32>
    %cst_72 = arith.constant dense<0.000000e+00> : vector<128xf32>
    %225 = vector.multi_reduction <add>, %224, %cst_72 [0] : vector<8x128xf32> to vector<128xf32>
    %226 = vector.shape_cast %225 : vector<128xf32> to vector<1x128xf32>
    %227 = arith.mulf %224, %221 : vector<8x128xf32>
    %cst_73 = arith.constant dense<0.000000e+00> : vector<128xf32>
    %228 = vector.multi_reduction <add>, %227, %cst_73 [0] : vector<8x128xf32> to vector<128xf32>
    %229 = vector.shape_cast %228 : vector<128xf32> to vector<1x128xf32>
    %230 = vector.shape_cast %11 : vector<2x1xi1> to vector<2x1xi1>
    %231 = vector.broadcast %230 : vector<2x1xi1> to vector<2x128xi1>
    %232 = vector.shape_cast %226 : vector<1x128xf32> to vector<1x128xf32>
    %233 = vector.broadcast %232 : vector<1x128xf32> to vector<2x128xf32>
    %234 = vector.shape_cast %229 : vector<1x128xf32> to vector<1x128xf32>
    %235 = vector.broadcast %234 : vector<1x128xf32> to vector<2x128xf32>
    %236 = arith.select %231, %233, %235 : vector<2x128xi1>, vector<2x128xf32>
    %237 = arith.truncf %236 : vector<2x128xf32> to vector<2x128xbf16>
    %238 = arith.extf %237 : vector<2x128xbf16> to vector<2x128xf32>
    %239 = arith.subf %236, %238 : vector<2x128xf32>
    %240 = arith.truncf %239 : vector<2x128xf32> to vector<2x128xbf16>
    %cst_74 = arith.constant dense<0.000000e+00> : vector<2x128xf32>
    %241 = tpu.matmul %237, %222, %cst_74 {dimension_numbers = #tpu.dot_dimension_numbers<[1], [0], [0], [1], [0, 0, 1, 1], [], []>} : vector<2x128xbf16>, vector<128x128xbf16>, vector<2x128xf32> -> vector<2x128xf32>
    %cst_75 = arith.constant dense<0.000000e+00> : vector<2x128xf32>
    %242 = tpu.matmul %240, %222, %cst_75 {dimension_numbers = #tpu.dot_dimension_numbers<[1], [0], [0], [1], [0, 0, 1, 1], [], []>} : vector<2x128xbf16>, vector<128x128xbf16>, vector<2x128xf32> -> vector<2x128xf32>
    %243 = arith.addf %241, %242 : vector<2x128xf32>
    %cst_76 = arith.constant 6.250000e-02 : f32
    %244 = vector.broadcast %cst_76 : f32 to vector<2x128xf32>
    %245 = arith.mulf %243, %244 : vector<2x128xf32>
    %cst_77 = arith.constant 0.000000e+00 : f32
    %246 = vector.shape_cast %11 : vector<2x1xi1> to vector<2x1xi1>
    %247 = vector.broadcast %246 : vector<2x1xi1> to vector<2x128xi1>
    %248 = vector.broadcast %cst_77 : f32 to vector<2x128xf32>
    %249 = arith.select %247, %245, %248 : vector<2x128xi1>, vector<2x128xf32>
    %cst_78 = arith.constant dense<0.000000e+00> : vector<128xf32>
    %250 = vector.multi_reduction <add>, %249, %cst_78 [0] : vector<2x128xf32> to vector<128xf32>
    %251 = vector.shape_cast %250 : vector<128xf32> to vector<1x128xf32>
    %cst_79 = arith.constant 0.000000e+00 : f32
    %252 = vector.shape_cast %11 : vector<2x1xi1> to vector<2x1xi1>
    %253 = vector.broadcast %252 : vector<2x1xi1> to vector<2x128xi1>
    %254 = vector.broadcast %cst_79 : f32 to vector<2x128xf32>
    %255 = arith.select %253, %254, %245 : vector<2x128xi1>, vector<2x128xf32>
    %cst_80 = arith.constant dense<0.000000e+00> : vector<128xf32>
    %256 = vector.multi_reduction <add>, %255, %cst_80 [0] : vector<2x128xf32> to vector<128xf32>
    %257 = vector.shape_cast %256 : vector<128xf32> to vector<1x128xf32>
    %258 = arith.mulf %251, %251 : vector<1x128xf32>
    %259 = arith.subf %257, %258 : vector<1x128xf32>
    %260 = vector.broadcast %251 : vector<1x128xf32> to vector<8x128xf32>
    %261 = arith.subf %221, %260 : vector<8x128xf32>
    %cst_81 = arith.constant 9.99999974E-6 : f32
    %262 = vector.broadcast %cst_81 : f32 to vector<1x128xf32>
    %263 = arith.addf %259, %262 : vector<1x128xf32>
    %264 = math.rsqrt %263 : vector<1x128xf32>
    %265 = vector.broadcast %264 : vector<1x128xf32> to vector<8x128xf32>
    %266 = arith.mulf %261, %265 : vector<8x128xf32>
    %cst_82 = arith.constant 0.000000e+00 : f32
    %267 = vector.broadcast %cst_82 : f32 to vector<8x128xf32>
    %268 = arith.maximumf %266, %267 : vector<8x128xf32>
    %c256_83 = arith.constant 256 : index
    %c0_84 = arith.constant 0 : index
    %269 = vector.load %arg8[%c256_83, %c0_84] : memref<2048x512xbf16, #tpu.memory_space<vmem>>, vector<128x256xbf16>
    %c384 = arith.constant 384 : index
    %c0_85 = arith.constant 0 : index
    %270 = vector.load %arg8[%c384, %c0_85] : memref<2048x512xbf16, #tpu.memory_space<vmem>>, vector<128x256xbf16>
    %271 = arith.truncf %268 : vector<8x128xf32> to vector<8x128xbf16>
    %272 = arith.extf %271 : vector<8x128xbf16> to vector<8x128xf32>
    %273 = arith.subf %268, %272 : vector<8x128xf32>
    %274 = arith.truncf %273 : vector<8x128xf32> to vector<8x128xbf16>
    %cst_86 = arith.constant dense<0.000000e+00> : vector<8x256xf32>
    %275 = tpu.matmul %271, %269, %cst_86 {dimension_numbers = #tpu.dot_dimension_numbers<[1], [0], [0], [1], [0, 0, 1, 1], [], []>} : vector<8x128xbf16>, vector<128x256xbf16>, vector<8x256xf32> -> vector<8x256xf32>
    %cst_87 = arith.constant dense<0.000000e+00> : vector<8x256xf32>
    %276 = tpu.matmul %274, %269, %cst_87 {dimension_numbers = #tpu.dot_dimension_numbers<[1], [0], [0], [1], [0, 0, 1, 1], [], []>} : vector<8x128xbf16>, vector<128x256xbf16>, vector<8x256xf32> -> vector<8x256xf32>
    %277 = arith.addf %275, %276 : vector<8x256xf32>
    %cst_88 = arith.constant dense<0.000000e+00> : vector<8x256xf32>
    %278 = tpu.matmul %271, %270, %cst_88 {dimension_numbers = #tpu.dot_dimension_numbers<[1], [0], [0], [1], [0, 0, 1, 1], [], []>} : vector<8x128xbf16>, vector<128x256xbf16>, vector<8x256xf32> -> vector<8x256xf32>
    %279 = arith.addf %277, %278 : vector<8x256xf32>
    %c32 = arith.constant 32 : index
    %c0_89 = arith.constant 0 : index
    %280 = vector.load %arg1[%c32, %c0_89] : memref<80x512xf32, #tpu.memory_space<vmem>>, vector<1x256xf32>
    %281 = vector.broadcast %280 : vector<1x256xf32> to vector<8x256xf32>
    %282 = arith.addf %279, %281 : vector<8x256xf32>
    %c512_90 = arith.constant 512 : index
    %c0_91 = arith.constant 0 : index
    %283 = vector.load %arg2[%c512_90, %c0_91] : memref<1792x256xbf16, #tpu.memory_space<vmem>>, vector<256x256xbf16>
    %284 = vector.broadcast %8 : vector<8x1xf32> to vector<8x256xf32>
    %285 = arith.mulf %282, %284 : vector<8x256xf32>
    %cst_92 = arith.constant dense<0.000000e+00> : vector<256xf32>
    %286 = vector.multi_reduction <add>, %285, %cst_92 [0] : vector<8x256xf32> to vector<256xf32>
    %287 = vector.shape_cast %286 : vector<256xf32> to vector<1x256xf32>
    %288 = arith.mulf %285, %282 : vector<8x256xf32>
    %cst_93 = arith.constant dense<0.000000e+00> : vector<256xf32>
    %289 = vector.multi_reduction <add>, %288, %cst_93 [0] : vector<8x256xf32> to vector<256xf32>
    %290 = vector.shape_cast %289 : vector<256xf32> to vector<1x256xf32>
    %291 = vector.shape_cast %11 : vector<2x1xi1> to vector<2x1xi1>
    %292 = vector.broadcast %291 : vector<2x1xi1> to vector<2x256xi1>
    %293 = vector.shape_cast %287 : vector<1x256xf32> to vector<1x256xf32>
    %294 = vector.broadcast %293 : vector<1x256xf32> to vector<2x256xf32>
    %295 = vector.shape_cast %290 : vector<1x256xf32> to vector<1x256xf32>
    %296 = vector.broadcast %295 : vector<1x256xf32> to vector<2x256xf32>
    %297 = arith.select %292, %294, %296 : vector<2x256xi1>, vector<2x256xf32>
    %298 = arith.truncf %297 : vector<2x256xf32> to vector<2x256xbf16>
    %299 = arith.extf %298 : vector<2x256xbf16> to vector<2x256xf32>
    %300 = arith.subf %297, %299 : vector<2x256xf32>
    %301 = arith.truncf %300 : vector<2x256xf32> to vector<2x256xbf16>
    %cst_94 = arith.constant dense<0.000000e+00> : vector<2x256xf32>
    %302 = tpu.matmul %298, %283, %cst_94 {dimension_numbers = #tpu.dot_dimension_numbers<[1], [0], [0], [1], [0, 0, 1, 1], [], []>} : vector<2x256xbf16>, vector<256x256xbf16>, vector<2x256xf32> -> vector<2x256xf32>
    %cst_95 = arith.constant dense<0.000000e+00> : vector<2x256xf32>
    %303 = tpu.matmul %301, %283, %cst_95 {dimension_numbers = #tpu.dot_dimension_numbers<[1], [0], [0], [1], [0, 0, 1, 1], [], []>} : vector<2x256xbf16>, vector<256x256xbf16>, vector<2x256xf32> -> vector<2x256xf32>
    %304 = arith.addf %302, %303 : vector<2x256xf32>
    %cst_96 = arith.constant 0.0166666675 : f32
    %305 = vector.broadcast %cst_96 : f32 to vector<2x256xf32>
    %306 = arith.mulf %304, %305 : vector<2x256xf32>
    %cst_97 = arith.constant 0.000000e+00 : f32
    %307 = vector.shape_cast %11 : vector<2x1xi1> to vector<2x1xi1>
    %308 = vector.broadcast %307 : vector<2x1xi1> to vector<2x256xi1>
    %309 = vector.broadcast %cst_97 : f32 to vector<2x256xf32>
    %310 = arith.select %308, %306, %309 : vector<2x256xi1>, vector<2x256xf32>
    %cst_98 = arith.constant dense<0.000000e+00> : vector<256xf32>
    %311 = vector.multi_reduction <add>, %310, %cst_98 [0] : vector<2x256xf32> to vector<256xf32>
    %312 = vector.shape_cast %311 : vector<256xf32> to vector<1x256xf32>
    %cst_99 = arith.constant 0.000000e+00 : f32
    %313 = vector.shape_cast %11 : vector<2x1xi1> to vector<2x1xi1>
    %314 = vector.broadcast %313 : vector<2x1xi1> to vector<2x256xi1>
    %315 = vector.broadcast %cst_99 : f32 to vector<2x256xf32>
    %316 = arith.select %314, %315, %306 : vector<2x256xi1>, vector<2x256xf32>
    %cst_100 = arith.constant dense<0.000000e+00> : vector<256xf32>
    %317 = vector.multi_reduction <add>, %316, %cst_100 [0] : vector<2x256xf32> to vector<256xf32>
    %318 = vector.shape_cast %317 : vector<256xf32> to vector<1x256xf32>
    %319 = arith.mulf %312, %312 : vector<1x256xf32>
    %320 = arith.subf %318, %319 : vector<1x256xf32>
    %321 = vector.broadcast %312 : vector<1x256xf32> to vector<8x256xf32>
    %322 = arith.subf %282, %321 : vector<8x256xf32>
    %cst_101 = arith.constant 9.99999974E-6 : f32
    %323 = vector.broadcast %cst_101 : f32 to vector<1x256xf32>
    %324 = arith.addf %320, %323 : vector<1x256xf32>
    %325 = math.rsqrt %324 : vector<1x256xf32>
    %326 = vector.broadcast %325 : vector<1x256xf32> to vector<8x256xf32>
    %327 = arith.mulf %322, %326 : vector<8x256xf32>
    %cst_102 = arith.constant 0.000000e+00 : f32
    %328 = vector.broadcast %cst_102 : f32 to vector<8x256xf32>
    %329 = arith.maximumf %327, %328 : vector<8x256xf32>
    %c512_103 = arith.constant 512 : index
    %c0_104 = arith.constant 0 : index
    %330 = vector.load %arg8[%c512_103, %c0_104] : memref<2048x512xbf16, #tpu.memory_space<vmem>>, vector<256x512xbf16>
    %c768_105 = arith.constant 768 : index
    %c0_106 = arith.constant 0 : index
    %331 = vector.load %arg8[%c768_105, %c0_106] : memref<2048x512xbf16, #tpu.memory_space<vmem>>, vector<256x512xbf16>
    %332 = arith.truncf %329 : vector<8x256xf32> to vector<8x256xbf16>
    %333 = arith.extf %332 : vector<8x256xbf16> to vector<8x256xf32>
    %334 = arith.subf %329, %333 : vector<8x256xf32>
    %335 = arith.truncf %334 : vector<8x256xf32> to vector<8x256xbf16>
    %cst_107 = arith.constant dense<0.000000e+00> : vector<8x512xf32>
    %336 = tpu.matmul %332, %330, %cst_107 {dimension_numbers = #tpu.dot_dimension_numbers<[1], [0], [0], [1], [0, 0, 1, 1], [], []>} : vector<8x256xbf16>, vector<256x512xbf16>, vector<8x512xf32> -> vector<8x512xf32>
    %cst_108 = arith.constant dense<0.000000e+00> : vector<8x512xf32>
    %337 = tpu.matmul %335, %330, %cst_108 {dimension_numbers = #tpu.dot_dimension_numbers<[1], [0], [0], [1], [0, 0, 1, 1], [], []>} : vector<8x256xbf16>, vector<256x512xbf16>, vector<8x512xf32> -> vector<8x512xf32>
    %338 = arith.addf %336, %337 : vector<8x512xf32>
    %cst_109 = arith.constant dense<0.000000e+00> : vector<8x512xf32>
    %339 = tpu.matmul %332, %331, %cst_109 {dimension_numbers = #tpu.dot_dimension_numbers<[1], [0], [0], [1], [0, 0, 1, 1], [], []>} : vector<8x256xbf16>, vector<256x512xbf16>, vector<8x512xf32> -> vector<8x512xf32>
    %340 = arith.addf %338, %339 : vector<8x512xf32>
    %c40 = arith.constant 40 : index
    %c0_110 = arith.constant 0 : index
    %341 = vector.load %arg1[%c40, %c0_110] : memref<80x512xf32, #tpu.memory_space<vmem>>, vector<1x512xf32>
    %342 = vector.broadcast %341 : vector<1x512xf32> to vector<8x512xf32>
    %343 = arith.addf %340, %342 : vector<8x512xf32>
    %cst_111 = arith.constant 0.000000e+00 : f32
    %344 = vector.broadcast %cst_111 : f32 to vector<8x512xf32>
    %345 = arith.maximumf %343, %344 : vector<8x512xf32>
    %c1024_112 = arith.constant 1024 : index
    %c0_113 = arith.constant 0 : index
    %346 = vector.load %arg8[%c1024_112, %c0_113] : memref<2048x512xbf16, #tpu.memory_space<vmem>>, vector<512x256xbf16>
    %c1536_114 = arith.constant 1536 : index
    %c0_115 = arith.constant 0 : index
    %347 = vector.load %arg8[%c1536_114, %c0_115] : memref<2048x512xbf16, #tpu.memory_space<vmem>>, vector<512x256xbf16>
    %348 = arith.truncf %345 : vector<8x512xf32> to vector<8x512xbf16>
    %349 = arith.extf %348 : vector<8x512xbf16> to vector<8x512xf32>
    %350 = arith.subf %345, %349 : vector<8x512xf32>
    %351 = arith.truncf %350 : vector<8x512xf32> to vector<8x512xbf16>
    %cst_116 = arith.constant dense<0.000000e+00> : vector<8x256xf32>
    %352 = tpu.matmul %348, %346, %cst_116 {dimension_numbers = #tpu.dot_dimension_numbers<[1], [0], [0], [1], [0, 0, 1, 1], [], []>} : vector<8x512xbf16>, vector<512x256xbf16>, vector<8x256xf32> -> vector<8x256xf32>
    %cst_117 = arith.constant dense<0.000000e+00> : vector<8x256xf32>
    %353 = tpu.matmul %351, %346, %cst_117 {dimension_numbers = #tpu.dot_dimension_numbers<[1], [0], [0], [1], [0, 0, 1, 1], [], []>} : vector<8x512xbf16>, vector<512x256xbf16>, vector<8x256xf32> -> vector<8x256xf32>
    %354 = arith.addf %352, %353 : vector<8x256xf32>
    %cst_118 = arith.constant dense<0.000000e+00> : vector<8x256xf32>
    %355 = tpu.matmul %348, %347, %cst_118 {dimension_numbers = #tpu.dot_dimension_numbers<[1], [0], [0], [1], [0, 0, 1, 1], [], []>} : vector<8x512xbf16>, vector<512x256xbf16>, vector<8x256xf32> -> vector<8x256xf32>
    %356 = arith.addf %354, %355 : vector<8x256xf32>
    %c48 = arith.constant 48 : index
    %c0_119 = arith.constant 0 : index
    %357 = vector.load %arg1[%c48, %c0_119] : memref<80x512xf32, #tpu.memory_space<vmem>>, vector<1x256xf32>
    %358 = vector.broadcast %357 : vector<1x256xf32> to vector<8x256xf32>
    %359 = arith.addf %356, %358 : vector<8x256xf32>
    %c0_120 = arith.constant 0 : index
    %c0_121 = arith.constant 0 : index
    %360 = vector.load %arg5[%c0_120, %c0_121] : memref<8x256xf32, #tpu.memory_space<vmem>>, vector<8x256xf32>
    tpu.vector_store %arg5[%c0_120, %c0_121], %359 {strides = array<i32>} : memref<8x256xf32, #tpu.memory_space<vmem>>, vector<8x256xf32>,
    %c1_i32_122 = arith.constant 1 : i32
    %361 = tpu.memref_slice %arg10[%c1_i32_122] : memref<2x!tpu.dma_semaphore, #tpu.memory_space<semaphore_mem>> -> memref<1x!tpu.dma_semaphore, #tpu.memory_space<semaphore_mem>>
    %362 = tpu.memref_squeeze %361 : memref<1x!tpu.dma_semaphore, #tpu.memory_space<semaphore_mem>> -> memref<!tpu.dma_semaphore, #tpu.memory_space<semaphore_mem>>
    tpu.wait_dma2 semaphore(%362 : memref<!tpu.dma_semaphore, #tpu.memory_space<semaphore_mem>>) src(%arg4 : memref<1280x256xbf16, #tpu.memory_space<any>>) dst(%arg9 : memref<1280x256xbf16, #tpu.memory_space<vmem>>)
    %c0_123 = arith.constant 0 : index
    %c0_124 = arith.constant 0 : index
    %363 = vector.load %arg9[%c0_123, %c0_124] : memref<1280x256xbf16, #tpu.memory_space<vmem>>, vector<256x256xbf16>
    %c256_125 = arith.constant 256 : index
    %c0_126 = arith.constant 0 : index
    %364 = vector.load %arg9[%c256_125, %c0_126] : memref<1280x256xbf16, #tpu.memory_space<vmem>>, vector<256x256xbf16>
    %365 = arith.truncf %359 : vector<8x256xf32> to vector<8x256xbf16>
    %366 = arith.extf %365 : vector<8x256xbf16> to vector<8x256xf32>
    %367 = arith.subf %359, %366 : vector<8x256xf32>
    %368 = arith.truncf %367 : vector<8x256xf32> to vector<8x256xbf16>
    %cst_127 = arith.constant dense<0.000000e+00> : vector<8x256xf32>
    %369 = tpu.matmul %365, %363, %cst_127 {dimension_numbers = #tpu.dot_dimension_numbers<[1], [0], [0], [1], [0, 0, 1, 1], [], []>} : vector<8x256xbf16>, vector<256x256xbf16>, vector<8x256xf32> -> vector<8x256xf32>
    %cst_128 = arith.constant dense<0.000000e+00> : vector<8x256xf32>
    %370 = tpu.matmul %368, %363, %cst_128 {dimension_numbers = #tpu.dot_dimension_numbers<[1], [0], [0], [1], [0, 0, 1, 1], [], []>} : vector<8x256xbf16>, vector<256x256xbf16>, vector<8x256xf32> -> vector<8x256xf32>
    %371 = arith.addf %369, %370 : vector<8x256xf32>
    %cst_129 = arith.constant dense<0.000000e+00> : vector<8x256xf32>
    %372 = tpu.matmul %365, %364, %cst_129 {dimension_numbers = #tpu.dot_dimension_numbers<[1], [0], [0], [1], [0, 0, 1, 1], [], []>} : vector<8x256xbf16>, vector<256x256xbf16>, vector<8x256xf32> -> vector<8x256xf32>
    %373 = arith.addf %371, %372 : vector<8x256xf32>
    %c56 = arith.constant 56 : index
    %c0_130 = arith.constant 0 : index
    %374 = vector.load %arg1[%c56, %c0_130] : memref<80x512xf32, #tpu.memory_space<vmem>>, vector<1x256xf32>
    %375 = vector.broadcast %374 : vector<1x256xf32> to vector<8x256xf32>
    %376 = arith.addf %373, %375 : vector<8x256xf32>
    %c512_131 = arith.constant 512 : index
    %c0_132 = arith.constant 0 : index
    %377 = vector.load %arg2[%c512_131, %c0_132] : memref<1792x256xbf16, #tpu.memory_space<vmem>>, vector<256x256xbf16>
    %cst_133 = arith.constant 0.000000e+00 : f32
    %378 = vector.broadcast %cst_133 : f32 to vector<8x256xf32>
    %379 = arith.cmpf oge, %376, %378 : vector<8x256xf32>
    %cst_134 = arith.constant 0.00999999977 : f32
    %380 = vector.broadcast %cst_134 : f32 to vector<8x256xf32>
    %381 = arith.mulf %380, %376 : vector<8x256xf32>
    %382 = arith.select %379, %376, %381 : vector<8x256xi1>, vector<8x256xf32>
    %383 = vector.broadcast %8 : vector<8x1xf32> to vector<8x256xf32>
    %384 = arith.mulf %382, %383 : vector<8x256xf32>
    %cst_135 = arith.constant dense<0.000000e+00> : vector<256xf32>
    %385 = vector.multi_reduction <add>, %384, %cst_135 [0] : vector<8x256xf32> to vector<256xf32>
    %386 = vector.shape_cast %385 : vector<256xf32> to vector<1x256xf32>
    %387 = arith.mulf %384, %382 : vector<8x256xf32>
    %cst_136 = arith.constant dense<0.000000e+00> : vector<256xf32>
    %388 = vector.multi_reduction <add>, %387, %cst_136 [0] : vector<8x256xf32> to vector<256xf32>
    %389 = vector.shape_cast %388 : vector<256xf32> to vector<1x256xf32>
    %390 = vector.shape_cast %11 : vector<2x1xi1> to vector<2x1xi1>
    %391 = vector.broadcast %390 : vector<2x1xi1> to vector<2x256xi1>
    %392 = vector.shape_cast %386 : vector<1x256xf32> to vector<1x256xf32>
    %393 = vector.broadcast %392 : vector<1x256xf32> to vector<2x256xf32>
    %394 = vector.shape_cast %389 : vector<1x256xf32> to vector<1x256xf32>
    %395 = vector.broadcast %394 : vector<1x256xf32> to vector<2x256xf32>
    %396 = arith.select %391, %393, %395 : vector<2x256xi1>, vector<2x256xf32>
    %397 = arith.truncf %396 : vector<2x256xf32> to vector<2x256xbf16>
    %398 = arith.extf %397 : vector<2x256xbf16> to vector<2x256xf32>
    %399 = arith.subf %396, %398 : vector<2x256xf32>
    %400 = arith.truncf %399 : vector<2x256xf32> to vector<2x256xbf16>
    %cst_137 = arith.constant dense<0.000000e+00> : vector<2x256xf32>
    %401 = tpu.matmul %397, %377, %cst_137 {dimension_numbers = #tpu.dot_dimension_numbers<[1], [0], [0], [1], [0, 0, 1, 1], [], []>} : vector<2x256xbf16>, vector<256x256xbf16>, vector<2x256xf32> -> vector<2x256xf32>
    %cst_138 = arith.constant dense<0.000000e+00> : vector<2x256xf32>
    %402 = tpu.matmul %400, %377, %cst_138 {dimension_numbers = #tpu.dot_dimension_numbers<[1], [0], [0], [1], [0, 0, 1, 1], [], []>} : vector<2x256xbf16>, vector<256x256xbf16>, vector<2x256xf32> -> vector<2x256xf32>
    %403 = arith.addf %401, %402 : vector<2x256xf32>
    %cst_139 = arith.constant 0.0166666675 : f32
    %404 = vector.broadcast %cst_139 : f32 to vector<2x256xf32>
    %405 = arith.mulf %403, %404 : vector<2x256xf32>
    %cst_140 = arith.constant 0.000000e+00 : f32
    %406 = vector.shape_cast %11 : vector<2x1xi1> to vector<2x1xi1>
    %407 = vector.broadcast %406 : vector<2x1xi1> to vector<2x256xi1>
    %408 = vector.broadcast %cst_140 : f32 to vector<2x256xf32>
    %409 = arith.select %407, %405, %408 : vector<2x256xi1>, vector<2x256xf32>
    %cst_141 = arith.constant dense<0.000000e+00> : vector<256xf32>
    %410 = vector.multi_reduction <add>, %409, %cst_141 [0] : vector<2x256xf32> to vector<256xf32>
    %411 = vector.shape_cast %410 : vector<256xf32> to vector<1x256xf32>
    %cst_142 = arith.constant 0.000000e+00 : f32
    %412 = vector.shape_cast %11 : vector<2x1xi1> to vector<2x1xi1>
    %413 = vector.broadcast %412 : vector<2x1xi1> to vector<2x256xi1>
    %414 = vector.broadcast %cst_142 : f32 to vector<2x256xf32>
    %415 = arith.select %413, %414, %405 : vector<2x256xi1>, vector<2x256xf32>
    %cst_143 = arith.constant dense<0.000000e+00> : vector<256xf32>
    %416 = vector.multi_reduction <add>, %415, %cst_143 [0] : vector<2x256xf32> to vector<256xf32>
    %417 = vector.shape_cast %416 : vector<256xf32> to vector<1x256xf32>
    %418 = arith.mulf %411, %411 : vector<1x256xf32>
    %419 = arith.subf %417, %418 : vector<1x256xf32>
    %420 = vector.broadcast %411 : vector<1x256xf32> to vector<8x256xf32>
    %421 = arith.subf %382, %420 : vector<8x256xf32>
    %cst_144 = arith.constant 9.99999974E-6 : f32
    %422 = vector.broadcast %cst_144 : f32 to vector<1x256xf32>
    %423 = arith.addf %419, %422 : vector<1x256xf32>
    %424 = math.rsqrt %423 : vector<1x256xf32>
    %425 = vector.broadcast %424 : vector<1x256xf32> to vector<8x256xf32>
    %426 = arith.mulf %421, %425 : vector<8x256xf32>
    %c512_145 = arith.constant 512 : index
    %c0_146 = arith.constant 0 : index
    %427 = vector.load %arg9[%c512_145, %c0_146] : memref<1280x256xbf16, #tpu.memory_space<vmem>>, vector<256x128xbf16>
    %c768_147 = arith.constant 768 : index
    %c0_148 = arith.constant 0 : index
    %428 = vector.load %arg9[%c768_147, %c0_148] : memref<1280x256xbf16, #tpu.memory_space<vmem>>, vector<256x128xbf16>
    %429 = arith.truncf %426 : vector<8x256xf32> to vector<8x256xbf16>
    %430 = arith.extf %429 : vector<8x256xbf16> to vector<8x256xf32>
    %431 = arith.subf %426, %430 : vector<8x256xf32>
    %432 = arith.truncf %431 : vector<8x256xf32> to vector<8x256xbf16>
    %cst_149 = arith.constant dense<0.000000e+00> : vector<8x128xf32>
    %433 = tpu.matmul %429, %427, %cst_149 {dimension_numbers = #tpu.dot_dimension_numbers<[1], [0], [0], [1], [0, 0, 1, 1], [], []>} : vector<8x256xbf16>, vector<256x128xbf16>, vector<8x128xf32> -> vector<8x128xf32>
    %cst_150 = arith.constant dense<0.000000e+00> : vector<8x128xf32>
    %434 = tpu.matmul %432, %427, %cst_150 {dimension_numbers = #tpu.dot_dimension_numbers<[1], [0], [0], [1], [0, 0, 1, 1], [], []>} : vector<8x256xbf16>, vector<256x128xbf16>, vector<8x128xf32> -> vector<8x128xf32>
    %435 = arith.addf %433, %434 : vector<8x128xf32>
    %cst_151 = arith.constant dense<0.000000e+00> : vector<8x128xf32>
    %436 = tpu.matmul %429, %428, %cst_151 {dimension_numbers = #tpu.dot_dimension_numbers<[1], [0], [0], [1], [0, 0, 1, 1], [], []>} : vector<8x256xbf16>, vector<256x128xbf16>, vector<8x128xf32> -> vector<8x128xf32>
    %437 = arith.addf %435, %436 : vector<8x128xf32>
    %c64 = arith.constant 64 : index
    %c0_152 = arith.constant 0 : index
    %438 = vector.load %arg1[%c64, %c0_152] : memref<80x512xf32, #tpu.memory_space<vmem>>, vector<1x128xf32>
    %439 = vector.broadcast %438 : vector<1x128xf32> to vector<8x128xf32>
    %440 = arith.addf %437, %439 : vector<8x128xf32>
    %c1280_153 = arith.constant 1280 : index
    %c0_154 = arith.constant 0 : index
    %441 = vector.load %arg2[%c1280_153, %c0_154] : memref<1792x256xbf16, #tpu.memory_space<vmem>>, vector<128x128xbf16>
    %cst_155 = arith.constant 0.000000e+00 : f32
    %442 = vector.broadcast %cst_155 : f32 to vector<8x128xf32>
    %443 = arith.cmpf oge, %440, %442 : vector<8x128xf32>
    %cst_156 = arith.constant 0.00999999977 : f32
    %444 = vector.broadcast %cst_156 : f32 to vector<8x128xf32>
    %445 = arith.mulf %444, %440 : vector<8x128xf32>
    %446 = arith.select %443, %440, %445 : vector<8x128xi1>, vector<8x128xf32>
    %447 = vector.broadcast %8 : vector<8x1xf32> to vector<8x128xf32>
    %448 = arith.mulf %446, %447 : vector<8x128xf32>
    %cst_157 = arith.constant dense<0.000000e+00> : vector<128xf32>
    %449 = vector.multi_reduction <add>, %448, %cst_157 [0] : vector<8x128xf32> to vector<128xf32>
    %450 = vector.shape_cast %449 : vector<128xf32> to vector<1x128xf32>
    %451 = arith.mulf %448, %446 : vector<8x128xf32>
    %cst_158 = arith.constant dense<0.000000e+00> : vector<128xf32>
    %452 = vector.multi_reduction <add>, %451, %cst_158 [0] : vector<8x128xf32> to vector<128xf32>
    %453 = vector.shape_cast %452 : vector<128xf32> to vector<1x128xf32>
    %454 = vector.shape_cast %11 : vector<2x1xi1> to vector<2x1xi1>
    %455 = vector.broadcast %454 : vector<2x1xi1> to vector<2x128xi1>
    %456 = vector.shape_cast %450 : vector<1x128xf32> to vector<1x128xf32>
    %457 = vector.broadcast %456 : vector<1x128xf32> to vector<2x128xf32>
    %458 = vector.shape_cast %453 : vector<1x128xf32> to vector<1x128xf32>
    %459 = vector.broadcast %458 : vector<1x128xf32> to vector<2x128xf32>
    %460 = arith.select %455, %457, %459 : vector<2x128xi1>, vector<2x128xf32>
    %461 = arith.truncf %460 : vector<2x128xf32> to vector<2x128xbf16>
    %462 = arith.extf %461 : vector<2x128xbf16> to vector<2x128xf32>
    %463 = arith.subf %460, %462 : vector<2x128xf32>
    %464 = arith.truncf %463 : vector<2x128xf32> to vector<2x128xbf16>
    %cst_159 = arith.constant dense<0.000000e+00> : vector<2x128xf32>
    %465 = tpu.matmul %461, %441, %cst_159 {dimension_numbers = #tpu.dot_dimension_numbers<[1], [0], [0], [1], [0, 0, 1, 1], [], []>} : vector<2x128xbf16>, vector<128x128xbf16>, vector<2x128xf32> -> vector<2x128xf32>
    %cst_160 = arith.constant dense<0.000000e+00> : vector<2x128xf32>
    %466 = tpu.matmul %464, %441, %cst_160 {dimension_numbers = #tpu.dot_dimension_numbers<[1], [0], [0], [1], [0, 0, 1, 1], [], []>} : vector<2x128xbf16>, vector<128x128xbf16>, vector<2x128xf32> -> vector<2x128xf32>
    %467 = arith.addf %465, %466 : vector<2x128xf32>
    %cst_161 = arith.constant 6.250000e-02 : f32
    %468 = vector.broadcast %cst_161 : f32 to vector<2x128xf32>
    %469 = arith.mulf %467, %468 : vector<2x128xf32>
    %cst_162 = arith.constant 0.000000e+00 : f32
    %470 = vector.shape_cast %11 : vector<2x1xi1> to vector<2x1xi1>
    %471 = vector.broadcast %470 : vector<2x1xi1> to vector<2x128xi1>
    %472 = vector.broadcast %cst_162 : f32 to vector<2x128xf32>
    %473 = arith.select %471, %469, %472 : vector<2x128xi1>, vector<2x128xf32>
    %cst_163 = arith.constant dense<0.000000e+00> : vector<128xf32>
    %474 = vector.multi_reduction <add>, %473, %cst_163 [0] : vector<2x128xf32> to vector<128xf32>
    %475 = vector.shape_cast %474 : vector<128xf32> to vector<1x128xf32>
    %cst_164 = arith.constant 0.000000e+00 : f32
    %476 = vector.shape_cast %11 : vector<2x1xi1> to vector<2x1xi1>
    %477 = vector.broadcast %476 : vector<2x1xi1> to vector<2x128xi1>
    %478 = vector.broadcast %cst_164 : f32 to vector<2x128xf32>
    %479 = arith.select %477, %478, %469 : vector<2x128xi1>, vector<2x128xf32>
    %cst_165 = arith.constant dense<0.000000e+00> : vector<128xf32>
    %480 = vector.multi_reduction <add>, %479, %cst_165 [0] : vector<2x128xf32> to vector<128xf32>
    %481 = vector.shape_cast %480 : vector<128xf32> to vector<1x128xf32>
    %482 = arith.mulf %475, %475 : vector<1x128xf32>
    %483 = arith.subf %481, %482 : vector<1x128xf32>
    %484 = vector.broadcast %475 : vector<1x128xf32> to vector<8x128xf32>
    %485 = arith.subf %446, %484 : vector<8x128xf32>
    %cst_166 = arith.constant 9.99999974E-6 : f32
    %486 = vector.broadcast %cst_166 : f32 to vector<1x128xf32>
    %487 = arith.addf %483, %486 : vector<1x128xf32>
    %488 = math.rsqrt %487 : vector<1x128xf32>
    %489 = vector.broadcast %488 : vector<1x128xf32> to vector<8x128xf32>
    %490 = arith.mulf %485, %489 : vector<8x128xf32>
    %c1024_167 = arith.constant 1024 : index
    %c0_168 = arith.constant 0 : index
    %491 = vector.load %arg9[%c1024_167, %c0_168] : memref<1280x256xbf16, #tpu.memory_space<vmem>>, vector<128x128xbf16>
    %c1152 = arith.constant 1152 : index
    %c0_169 = arith.constant 0 : index
    %492 = vector.load %arg9[%c1152, %c0_169] : memref<1280x256xbf16, #tpu.memory_space<vmem>>, vector<128x128xbf16>
    %493 = arith.truncf %490 : vector<8x128xf32> to vector<8x128xbf16>
    %494 = arith.extf %493 : vector<8x128xbf16> to vector<8x128xf32>
    %495 = arith.subf %490, %494 : vector<8x128xf32>
    %496 = arith.truncf %495 : vector<8x128xf32> to vector<8x128xbf16>
    %cst_170 = arith.constant dense<0.000000e+00> : vector<8x128xf32>
    %497 = tpu.matmul %493, %491, %cst_170 {dimension_numbers = #tpu.dot_dimension_numbers<[1], [0], [0], [1], [0, 0, 1, 1], [], []>} : vector<8x128xbf16>, vector<128x128xbf16>, vector<8x128xf32> -> vector<8x128xf32>
    %cst_171 = arith.constant dense<0.000000e+00> : vector<8x128xf32>
    %498 = tpu.matmul %496, %491, %cst_171 {dimension_numbers = #tpu.dot_dimension_numbers<[1], [0], [0], [1], [0, 0, 1, 1], [], []>} : vector<8x128xbf16>, vector<128x128xbf16>, vector<8x128xf32> -> vector<8x128xf32>
    %499 = arith.addf %497, %498 : vector<8x128xf32>
    %cst_172 = arith.constant dense<0.000000e+00> : vector<8x128xf32>
    %500 = tpu.matmul %493, %492, %cst_172 {dimension_numbers = #tpu.dot_dimension_numbers<[1], [0], [0], [1], [0, 0, 1, 1], [], []>} : vector<8x128xbf16>, vector<128x128xbf16>, vector<8x128xf32> -> vector<8x128xf32>
    %501 = arith.addf %499, %500 : vector<8x128xf32>
    %c72 = arith.constant 72 : index
    %c0_173 = arith.constant 0 : index
    %502 = vector.load %arg1[%c72, %c0_173] : memref<80x512xf32, #tpu.memory_space<vmem>>, vector<1x128xf32>
    %503 = vector.broadcast %502 : vector<1x128xf32> to vector<8x128xf32>
    %504 = arith.addf %501, %503 : vector<8x128xf32>
    %c1664_174 = arith.constant 1664 : index
    %c0_175 = arith.constant 0 : index
    %505 = vector.load %arg2[%c1664_174, %c0_175] : memref<1792x256xbf16, #tpu.memory_space<vmem>>, vector<128x128xbf16>
    %cst_176 = arith.constant 0.000000e+00 : f32
    %506 = vector.broadcast %cst_176 : f32 to vector<8x128xf32>
    %507 = arith.cmpf oge, %504, %506 : vector<8x128xf32>
    %cst_177 = arith.constant 0.00999999977 : f32
    %508 = vector.broadcast %cst_177 : f32 to vector<8x128xf32>
    %509 = arith.mulf %508, %504 : vector<8x128xf32>
    %510 = arith.select %507, %504, %509 : vector<8x128xi1>, vector<8x128xf32>
    %511 = vector.broadcast %8 : vector<8x1xf32> to vector<8x128xf32>
    %512 = arith.mulf %510, %511 : vector<8x128xf32>
    %cst_178 = arith.constant dense<0.000000e+00> : vector<128xf32>
    %513 = vector.multi_reduction <add>, %512, %cst_178 [0] : vector<8x128xf32> to vector<128xf32>
    %514 = vector.shape_cast %513 : vector<128xf32> to vector<1x128xf32>
    %515 = arith.mulf %512, %510 : vector<8x128xf32>
    %cst_179 = arith.constant dense<0.000000e+00> : vector<128xf32>
    %516 = vector.multi_reduction <add>, %515, %cst_179 [0] : vector<8x128xf32> to vector<128xf32>
    %517 = vector.shape_cast %516 : vector<128xf32> to vector<1x128xf32>
    %518 = vector.shape_cast %11 : vector<2x1xi1> to vector<2x1xi1>
    %519 = vector.broadcast %518 : vector<2x1xi1> to vector<2x128xi1>
    %520 = vector.shape_cast %514 : vector<1x128xf32> to vector<1x128xf32>
    %521 = vector.broadcast %520 : vector<1x128xf32> to vector<2x128xf32>
    %522 = vector.shape_cast %517 : vector<1x128xf32> to vector<1x128xf32>
    %523 = vector.broadcast %522 : vector<1x128xf32> to vector<2x128xf32>
    %524 = arith.select %519, %521, %523 : vector<2x128xi1>, vector<2x128xf32>
    %525 = arith.truncf %524 : vector<2x128xf32> to vector<2x128xbf16>
    %526 = arith.extf %525 : vector<2x128xbf16> to vector<2x128xf32>
    %527 = arith.subf %524, %526 : vector<2x128xf32>
    %528 = arith.truncf %527 : vector<2x128xf32> to vector<2x128xbf16>
    %cst_180 = arith.constant dense<0.000000e+00> : vector<2x128xf32>
    %529 = tpu.matmul %525, %505, %cst_180 {dimension_numbers = #tpu.dot_dimension_numbers<[1], [0], [0], [1], [0, 0, 1, 1], [], []>} : vector<2x128xbf16>, vector<128x128xbf16>, vector<2x128xf32> -> vector<2x128xf32>
    %cst_181 = arith.constant dense<0.000000e+00> : vector<2x128xf32>
    %530 = tpu.matmul %528, %505, %cst_181 {dimension_numbers = #tpu.dot_dimension_numbers<[1], [0], [0], [1], [0, 0, 1, 1], [], []>} : vector<2x128xbf16>, vector<128x128xbf16>, vector<2x128xf32> -> vector<2x128xf32>
    %531 = arith.addf %529, %530 : vector<2x128xf32>
    %cst_182 = arith.constant 2.500000e-01 : f32
    %532 = vector.broadcast %cst_182 : f32 to vector<2x128xf32>
    %533 = arith.mulf %531, %532 : vector<2x128xf32>
    %cst_183 = arith.constant 0.000000e+00 : f32
    %534 = vector.shape_cast %11 : vector<2x1xi1> to vector<2x1xi1>
    %535 = vector.broadcast %534 : vector<2x1xi1> to vector<2x128xi1>
    %536 = vector.broadcast %cst_183 : f32 to vector<2x128xf32>
    %537 = arith.select %535, %533, %536 : vector<2x128xi1>, vector<2x128xf32>
    %cst_184 = arith.constant dense<0.000000e+00> : vector<128xf32>
    %538 = vector.multi_reduction <add>, %537, %cst_184 [0] : vector<2x128xf32> to vector<128xf32>
    %539 = vector.shape_cast %538 : vector<128xf32> to vector<1x128xf32>
    %cst_185 = arith.constant 0.000000e+00 : f32
    %540 = vector.shape_cast %11 : vector<2x1xi1> to vector<2x1xi1>
    %541 = vector.broadcast %540 : vector<2x1xi1> to vector<2x128xi1>
    %542 = vector.broadcast %cst_185 : f32 to vector<2x128xf32>
    %543 = arith.select %541, %542, %533 : vector<2x128xi1>, vector<2x128xf32>
    %cst_186 = arith.constant dense<0.000000e+00> : vector<128xf32>
    %544 = vector.multi_reduction <add>, %543, %cst_186 [0] : vector<2x128xf32> to vector<128xf32>
    %545 = vector.shape_cast %544 : vector<128xf32> to vector<1x128xf32>
    %546 = arith.mulf %539, %539 : vector<1x128xf32>
    %547 = arith.subf %545, %546 : vector<1x128xf32>
    %548 = vector.broadcast %539 : vector<1x128xf32> to vector<8x128xf32>
    %549 = arith.subf %510, %548 : vector<8x128xf32>
    %cst_187 = arith.constant 9.99999974E-6 : f32
    %550 = vector.broadcast %cst_187 : f32 to vector<1x128xf32>
    %551 = arith.addf %547, %550 : vector<1x128xf32>
    %552 = math.rsqrt %551 : vector<1x128xf32>
    %553 = vector.broadcast %552 : vector<1x128xf32> to vector<8x128xf32>
    %554 = arith.mulf %549, %553 : vector<8x128xf32>
    %c0_188 = arith.constant 0 : index
    %c0_189 = arith.constant 0 : index
    %555 = vector.load %arg7[%c0_188, %c0_189] : memref<8x128xf32, #tpu.memory_space<vmem>>, vector<8x128xf32>
    tpu.vector_store %arg7[%c0_188, %c0_189], %554 {strides = array<i32>} : memref<8x128xf32, #tpu.memory_space<vmem>>, vector<8x128xf32>,
    return
  }
}

</mosaic_0001>

<llo_original>
// kernel: _lambda_.1
$region0: #{_lambda_.1}
  #allocation0 [shape = 'u32[]', space=smem, size = 0x4, offset = 0x4, fixed_abs, tag = 'smem constant byte address 0x4 - core index']
  #allocation1 [shape = 'u32[72,128]{1,0:T(1,128)}', space=vmem, size = 0x9000, scoped, tag = 'internal scratch']
  #allocation2 [shape = 'bf16[2048,512]{1,0:T(8,128)(2,1)}', space=vmem, size = 0x200000, scoped, tag = 'scratch operand']
  #allocation3 [shape = 'bf16[1280,256]{1,0:T(8,128)(2,1)}', space=vmem, size = 0xa0000, scoped, tag = 'scratch operand']
  #allocation4 [shape = 's32[2]{0}', space=sflag, size = 0x8, scoped, tag = 'scratch operand']
  #allocation9 [shape = 's32[]', space=sflag, size = 0x4, offset = 0, fixed_abs, tag = 'sflag constant byte address 0x0 - dummy sync flag']
  #allocation10 [shape = 's32[]', space=sflag, size = 0x4, offset = 0, fixed_abs, tag = 'sflag constant byte address 0x0 - dummy sync flag']
  #allocation11 [shape = 'u32[]', space=smem, size = 0x4, offset = 0x44, fixed_abs, tag = 'smem constant byte address 0x44 - assertion arg 0']
  #allocation12 [shape = 'u32[]', space=smem, size = 0x4, offset = 0x48, fixed_abs, tag = 'smem constant byte address 0x48 - assertion arg 1']
  #allocation13 [shape = 's32[]', space=sflag, size = 0x4, offset = 0, fixed_abs, tag = 'sflag constant byte address 0x0 - dummy sync flag']
  #allocation14 [shape = 's32[]', space=sflag, size = 0x4, offset = 0, fixed_abs, tag = 'sflag constant byte address 0x0 - dummy sync flag']
  %s0 = inlined_call_operand.vmem [shape: f32[8,256], index: 0, kind: input, shape index: {}]
  %s1 = inlined_call_operand.hbm [shape: f32[80,512], index: 1, kind: input, shape index: {}]
  %s2 = inlined_call_operand.hbm [shape: bf16[1792,256], index: 2, kind: input, shape index: {}]
  %s3 = inlined_call_operand.hbm [shape: bf16[2048,512], index: 3, kind: input, shape index: {}]
  %s4 = inlined_call_operand.hbm [shape: bf16[1280,256], index: 4, kind: input, shape index: {}]
  %s5 = inlined_call_operand.vmem [shape: f32[8,256], index: 5, kind: output, shape index: {0}]
  %s6 = inlined_call_operand.vmem [shape: f32[8,128], index: 6, kind: output, shape index: {1}]
  %s7 = inlined_call_operand.vmem [shape: f32[8,128], index: 7, kind: output, shape index: {2}]
  %8 = xla_tuple %s5, %s6, %s7
  %s9 = sld [smem:[#allocation0]]
  $region54: #{_lambda_.1} parent=0
    _
  %s11 = ssub.s32 1, %s9
  %s12 = scalar_select 0, %s11, %s9
  $region1: #{_lambda_.1} parent=0
    #allocation5 [shape = 'u8[163840]{0}', space=vmem, size = 0x28000, scoped, tag = 'input window, operand 1, single buffered']
    #allocation6 [shape = 's32[1]{0}', space=sflag, size = 0x4, scoped, tag = 'scoped memory for _lambda_.1']
    #allocation7 [shape = 'u8[917504]{0}', space=vmem, size = 0xe0000, scoped, tag = 'input window, operand 2, single buffered']
    #allocation8 [shape = 's32[1]{0}', space=sflag, size = 0x4, scoped, tag = 'scoped memory for _lambda_.1']
    %13 = vsyncpa [#allocation6], 0
    %14 = vsyncpa [#allocation8], 0
    // Predicated region
    $region2: #{_lambda_.1} parent=1 // pred_check
      _
    $region3: #{_lambda_.1} parent=1 // pred_check_branch
      %16 = sbr.rel (0) target = $region5
    $region4: #{_lambda_.1} parent=1 // pred_region
      _
    $region5: #{_lambda_.1} parent=1 // pred_fallthru
      _
    // Predicated region
    $region6: #{_lambda_.1} parent=1 // pred_check
      _
    $region7: #{_lambda_.1} parent=1 // pred_check_branch
      %18 = sbr.rel (0) target = $region9
    $region8: #{_lambda_.1} parent=1 // pred_region
      %20 = vsyncadd [#allocation6], 0
      %s21 = sshll.u32 %s1, 4
      %s22 = int_to_ptr.hbm [resolvable:$true] %s21
      %s23 = sshll.u32 [#allocation5], 4
      %s24 = int_to_ptr.vmem [resolvable:$true] %s23
      %29 = dma.hbm_to_vmem [thread:$0]  %s22, 5120, %s24, [#allocation6], 512, 512, 32
    $region9: #{_lambda_.1} parent=1 // pred_fallthru
      _
    // Predicated region
    $region10: #{_lambda_.1} parent=1 // pred_check
      _
    $region11: #{_lambda_.1} parent=1 // pred_check_branch
      %31 = sbr.rel (0) target = $region13
    $region12: #{_lambda_.1} parent=1 // pred_region
      %33 = vsyncadd [#allocation8], 0
      %s34 = sshll.u32 %s2, 4
      %s35 = int_to_ptr.hbm [resolvable:$true] %s34
      %s36 = sshll.u32 [#allocation7], 4
      %s37 = int_to_ptr.vmem [resolvable:$true] %s36
      %42 = dma.hbm_to_vmem [thread:$0]  %s35, 28672, %s37, [#allocation8], 128, 128, 8
    $region13: #{_lambda_.1} parent=1 // pred_fallthru
      _
    // Predicated region
    $region14: #{_lambda_.1} parent=1 // pred_check
      _
    $region15: #{_lambda_.1} parent=1 // pred_check_branch
      %44 = sbr.rel (0) target = $region17
    $region16: #{_lambda_.1} parent=1 // pred_region
      %46 = dma.done [#allocation6], 5120
    $region17: #{_lambda_.1} parent=1 // pred_fallthru
      _
    // Predicated region
    $region18: #{_lambda_.1} parent=1 // pred_check
      _
    $region19: #{_lambda_.1} parent=1 // pred_check_branch
      %48 = sbr.rel (0) target = $region21
    $region20: #{_lambda_.1} parent=1 // pred_region
      %50 = dma.done [#allocation8], 28672
    $region21: #{_lambda_.1} parent=1 // pred_fallthru
      _
    // Predicated region
    $region22: #{_lambda_.1} parent=1 // pred_check
      _
    $region23: #{_lambda_.1} parent=1 // pred_check_branch
      %52 = sbr.rel target = $region25
    $region24: #{_lambda_.1} parent=1 // pred_region
      %53 = sst [smem:[#allocation11]] [#allocation10]
      %54 = sst [smem:[#allocation12]] [#allocation9]
    $region25: #{_lambda_.1} parent=1 // pred_fallthru
      _
    %56 = shalt.err (0)
    %s58 = sshll.u32 %s3, 4
    %s59 = int_to_ptr.hbm [resolvable:$true] %s58
    %s60 = sshll.u32 [#allocation2], 4
    %s61 = int_to_ptr.vmem [resolvable:$true] %s60
    %63 = dma.hbm_to_vmem [thread:$0]  %s59, 65536, %s61, [#allocation4]
    %s64 = scalar_lea.sflag [#allocation4], 1
    // Predicated region
    $region26: #{_lambda_.1} parent=1 // pred_check
      _
    $region27: #{_lambda_.1} parent=1 // pred_check_branch
      %66 = sbr.rel target = $region29
    $region28: #{_lambda_.1} parent=1 // pred_region
      %67 = sst [smem:[#allocation11]] [#allocation14]
      %68 = sst [smem:[#allocation12]] [#allocation13]
    $region29: #{_lambda_.1} parent=1 // pred_fallthru
      _
    %70 = shalt.err (0)
    %s72 = sshll.u32 %s4, 4
    %s73 = int_to_ptr.hbm [resolvable:$true] %s72
    %s74 = sshll.u32 [#allocation3], 4
    %s75 = int_to_ptr.vmem [resolvable:$true] %s74
    %77 = dma.hbm_to_vmem [thread:$0]  %s73, 20480, %s75, %s64
    %v78 = vlaneseq
    %v79 = vshrl.u32 %v78, 7
    %vm80 = vcmp.lt.s32.totalorder %v79, 2
    %v81 = vsel %vm80, 1, 0
    %v82 = vcvt.s32.f32 %v81
    %vm83 = vcmp.eq.s32.totalorder %v79, 0
    %v84 = vld [vmem:[%s0] sm:$0xff]
    %v85 = vld [vmem:[%s0 + $0x8] sm:$0xff]
    %v86 = vld [vmem:[#allocation7] sm:$0xff]
    %v87 = vld [vmem:[#allocation7 + $0x8] sm:$0xff]
    %v88 = vld [vmem:[#allocation7 + $0x10] sm:$0xff]
    %v89 = vld [vmem:[#allocation7 + $0x18] sm:$0xff]
    %v90 = vld [vmem:[#allocation7 + $0x20] sm:$0xff]
    %v91 = vld [vmem:[#allocation7 + $0x28] sm:$0xff]
    %v92 = vld [vmem:[#allocation7 + $0x30] sm:$0xff]
    %v93 = vld [vmem:[#allocation7 + $0x38] sm:$0xff]
    %v94 = vld [vmem:[#allocation7 + $0x40] sm:$0xff]
    %v95 = vld [vmem:[#allocation7 + $0x48] sm:$0xff]
    %v96 = vld [vmem:[#allocation7 + $0x50] sm:$0xff]
    %v97 = vld [vmem:[#allocation7 + $0x58] sm:$0xff]
    %v98 = vld [vmem:[#allocation7 + $0x60] sm:$0xff]
    %v99 = vld [vmem:[#allocation7 + $0x68] sm:$0xff]
    %v100 = vld [vmem:[#allocation7 + $0x70] sm:$0xff]
    %v101 = vld [vmem:[#allocation7 + $0x78] sm:$0xff]
    %v102 = vld [vmem:[#allocation7 + $0x80] sm:$0xff]
    %v103 = vld [vmem:[#allocation7 + $0x88] sm:$0xff]
    %v104 = vld [vmem:[#allocation7 + $0x90] sm:$0xff]
    %v105 = vld [vmem:[#allocation7 + $0x98] sm:$0xff]
    %v106 = vld [vmem:[#allocation7 + $0xa0] sm:$0xff]
    %v107 = vld [vmem:[#allocation7 + $0xa8] sm:$0xff]
    %v108 = vld [vmem:[#allocation7 + $0xb0] sm:$0xff]
    %v109 = vld [vmem:[#allocation7 + $0xb8] sm:$0xff]
    %v110 = vld [vmem:[#allocation7 + $0xc0] sm:$0xff]
    %v111 = vld [vmem:[#allocation7 + $0xc8] sm:$0xff]
    %v112 = vld [vmem:[#allocation7 + $0xd0] sm:$0xff]
    %v113 = vld [vmem:[#allocation7 + $0xd8] sm:$0xff]
    %v114 = vld [vmem:[#allocation7 + $0xe0] sm:$0xff]
    %v115 = vld [vmem:[#allocation7 + $0xe8] sm:$0xff]
    %v116 = vld [vmem:[#allocation7 + $0xf0] sm:$0xff]
    %v117 = vld [vmem:[#allocation7 + $0xf8] sm:$0xff]
    %v118 = vld [vmem:[#allocation7 + $0x100] sm:$0xff]
    %v119 = vld [vmem:[#allocation7 + $0x108] sm:$0xff]
    %v120 = vld [vmem:[#allocation7 + $0x110] sm:$0xff]
    %v121 = vld [vmem:[#allocation7 + $0x118] sm:$0xff]
    %v122 = vld [vmem:[#allocation7 + $0x120] sm:$0xff]
    %v123 = vld [vmem:[#allocation7 + $0x128] sm:$0xff]
    %v124 = vld [vmem:[#allocation7 + $0x130] sm:$0xff]
    %v125 = vld [vmem:[#allocation7 + $0x138] sm:$0xff]
    %v126 = vld [vmem:[#allocation7 + $0x140] sm:$0xff]
    %v127 = vld [vmem:[#allocation7 + $0x148] sm:$0xff]
    %v128 = vld [vmem:[#allocation7 + $0x150] sm:$0xff]
    %v129 = vld [vmem:[#allocation7 + $0x158] sm:$0xff]
    %v130 = vld [vmem:[#allocation7 + $0x160] sm:$0xff]
    %v131 = vld [vmem:[#allocation7 + $0x168] sm:$0xff]
    %v132 = vld [vmem:[#allocation7 + $0x170] sm:$0xff]
    %v133 = vld [vmem:[#allocation7 + $0x178] sm:$0xff]
    %v134 = vld [vmem:[#allocation7 + $0x180] sm:$0xff]
    %v135 = vld [vmem:[#allocation7 + $0x188] sm:$0xff]
    %v136 = vld [vmem:[#allocation7 + $0x190] sm:$0xff]
    %v137 = vld [vmem:[#allocation7 + $0x198] sm:$0xff]
    %v138 = vld [vmem:[#allocation7 + $0x1a0] sm:$0xff]
    %v139 = vld [vmem:[#allocation7 + $0x1a8] sm:$0xff]
    %v140 = vld [vmem:[#allocation7 + $0x1b0] sm:$0xff]
    %v141 = vld [vmem:[#allocation7 + $0x1b8] sm:$0xff]
    %v142 = vld [vmem:[#allocation7 + $0x1c0] sm:$0xff]
    %v143 = vld [vmem:[#allocation7 + $0x1c8] sm:$0xff]
    %v144 = vld [vmem:[#allocation7 + $0x1d0] sm:$0xff]
    %v145 = vld [vmem:[#allocation7 + $0x1d8] sm:$0xff]
    %v146 = vld [vmem:[#allocation7 + $0x1e0] sm:$0xff]
    %v147 = vld [vmem:[#allocation7 + $0x1e8] sm:$0xff]
    %v148 = vld [vmem:[#allocation7 + $0x1f0] sm:$0xff]
    %v149 = vld [vmem:[#allocation7 + $0x1f8] sm:$0xff]
    %v150 = vpack.c.bf16 %v85, %v84
    %v151 = vunpack.c.l.bf16 %v150
    %v152 = vunpack.c.h.bf16 %v150
    %v153 = vsub.f32 %v84, %v151
    %v154 = vsub.f32 %v85, %v152
    %v155 = vpack.c.bf16 %v153, %v153
    %v156 = vpack.c.bf16 %v154, %v154
    %v189 = vunpack.c.l.b16 %v86
    %v190 = vunpack.c.h.b16 %v86
    %v191 = vunpack.c.l.b16 %v87
    %v192 = vunpack.c.h.b16 %v87
    %v193 = vunpack.c.l.b16 %v88
    %v194 = vunpack.c.h.b16 %v88
    %v195 = vunpack.c.l.b16 %v89
    %v196 = vunpack.c.h.b16 %v89
    %v197 = vunpack.c.l.b16 %v90
    %v198 = vunpack.c.h.b16 %v90
    %v199 = vunpack.c.l.b16 %v91
    %v200 = vunpack.c.h.b16 %v91
    %v201 = vunpack.c.l.b16 %v92
    %v202 = vunpack.c.h.b16 %v92
    %v203 = vunpack.c.l.b16 %v93
    %v204 = vunpack.c.h.b16 %v93
    %v205 = vunpack.c.l.b16 %v94
    %v206 = vunpack.c.h.b16 %v94
    %v207 = vunpack.c.l.b16 %v95
    %v208 = vunpack.c.h.b16 %v95
    %v209 = vunpack.c.l.b16 %v96
    %v210 = vunpack.c.h.b16 %v96
    %v211 = vunpack.c.l.b16 %v97
    %v212 = vunpack.c.h.b16 %v97
    %v213 = vunpack.c.l.b16 %v98
    %v214 = vunpack.c.h.b16 %v98
    %v215 = vunpack.c.l.b16 %v99
    %v216 = vunpack.c.h.b16 %v99
    %v217 = vunpack.c.l.b16 %v100
    %v218 = vunpack.c.h.b16 %v100
    %v219 = vunpack.c.l.b16 %v101
    %v220 = vunpack.c.h.b16 %v101
    %v221 = vunpack.c.l.b16 %v102
    %v222 = vunpack.c.h.b16 %v102
    %v223 = vunpack.c.l.b16 %v103
    %v224 = vunpack.c.h.b16 %v103
    %v225 = vunpack.c.l.b16 %v104
    %v226 = vunpack.c.h.b16 %v104
    %v227 = vunpack.c.l.b16 %v105
    %v228 = vunpack.c.h.b16 %v105
    %v229 = vunpack.c.l.b16 %v106
    %v230 = vunpack.c.h.b16 %v106
    %v231 = vunpack.c.l.b16 %v107
    %v232 = vunpack.c.h.b16 %v107
    %v233 = vunpack.c.l.b16 %v108
    %v234 = vunpack.c.h.b16 %v108
    %v235 = vunpack.c.l.b16 %v109
    %v236 = vunpack.c.h.b16 %v109
    %v237 = vunpack.c.l.b16 %v110
    %v238 = vunpack.c.h.b16 %v110
    %v239 = vunpack.c.l.b16 %v111
    %v240 = vunpack.c.h.b16 %v111
    %v241 = vunpack.c.l.b16 %v112
    %v242 = vunpack.c.h.b16 %v112
    %v243 = vunpack.c.l.b16 %v113
    %v244 = vunpack.c.h.b16 %v113
    %v245 = vunpack.c.l.b16 %v114
    %v246 = vunpack.c.h.b16 %v114
    %v247 = vunpack.c.l.b16 %v115
    %v248 = vunpack.c.h.b16 %v115
    %v249 = vunpack.c.l.b16 %v116
    %v250 = vunpack.c.h.b16 %v116
    %v251 = vunpack.c.l.b16 %v117
    %v252 = vunpack.c.h.b16 %v117
    %v253 = vpack.c.b16 %v191, %v189
    %v254 = vpack.c.b16 %v192, %v190
    %v255 = vpack.c.b16 %v195, %v193
    %v256 = vpack.c.b16 %v196, %v194
    %v257 = vpack.c.b16 %v199, %v197
    %v258 = vpack.c.b16 %v200, %v198
    %v259 = vpack.c.b16 %v203, %v201
    %v260 = vpack.c.b16 %v204, %v202
    %v261 = vpack.c.b16 %v207, %v205
    %v262 = vpack.c.b16 %v208, %v206
    %v263 = vpack.c.b16 %v211, %v209
    %v264 = vpack.c.b16 %v212, %v210
    %v265 = vpack.c.b16 %v215, %v213
    %v266 = vpack.c.b16 %v216, %v214
    %v267 = vpack.c.b16 %v219, %v217
    %v268 = vpack.c.b16 %v220, %v218
    %v269 = vpack.c.b16 %v223, %v221
    %v270 = vpack.c.b16 %v224, %v222
    %v271 = vpack.c.b16 %v227, %v225
    %v272 = vpack.c.b16 %v228, %v226
    %v273 = vpack.c.b16 %v231, %v229
    %v274 = vpack.c.b16 %v232, %v230
    %v275 = vpack.c.b16 %v235, %v233
    %v276 = vpack.c.b16 %v236, %v234
    %v277 = vpack.c.b16 %v239, %v237
    %v278 = vpack.c.b16 %v240, %v238
    %v279 = vpack.c.b16 %v243, %v241
    %v280 = vpack.c.b16 %v244, %v242
    %v281 = vpack.c.b16 %v247, %v245
    %v282 = vpack.c.b16 %v248, %v246
    %v283 = vpack.c.b16 %v251, %v249
    %v284 = vpack.c.b16 %v252, %v250
    %317 = vmatpush.bf16.msra.mxu0 %v267
    %318 = vmatpush.bf16.msra.mxu0 %v265
    %319 = vmatpush.bf16.msra.mxu0 %v263
    %320 = vmatpush.bf16.msra.mxu0 %v261
    %321 = vmatpush.bf16.msra.mxu0 %v259
    %322 = vmatpush.bf16.msra.mxu0 %v257
    %323 = vmatpush.bf16.msra.mxu0 %v255
    %324 = vmatpush.bf16.msra.mxu0 %v253
    %325 = vmatmul.bf16.gmra.mxu0 %v155
    %v326 = vpop.f32.mrf.mxu0
    %v327 = vadd.f32 0.0, %v326
    %v328 = vpop.f32.mrf.mxu0
    %329 = vdwg.mxu0
    %330 = vmatpush.bf16.msra.mxu0 %v283
    %331 = vmatpush.bf16.msra.mxu0 %v281
    %332 = vmatpush.bf16.msra.mxu0 %v279
    %333 = vmatpush.bf16.msra.mxu0 %v277
    %334 = vmatpush.bf16.msra.mxu0 %v275
    %335 = vmatpush.bf16.msra.mxu0 %v273
    %336 = vmatpush.bf16.msra.mxu0 %v271
    %337 = vmatpush.bf16.msra.mxu0 %v269
    %338 = vmatmul.bf16.gmra.mxu0 %v156
    %v339 = vpop.f32.mrf.mxu0
    %v340 = vadd.f32 %v327, %v339
    %v341 = vpop.f32.mrf.mxu0
    %342 = vdwg.mxu0
    %343 = vmatpush.bf16.msra.mxu0 %v268
    %344 = vmatpush.bf16.msra.mxu0 %v266
    %345 = vmatpush.bf16.msra.mxu0 %v264
    %346 = vmatpush.bf16.msra.mxu0 %v262
    %347 = vmatpush.bf16.msra.mxu0 %v260
    %348 = vmatpush.bf16.msra.mxu0 %v258
    %349 = vmatpush.bf16.msra.mxu0 %v256
    %350 = vmatpush.bf16.msra.mxu0 %v254
    %351 = vmatmul.bf16.gmra.mxu0 %v155
    %v352 = vpop.f32.mrf.mxu0
    %v353 = vadd.f32 0.0, %v352
    %v354 = vpop.f32.mrf.mxu0
    %355 = vdwg.mxu0
    %356 = vmatpush.bf16.msra.mxu0 %v284
    %357 = vmatpush.bf16.msra.mxu0 %v282
    %358 = vmatpush.bf16.msra.mxu0 %v280
    %359 = vmatpush.bf16.msra.mxu0 %v278
    %360 = vmatpush.bf16.msra.mxu0 %v276
    %361 = vmatpush.bf16.msra.mxu0 %v274
    %362 = vmatpush.bf16.msra.mxu0 %v272
    %363 = vmatpush.bf16.msra.mxu0 %v270
    %364 = vmatmul.bf16.gmra.mxu0 %v156
    %v365 = vpop.f32.mrf.mxu0
    %v366 = vadd.f32 %v353, %v365
    %v367 = vpop.f32.mrf.mxu0
    %368 = vdwg.mxu0
    %v370 = vunpack.c.l.b16 %v150
    %v371 = vunpack.c.h.b16 %v150
    %v372 = vpack.c.b16 %v370, %v370
    %v373 = vpack.c.b16 %v371, %v371
    %376 = vmatpush.bf16.msra.mxu0 %v267
    %377 = vmatpush.bf16.msra.mxu0 %v265
    %378 = vmatpush.bf16.msra.mxu0 %v263
    %379 = vmatpush.bf16.msra.mxu0 %v261
    %380 = vmatpush.bf16.msra.mxu0 %v259
    %381 = vmatpush.bf16.msra.mxu0 %v257
    %382 = vmatpush.bf16.msra.mxu0 %v255
    %383 = vmatpush.bf16.msra.mxu0 %v253
    %384 = vmatmul.bf16.gmra.mxu0 %v372
    %v385 = vpop.f32.mrf.mxu0
    %v386 = vadd.f32 %v340, %v385
    %v387 = vpop.f32.mrf.mxu0
    %388 = vdwg.mxu0
    %389 = vmatpush.bf16.msra.mxu0 %v283
    %390 = vmatpush.bf16.msra.mxu0 %v281
    %391 = vmatpush.bf16.msra.mxu0 %v279
    %392 = vmatpush.bf16.msra.mxu0 %v277
    %393 = vmatpush.bf16.msra.mxu0 %v275
    %394 = vmatpush.bf16.msra.mxu0 %v273
    %395 = vmatpush.bf16.msra.mxu0 %v271
    %396 = vmatpush.bf16.msra.mxu0 %v269
    %397 = vmatmul.bf16.gmra.mxu0 %v373
    %v398 = vpop.f32.mrf.mxu0
    %v399 = vadd.f32 %v386, %v398
    %v400 = vpop.f32.mrf.mxu0
    %401 = vdwg.mxu0
    %402 = vmatpush.bf16.msra.mxu0 %v268
    %403 = vmatpush.bf16.msra.mxu0 %v266
    %404 = vmatpush.bf16.msra.mxu0 %v264
    %405 = vmatpush.bf16.msra.mxu0 %v262
    %406 = vmatpush.bf16.msra.mxu0 %v260
    %407 = vmatpush.bf16.msra.mxu0 %v258
    %408 = vmatpush.bf16.msra.mxu0 %v256
    %409 = vmatpush.bf16.msra.mxu0 %v254
    %410 = vmatmul.bf16.gmra.mxu0 %v372
    %v411 = vpop.f32.mrf.mxu0
    %v412 = vadd.f32 %v366, %v411
    %v413 = vpop.f32.mrf.mxu0
    %414 = vdwg.mxu0
    %415 = vmatpush.bf16.msra.mxu0 %v284
    %416 = vmatpush.bf16.msra.mxu0 %v282
    %417 = vmatpush.bf16.msra.mxu0 %v280
    %418 = vmatpush.bf16.msra.mxu0 %v278
    %419 = vmatpush.bf16.msra.mxu0 %v276
    %420 = vmatpush.bf16.msra.mxu0 %v274
    %421 = vmatpush.bf16.msra.mxu0 %v272
    %422 = vmatpush.bf16.msra.mxu0 %v270
    %423 = vmatmul.bf16.gmra.mxu0 %v373
    %v424 = vpop.f32.mrf.mxu0
    %v425 = vadd.f32 %v412, %v424
    %v426 = vpop.f32.mrf.mxu0
    %427 = vdwg.mxu0
    %v460 = vunpack.c.l.b16 %v118
    %v461 = vunpack.c.h.b16 %v118
    %v462 = vunpack.c.l.b16 %v119
    %v463 = vunpack.c.h.b16 %v119
    %v464 = vunpack.c.l.b16 %v120
    %v465 = vunpack.c.h.b16 %v120
    %v466 = vunpack.c.l.b16 %v121
    %v467 = vunpack.c.h.b16 %v121
    %v468 = vunpack.c.l.b16 %v122
    %v469 = vunpack.c.h.b16 %v122
    %v470 = vunpack.c.l.b16 %v123
    %v471 = vunpack.c.h.b16 %v123
    %v472 = vunpack.c.l.b16 %v124
    %v473 = vunpack.c.h.b16 %v124
    %v474 = vunpack.c.l.b16 %v125
    %v475 = vunpack.c.h.b16 %v125
    %v476 = vunpack.c.l.b16 %v126
    %v477 = vunpack.c.h.b16 %v126
    %v478 = vunpack.c.l.b16 %v127
    %v479 = vunpack.c.h.b16 %v127
    %v480 = vunpack.c.l.b16 %v128
    %v481 = vunpack.c.h.b16 %v128
    %v482 = vunpack.c.l.b16 %v129
    %v483 = vunpack.c.h.b16 %v129
    %v484 = vunpack.c.l.b16 %v130
    %v485 = vunpack.c.h.b16 %v130
    %v486 = vunpack.c.l.b16 %v131
    %v487 = vunpack.c.h.b16 %v131
    %v488 = vunpack.c.l.b16 %v132
    %v489 = vunpack.c.h.b16 %v132
    %v490 = vunpack.c.l.b16 %v133
    %v491 = vunpack.c.h.b16 %v133
    %v492 = vunpack.c.l.b16 %v134
    %v493 = vunpack.c.h.b16 %v134
    %v494 = vunpack.c.l.b16 %v135
    %v495 = vunpack.c.h.b16 %v135
    %v496 = vunpack.c.l.b16 %v136
    %v497 = vunpack.c.h.b16 %v136
    %v498 = vunpack.c.l.b16 %v137
    %v499 = vunpack.c.h.b16 %v137
    %v500 = vunpack.c.l.b16 %v138
    %v501 = vunpack.c.h.b16 %v138
    %v502 = vunpack.c.l.b16 %v139
    %v503 = vunpack.c.h.b16 %v139
    %v504 = vunpack.c.l.b16 %v140
    %v505 = vunpack.c.h.b16 %v140
    %v506 = vunpack.c.l.b16 %v141
    %v507 = vunpack.c.h.b16 %v141
    %v508 = vunpack.c.l.b16 %v142
    %v509 = vunpack.c.h.b16 %v142
    %v510 = vunpack.c.l.b16 %v143
    %v511 = vunpack.c.h.b16 %v143
    %v512 = vunpack.c.l.b16 %v144
    %v513 = vunpack.c.h.b16 %v144
    %v514 = vunpack.c.l.b16 %v145
    %v515 = vunpack.c.h.b16 %v145
    %v516 = vunpack.c.l.b16 %v146
    %v517 = vunpack.c.h.b16 %v146
    %v518 = vunpack.c.l.b16 %v147
    %v519 = vunpack.c.h.b16 %v147
    %v520 = vunpack.c.l.b16 %v148
    %v521 = vunpack.c.h.b16 %v148
    %v522 = vunpack.c.l.b16 %v149
    %v523 = vunpack.c.h.b16 %v149
    %v524 = vpack.c.b16 %v462, %v460
    %v525 = vpack.c.b16 %v463, %v461
    %v526 = vpack.c.b16 %v466, %v464
    %v527 = vpack.c.b16 %v467, %v465
    %v528 = vpack.c.b16 %v470, %v468
    %v529 = vpack.c.b16 %v471, %v469
    %v530 = vpack.c.b16 %v474, %v472
    %v531 = vpack.c.b16 %v475, %v473
    %v532 = vpack.c.b16 %v478, %v476
    %v533 = vpack.c.b16 %v479, %v477
    %v534 = vpack.c.b16 %v482, %v480
    %v535 = vpack.c.b16 %v483, %v481
    %v536 = vpack.c.b16 %v486, %v484
    %v537 = vpack.c.b16 %v487, %v485
    %v538 = vpack.c.b16 %v490, %v488
    %v539 = vpack.c.b16 %v491, %v489
    %v540 = vpack.c.b16 %v494, %v492
    %v541 = vpack.c.b16 %v495, %v493
    %v542 = vpack.c.b16 %v498, %v496
    %v543 = vpack.c.b16 %v499, %v497
    %v544 = vpack.c.b16 %v502, %v500
    %v545 = vpack.c.b16 %v503, %v501
    %v546 = vpack.c.b16 %v506, %v504
    %v547 = vpack.c.b16 %v507, %v505
    %v548 = vpack.c.b16 %v510, %v508
    %v549 = vpack.c.b16 %v511, %v509
    %v550 = vpack.c.b16 %v514, %v512
    %v551 = vpack.c.b16 %v515, %v513
    %v552 = vpack.c.b16 %v518, %v516
    %v553 = vpack.c.b16 %v519, %v517
    %v554 = vpack.c.b16 %v522, %v520
    %v555 = vpack.c.b16 %v523, %v521
    %588 = vmatpush.bf16.msra.mxu0 %v538
    %589 = vmatpush.bf16.msra.mxu0 %v536
    %590 = vmatpush.bf16.msra.mxu0 %v534
    %591 = vmatpush.bf16.msra.mxu0 %v532
    %592 = vmatpush.bf16.msra.mxu0 %v530
    %593 = vmatpush.bf16.msra.mxu0 %v528
    %594 = vmatpush.bf16.msra.mxu0 %v526
    %595 = vmatpush.bf16.msra.mxu0 %v524
    %596 = vmatmul.bf16.gmra.mxu0 %v372
    %v597 = vpop.f32.mrf.mxu0
    %v598 = vadd.f32 0.0, %v597
    %v599 = vpop.f32.mrf.mxu0
    %600 = vdwg.mxu0
    %601 = vmatpush.bf16.msra.mxu0 %v554
    %602 = vmatpush.bf16.msra.mxu0 %v552
    %603 = vmatpush.bf16.msra.mxu0 %v550
    %604 = vmatpush.bf16.msra.mxu0 %v548
    %605 = vmatpush.bf16.msra.mxu0 %v546
    %606 = vmatpush.bf16.msra.mxu0 %v544
    %607 = vmatpush.bf16.msra.mxu0 %v542
    %608 = vmatpush.bf16.msra.mxu0 %v540
    %609 = vmatmul.bf16.gmra.mxu0 %v373
    %v610 = vpop.f32.mrf.mxu0
    %v611 = vadd.f32 %v598, %v610
    %v612 = vpop.f32.mrf.mxu0
    %613 = vdwg.mxu0
    %614 = vmatpush.bf16.msra.mxu0 %v539
    %615 = vmatpush.bf16.msra.mxu0 %v537
    %616 = vmatpush.bf16.msra.mxu0 %v535
    %617 = vmatpush.bf16.msra.mxu0 %v533
    %618 = vmatpush.bf16.msra.mxu0 %v531
    %619 = vmatpush.bf16.msra.mxu0 %v529
    %620 = vmatpush.bf16.msra.mxu0 %v527
    %621 = vmatpush.bf16.msra.mxu0 %v525
    %622 = vmatmul.bf16.gmra.mxu0 %v372
    %v623 = vpop.f32.mrf.mxu0
    %v624 = vadd.f32 0.0, %v623
    %v625 = vpop.f32.mrf.mxu0
    %626 = vdwg.mxu0
    %627 = vmatpush.bf16.msra.mxu0 %v555
    %628 = vmatpush.bf16.msra.mxu0 %v553
    %629 = vmatpush.bf16.msra.mxu0 %v551
    %630 = vmatpush.bf16.msra.mxu0 %v549
    %631 = vmatpush.bf16.msra.mxu0 %v547
    %632 = vmatpush.bf16.msra.mxu0 %v545
    %633 = vmatpush.bf16.msra.mxu0 %v543
    %634 = vmatpush.bf16.msra.mxu0 %v541
    %635 = vmatmul.bf16.gmra.mxu0 %v373
    %v636 = vpop.f32.mrf.mxu0
    %v637 = vadd.f32 %v624, %v636
    %v638 = vpop.f32.mrf.mxu0
    %639 = vdwg.mxu0
    %v640 = vadd.f32 %v399, %v611
    %v641 = vadd.f32 %v425, %v637
    %v642 = vld [vmem:[#allocation5] ss:$8 sm:$0x3]
    %v644 = vperm.slane %v642, 0
    %v645 = vperm.slane %v642, 1
    %v648 = vadd.f32 %v640, %v644
    %v649 = vadd.f32 %v641, %v645
    %v650 = vld [vmem:[#allocation7 + $0x200] sm:$0xff]
    %v651 = vld [vmem:[#allocation7 + $0x208] sm:$0xff]
    %v652 = vld [vmem:[#allocation7 + $0x210] sm:$0xff]
    %v653 = vld [vmem:[#allocation7 + $0x218] sm:$0xff]
    %v654 = vld [vmem:[#allocation7 + $0x220] sm:$0xff]
    %v655 = vld [vmem:[#allocation7 + $0x228] sm:$0xff]
    %v656 = vld [vmem:[#allocation7 + $0x230] sm:$0xff]
    %v657 = vld [vmem:[#allocation7 + $0x238] sm:$0xff]
    %v658 = vld [vmem:[#allocation7 + $0x240] sm:$0xff]
    %v659 = vld [vmem:[#allocation7 + $0x248] sm:$0xff]
    %v660 = vld [vmem:[#allocation7 + $0x250] sm:$0xff]
    %v661 = vld [vmem:[#allocation7 + $0x258] sm:$0xff]
    %v662 = vld [vmem:[#allocation7 + $0x260] sm:$0xff]
    %v663 = vld [vmem:[#allocation7 + $0x268] sm:$0xff]
    %v664 = vld [vmem:[#allocation7 + $0x270] sm:$0xff]
    %v665 = vld [vmem:[#allocation7 + $0x278] sm:$0xff]
    %v666 = vld [vmem:[#allocation7 + $0x280] sm:$0xff]
    %v667 = vld [vmem:[#allocation7 + $0x288] sm:$0xff]
    %v668 = vld [vmem:[#allocation7 + $0x290] sm:$0xff]
    %v669 = vld [vmem:[#allocation7 + $0x298] sm:$0xff]
    %v670 = vld [vmem:[#allocation7 + $0x2a0] sm:$0xff]
    %v671 = vld [vmem:[#allocation7 + $0x2a8] sm:$0xff]
    %v672 = vld [vmem:[#allocation7 + $0x2b0] sm:$0xff]
    %v673 = vld [vmem:[#allocation7 + $0x2b8] sm:$0xff]
    %v674 = vld [vmem:[#allocation7 + $0x2c0] sm:$0xff]
    %v675 = vld [vmem:[#allocation7 + $0x2c8] sm:$0xff]
    %v676 = vld [vmem:[#allocation7 + $0x2d0] sm:$0xff]
    %v677 = vld [vmem:[#allocation7 + $0x2d8] sm:$0xff]
    %v678 = vld [vmem:[#allocation7 + $0x2e0] sm:$0xff]
    %v679 = vld [vmem:[#allocation7 + $0x2e8] sm:$0xff]
    %v680 = vld [vmem:[#allocation7 + $0x2f0] sm:$0xff]
    %v681 = vld [vmem:[#allocation7 + $0x2f8] sm:$0xff]
    %vm682 = vcmp.ge.f32.partialorder %v648, 0.0
    %vm683 = vcmp.ge.f32.partialorder %v649, 0.0
    %v684 = vmul.f32 %v648, 0.01
    %v685 = vmul.f32 %v649, 0.01
    %v686 = vsel %vm682, %v648, %v684
    %v687 = vsel %vm683, %v649, %v685
    %v688 = vmul.f32 %v686, %v82
    %v689 = vmul.f32 %v687, %v82
    %v690 = vrot.slane %v688, 4
    %v691 = vadd.f32 %v688, %v690
    %v692 = vrot.slane %v691, 2
    %v693 = vadd.f32 %v691, %v692
    %v694 = vrot.slane %v693, 1
    %v695 = vadd.f32 %v693, %v694
    %v696 = vrot.slane %v689, 4
    %v697 = vadd.f32 %v689, %v696
    %v698 = vrot.slane %v697, 2
    %v699 = vadd.f32 %v697, %v698
    %v700 = vrot.slane %v699, 1
    %v701 = vadd.f32 %v699, %v700
    %v702 = vmul.f32 %v688, %v686
    %v703 = vmul.f32 %v689, %v687
    %v704 = vrot.slane %v702, 4
    %v705 = vadd.f32 %v702, %v704
    %v706 = vrot.slane %v705, 2
    %v707 = vadd.f32 %v705, %v706
    %v708 = vrot.slane %v707, 1
    %v709 = vadd.f32 %v707, %v708
    %v710 = vrot.slane %v703, 4
    %v711 = vadd.f32 %v703, %v710
    %v712 = vrot.slane %v711, 2
    %v713 = vadd.f32 %v711, %v712
    %v714 = vrot.slane %v713, 1
    %v715 = vadd.f32 %v713, %v714
    %v716 = vsel %vm83, 1, 0
    %vm717 = vcmp.eq.s32.totalorder %v716, 1
    %v718 = vsel %vm717, %v695, %v709
    %v719 = vsel %vm717, %v701, %v715
    %v720 = vpack.c.bf16 %v719, %v718
    %v721 = vunpack.c.l.bf16 %v720
    %v722 = vunpack.c.h.bf16 %v720
    %v723 = vsub.f32 %v718, %v721
    %v724 = vsub.f32 %v719, %v722
    %v725 = vpack.c.bf16 %v723, %v723
    %v726 = vpack.c.bf16 %v724, %v724
    %v759 = vunpack.c.l.b16 %v650
    %v760 = vunpack.c.h.b16 %v650
    %v761 = vunpack.c.l.b16 %v651
    %v762 = vunpack.c.h.b16 %v651
    %v763 = vunpack.c.l.b16 %v652
    %v764 = vunpack.c.h.b16 %v652
    %v765 = vunpack.c.l.b16 %v653
    %v766 = vunpack.c.h.b16 %v653
    %v767 = vunpack.c.l.b16 %v654
    %v768 = vunpack.c.h.b16 %v654
    %v769 = vunpack.c.l.b16 %v655
    %v770 = vunpack.c.h.b16 %v655
    %v771 = vunpack.c.l.b16 %v656
    %v772 = vunpack.c.h.b16 %v656
    %v773 = vunpack.c.l.b16 %v657
    %v774 = vunpack.c.h.b16 %v657
    %v775 = vunpack.c.l.b16 %v658
    %v776 = vunpack.c.h.b16 %v658
    %v777 = vunpack.c.l.b16 %v659
    %v778 = vunpack.c.h.b16 %v659
    %v779 = vunpack.c.l.b16 %v660
    %v780 = vunpack.c.h.b16 %v660
    %v781 = vunpack.c.l.b16 %v661
    %v782 = vunpack.c.h.b16 %v661
    %v783 = vunpack.c.l.b16 %v662
    %v784 = vunpack.c.h.b16 %v662
    %v785 = vunpack.c.l.b16 %v663
    %v786 = vunpack.c.h.b16 %v663
    %v787 = vunpack.c.l.b16 %v664
    %v788 = vunpack.c.h.b16 %v664
    %v789 = vunpack.c.l.b16 %v665
    %v790 = vunpack.c.h.b16 %v665
    %v791 = vunpack.c.l.b16 %v666
    %v792 = vunpack.c.h.b16 %v666
    %v793 = vunpack.c.l.b16 %v667
    %v794 = vunpack.c.h.b16 %v667
    %v795 = vunpack.c.l.b16 %v668
    %v796 = vunpack.c.h.b16 %v668
    %v797 = vunpack.c.l.b16 %v669
    %v798 = vunpack.c.h.b16 %v669
    %v799 = vunpack.c.l.b16 %v670
    %v800 = vunpack.c.h.b16 %v670
    %v801 = vunpack.c.l.b16 %v671
    %v802 = vunpack.c.h.b16 %v671
    %v803 = vunpack.c.l.b16 %v672
    %v804 = vunpack.c.h.b16 %v672
    %v805 = vunpack.c.l.b16 %v673
    %v806 = vunpack.c.h.b16 %v673
    %v807 = vunpack.c.l.b16 %v674
    %v808 = vunpack.c.h.b16 %v674
    %v809 = vunpack.c.l.b16 %v675
    %v810 = vunpack.c.h.b16 %v675
    %v811 = vunpack.c.l.b16 %v676
    %v812 = vunpack.c.h.b16 %v676
    %v813 = vunpack.c.l.b16 %v677
    %v814 = vunpack.c.h.b16 %v677
    %v815 = vunpack.c.l.b16 %v678
    %v816 = vunpack.c.h.b16 %v678
    %v817 = vunpack.c.l.b16 %v679
    %v818 = vunpack.c.h.b16 %v679
    %v819 = vunpack.c.l.b16 %v680
    %v820 = vunpack.c.h.b16 %v680
    %v821 = vunpack.c.l.b16 %v681
    %v822 = vunpack.c.h.b16 %v681
    %v823 = vpack.c.b16 %v761, %v759
    %v824 = vpack.c.b16 %v762, %v760
    %v825 = vpack.c.b16 %v765, %v763
    %v826 = vpack.c.b16 %v766, %v764
    %v827 = vpack.c.b16 %v769, %v767
    %v828 = vpack.c.b16 %v770, %v768
    %v829 = vpack.c.b16 %v773, %v771
    %v830 = vpack.c.b16 %v774, %v772
    %v831 = vpack.c.b16 %v777, %v775
    %v832 = vpack.c.b16 %v778, %v776
    %v833 = vpack.c.b16 %v781, %v779
    %v834 = vpack.c.b16 %v782, %v780
    %v835 = vpack.c.b16 %v785, %v783
    %v836 = vpack.c.b16 %v786, %v784
    %v837 = vpack.c.b16 %v789, %v787
    %v838 = vpack.c.b16 %v790, %v788
    %v839 = vpack.c.b16 %v793, %v791
    %v840 = vpack.c.b16 %v794, %v792
    %v841 = vpack.c.b16 %v797, %v795
    %v842 = vpack.c.b16 %v798, %v796
    %v843 = vpack.c.b16 %v801, %v799
    %v844 = vpack.c.b16 %v802, %v800
    %v845 = vpack.c.b16 %v805, %v803
    %v846 = vpack.c.b16 %v806, %v804
    %v847 = vpack.c.b16 %v809, %v807
    %v848 = vpack.c.b16 %v810, %v808
    %v849 = vpack.c.b16 %v813, %v811
    %v850 = vpack.c.b16 %v814, %v812
    %v851 = vpack.c.b16 %v817, %v815
    %v852 = vpack.c.b16 %v818, %v816
    %v853 = vpack.c.b16 %v821, %v819
    %v854 = vpack.c.b16 %v822, %v820
    %887 = vmatpush.bf16.msra.mxu0 %v837
    %888 = vmatpush.bf16.msra.mxu0 %v835
    %889 = vmatpush.bf16.msra.mxu0 %v833
    %890 = vmatpush.bf16.msra.mxu0 %v831
    %891 = vmatpush.bf16.msra.mxu0 %v829
    %892 = vmatpush.bf16.msra.mxu0 %v827
    %893 = vmatpush.bf16.msra.mxu0 %v825
    %894 = vmatpush.bf16.msra.mxu0 %v823
    %895 = vmatmul.bf16.gmra.mxu0 %v725
    %v896 = vpop.f32.mrf.mxu0
    %v897 = vadd.f32 0.0, %v896
    %v898 = vpop.f32.mrf.mxu0
    %899 = vdwg.mxu0
    %900 = vmatpush.bf16.msra.mxu0 %v853
    %901 = vmatpush.bf16.msra.mxu0 %v851
    %902 = vmatpush.bf16.msra.mxu0 %v849
    %903 = vmatpush.bf16.msra.mxu0 %v847
    %904 = vmatpush.bf16.msra.mxu0 %v845
    %905 = vmatpush.bf16.msra.mxu0 %v843
    %906 = vmatpush.bf16.msra.mxu0 %v841
    %907 = vmatpush.bf16.msra.mxu0 %v839
    %908 = vmatmul.bf16.gmra.mxu0 %v726
    %v909 = vpop.f32.mrf.mxu0
    %v910 = vadd.f32 %v897, %v909
    %v911 = vpop.f32.mrf.mxu0
    %912 = vdwg.mxu0
    %913 = vmatpush.bf16.msra.mxu0 %v838
    %914 = vmatpush.bf16.msra.mxu0 %v836
    %915 = vmatpush.bf16.msra.mxu0 %v834
    %916 = vmatpush.bf16.msra.mxu0 %v832
    %917 = vmatpush.bf16.msra.mxu0 %v830
    %918 = vmatpush.bf16.msra.mxu0 %v828
    %919 = vmatpush.bf16.msra.mxu0 %v826
    %920 = vmatpush.bf16.msra.mxu0 %v824
    %921 = vmatmul.bf16.gmra.mxu0 %v725
    %v922 = vpop.f32.mrf.mxu0
    %v923 = vadd.f32 0.0, %v922
    %v924 = vpop.f32.mrf.mxu0
    %925 = vdwg.mxu0
    %926 = vmatpush.bf16.msra.mxu0 %v854
    %927 = vmatpush.bf16.msra.mxu0 %v852
    %928 = vmatpush.bf16.msra.mxu0 %v850
    %929 = vmatpush.bf16.msra.mxu0 %v848
    %930 = vmatpush.bf16.msra.mxu0 %v846
    %931 = vmatpush.bf16.msra.mxu0 %v844
    %932 = vmatpush.bf16.msra.mxu0 %v842
    %933 = vmatpush.bf16.msra.mxu0 %v840
    %934 = vmatmul.bf16.gmra.mxu0 %v726
    %v935 = vpop.f32.mrf.mxu0
    %v936 = vadd.f32 %v923, %v935
    %v937 = vpop.f32.mrf.mxu0
    %938 = vdwg.mxu0
    %v940 = vunpack.c.l.b16 %v720
    %v941 = vunpack.c.h.b16 %v720
    %v942 = vpack.c.b16 %v940, %v940
    %v943 = vpack.c.b16 %v941, %v941
    %946 = vmatpush.bf16.msra.mxu0 %v837
    %947 = vmatpush.bf16.msra.mxu0 %v835
    %948 = vmatpush.bf16.msra.mxu0 %v833
    %949 = vmatpush.bf16.msra.mxu0 %v831
    %950 = vmatpush.bf16.msra.mxu0 %v829
    %951 = vmatpush.bf16.msra.mxu0 %v827
    %952 = vmatpush.bf16.msra.mxu0 %v825
    %953 = vmatpush.bf16.msra.mxu0 %v823
    %954 = vmatmul.bf16.gmra.mxu0 %v942
    %v955 = vpop.f32.mrf.mxu0
    %v956 = vadd.f32 %v910, %v955
    %v957 = vpop.f32.mrf.mxu0
    %958 = vdwg.mxu0
    %959 = vmatpush.bf16.msra.mxu0 %v853
    %960 = vmatpush.bf16.msra.mxu0 %v851
    %961 = vmatpush.bf16.msra.mxu0 %v849
    %962 = vmatpush.bf16.msra.mxu0 %v847
    %963 = vmatpush.bf16.msra.mxu0 %v845
    %964 = vmatpush.bf16.msra.mxu0 %v843
    %965 = vmatpush.bf16.msra.mxu0 %v841
    %966 = vmatpush.bf16.msra.mxu0 %v839
    %967 = vmatmul.bf16.gmra.mxu0 %v943
    %v968 = vpop.f32.mrf.mxu0
    %v969 = vadd.f32 %v956, %v968
    %v970 = vpop.f32.mrf.mxu0
    %971 = vdwg.mxu0
    %972 = vmatpush.bf16.msra.mxu0 %v838
    %973 = vmatpush.bf16.msra.mxu0 %v836
    %974 = vmatpush.bf16.msra.mxu0 %v834
    %975 = vmatpush.bf16.msra.mxu0 %v832
    %976 = vmatpush.bf16.msra.mxu0 %v830
    %977 = vmatpush.bf16.msra.mxu0 %v828
    %978 = vmatpush.bf16.msra.mxu0 %v826
    %979 = vmatpush.bf16.msra.mxu0 %v824
    %980 = vmatmul.bf16.gmra.mxu0 %v942
    %v981 = vpop.f32.mrf.mxu0
    %v982 = vadd.f32 %v936, %v981
    %v983 = vpop.f32.mrf.mxu0
    %984 = vdwg.mxu0
    %985 = vmatpush.bf16.msra.mxu0 %v854
    %986 = vmatpush.bf16.msra.mxu0 %v852
    %987 = vmatpush.bf16.msra.mxu0 %v850
    %988 = vmatpush.bf16.msra.mxu0 %v848
    %989 = vmatpush.bf16.msra.mxu0 %v846
    %990 = vmatpush.bf16.msra.mxu0 %v844
    %991 = vmatpush.bf16.msra.mxu0 %v842
    %992 = vmatpush.bf16.msra.mxu0 %v840
    %993 = vmatmul.bf16.gmra.mxu0 %v943
    %v994 = vpop.f32.mrf.mxu0
    %v995 = vadd.f32 %v982, %v994
    %v996 = vpop.f32.mrf.mxu0
    %997 = vdwg.mxu0
    %v998 = vmul.f32 %v969, 0.016666668
    %v999 = vmul.f32 %v995, 0.016666668
    %v1000 = vsel %vm717, %v998, 0.0
    %v1001 = vsel %vm717, %v999, 0.0
    %vm1002 = vcmask 1041408
    %v1003 = vsel %vm1002, %v1000, 0.0
    %v1004 = vrot.slane %v1003, 4
    %v1005 = vadd.f32 %v1003, %v1004
    %v1006 = vrot.slane %v1005, 2
    %v1007 = vadd.f32 %v1005, %v1006
    %v1008 = vrot.slane %v1007, 1
    %v1009 = vadd.f32 %v1007, %v1008
    %v1010 = vsel %vm1002, %v1001, 0.0
    %v1011 = vrot.slane %v1010, 4
    %v1012 = vadd.f32 %v1010, %v1011
    %v1013 = vrot.slane %v1012, 2
    %v1014 = vadd.f32 %v1012, %v1013
    %v1015 = vrot.slane %v1014, 1
    %v1016 = vadd.f32 %v1014, %v1015
    %v1017 = vsel %vm717, 0.0, %v998
    %v1018 = vsel %vm717, 0.0, %v999
    %v1019 = vsel %vm1002, %v1017, 0.0
    %v1020 = vrot.slane %v1019, 4
    %v1021 = vadd.f32 %v1019, %v1020
    %v1022 = vrot.slane %v1021, 2
    %v1023 = vadd.f32 %v1021, %v1022
    %v1024 = vrot.slane %v1023, 1
    %v1025 = vadd.f32 %v1023, %v1024
    %v1026 = vsel %vm1002, %v1018, 0.0
    %v1027 = vrot.slane %v1026, 4
    %v1028 = vadd.f32 %v1026, %v1027
    %v1029 = vrot.slane %v1028, 2
    %v1030 = vadd.f32 %v1028, %v1029
    %v1031 = vrot.slane %v1030, 1
    %v1032 = vadd.f32 %v1030, %v1031
    %v1033 = vmul.f32 %v1009, %v1009
    %v1034 = vmul.f32 %v1016, %v1016
    %v1035 = vsub.f32 %v1025, %v1033
    %v1036 = vsub.f32 %v1032, %v1034
    %v1037 = vsub.f32 %v686, %v1009
    %v1038 = vsub.f32 %v687, %v1016
    %v1039 = vadd.f32 %v1035, 1e-05
    %v1040 = vadd.f32 %v1036, 1e-05
    %v1041 = vrsqrt.pop %v1039
    %v1042 = vmul.f32 %v1041, %v1039
    %v1043 = vmul.f32 %v1042, %v1041
    %v1044 = vmul.f32 0.5, %v1043
    %v1045 = vsub.f32 1.5, %v1044
    %v1046 = vmul.f32 %v1041, %v1045
    %vm1047 = vweird.f32 %v1039
    %vm1048 = vweird.f32 %v1041
    %vm1049 = vmor %vm1047, %vm1048
    %v1050 = vsel %vm1049, %v1041, %v1046
    %v1051 = vrsqrt.pop %v1040
    %v1052 = vmul.f32 %v1051, %v1040
    %v1053 = vmul.f32 %v1052, %v1051
    %v1054 = vmul.f32 0.5, %v1053
    %v1055 = vsub.f32 1.5, %v1054
    %v1056 = vmul.f32 %v1051, %v1055
    %vm1057 = vweird.f32 %v1040
    %vm1058 = vweird.f32 %v1051
    %vm1059 = vmor %vm1057, %vm1058
    %v1060 = vsel %vm1059, %v1051, %v1056
    %v1061 = vmul.f32 %v1037, %v1050
    %v1062 = vmul.f32 %v1038, %v1060
    %v1063 = vld [vmem:[#allocation7 + $0x300] sm:$0xf]
    %v1064 = vld [vmem:[#allocation7 + $0x308] sm:$0xf]
    %v1065 = vld [vmem:[#allocation7 + $0x310] sm:$0xf]
    %v1066 = vld [vmem:[#allocation7 + $0x318] sm:$0xf]
    %v1067 = vld [vmem:[#allocation7 + $0x320] sm:$0xf]
    %v1068 = vld [vmem:[#allocation7 + $0x328] sm:$0xf]
    %v1069 = vld [vmem:[#allocation7 + $0x330] sm:$0xf]
    %v1070 = vld [vmem:[#allocation7 + $0x338] sm:$0xf]
    %v1071 = vld [vmem:[#allocation7 + $0x340] sm:$0xf]
    %v1072 = vld [vmem:[#allocation7 + $0x348] sm:$0xf]
    %v1073 = vld [vmem:[#allocation7 + $0x350] sm:$0xf]
    %v1074 = vld [vmem:[#allocation7 + $0x358] sm:$0xf]
    %v1075 = vld [vmem:[#allocation7 + $0x360] sm:$0xf]
    %v1076 = vld [vmem:[#allocation7 + $0x368] sm:$0xf]
    %v1077 = vld [vmem:[#allocation7 + $0x370] sm:$0xf]
    %v1078 = vld [vmem:[#allocation7 + $0x378] sm:$0xf]
    %v1079 = vld [vmem:[#allocation7 + $0x380] sm:$0xf]
    %v1080 = vld [vmem:[#allocation7 + $0x388] sm:$0xf]
    %v1081 = vld [vmem:[#allocation7 + $0x390] sm:$0xf]
    %v1082 = vld [vmem:[#allocation7 + $0x398] sm:$0xf]
    %v1083 = vld [vmem:[#allocation7 + $0x3a0] sm:$0xf]
    %v1084 = vld [vmem:[#allocation7 + $0x3a8] sm:$0xf]
    %v1085 = vld [vmem:[#allocation7 + $0x3b0] sm:$0xf]
    %v1086 = vld [vmem:[#allocation7 + $0x3b8] sm:$0xf]
    %v1087 = vld [vmem:[#allocation7 + $0x3c0] sm:$0xf]
    %v1088 = vld [vmem:[#allocation7 + $0x3c8] sm:$0xf]
    %v1089 = vld [vmem:[#allocation7 + $0x3d0] sm:$0xf]
    %v1090 = vld [vmem:[#allocation7 + $0x3d8] sm:$0xf]
    %v1091 = vld [vmem:[#allocation7 + $0x3e0] sm:$0xf]
    %v1092 = vld [vmem:[#allocation7 + $0x3e8] sm:$0xf]
    %v1093 = vld [vmem:[#allocation7 + $0x3f0] sm:$0xf]
    %v1094 = vld [vmem:[#allocation7 + $0x3f8] sm:$0xf]
    %v1095 = vld [vmem:[#allocation7 + $0x400] sm:$0xf]
    %v1096 = vld [vmem:[#allocation7 + $0x408] sm:$0xf]
    %v1097 = vld [vmem:[#allocation7 + $0x410] sm:$0xf]
    %v1098 = vld [vmem:[#allocation7 + $0x418] sm:$0xf]
    %v1099 = vld [vmem:[#allocation7 + $0x420] sm:$0xf]
    %v1100 = vld [vmem:[#allocation7 + $0x428] sm:$0xf]
    %v1101 = vld [vmem:[#allocation7 + $0x430] sm:$0xf]
    %v1102 = vld [vmem:[#allocation7 + $0x438] sm:$0xf]
    %v1103 = vld [vmem:[#allocation7 + $0x440] sm:$0xf]
    %v1104 = vld [vmem:[#allocation7 + $0x448] sm:$0xf]
    %v1105 = vld [vmem:[#allocation7 + $0x450] sm:$0xf]
    %v1106 = vld [vmem:[#allocation7 + $0x458] sm:$0xf]
    %v1107 = vld [vmem:[#allocation7 + $0x460] sm:$0xf]
    %v1108 = vld [vmem:[#allocation7 + $0x468] sm:$0xf]
    %v1109 = vld [vmem:[#allocation7 + $0x470] sm:$0xf]
    %v1110 = vld [vmem:[#allocation7 + $0x478] sm:$0xf]
    %v1111 = vld [vmem:[#allocation7 + $0x480] sm:$0xf]
    %v1112 = vld [vmem:[#allocation7 + $0x488] sm:$0xf]
    %v1113 = vld [vmem:[#allocation7 + $0x490] sm:$0xf]
    %v1114 = vld [vmem:[#allocation7 + $0x498] sm:$0xf]
    %v1115 = vld [vmem:[#allocation7 + $0x4a0] sm:$0xf]
    %v1116 = vld [vmem:[#allocation7 + $0x4a8] sm:$0xf]
    %v1117 = vld [vmem:[#allocation7 + $0x4b0] sm:$0xf]
    %v1118 = vld [vmem:[#allocation7 + $0x4b8] sm:$0xf]
    %v1119 = vld [vmem:[#allocation7 + $0x4c0] sm:$0xf]
    %v1120 = vld [vmem:[#allocation7 + $0x4c8] sm:$0xf]
    %v1121 = vld [vmem:[#allocation7 + $0x4d0] sm:$0xf]
    %v1122 = vld [vmem:[#allocation7 + $0x4d8] sm:$0xf]
    %v1123 = vld [vmem:[#allocation7 + $0x4e0] sm:$0xf]
    %v1124 = vld [vmem:[#allocation7 + $0x4e8] sm:$0xf]
    %v1125 = vld [vmem:[#allocation7 + $0x4f0] sm:$0xf]
    %v1126 = vld [vmem:[#allocation7 + $0x4f8] sm:$0xf]
    %v1127 = vpack.c.bf16 %v1062, %v1061
    %v1128 = vunpack.c.l.bf16 %v1127
    %v1129 = vunpack.c.h.bf16 %v1127
    %v1130 = vsub.f32 %v1061, %v1128
    %v1131 = vsub.f32 %v1062, %v1129
    %v1132 = vpack.c.bf16 %v1130, %v1130
    %v1133 = vpack.c.bf16 %v1131, %v1131
    %v1166 = vunpack.c.l.b16 %v1063
    %v1167 = vunpack.c.l.b16 %v1064
    %v1168 = vunpack.c.l.b16 %v1065
    %v1169 = vunpack.c.l.b16 %v1066
    %v1170 = vunpack.c.l.b16 %v1067
    %v1171 = vunpack.c.l.b16 %v1068
    %v1172 = vunpack.c.l.b16 %v1069
    %v1173 = vunpack.c.l.b16 %v1070
    %v1174 = vunpack.c.l.b16 %v1071
    %v1175 = vunpack.c.l.b16 %v1072
    %v1176 = vunpack.c.l.b16 %v1073
    %v1177 = vunpack.c.l.b16 %v1074
    %v1178 = vunpack.c.l.b16 %v1075
    %v1179 = vunpack.c.l.b16 %v1076
    %v1180 = vunpack.c.l.b16 %v1077
    %v1181 = vunpack.c.l.b16 %v1078
    %v1182 = vunpack.c.l.b16 %v1079
    %v1183 = vunpack.c.l.b16 %v1080
    %v1184 = vunpack.c.l.b16 %v1081
    %v1185 = vunpack.c.l.b16 %v1082
    %v1186 = vunpack.c.l.b16 %v1083
    %v1187 = vunpack.c.l.b16 %v1084
    %v1188 = vunpack.c.l.b16 %v1085
    %v1189 = vunpack.c.l.b16 %v1086
    %v1190 = vunpack.c.l.b16 %v1087
    %v1191 = vunpack.c.l.b16 %v1088
    %v1192 = vunpack.c.l.b16 %v1089
    %v1193 = vunpack.c.l.b16 %v1090
    %v1194 = vunpack.c.l.b16 %v1091
    %v1195 = vunpack.c.l.b16 %v1092
    %v1196 = vunpack.c.l.b16 %v1093
    %v1197 = vunpack.c.l.b16 %v1094
    %v1198 = vpack.c.b16 %v1167, %v1166
    %v1199 = vpack.c.b16 %v1169, %v1168
    %v1200 = vpack.c.b16 %v1171, %v1170
    %v1201 = vpack.c.b16 %v1173, %v1172
    %v1202 = vpack.c.b16 %v1175, %v1174
    %v1203 = vpack.c.b16 %v1177, %v1176
    %v1204 = vpack.c.b16 %v1179, %v1178
    %v1205 = vpack.c.b16 %v1181, %v1180
    %v1206 = vpack.c.b16 %v1183, %v1182
    %v1207 = vpack.c.b16 %v1185, %v1184
    %v1208 = vpack.c.b16 %v1187, %v1186
    %v1209 = vpack.c.b16 %v1189, %v1188
    %v1210 = vpack.c.b16 %v1191, %v1190
    %v1211 = vpack.c.b16 %v1193, %v1192
    %v1212 = vpack.c.b16 %v1195, %v1194
    %v1213 = vpack.c.b16 %v1197, %v1196
    %1230 = vmatpush.bf16.msra.mxu0 %v1205
    %1231 = vmatpush.bf16.msra.mxu0 %v1204
    %1232 = vmatpush.bf16.msra.mxu0 %v1203
    %1233 = vmatpush.bf16.msra.mxu0 %v1202
    %1234 = vmatpush.bf16.msra.mxu0 %v1201
    %1235 = vmatpush.bf16.msra.mxu0 %v1200
    %1236 = vmatpush.bf16.msra.mxu0 %v1199
    %1237 = vmatpush.bf16.msra.mxu0 %v1198
    %1238 = vmatmul.bf16.gmra.mxu0 %v1132
    %v1239 = vpop.f32.mrf.mxu0
    %v1240 = vadd.f32 0.0, %v1239
    %v1241 = vpop.f32.mrf.mxu0
    %1242 = vdwg.mxu0
    %1243 = vmatpush.bf16.msra.mxu0 %v1213
    %1244 = vmatpush.bf16.msra.mxu0 %v1212
    %1245 = vmatpush.bf16.msra.mxu0 %v1211
    %1246 = vmatpush.bf16.msra.mxu0 %v1210
    %1247 = vmatpush.bf16.msra.mxu0 %v1209
    %1248 = vmatpush.bf16.msra.mxu0 %v1208
    %1249 = vmatpush.bf16.msra.mxu0 %v1207
    %1250 = vmatpush.bf16.msra.mxu0 %v1206
    %1251 = vmatmul.bf16.gmra.mxu0 %v1133
    %v1252 = vpop.f32.mrf.mxu0
    %v1253 = vadd.f32 %v1240, %v1252
    %v1254 = vpop.f32.mrf.mxu0
    %1255 = vdwg.mxu0
    %v1257 = vunpack.c.l.b16 %v1127
    %v1258 = vunpack.c.h.b16 %v1127
    %v1259 = vpack.c.b16 %v1257, %v1257
    %v1260 = vpack.c.b16 %v1258, %v1258
    %1263 = vmatpush.bf16.msra.mxu0 %v1205
    %1264 = vmatpush.bf16.msra.mxu0 %v1204
    %1265 = vmatpush.bf16.msra.mxu0 %v1203
    %1266 = vmatpush.bf16.msra.mxu0 %v1202
    %1267 = vmatpush.bf16.msra.mxu0 %v1201
    %1268 = vmatpush.bf16.msra.mxu0 %v1200
    %1269 = vmatpush.bf16.msra.mxu0 %v1199
    %1270 = vmatpush.bf16.msra.mxu0 %v1198
    %1271 = vmatmul.bf16.gmra.mxu0 %v1259
    %v1272 = vpop.f32.mrf.mxu0
    %v1273 = vadd.f32 %v1253, %v1272
    %v1274 = vpop.f32.mrf.mxu0
    %1275 = vdwg.mxu0
    %1276 = vmatpush.bf16.msra.mxu0 %v1213
    %1277 = vmatpush.bf16.msra.mxu0 %v1212
    %1278 = vmatpush.bf16.msra.mxu0 %v1211
    %1279 = vmatpush.bf16.msra.mxu0 %v1210
    %1280 = vmatpush.bf16.msra.mxu0 %v1209
    %1281 = vmatpush.bf16.msra.mxu0 %v1208
    %1282 = vmatpush.bf16.msra.mxu0 %v1207
    %1283 = vmatpush.bf16.msra.mxu0 %v1206
    %1284 = vmatmul.bf16.gmra.mxu0 %v1260
    %v1285 = vpop.f32.mrf.mxu0
    %v1286 = vadd.f32 %v1273, %v1285
    %v1287 = vpop.f32.mrf.mxu0
    %1288 = vdwg.mxu0
    %v1321 = vunpack.c.l.b16 %v1095
    %v1322 = vunpack.c.l.b16 %v1096
    %v1323 = vunpack.c.l.b16 %v1097
    %v1324 = vunpack.c.l.b16 %v1098
    %v1325 = vunpack.c.l.b16 %v1099
    %v1326 = vunpack.c.l.b16 %v1100
    %v1327 = vunpack.c.l.b16 %v1101
    %v1328 = vunpack.c.l.b16 %v1102
    %v1329 = vunpack.c.l.b16 %v1103
    %v1330 = vunpack.c.l.b16 %v1104
    %v1331 = vunpack.c.l.b16 %v1105
    %v1332 = vunpack.c.l.b16 %v1106
    %v1333 = vunpack.c.l.b16 %v1107
    %v1334 = vunpack.c.l.b16 %v1108
    %v1335 = vunpack.c.l.b16 %v1109
    %v1336 = vunpack.c.l.b16 %v1110
    %v1337 = vunpack.c.l.b16 %v1111
    %v1338 = vunpack.c.l.b16 %v1112
    %v1339 = vunpack.c.l.b16 %v1113
    %v1340 = vunpack.c.l.b16 %v1114
    %v1341 = vunpack.c.l.b16 %v1115
    %v1342 = vunpack.c.l.b16 %v1116
    %v1343 = vunpack.c.l.b16 %v1117
    %v1344 = vunpack.c.l.b16 %v1118
    %v1345 = vunpack.c.l.b16 %v1119
    %v1346 = vunpack.c.l.b16 %v1120
    %v1347 = vunpack.c.l.b16 %v1121
    %v1348 = vunpack.c.l.b16 %v1122
    %v1349 = vunpack.c.l.b16 %v1123
    %v1350 = vunpack.c.l.b16 %v1124
    %v1351 = vunpack.c.l.b16 %v1125
    %v1352 = vunpack.c.l.b16 %v1126
    %v1353 = vpack.c.b16 %v1322, %v1321
    %v1354 = vpack.c.b16 %v1324, %v1323
    %v1355 = vpack.c.b16 %v1326, %v1325
    %v1356 = vpack.c.b16 %v1328, %v1327
    %v1357 = vpack.c.b16 %v1330, %v1329
    %v1358 = vpack.c.b16 %v1332, %v1331
    %v1359 = vpack.c.b16 %v1334, %v1333
    %v1360 = vpack.c.b16 %v1336, %v1335
    %v1361 = vpack.c.b16 %v1338, %v1337
    %v1362 = vpack.c.b16 %v1340, %v1339
    %v1363 = vpack.c.b16 %v1342, %v1341
    %v1364 = vpack.c.b16 %v1344, %v1343
    %v1365 = vpack.c.b16 %v1346, %v1345
    %v1366 = vpack.c.b16 %v1348, %v1347
    %v1367 = vpack.c.b16 %v1350, %v1349
    %v1368 = vpack.c.b16 %v1352, %v1351
    %1385 = vmatpush.bf16.msra.mxu0 %v1360
    %1386 = vmatpush.bf16.msra.mxu0 %v1359
    %1387 = vmatpush.bf16.msra.mxu0 %v1358
    %1388 = vmatpush.bf16.msra.mxu0 %v1357
    %1389 = vmatpush.bf16.msra.mxu0 %v1356
    %1390 = vmatpush.bf16.msra.mxu0 %v1355
    %1391 = vmatpush.bf16.msra.mxu0 %v1354
    %1392 = vmatpush.bf16.msra.mxu0 %v1353
    %1393 = vmatmul.bf16.gmra.mxu0 %v1259
    %v1394 = vpop.f32.mrf.mxu0
    %v1395 = vadd.f32 0.0, %v1394
    %v1396 = vpop.f32.mrf.mxu0
    %1397 = vdwg.mxu0
    %1398 = vmatpush.bf16.msra.mxu0 %v1368
    %1399 = vmatpush.bf16.msra.mxu0 %v1367
    %1400 = vmatpush.bf16.msra.mxu0 %v1366
    %1401 = vmatpush.bf16.msra.mxu0 %v1365
    %1402 = vmatpush.bf16.msra.mxu0 %v1364
    %1403 = vmatpush.bf16.msra.mxu0 %v1363
    %1404 = vmatpush.bf16.msra.mxu0 %v1362
    %1405 = vmatpush.bf16.msra.mxu0 %v1361
    %1406 = vmatmul.bf16.gmra.mxu0 %v1260
    %v1407 = vpop.f32.mrf.mxu0
    %v1408 = vadd.f32 %v1395, %v1407
    %v1409 = vpop.f32.mrf.mxu0
    %1410 = vdwg.mxu0
    %v1411 = vadd.f32 %v1286, %v1408
    %v1412 = vld [vmem:[#allocation5 + $0x20] ss:$0 sm:$0xff]
    %v1413 = vadd.f32 %v1411, %v1412
    %v1414 = vld [vmem:[#allocation7 + $0x500] sm:$0xf]
    %v1415 = vld [vmem:[#allocation7 + $0x508] sm:$0xf]
    %v1416 = vld [vmem:[#allocation7 + $0x510] sm:$0xf]
    %v1417 = vld [vmem:[#allocation7 + $0x518] sm:$0xf]
    %v1418 = vld [vmem:[#allocation7 + $0x520] sm:$0xf]
    %v1419 = vld [vmem:[#allocation7 + $0x528] sm:$0xf]
    %v1420 = vld [vmem:[#allocation7 + $0x530] sm:$0xf]
    %v1421 = vld [vmem:[#allocation7 + $0x538] sm:$0xf]
    %v1422 = vld [vmem:[#allocation7 + $0x540] sm:$0xf]
    %v1423 = vld [vmem:[#allocation7 + $0x548] sm:$0xf]
    %v1424 = vld [vmem:[#allocation7 + $0x550] sm:$0xf]
    %v1425 = vld [vmem:[#allocation7 + $0x558] sm:$0xf]
    %v1426 = vld [vmem:[#allocation7 + $0x560] sm:$0xf]
    %v1427 = vld [vmem:[#allocation7 + $0x568] sm:$0xf]
    %v1428 = vld [vmem:[#allocation7 + $0x570] sm:$0xf]
    %v1429 = vld [vmem:[#allocation7 + $0x578] sm:$0xf]
    %vm1430 = vcmp.ge.f32.partialorder %v1413, 0.0
    %v1431 = vmul.f32 %v1413, 0.01
    %v1432 = vsel %vm1430, %v1413, %v1431
    %v1433 = vmul.f32 %v1432, %v82
    %v1434 = vrot.slane %v1433, 4
    %v1435 = vadd.f32 %v1433, %v1434
    %v1436 = vrot.slane %v1435, 2
    %v1437 = vadd.f32 %v1435, %v1436
    %v1438 = vrot.slane %v1437, 1
    %v1439 = vadd.f32 %v1437, %v1438
    %v1440 = vmul.f32 %v1433, %v1432
    %v1441 = vrot.slane %v1440, 4
    %v1442 = vadd.f32 %v1440, %v1441
    %v1443 = vrot.slane %v1442, 2
    %v1444 = vadd.f32 %v1442, %v1443
    %v1445 = vrot.slane %v1444, 1
    %v1446 = vadd.f32 %v1444, %v1445
    %v1447 = vsel %vm717, %v1439, %v1446
    %v1448 = vpack.c.bf16 %v1447, %v1447
    %v1449 = vunpack.c.l.bf16 %v1448
    %v1450 = vsub.f32 %v1447, %v1449
    %v1451 = vpack.c.bf16 %v1450, %v1450
    %v1468 = vunpack.c.l.b16 %v1414
    %v1469 = vunpack.c.l.b16 %v1415
    %v1470 = vunpack.c.l.b16 %v1416
    %v1471 = vunpack.c.l.b16 %v1417
    %v1472 = vunpack.c.l.b16 %v1418
    %v1473 = vunpack.c.l.b16 %v1419
    %v1474 = vunpack.c.l.b16 %v1420
    %v1475 = vunpack.c.l.b16 %v1421
    %v1476 = vunpack.c.l.b16 %v1422
    %v1477 = vunpack.c.l.b16 %v1423
    %v1478 = vunpack.c.l.b16 %v1424
    %v1479 = vunpack.c.l.b16 %v1425
    %v1480 = vunpack.c.l.b16 %v1426
    %v1481 = vunpack.c.l.b16 %v1427
    %v1482 = vunpack.c.l.b16 %v1428
    %v1483 = vunpack.c.l.b16 %v1429
    %v1484 = vpack.c.b16 %v1469, %v1468
    %v1485 = vpack.c.b16 %v1471, %v1470
    %v1486 = vpack.c.b16 %v1473, %v1472
    %v1487 = vpack.c.b16 %v1475, %v1474
    %v1488 = vpack.c.b16 %v1477, %v1476
    %v1489 = vpack.c.b16 %v1479, %v1478
    %v1490 = vpack.c.b16 %v1481, %v1480
    %v1491 = vpack.c.b16 %v1483, %v1482
    %1500 = vmatpush.bf16.msra.mxu0 %v1491
    %1501 = vmatpush.bf16.msra.mxu0 %v1490
    %1502 = vmatpush.bf16.msra.mxu0 %v1489
    %1503 = vmatpush.bf16.msra.mxu0 %v1488
    %1504 = vmatpush.bf16.msra.mxu0 %v1487
    %1505 = vmatpush.bf16.msra.mxu0 %v1486
    %1506 = vmatpush.bf16.msra.mxu0 %v1485
    %1507 = vmatpush.bf16.msra.mxu0 %v1484
    %1508 = vmatmul.bf16.gmra.mxu0 %v1451
    %v1509 = vpop.f32.mrf.mxu0
    %v1510 = vadd.f32 0.0, %v1509
    %v1511 = vpop.f32.mrf.mxu0
    %1512 = vdwg.mxu0
    %1513 = vmatpush.bf16.msra.mxu0 %v1491
    %1514 = vmatpush.bf16.msra.mxu0 %v1490
    %1515 = vmatpush.bf16.msra.mxu0 %v1489
    %1516 = vmatpush.bf16.msra.mxu0 %v1488
    %1517 = vmatpush.bf16.msra.mxu0 %v1487
    %1518 = vmatpush.bf16.msra.mxu0 %v1486
    %1519 = vmatpush.bf16.msra.mxu0 %v1485
    %1520 = vmatpush.bf16.msra.mxu0 %v1484
    %1521 = vmatmul.bf16.gmra.mxu0 %v1448
    %v1522 = vpop.f32.mrf.mxu0
    %v1523 = vadd.f32 %v1510, %v1522
    %v1524 = vpop.f32.mrf.mxu0
    %1525 = vdwg.mxu0
    %v1526 = vmul.f32 %v1523, 0.0625
    %v1527 = vsel %vm717, %v1526, 0.0
    %v1528 = vsel %vm1002, %v1527, 0.0
    %v1529 = vrot.slane %v1528, 4
    %v1530 = vadd.f32 %v1528, %v1529
    %v1531 = vrot.slane %v1530, 2
    %v1532 = vadd.f32 %v1530, %v1531
    %v1533 = vrot.slane %v1532, 1
    %v1534 = vadd.f32 %v1532, %v1533
    %v1535 = vsel %vm717, 0.0, %v1526
    %v1536 = vsel %vm1002, %v1535, 0.0
    %v1537 = vrot.slane %v1536, 4
    %v1538 = vadd.f32 %v1536, %v1537
    %v1539 = vrot.slane %v1538, 2
    %v1540 = vadd.f32 %v1538, %v1539
    %v1541 = vrot.slane %v1540, 1
    %v1542 = vadd.f32 %v1540, %v1541
    %v1543 = vmul.f32 %v1534, %v1534
    %v1544 = vsub.f32 %v1542, %v1543
    %v1545 = vsub.f32 %v1432, %v1534
    %v1546 = vadd.f32 %v1544, 1e-05
    %v1547 = vrsqrt.pop %v1546
    %v1548 = vmul.f32 %v1547, %v1546
    %v1549 = vmul.f32 %v1548, %v1547
    %v1550 = vmul.f32 0.5, %v1549
    %v1551 = vsub.f32 1.5, %v1550
    %v1552 = vmul.f32 %v1547, %v1551
    %vm1553 = vweird.f32 %v1546
    %vm1554 = vweird.f32 %v1547
    %vm1555 = vmor %vm1553, %vm1554
    %v1556 = vsel %vm1555, %v1547, %v1552
    %v1557 = vmul.f32 %v1545, %v1556
    %v1558 = vld [vmem:[#allocation7 + $0x580] sm:$0xf]
    %v1559 = vld [vmem:[#allocation7 + $0x588] sm:$0xf]
    %v1560 = vld [vmem:[#allocation7 + $0x590] sm:$0xf]
    %v1561 = vld [vmem:[#allocation7 + $0x598] sm:$0xf]
    %v1562 = vld [vmem:[#allocation7 + $0x5a0] sm:$0xf]
    %v1563 = vld [vmem:[#allocation7 + $0x5a8] sm:$0xf]
    %v1564 = vld [vmem:[#allocation7 + $0x5b0] sm:$0xf]
    %v1565 = vld [vmem:[#allocation7 + $0x5b8] sm:$0xf]
    %v1566 = vld [vmem:[#allocation7 + $0x5c0] sm:$0xf]
    %v1567 = vld [vmem:[#allocation7 + $0x5c8] sm:$0xf]
    %v1568 = vld [vmem:[#allocation7 + $0x5d0] sm:$0xf]
    %v1569 = vld [vmem:[#allocation7 + $0x5d8] sm:$0xf]
    %v1570 = vld [vmem:[#allocation7 + $0x5e0] sm:$0xf]
    %v1571 = vld [vmem:[#allocation7 + $0x5e8] sm:$0xf]
    %v1572 = vld [vmem:[#allocation7 + $0x5f0] sm:$0xf]
    %v1573 = vld [vmem:[#allocation7 + $0x5f8] sm:$0xf]
    %v1574 = vld [vmem:[#allocation7 + $0x600] sm:$0xf]
    %v1575 = vld [vmem:[#allocation7 + $0x608] sm:$0xf]
    %v1576 = vld [vmem:[#allocation7 + $0x610] sm:$0xf]
    %v1577 = vld [vmem:[#allocation7 + $0x618] sm:$0xf]
    %v1578 = vld [vmem:[#allocation7 + $0x620] sm:$0xf]
    %v1579 = vld [vmem:[#allocation7 + $0x628] sm:$0xf]
    %v1580 = vld [vmem:[#allocation7 + $0x630] sm:$0xf]
    %v1581 = vld [vmem:[#allocation7 + $0x638] sm:$0xf]
    %v1582 = vld [vmem:[#allocation7 + $0x640] sm:$0xf]
    %v1583 = vld [vmem:[#allocation7 + $0x648] sm:$0xf]
    %v1584 = vld [vmem:[#allocation7 + $0x650] sm:$0xf]
    %v1585 = vld [vmem:[#allocation7 + $0x658] sm:$0xf]
    %v1586 = vld [vmem:[#allocation7 + $0x660] sm:$0xf]
    %v1587 = vld [vmem:[#allocation7 + $0x668] sm:$0xf]
    %v1588 = vld [vmem:[#allocation7 + $0x670] sm:$0xf]
    %v1589 = vld [vmem:[#allocation7 + $0x678] sm:$0xf]
    %v1590 = vpack.c.bf16 %v1557, %v1557
    %v1591 = vunpack.c.l.bf16 %v1590
    %v1592 = vsub.f32 %v1557, %v1591
    %v1593 = vpack.c.bf16 %v1592, %v1592
    %v1610 = vunpack.c.l.b16 %v1558
    %v1611 = vunpack.c.l.b16 %v1559
    %v1612 = vunpack.c.l.b16 %v1560
    %v1613 = vunpack.c.l.b16 %v1561
    %v1614 = vunpack.c.l.b16 %v1562
    %v1615 = vunpack.c.l.b16 %v1563
    %v1616 = vunpack.c.l.b16 %v1564
    %v1617 = vunpack.c.l.b16 %v1565
    %v1618 = vunpack.c.l.b16 %v1566
    %v1619 = vunpack.c.l.b16 %v1567
    %v1620 = vunpack.c.l.b16 %v1568
    %v1621 = vunpack.c.l.b16 %v1569
    %v1622 = vunpack.c.l.b16 %v1570
    %v1623 = vunpack.c.l.b16 %v1571
    %v1624 = vunpack.c.l.b16 %v1572
    %v1625 = vunpack.c.l.b16 %v1573
    %v1626 = vpack.c.b16 %v1611, %v1610
    %v1627 = vpack.c.b16 %v1613, %v1612
    %v1628 = vpack.c.b16 %v1615, %v1614
    %v1629 = vpack.c.b16 %v1617, %v1616
    %v1630 = vpack.c.b16 %v1619, %v1618
    %v1631 = vpack.c.b16 %v1621, %v1620
    %v1632 = vpack.c.b16 %v1623, %v1622
    %v1633 = vpack.c.b16 %v1625, %v1624
    %1642 = vmatpush.bf16.msra.mxu0 %v1633
    %1643 = vmatpush.bf16.msra.mxu0 %v1632
    %1644 = vmatpush.bf16.msra.mxu0 %v1631
    %1645 = vmatpush.bf16.msra.mxu0 %v1630
    %1646 = vmatpush.bf16.msra.mxu0 %v1629
    %1647 = vmatpush.bf16.msra.mxu0 %v1628
    %1648 = vmatpush.bf16.msra.mxu0 %v1627
    %1649 = vmatpush.bf16.msra.mxu0 %v1626
    %1650 = vmatmul.bf16.gmra.mxu0 %v1593
    %v1651 = vpop.f32.mrf.mxu0
    %v1652 = vadd.f32 0.0, %v1651
    %v1653 = vpop.f32.mrf.mxu0
    %1654 = vdwg.mxu0
    %1655 = vmatpush.bf16.msra.mxu0 %v1633
    %1656 = vmatpush.bf16.msra.mxu0 %v1632
    %1657 = vmatpush.bf16.msra.mxu0 %v1631
    %1658 = vmatpush.bf16.msra.mxu0 %v1630
    %1659 = vmatpush.bf16.msra.mxu0 %v1629
    %1660 = vmatpush.bf16.msra.mxu0 %v1628
    %1661 = vmatpush.bf16.msra.mxu0 %v1627
    %1662 = vmatpush.bf16.msra.mxu0 %v1626
    %1663 = vmatmul.bf16.gmra.mxu0 %v1590
    %v1664 = vpop.f32.mrf.mxu0
    %v1665 = vadd.f32 %v1652, %v1664
    %v1666 = vpop.f32.mrf.mxu0
    %1667 = vdwg.mxu0
    %v1684 = vunpack.c.l.b16 %v1574
    %v1685 = vunpack.c.l.b16 %v1575
    %v1686 = vunpack.c.l.b16 %v1576
    %v1687 = vunpack.c.l.b16 %v1577
    %v1688 = vunpack.c.l.b16 %v1578
    %v1689 = vunpack.c.l.b16 %v1579
    %v1690 = vunpack.c.l.b16 %v1580
    %v1691 = vunpack.c.l.b16 %v1581
    %v1692 = vunpack.c.l.b16 %v1582
    %v1693 = vunpack.c.l.b16 %v1583
    %v1694 = vunpack.c.l.b16 %v1584
    %v1695 = vunpack.c.l.b16 %v1585
    %v1696 = vunpack.c.l.b16 %v1586
    %v1697 = vunpack.c.l.b16 %v1587
    %v1698 = vunpack.c.l.b16 %v1588
    %v1699 = vunpack.c.l.b16 %v1589
    %v1700 = vpack.c.b16 %v1685, %v1684
    %v1701 = vpack.c.b16 %v1687, %v1686
    %v1702 = vpack.c.b16 %v1689, %v1688
    %v1703 = vpack.c.b16 %v1691, %v1690
    %v1704 = vpack.c.b16 %v1693, %v1692
    %v1705 = vpack.c.b16 %v1695, %v1694
    %v1706 = vpack.c.b16 %v1697, %v1696
    %v1707 = vpack.c.b16 %v1699, %v1698
    %1716 = vmatpush.bf16.msra.mxu0 %v1707
    %1717 = vmatpush.bf16.msra.mxu0 %v1706
    %1718 = vmatpush.bf16.msra.mxu0 %v1705
    %1719 = vmatpush.bf16.msra.mxu0 %v1704
    %1720 = vmatpush.bf16.msra.mxu0 %v1703
    %1721 = vmatpush.bf16.msra.mxu0 %v1702
    %1722 = vmatpush.bf16.msra.mxu0 %v1701
    %1723 = vmatpush.bf16.msra.mxu0 %v1700
    %1724 = vmatmul.bf16.gmra.mxu0 %v1590
    %v1725 = vpop.f32.mrf.mxu0
    %v1726 = vadd.f32 0.0, %v1725
    %v1727 = vpop.f32.mrf.mxu0
    %1728 = vdwg.mxu0
    %v1729 = vadd.f32 %v1665, %v1726
    %v1730 = vld [vmem:[#allocation5 + $0x40] ss:$0 sm:$0xff]
    %v1731 = vadd.f32 %v1729, %v1730
    %v1732 = vld [vmem:[#allocation7 + $0x680] sm:$0xf]
    %v1733 = vld [vmem:[#allocation7 + $0x688] sm:$0xf]
    %v1734 = vld [vmem:[#allocation7 + $0x690] sm:$0xf]
    %v1735 = vld [vmem:[#allocation7 + $0x698] sm:$0xf]
    %v1736 = vld [vmem:[#allocation7 + $0x6a0] sm:$0xf]
    %v1737 = vld [vmem:[#allocation7 + $0x6a8] sm:$0xf]
    %v1738 = vld [vmem:[#allocation7 + $0x6b0] sm:$0xf]
    %v1739 = vld [vmem:[#allocation7 + $0x6b8] sm:$0xf]
    %v1740 = vld [vmem:[#allocation7 + $0x6c0] sm:$0xf]
    %v1741 = vld [vmem:[#allocation7 + $0x6c8] sm:$0xf]
    %v1742 = vld [vmem:[#allocation7 + $0x6d0] sm:$0xf]
    %v1743 = vld [vmem:[#allocation7 + $0x6d8] sm:$0xf]
    %v1744 = vld [vmem:[#allocation7 + $0x6e0] sm:$0xf]
    %v1745 = vld [vmem:[#allocation7 + $0x6e8] sm:$0xf]
    %v1746 = vld [vmem:[#allocation7 + $0x6f0] sm:$0xf]
    %v1747 = vld [vmem:[#allocation7 + $0x6f8] sm:$0xf]
    %vm1748 = vcmp.ge.f32.partialorder %v1731, 0.0
    %v1749 = vmul.f32 %v1731, 0.01
    %v1750 = vsel %vm1748, %v1731, %v1749
    %v1751 = vmul.f32 %v1750, %v82
    %v1752 = vrot.slane %v1751, 4
    %v1753 = vadd.f32 %v1751, %v1752
    %v1754 = vrot.slane %v1753, 2
    %v1755 = vadd.f32 %v1753, %v1754
    %v1756 = vrot.slane %v1755, 1
    %v1757 = vadd.f32 %v1755, %v1756
    %v1758 = vmul.f32 %v1751, %v1750
    %v1759 = vrot.slane %v1758, 4
    %v1760 = vadd.f32 %v1758, %v1759
    %v1761 = vrot.slane %v1760, 2
    %v1762 = vadd.f32 %v1760, %v1761
    %v1763 = vrot.slane %v1762, 1
    %v1764 = vadd.f32 %v1762, %v1763
    %v1765 = vsel %vm717, %v1757, %v1764
    %v1766 = vpack.c.bf16 %v1765, %v1765
    %v1767 = vunpack.c.l.bf16 %v1766
    %v1768 = vsub.f32 %v1765, %v1767
    %v1769 = vpack.c.bf16 %v1768, %v1768
    %v1786 = vunpack.c.l.b16 %v1732
    %v1787 = vunpack.c.l.b16 %v1733
    %v1788 = vunpack.c.l.b16 %v1734
    %v1789 = vunpack.c.l.b16 %v1735
    %v1790 = vunpack.c.l.b16 %v1736
    %v1791 = vunpack.c.l.b16 %v1737
    %v1792 = vunpack.c.l.b16 %v1738
    %v1793 = vunpack.c.l.b16 %v1739
    %v1794 = vunpack.c.l.b16 %v1740
    %v1795 = vunpack.c.l.b16 %v1741
    %v1796 = vunpack.c.l.b16 %v1742
    %v1797 = vunpack.c.l.b16 %v1743
    %v1798 = vunpack.c.l.b16 %v1744
    %v1799 = vunpack.c.l.b16 %v1745
    %v1800 = vunpack.c.l.b16 %v1746
    %v1801 = vunpack.c.l.b16 %v1747
    %v1802 = vpack.c.b16 %v1787, %v1786
    %v1803 = vpack.c.b16 %v1789, %v1788
    %v1804 = vpack.c.b16 %v1791, %v1790
    %v1805 = vpack.c.b16 %v1793, %v1792
    %v1806 = vpack.c.b16 %v1795, %v1794
    %v1807 = vpack.c.b16 %v1797, %v1796
    %v1808 = vpack.c.b16 %v1799, %v1798
    %v1809 = vpack.c.b16 %v1801, %v1800
    %1818 = vmatpush.bf16.msra.mxu0 %v1809
    %1819 = vmatpush.bf16.msra.mxu0 %v1808
    %1820 = vmatpush.bf16.msra.mxu0 %v1807
    %1821 = vmatpush.bf16.msra.mxu0 %v1806
    %1822 = vmatpush.bf16.msra.mxu0 %v1805
    %1823 = vmatpush.bf16.msra.mxu0 %v1804
    %1824 = vmatpush.bf16.msra.mxu0 %v1803
    %1825 = vmatpush.bf16.msra.mxu0 %v1802
    %1826 = vmatmul.bf16.gmra.mxu0 %v1769
    %v1827 = vpop.f32.mrf.mxu0
    %v1828 = vadd.f32 0.0, %v1827
    %v1829 = vpop.f32.mrf.mxu0
    %1830 = vdwg.mxu0
    %1831 = vmatpush.bf16.msra.mxu0 %v1809
    %1832 = vmatpush.bf16.msra.mxu0 %v1808
    %1833 = vmatpush.bf16.msra.mxu0 %v1807
    %1834 = vmatpush.bf16.msra.mxu0 %v1806
    %1835 = vmatpush.bf16.msra.mxu0 %v1805
    %1836 = vmatpush.bf16.msra.mxu0 %v1804
    %1837 = vmatpush.bf16.msra.mxu0 %v1803
    %1838 = vmatpush.bf16.msra.mxu0 %v1802
    %1839 = vmatmul.bf16.gmra.mxu0 %v1766
    %v1840 = vpop.f32.mrf.mxu0
    %v1841 = vadd.f32 %v1828, %v1840
    %v1842 = vpop.f32.mrf.mxu0
    %1843 = vdwg.mxu0
    %v1844 = vmul.f32 %v1841, 0.25
    %v1845 = vsel %vm717, %v1844, 0.0
    %v1846 = vsel %vm1002, %v1845, 0.0
    %v1847 = vrot.slane %v1846, 4
    %v1848 = vadd.f32 %v1846, %v1847
    %v1849 = vrot.slane %v1848, 2
    %v1850 = vadd.f32 %v1848, %v1849
    %v1851 = vrot.slane %v1850, 1
    %v1852 = vadd.f32 %v1850, %v1851
    %v1853 = vsel %vm717, 0.0, %v1844
    %v1854 = vsel %vm1002, %v1853, 0.0
    %v1855 = vrot.slane %v1854, 4
    %v1856 = vadd.f32 %v1854, %v1855
    %v1857 = vrot.slane %v1856, 2
    %v1858 = vadd.f32 %v1856, %v1857
    %v1859 = vrot.slane %v1858, 1
    %v1860 = vadd.f32 %v1858, %v1859
    %v1861 = vmul.f32 %v1852, %v1852
    %v1862 = vsub.f32 %v1860, %v1861
    %v1863 = vsub.f32 %v1750, %v1852
    %v1864 = vadd.f32 %v1862, 1e-05
    %v1865 = vrsqrt.pop %v1864
    %v1866 = vmul.f32 %v1865, %v1864
    %v1867 = vmul.f32 %v1866, %v1865
    %v1868 = vmul.f32 0.5, %v1867
    %v1869 = vsub.f32 1.5, %v1868
    %v1870 = vmul.f32 %v1865, %v1869
    %vm1871 = vweird.f32 %v1864
    %vm1872 = vweird.f32 %v1865
    %vm1873 = vmor %vm1871, %vm1872
    %v1874 = vsel %vm1873, %v1865, %v1870
    %v1875 = vmul.f32 %v1863, %v1874
    %1876 = vst [vmem:[%s6] sm:$0xff] %v1875
    %s1877 = smul.u32 4, 256
    %s1878 = smul.u32 %s1877, 4
    %s1879 = sshll.u32 %s1878, 4
    %1880 = dma.done [#allocation4], %s1879
    %v1881 = vld [vmem:[#allocation2] sm:$0xf]
    %v1882 = vld [vmem:[#allocation2 + $0x10] sm:$0xf]
    %v1883 = vld [vmem:[#allocation2 + $0x20] sm:$0xf]
    %v1884 = vld [vmem:[#allocation2 + $0x30] sm:$0xf]
    %v1885 = vld [vmem:[#allocation2 + $0x40] sm:$0xf]
    %v1886 = vld [vmem:[#allocation2 + $0x50] sm:$0xf]
    %v1887 = vld [vmem:[#allocation2 + $0x60] sm:$0xf]
    %v1888 = vld [vmem:[#allocation2 + $0x70] sm:$0xf]
    %v1889 = vld [vmem:[#allocation2 + $0x80] sm:$0xf]
    %v1890 = vld [vmem:[#allocation2 + $0x90] sm:$0xf]
    %v1891 = vld [vmem:[#allocation2 + $0xa0] sm:$0xf]
    %v1892 = vld [vmem:[#allocation2 + $0xb0] sm:$0xf]
    %v1893 = vld [vmem:[#allocation2 + $0xc0] sm:$0xf]
    %v1894 = vld [vmem:[#allocation2 + $0xd0] sm:$0xf]
    %v1895 = vld [vmem:[#allocation2 + $0xe0] sm:$0xf]
    %v1896 = vld [vmem:[#allocation2 + $0xf0] sm:$0xf]
    %v1897 = vld [vmem:[#allocation2 + $0x100] sm:$0xf]
    %v1898 = vld [vmem:[#allocation2 + $0x110] sm:$0xf]
    %v1899 = vld [vmem:[#allocation2 + $0x120] sm:$0xf]
    %v1900 = vld [vmem:[#allocation2 + $0x130] sm:$0xf]
    %v1901 = vld [vmem:[#allocation2 + $0x140] sm:$0xf]
    %v1902 = vld [vmem:[#allocation2 + $0x150] sm:$0xf]
    %v1903 = vld [vmem:[#allocation2 + $0x160] sm:$0xf]
    %v1904 = vld [vmem:[#allocation2 + $0x170] sm:$0xf]
    %v1905 = vld [vmem:[#allocation2 + $0x180] sm:$0xf]
    %v1906 = vld [vmem:[#allocation2 + $0x190] sm:$0xf]
    %v1907 = vld [vmem:[#allocation2 + $0x1a0] sm:$0xf]
    %v1908 = vld [vmem:[#allocation2 + $0x1b0] sm:$0xf]
    %v1909 = vld [vmem:[#allocation2 + $0x1c0] sm:$0xf]
    %v1910 = vld [vmem:[#allocation2 + $0x1d0] sm:$0xf]
    %v1911 = vld [vmem:[#allocation2 + $0x1e0] sm:$0xf]
    %v1912 = vld [vmem:[#allocation2 + $0x1f0] sm:$0xf]
    %v1913 = vpack.c.bf16 %v1875, %v1875
    %v1914 = vunpack.c.l.bf16 %v1913
    %v1915 = vsub.f32 %v1875, %v1914
    %v1916 = vpack.c.bf16 %v1915, %v1915
    %v1933 = vunpack.c.l.b16 %v1881
    %v1934 = vunpack.c.l.b16 %v1882
    %v1935 = vunpack.c.l.b16 %v1883
    %v1936 = vunpack.c.l.b16 %v1884
    %v1937 = vunpack.c.l.b16 %v1885
    %v1938 = vunpack.c.l.b16 %v1886
    %v1939 = vunpack.c.l.b16 %v1887
    %v1940 = vunpack.c.l.b16 %v1888
    %v1941 = vunpack.c.l.b16 %v1889
    %v1942 = vunpack.c.l.b16 %v1890
    %v1943 = vunpack.c.l.b16 %v1891
    %v1944 = vunpack.c.l.b16 %v1892
    %v1945 = vunpack.c.l.b16 %v1893
    %v1946 = vunpack.c.l.b16 %v1894
    %v1947 = vunpack.c.l.b16 %v1895
    %v1948 = vunpack.c.l.b16 %v1896
    %v1949 = vpack.c.b16 %v1934, %v1933
    %v1950 = vpack.c.b16 %v1936, %v1935
    %v1951 = vpack.c.b16 %v1938, %v1937
    %v1952 = vpack.c.b16 %v1940, %v1939
    %v1953 = vpack.c.b16 %v1942, %v1941
    %v1954 = vpack.c.b16 %v1944, %v1943
    %v1955 = vpack.c.b16 %v1946, %v1945
    %v1956 = vpack.c.b16 %v1948, %v1947
    %1965 = vmatpush.bf16.msra.mxu0 %v1956
    %1966 = vmatpush.bf16.msra.mxu0 %v1955
    %1967 = vmatpush.bf16.msra.mxu0 %v1954
    %1968 = vmatpush.bf16.msra.mxu0 %v1953
    %1969 = vmatpush.bf16.msra.mxu0 %v1952
    %1970 = vmatpush.bf16.msra.mxu0 %v1951
    %1971 = vmatpush.bf16.msra.mxu0 %v1950
    %1972 = vmatpush.bf16.msra.mxu0 %v1949
    %1973 = vmatmul.bf16.gmra.mxu0 %v1916
    %v1974 = vpop.f32.mrf.mxu0
    %v1975 = vadd.f32 0.0, %v1974
    %v1976 = vpop.f32.mrf.mxu0
    %1977 = vdwg.mxu0
    %1978 = vmatpush.bf16.msra.mxu0 %v1956
    %1979 = vmatpush.bf16.msra.mxu0 %v1955
    %1980 = vmatpush.bf16.msra.mxu0 %v1954
    %1981 = vmatpush.bf16.msra.mxu0 %v1953
    %1982 = vmatpush.bf16.msra.mxu0 %v1952
    %1983 = vmatpush.bf16.msra.mxu0 %v1951
    %1984 = vmatpush.bf16.msra.mxu0 %v1950
    %1985 = vmatpush.bf16.msra.mxu0 %v1949
    %1986 = vmatmul.bf16.gmra.mxu0 %v1913
    %v1987 = vpop.f32.mrf.mxu0
    %v1988 = vadd.f32 %v1975, %v1987
    %v1989 = vpop.f32.mrf.mxu0
    %1990 = vdwg.mxu0
    %v2007 = vunpack.c.l.b16 %v1897
    %v2008 = vunpack.c.l.b16 %v1898
    %v2009 = vunpack.c.l.b16 %v1899
    %v2010 = vunpack.c.l.b16 %v1900
    %v2011 = vunpack.c.l.b16 %v1901
    %v2012 = vunpack.c.l.b16 %v1902
    %v2013 = vunpack.c.l.b16 %v1903
    %v2014 = vunpack.c.l.b16 %v1904
    %v2015 = vunpack.c.l.b16 %v1905
    %v2016 = vunpack.c.l.b16 %v1906
    %v2017 = vunpack.c.l.b16 %v1907
    %v2018 = vunpack.c.l.b16 %v1908
    %v2019 = vunpack.c.l.b16 %v1909
    %v2020 = vunpack.c.l.b16 %v1910
    %v2021 = vunpack.c.l.b16 %v1911
    %v2022 = vunpack.c.l.b16 %v1912
    %v2023 = vpack.c.b16 %v2008, %v2007
    %v2024 = vpack.c.b16 %v2010, %v2009
    %v2025 = vpack.c.b16 %v2012, %v2011
    %v2026 = vpack.c.b16 %v2014, %v2013
    %v2027 = vpack.c.b16 %v2016, %v2015
    %v2028 = vpack.c.b16 %v2018, %v2017
    %v2029 = vpack.c.b16 %v2020, %v2019
    %v2030 = vpack.c.b16 %v2022, %v2021
    %2039 = vmatpush.bf16.msra.mxu0 %v2030
    %2040 = vmatpush.bf16.msra.mxu0 %v2029
    %2041 = vmatpush.bf16.msra.mxu0 %v2028
    %2042 = vmatpush.bf16.msra.mxu0 %v2027
    %2043 = vmatpush.bf16.msra.mxu0 %v2026
    %2044 = vmatpush.bf16.msra.mxu0 %v2025
    %2045 = vmatpush.bf16.msra.mxu0 %v2024
    %2046 = vmatpush.bf16.msra.mxu0 %v2023
    %2047 = vmatmul.bf16.gmra.mxu0 %v1913
    %v2048 = vpop.f32.mrf.mxu0
    %v2049 = vadd.f32 0.0, %v2048
    %v2050 = vpop.f32.mrf.mxu0
    %2051 = vdwg.mxu0
    %v2052 = vadd.f32 %v1988, %v2049
    %v2053 = vld [vmem:[#allocation5 + $0x60] ss:$0 sm:$0xff]
    %v2054 = vadd.f32 %v2052, %v2053
    %v2055 = vld [vmem:[#allocation7 + $0x500] sm:$0xf]
    %v2056 = vld [vmem:[#allocation7 + $0x508] sm:$0xf]
    %v2057 = vld [vmem:[#allocation7 + $0x510] sm:$0xf]
    %v2058 = vld [vmem:[#allocation7 + $0x518] sm:$0xf]
    %v2059 = vld [vmem:[#allocation7 + $0x520] sm:$0xf]
    %v2060 = vld [vmem:[#allocation7 + $0x528] sm:$0xf]
    %v2061 = vld [vmem:[#allocation7 + $0x530] sm:$0xf]
    %v2062 = vld [vmem:[#allocation7 + $0x538] sm:$0xf]
    %v2063 = vld [vmem:[#allocation7 + $0x540] sm:$0xf]
    %v2064 = vld [vmem:[#allocation7 + $0x548] sm:$0xf]
    %v2065 = vld [vmem:[#allocation7 + $0x550] sm:$0xf]
    %v2066 = vld [vmem:[#allocation7 + $0x558] sm:$0xf]
    %v2067 = vld [vmem:[#allocation7 + $0x560] sm:$0xf]
    %v2068 = vld [vmem:[#allocation7 + $0x568] sm:$0xf]
    %v2069 = vld [vmem:[#allocation7 + $0x570] sm:$0xf]
    %v2070 = vld [vmem:[#allocation7 + $0x578] sm:$0xf]
    %v2071 = vmul.f32 %v2054, %v82
    %v2072 = vrot.slane %v2071, 4
    %v2073 = vadd.f32 %v2071, %v2072
    %v2074 = vrot.slane %v2073, 2
    %v2075 = vadd.f32 %v2073, %v2074
    %v2076 = vrot.slane %v2075, 1
    %v2077 = vadd.f32 %v2075, %v2076
    %v2078 = vmul.f32 %v2071, %v2054
    %v2079 = vrot.slane %v2078, 4
    %v2080 = vadd.f32 %v2078, %v2079
    %v2081 = vrot.slane %v2080, 2
    %v2082 = vadd.f32 %v2080, %v2081
    %v2083 = vrot.slane %v2082, 1
    %v2084 = vadd.f32 %v2082, %v2083
    %v2085 = vsel %vm717, %v2077, %v2084
    %v2086 = vpack.c.bf16 %v2085, %v2085
    %v2087 = vunpack.c.l.bf16 %v2086
    %v2088 = vsub.f32 %v2085, %v2087
    %v2089 = vpack.c.bf16 %v2088, %v2088
    %v2106 = vunpack.c.l.b16 %v2055
    %v2107 = vunpack.c.l.b16 %v2056
    %v2108 = vunpack.c.l.b16 %v2057
    %v2109 = vunpack.c.l.b16 %v2058
    %v2110 = vunpack.c.l.b16 %v2059
    %v2111 = vunpack.c.l.b16 %v2060
    %v2112 = vunpack.c.l.b16 %v2061
    %v2113 = vunpack.c.l.b16 %v2062
    %v2114 = vunpack.c.l.b16 %v2063
    %v2115 = vunpack.c.l.b16 %v2064
    %v2116 = vunpack.c.l.b16 %v2065
    %v2117 = vunpack.c.l.b16 %v2066
    %v2118 = vunpack.c.l.b16 %v2067
    %v2119 = vunpack.c.l.b16 %v2068
    %v2120 = vunpack.c.l.b16 %v2069
    %v2121 = vunpack.c.l.b16 %v2070
    %v2122 = vpack.c.b16 %v2107, %v2106
    %v2123 = vpack.c.b16 %v2109, %v2108
    %v2124 = vpack.c.b16 %v2111, %v2110
    %v2125 = vpack.c.b16 %v2113, %v2112
    %v2126 = vpack.c.b16 %v2115, %v2114
    %v2127 = vpack.c.b16 %v2117, %v2116
    %v2128 = vpack.c.b16 %v2119, %v2118
    %v2129 = vpack.c.b16 %v2121, %v2120
    %2138 = vmatpush.bf16.msra.mxu0 %v2129
    %2139 = vmatpush.bf16.msra.mxu0 %v2128
    %2140 = vmatpush.bf16.msra.mxu0 %v2127
    %2141 = vmatpush.bf16.msra.mxu0 %v2126
    %2142 = vmatpush.bf16.msra.mxu0 %v2125
    %2143 = vmatpush.bf16.msra.mxu0 %v2124
    %2144 = vmatpush.bf16.msra.mxu0 %v2123
    %2145 = vmatpush.bf16.msra.mxu0 %v2122
    %2146 = vmatmul.bf16.gmra.mxu0 %v2089
    %v2147 = vpop.f32.mrf.mxu0
    %v2148 = vadd.f32 0.0, %v2147
    %v2149 = vpop.f32.mrf.mxu0
    %2150 = vdwg.mxu0
    %2151 = vmatpush.bf16.msra.mxu0 %v2129
    %2152 = vmatpush.bf16.msra.mxu0 %v2128
    %2153 = vmatpush.bf16.msra.mxu0 %v2127
    %2154 = vmatpush.bf16.msra.mxu0 %v2126
    %2155 = vmatpush.bf16.msra.mxu0 %v2125
    %2156 = vmatpush.bf16.msra.mxu0 %v2124
    %2157 = vmatpush.bf16.msra.mxu0 %v2123
    %2158 = vmatpush.bf16.msra.mxu0 %v2122
    %2159 = vmatmul.bf16.gmra.mxu0 %v2086
    %v2160 = vpop.f32.mrf.mxu0
    %v2161 = vadd.f32 %v2148, %v2160
    %v2162 = vpop.f32.mrf.mxu0
    %2163 = vdwg.mxu0
    %v2164 = vmul.f32 %v2161, 0.0625
    %v2165 = vsel %vm717, %v2164, 0.0
    %v2166 = vsel %vm1002, %v2165, 0.0
    %v2167 = vrot.slane %v2166, 4
    %v2168 = vadd.f32 %v2166, %v2167
    %v2169 = vrot.slane %v2168, 2
    %v2170 = vadd.f32 %v2168, %v2169
    %v2171 = vrot.slane %v2170, 1
    %v2172 = vadd.f32 %v2170, %v2171
    %v2173 = vsel %vm717, 0.0, %v2164
    %v2174 = vsel %vm1002, %v2173, 0.0
    %v2175 = vrot.slane %v2174, 4
    %v2176 = vadd.f32 %v2174, %v2175
    %v2177 = vrot.slane %v2176, 2
    %v2178 = vadd.f32 %v2176, %v2177
    %v2179 = vrot.slane %v2178, 1
    %v2180 = vadd.f32 %v2178, %v2179
    %v2181 = vmul.f32 %v2172, %v2172
    %v2182 = vsub.f32 %v2180, %v2181
    %v2183 = vsub.f32 %v2054, %v2172
    %v2184 = vadd.f32 %v2182, 1e-05
    %v2185 = vrsqrt.pop %v2184
    %v2186 = vmul.f32 %v2185, %v2184
    %v2187 = vmul.f32 %v2186, %v2185
    %v2188 = vmul.f32 0.5, %v2187
    %v2189 = vsub.f32 1.5, %v2188
    %v2190 = vmul.f32 %v2185, %v2189
    %vm2191 = vweird.f32 %v2184
    %vm2192 = vweird.f32 %v2185
    %vm2193 = vmor %vm2191, %vm2192
    %v2194 = vsel %vm2193, %v2185, %v2190
    %v2195 = vmul.f32 %v2183, %v2194
    %v2196 = vmax.f32 %v2195, 0.0
    %v2197 = vld [vmem:[#allocation2 + $0x200] sm:$0xff]
    %v2198 = vld [vmem:[#allocation2 + $0x210] sm:$0xff]
    %v2199 = vld [vmem:[#allocation2 + $0x220] sm:$0xff]
    %v2200 = vld [vmem:[#allocation2 + $0x230] sm:$0xff]
    %v2201 = vld [vmem:[#allocation2 + $0x240] sm:$0xff]
    %v2202 = vld [vmem:[#allocation2 + $0x250] sm:$0xff]
    %v2203 = vld [vmem:[#allocation2 + $0x260] sm:$0xff]
    %v2204 = vld [vmem:[#allocation2 + $0x270] sm:$0xff]
    %v2205 = vld [vmem:[#allocation2 + $0x280] sm:$0xff]
    %v2206 = vld [vmem:[#allocation2 + $0x290] sm:$0xff]
    %v2207 = vld [vmem:[#allocation2 + $0x2a0] sm:$0xff]
    %v2208 = vld [vmem:[#allocation2 + $0x2b0] sm:$0xff]
    %v2209 = vld [vmem:[#allocation2 + $0x2c0] sm:$0xff]
    %v2210 = vld [vmem:[#allocation2 + $0x2d0] sm:$0xff]
    %v2211 = vld [vmem:[#allocation2 + $0x2e0] sm:$0xff]
    %v2212 = vld [vmem:[#allocation2 + $0x2f0] sm:$0xff]
    %v2213 = vld [vmem:[#allocation2 + $0x300] sm:$0xff]
    %v2214 = vld [vmem:[#allocation2 + $0x310] sm:$0xff]
    %v2215 = vld [vmem:[#allocation2 + $0x320] sm:$0xff]
    %v2216 = vld [vmem:[#allocation2 + $0x330] sm:$0xff]
    %v2217 = vld [vmem:[#allocation2 + $0x340] sm:$0xff]
    %v2218 = vld [vmem:[#allocation2 + $0x350] sm:$0xff]
    %v2219 = vld [vmem:[#allocation2 + $0x360] sm:$0xff]
    %v2220 = vld [vmem:[#allocation2 + $0x370] sm:$0xff]
    %v2221 = vld [vmem:[#allocation2 + $0x380] sm:$0xff]
    %v2222 = vld [vmem:[#allocation2 + $0x390] sm:$0xff]
    %v2223 = vld [vmem:[#allocation2 + $0x3a0] sm:$0xff]
    %v2224 = vld [vmem:[#allocation2 + $0x3b0] sm:$0xff]
    %v2225 = vld [vmem:[#allocation2 + $0x3c0] sm:$0xff]
    %v2226 = vld [vmem:[#allocation2 + $0x3d0] sm:$0xff]
    %v2227 = vld [vmem:[#allocation2 + $0x3e0] sm:$0xff]
    %v2228 = vld [vmem:[#allocation2 + $0x3f0] sm:$0xff]
    %v2229 = vpack.c.bf16 %v2196, %v2196
    %v2230 = vunpack.c.l.bf16 %v2229
    %v2231 = vsub.f32 %v2196, %v2230
    %v2232 = vpack.c.bf16 %v2231, %v2231
    %v2249 = vunpack.c.l.b16 %v2197
    %v2250 = vunpack.c.h.b16 %v2197
    %v2251 = vunpack.c.l.b16 %v2198
    %v2252 = vunpack.c.h.b16 %v2198
    %v2253 = vunpack.c.l.b16 %v2199
    %v2254 = vunpack.c.h.b16 %v2199
    %v2255 = vunpack.c.l.b16 %v2200
    %v2256 = vunpack.c.h.b16 %v2200
    %v2257 = vunpack.c.l.b16 %v2201
    %v2258 = vunpack.c.h.b16 %v2201
    %v2259 = vunpack.c.l.b16 %v2202
    %v2260 = vunpack.c.h.b16 %v2202
    %v2261 = vunpack.c.l.b16 %v2203
    %v2262 = vunpack.c.h.b16 %v2203
    %v2263 = vunpack.c.l.b16 %v2204
    %v2264 = vunpack.c.h.b16 %v2204
    %v2265 = vunpack.c.l.b16 %v2205
    %v2266 = vunpack.c.h.b16 %v2205
    %v2267 = vunpack.c.l.b16 %v2206
    %v2268 = vunpack.c.h.b16 %v2206
    %v2269 = vunpack.c.l.b16 %v2207
    %v2270 = vunpack.c.h.b16 %v2207
    %v2271 = vunpack.c.l.b16 %v2208
    %v2272 = vunpack.c.h.b16 %v2208
    %v2273 = vunpack.c.l.b16 %v2209
    %v2274 = vunpack.c.h.b16 %v2209
    %v2275 = vunpack.c.l.b16 %v2210
    %v2276 = vunpack.c.h.b16 %v2210
    %v2277 = vunpack.c.l.b16 %v2211
    %v2278 = vunpack.c.h.b16 %v2211
    %v2279 = vunpack.c.l.b16 %v2212
    %v2280 = vunpack.c.h.b16 %v2212
    %v2281 = vpack.c.b16 %v2251, %v2249
    %v2282 = vpack.c.b16 %v2252, %v2250
    %v2283 = vpack.c.b16 %v2255, %v2253
    %v2284 = vpack.c.b16 %v2256, %v2254
    %v2285 = vpack.c.b16 %v2259, %v2257
    %v2286 = vpack.c.b16 %v2260, %v2258
    %v2287 = vpack.c.b16 %v2263, %v2261
    %v2288 = vpack.c.b16 %v2264, %v2262
    %v2289 = vpack.c.b16 %v2267, %v2265
    %v2290 = vpack.c.b16 %v2268, %v2266
    %v2291 = vpack.c.b16 %v2271, %v2269
    %v2292 = vpack.c.b16 %v2272, %v2270
    %v2293 = vpack.c.b16 %v2275, %v2273
    %v2294 = vpack.c.b16 %v2276, %v2274
    %v2295 = vpack.c.b16 %v2279, %v2277
    %v2296 = vpack.c.b16 %v2280, %v2278
    %2313 = vmatpush.bf16.msra.mxu0 %v2295
    %2314 = vmatpush.bf16.msra.mxu0 %v2293
    %2315 = vmatpush.bf16.msra.mxu0 %v2291
    %2316 = vmatpush.bf16.msra.mxu0 %v2289
    %2317 = vmatpush.bf16.msra.mxu0 %v2287
    %2318 = vmatpush.bf16.msra.mxu0 %v2285
    %2319 = vmatpush.bf16.msra.mxu0 %v2283
    %2320 = vmatpush.bf16.msra.mxu0 %v2281
    %2321 = vmatmul.bf16.gmra.mxu0 %v2232
    %v2322 = vpop.f32.mrf.mxu0
    %v2323 = vadd.f32 0.0, %v2322
    %v2324 = vpop.f32.mrf.mxu0
    %2325 = vdwg.mxu0
    %2326 = vmatpush.bf16.msra.mxu0 %v2296
    %2327 = vmatpush.bf16.msra.mxu0 %v2294
    %2328 = vmatpush.bf16.msra.mxu0 %v2292
    %2329 = vmatpush.bf16.msra.mxu0 %v2290
    %2330 = vmatpush.bf16.msra.mxu0 %v2288
    %2331 = vmatpush.bf16.msra.mxu0 %v2286
    %2332 = vmatpush.bf16.msra.mxu0 %v2284
    %2333 = vmatpush.bf16.msra.mxu0 %v2282
    %2334 = vmatmul.bf16.gmra.mxu0 %v2232
    %v2335 = vpop.f32.mrf.mxu0
    %v2336 = vadd.f32 0.0, %v2335
    %v2337 = vpop.f32.mrf.mxu0
    %2338 = vdwg.mxu0
    %2339 = vmatpush.bf16.msra.mxu0 %v2295
    %2340 = vmatpush.bf16.msra.mxu0 %v2293
    %2341 = vmatpush.bf16.msra.mxu0 %v2291
    %2342 = vmatpush.bf16.msra.mxu0 %v2289
    %2343 = vmatpush.bf16.msra.mxu0 %v2287
    %2344 = vmatpush.bf16.msra.mxu0 %v2285
    %2345 = vmatpush.bf16.msra.mxu0 %v2283
    %2346 = vmatpush.bf16.msra.mxu0 %v2281
    %2347 = vmatmul.bf16.gmra.mxu0 %v2229
    %v2348 = vpop.f32.mrf.mxu0
    %v2349 = vadd.f32 %v2323, %v2348
    %v2350 = vpop.f32.mrf.mxu0
    %2351 = vdwg.mxu0
    %2352 = vmatpush.bf16.msra.mxu0 %v2296
    %2353 = vmatpush.bf16.msra.mxu0 %v2294
    %2354 = vmatpush.bf16.msra.mxu0 %v2292
    %2355 = vmatpush.bf16.msra.mxu0 %v2290
    %2356 = vmatpush.bf16.msra.mxu0 %v2288
    %2357 = vmatpush.bf16.msra.mxu0 %v2286
    %2358 = vmatpush.bf16.msra.mxu0 %v2284
    %2359 = vmatpush.bf16.msra.mxu0 %v2282
    %2360 = vmatmul.bf16.gmra.mxu0 %v2229
    %v2361 = vpop.f32.mrf.mxu0
    %v2362 = vadd.f32 %v2336, %v2361
    %v2363 = vpop.f32.mrf.mxu0
    %2364 = vdwg.mxu0
    %v2381 = vunpack.c.l.b16 %v2213
    %v2382 = vunpack.c.h.b16 %v2213
    %v2383 = vunpack.c.l.b16 %v2214
    %v2384 = vunpack.c.h.b16 %v2214
    %v2385 = vunpack.c.l.b16 %v2215
    %v2386 = vunpack.c.h.b16 %v2215
    %v2387 = vunpack.c.l.b16 %v2216
    %v2388 = vunpack.c.h.b16 %v2216
    %v2389 = vunpack.c.l.b16 %v2217
    %v2390 = vunpack.c.h.b16 %v2217
    %v2391 = vunpack.c.l.b16 %v2218
    %v2392 = vunpack.c.h.b16 %v2218
    %v2393 = vunpack.c.l.b16 %v2219
    %v2394 = vunpack.c.h.b16 %v2219
    %v2395 = vunpack.c.l.b16 %v2220
    %v2396 = vunpack.c.h.b16 %v2220
    %v2397 = vunpack.c.l.b16 %v2221
    %v2398 = vunpack.c.h.b16 %v2221
    %v2399 = vunpack.c.l.b16 %v2222
    %v2400 = vunpack.c.h.b16 %v2222
    %v2401 = vunpack.c.l.b16 %v2223
    %v2402 = vunpack.c.h.b16 %v2223
    %v2403 = vunpack.c.l.b16 %v2224
    %v2404 = vunpack.c.h.b16 %v2224
    %v2405 = vunpack.c.l.b16 %v2225
    %v2406 = vunpack.c.h.b16 %v2225
    %v2407 = vunpack.c.l.b16 %v2226
    %v2408 = vunpack.c.h.b16 %v2226
    %v2409 = vunpack.c.l.b16 %v2227
    %v2410 = vunpack.c.h.b16 %v2227
    %v2411 = vunpack.c.l.b16 %v2228
    %v2412 = vunpack.c.h.b16 %v2228
    %v2413 = vpack.c.b16 %v2383, %v2381
    %v2414 = vpack.c.b16 %v2384, %v2382
    %v2415 = vpack.c.b16 %v2387, %v2385
    %v2416 = vpack.c.b16 %v2388, %v2386
    %v2417 = vpack.c.b16 %v2391, %v2389
    %v2418 = vpack.c.b16 %v2392, %v2390
    %v2419 = vpack.c.b16 %v2395, %v2393
    %v2420 = vpack.c.b16 %v2396, %v2394
    %v2421 = vpack.c.b16 %v2399, %v2397
    %v2422 = vpack.c.b16 %v2400, %v2398
    %v2423 = vpack.c.b16 %v2403, %v2401
    %v2424 = vpack.c.b16 %v2404, %v2402
    %v2425 = vpack.c.b16 %v2407, %v2405
    %v2426 = vpack.c.b16 %v2408, %v2406
    %v2427 = vpack.c.b16 %v2411, %v2409
    %v2428 = vpack.c.b16 %v2412, %v2410
    %2445 = vmatpush.bf16.msra.mxu0 %v2427
    %2446 = vmatpush.bf16.msra.mxu0 %v2425
    %2447 = vmatpush.bf16.msra.mxu0 %v2423
    %2448 = vmatpush.bf16.msra.mxu0 %v2421
    %2449 = vmatpush.bf16.msra.mxu0 %v2419
    %2450 = vmatpush.bf16.msra.mxu0 %v2417
    %2451 = vmatpush.bf16.msra.mxu0 %v2415
    %2452 = vmatpush.bf16.msra.mxu0 %v2413
    %2453 = vmatmul.bf16.gmra.mxu0 %v2229
    %v2454 = vpop.f32.mrf.mxu0
    %v2455 = vadd.f32 0.0, %v2454
    %v2456 = vpop.f32.mrf.mxu0
    %2457 = vdwg.mxu0
    %2458 = vmatpush.bf16.msra.mxu0 %v2428
    %2459 = vmatpush.bf16.msra.mxu0 %v2426
    %2460 = vmatpush.bf16.msra.mxu0 %v2424
    %2461 = vmatpush.bf16.msra.mxu0 %v2422
    %2462 = vmatpush.bf16.msra.mxu0 %v2420
    %2463 = vmatpush.bf16.msra.mxu0 %v2418
    %2464 = vmatpush.bf16.msra.mxu0 %v2416
    %2465 = vmatpush.bf16.msra.mxu0 %v2414
    %2466 = vmatmul.bf16.gmra.mxu0 %v2229
    %v2467 = vpop.f32.mrf.mxu0
    %v2468 = vadd.f32 0.0, %v2467
    %v2469 = vpop.f32.mrf.mxu0
    %2470 = vdwg.mxu0
    %v2471 = vadd.f32 %v2349, %v2455
    %v2472 = vadd.f32 %v2362, %v2468
    %s2473 = scalar_lea.vmem [#allocation5], 128
    %v2474 = vld [vmem:[%s2473] ss:$8 sm:$0x3]
    %v2476 = vperm.slane %v2474, 0
    %v2477 = vperm.slane %v2474, 1
    %v2480 = vadd.f32 %v2471, %v2476
    %v2481 = vadd.f32 %v2472, %v2477
    %v2482 = vld [vmem:[#allocation7 + $0x200] sm:$0xff]
    %v2483 = vld [vmem:[#allocation7 + $0x208] sm:$0xff]
    %v2484 = vld [vmem:[#allocation7 + $0x210] sm:$0xff]
    %v2485 = vld [vmem:[#allocation7 + $0x218] sm:$0xff]
    %v2486 = vld [vmem:[#allocation7 + $0x220] sm:$0xff]
    %v2487 = vld [vmem:[#allocation7 + $0x228] sm:$0xff]
    %v2488 = vld [vmem:[#allocation7 + $0x230] sm:$0xff]
    %v2489 = vld [vmem:[#allocation7 + $0x238] sm:$0xff]
    %v2490 = vld [vmem:[#allocation7 + $0x240] sm:$0xff]
    %v2491 = vld [vmem:[#allocation7 + $0x248] sm:$0xff]
    %v2492 = vld [vmem:[#allocation7 + $0x250] sm:$0xff]
    %v2493 = vld [vmem:[#allocation7 + $0x258] sm:$0xff]
    %v2494 = vld [vmem:[#allocation7 + $0x260] sm:$0xff]
    %v2495 = vld [vmem:[#allocation7 + $0x268] sm:$0xff]
    %v2496 = vld [vmem:[#allocation7 + $0x270] sm:$0xff]
    %v2497 = vld [vmem:[#allocation7 + $0x278] sm:$0xff]
    %v2498 = vld [vmem:[#allocation7 + $0x280] sm:$0xff]
    %v2499 = vld [vmem:[#allocation7 + $0x288] sm:$0xff]
    %v2500 = vld [vmem:[#allocation7 + $0x290] sm:$0xff]
    %v2501 = vld [vmem:[#allocation7 + $0x298] sm:$0xff]
    %v2502 = vld [vmem:[#allocation7 + $0x2a0] sm:$0xff]
    %v2503 = vld [vmem:[#allocation7 + $0x2a8] sm:$0xff]
    %v2504 = vld [vmem:[#allocation7 + $0x2b0] sm:$0xff]
    %v2505 = vld [vmem:[#allocation7 + $0x2b8] sm:$0xff]
    %v2506 = vld [vmem:[#allocation7 + $0x2c0] sm:$0xff]
    %v2507 = vld [vmem:[#allocation7 + $0x2c8] sm:$0xff]
    %v2508 = vld [vmem:[#allocation7 + $0x2d0] sm:$0xff]
    %v2509 = vld [vmem:[#allocation7 + $0x2d8] sm:$0xff]
    %v2510 = vld [vmem:[#allocation7 + $0x2e0] sm:$0xff]
    %v2511 = vld [vmem:[#allocation7 + $0x2e8] sm:$0xff]
    %v2512 = vld [vmem:[#allocation7 + $0x2f0] sm:$0xff]
    %v2513 = vld [vmem:[#allocation7 + $0x2f8] sm:$0xff]
    %v2514 = vmul.f32 %v2480, %v82
    %v2515 = vmul.f32 %v2481, %v82
    %v2516 = vrot.slane %v2514, 4
    %v2517 = vadd.f32 %v2514, %v2516
    %v2518 = vrot.slane %v2517, 2
    %v2519 = vadd.f32 %v2517, %v2518
    %v2520 = vrot.slane %v2519, 1
    %v2521 = vadd.f32 %v2519, %v2520
    %v2522 = vrot.slane %v2515, 4
    %v2523 = vadd.f32 %v2515, %v2522
    %v2524 = vrot.slane %v2523, 2
    %v2525 = vadd.f32 %v2523, %v2524
    %v2526 = vrot.slane %v2525, 1
    %v2527 = vadd.f32 %v2525, %v2526
    %v2528 = vmul.f32 %v2514, %v2480
    %v2529 = vmul.f32 %v2515, %v2481
    %v2530 = vrot.slane %v2528, 4
    %v2531 = vadd.f32 %v2528, %v2530
    %v2532 = vrot.slane %v2531, 2
    %v2533 = vadd.f32 %v2531, %v2532
    %v2534 = vrot.slane %v2533, 1
    %v2535 = vadd.f32 %v2533, %v2534
    %v2536 = vrot.slane %v2529, 4
    %v2537 = vadd.f32 %v2529, %v2536
    %v2538 = vrot.slane %v2537, 2
    %v2539 = vadd.f32 %v2537, %v2538
    %v2540 = vrot.slane %v2539, 1
    %v2541 = vadd.f32 %v2539, %v2540
    %v2542 = vsel %vm717, %v2521, %v2535
    %v2543 = vsel %vm717, %v2527, %v2541
    %v2544 = vpack.c.bf16 %v2543, %v2542
    %v2545 = vunpack.c.l.bf16 %v2544
    %v2546 = vunpack.c.h.bf16 %v2544
    %v2547 = vsub.f32 %v2542, %v2545
    %v2548 = vsub.f32 %v2543, %v2546
    %v2549 = vpack.c.bf16 %v2547, %v2547
    %v2550 = vpack.c.bf16 %v2548, %v2548
    %v2583 = vunpack.c.l.b16 %v2482
    %v2584 = vunpack.c.h.b16 %v2482
    %v2585 = vunpack.c.l.b16 %v2483
    %v2586 = vunpack.c.h.b16 %v2483
    %v2587 = vunpack.c.l.b16 %v2484
    %v2588 = vunpack.c.h.b16 %v2484
    %v2589 = vunpack.c.l.b16 %v2485
    %v2590 = vunpack.c.h.b16 %v2485
    %v2591 = vunpack.c.l.b16 %v2486
    %v2592 = vunpack.c.h.b16 %v2486
    %v2593 = vunpack.c.l.b16 %v2487
    %v2594 = vunpack.c.h.b16 %v2487
    %v2595 = vunpack.c.l.b16 %v2488
    %v2596 = vunpack.c.h.b16 %v2488
    %v2597 = vunpack.c.l.b16 %v2489
    %v2598 = vunpack.c.h.b16 %v2489
    %v2599 = vunpack.c.l.b16 %v2490
    %v2600 = vunpack.c.h.b16 %v2490
    %v2601 = vunpack.c.l.b16 %v2491
    %v2602 = vunpack.c.h.b16 %v2491
    %v2603 = vunpack.c.l.b16 %v2492
    %v2604 = vunpack.c.h.b16 %v2492
    %v2605 = vunpack.c.l.b16 %v2493
    %v2606 = vunpack.c.h.b16 %v2493
    %v2607 = vunpack.c.l.b16 %v2494
    %v2608 = vunpack.c.h.b16 %v2494
    %v2609 = vunpack.c.l.b16 %v2495
    %v2610 = vunpack.c.h.b16 %v2495
    %v2611 = vunpack.c.l.b16 %v2496
    %v2612 = vunpack.c.h.b16 %v2496
    %v2613 = vunpack.c.l.b16 %v2497
    %v2614 = vunpack.c.h.b16 %v2497
    %v2615 = vunpack.c.l.b16 %v2498
    %v2616 = vunpack.c.h.b16 %v2498
    %v2617 = vunpack.c.l.b16 %v2499
    %v2618 = vunpack.c.h.b16 %v2499
    %v2619 = vunpack.c.l.b16 %v2500
    %v2620 = vunpack.c.h.b16 %v2500
    %v2621 = vunpack.c.l.b16 %v2501
    %v2622 = vunpack.c.h.b16 %v2501
    %v2623 = vunpack.c.l.b16 %v2502
    %v2624 = vunpack.c.h.b16 %v2502
    %v2625 = vunpack.c.l.b16 %v2503
    %v2626 = vunpack.c.h.b16 %v2503
    %v2627 = vunpack.c.l.b16 %v2504
    %v2628 = vunpack.c.h.b16 %v2504
    %v2629 = vunpack.c.l.b16 %v2505
    %v2630 = vunpack.c.h.b16 %v2505
    %v2631 = vunpack.c.l.b16 %v2506
    %v2632 = vunpack.c.h.b16 %v2506
    %v2633 = vunpack.c.l.b16 %v2507
    %v2634 = vunpack.c.h.b16 %v2507
    %v2635 = vunpack.c.l.b16 %v2508
    %v2636 = vunpack.c.h.b16 %v2508
    %v2637 = vunpack.c.l.b16 %v2509
    %v2638 = vunpack.c.h.b16 %v2509
    %v2639 = vunpack.c.l.b16 %v2510
    %v2640 = vunpack.c.h.b16 %v2510
    %v2641 = vunpack.c.l.b16 %v2511
    %v2642 = vunpack.c.h.b16 %v2511
    %v2643 = vunpack.c.l.b16 %v2512
    %v2644 = vunpack.c.h.b16 %v2512
    %v2645 = vunpack.c.l.b16 %v2513
    %v2646 = vunpack.c.h.b16 %v2513
    %v2647 = vpack.c.b16 %v2585, %v2583
    %v2648 = vpack.c.b16 %v2586, %v2584
    %v2649 = vpack.c.b16 %v2589, %v2587
    %v2650 = vpack.c.b16 %v2590, %v2588
    %v2651 = vpack.c.b16 %v2593, %v2591
    %v2652 = vpack.c.b16 %v2594, %v2592
    %v2653 = vpack.c.b16 %v2597, %v2595
    %v2654 = vpack.c.b16 %v2598, %v2596
    %v2655 = vpack.c.b16 %v2601, %v2599
    %v2656 = vpack.c.b16 %v2602, %v2600
    %v2657 = vpack.c.b16 %v2605, %v2603
    %v2658 = vpack.c.b16 %v2606, %v2604
    %v2659 = vpack.c.b16 %v2609, %v2607
    %v2660 = vpack.c.b16 %v2610, %v2608
    %v2661 = vpack.c.b16 %v2613, %v2611
    %v2662 = vpack.c.b16 %v2614, %v2612
    %v2663 = vpack.c.b16 %v2617, %v2615
    %v2664 = vpack.c.b16 %v2618, %v2616
    %v2665 = vpack.c.b16 %v2621, %v2619
    %v2666 = vpack.c.b16 %v2622, %v2620
    %v2667 = vpack.c.b16 %v2625, %v2623
    %v2668 = vpack.c.b16 %v2626, %v2624
    %v2669 = vpack.c.b16 %v2629, %v2627
    %v2670 = vpack.c.b16 %v2630, %v2628
    %v2671 = vpack.c.b16 %v2633, %v2631
    %v2672 = vpack.c.b16 %v2634, %v2632
    %v2673 = vpack.c.b16 %v2637, %v2635
    %v2674 = vpack.c.b16 %v2638, %v2636
    %v2675 = vpack.c.b16 %v2641, %v2639
    %v2676 = vpack.c.b16 %v2642, %v2640
    %v2677 = vpack.c.b16 %v2645, %v2643
    %v2678 = vpack.c.b16 %v2646, %v2644
    %2711 = vmatpush.bf16.msra.mxu0 %v2661
    %2712 = vmatpush.bf16.msra.mxu0 %v2659
    %2713 = vmatpush.bf16.msra.mxu0 %v2657
    %2714 = vmatpush.bf16.msra.mxu0 %v2655
    %2715 = vmatpush.bf16.msra.mxu0 %v2653
    %2716 = vmatpush.bf16.msra.mxu0 %v2651
    %2717 = vmatpush.bf16.msra.mxu0 %v2649
    %2718 = vmatpush.bf16.msra.mxu0 %v2647
    %2719 = vmatmul.bf16.gmra.mxu0 %v2549
    %v2720 = vpop.f32.mrf.mxu0
    %v2721 = vadd.f32 0.0, %v2720
    %v2722 = vpop.f32.mrf.mxu0
    %2723 = vdwg.mxu0
    %2724 = vmatpush.bf16.msra.mxu0 %v2677
    %2725 = vmatpush.bf16.msra.mxu0 %v2675
    %2726 = vmatpush.bf16.msra.mxu0 %v2673
    %2727 = vmatpush.bf16.msra.mxu0 %v2671
    %2728 = vmatpush.bf16.msra.mxu0 %v2669
    %2729 = vmatpush.bf16.msra.mxu0 %v2667
    %2730 = vmatpush.bf16.msra.mxu0 %v2665
    %2731 = vmatpush.bf16.msra.mxu0 %v2663
    %2732 = vmatmul.bf16.gmra.mxu0 %v2550
    %v2733 = vpop.f32.mrf.mxu0
    %v2734 = vadd.f32 %v2721, %v2733
    %v2735 = vpop.f32.mrf.mxu0
    %2736 = vdwg.mxu0
    %2737 = vmatpush.bf16.msra.mxu0 %v2662
    %2738 = vmatpush.bf16.msra.mxu0 %v2660
    %2739 = vmatpush.bf16.msra.mxu0 %v2658
    %2740 = vmatpush.bf16.msra.mxu0 %v2656
    %2741 = vmatpush.bf16.msra.mxu0 %v2654
    %2742 = vmatpush.bf16.msra.mxu0 %v2652
    %2743 = vmatpush.bf16.msra.mxu0 %v2650
    %2744 = vmatpush.bf16.msra.mxu0 %v2648
    %2745 = vmatmul.bf16.gmra.mxu0 %v2549
    %v2746 = vpop.f32.mrf.mxu0
    %v2747 = vadd.f32 0.0, %v2746
    %v2748 = vpop.f32.mrf.mxu0
    %2749 = vdwg.mxu0
    %2750 = vmatpush.bf16.msra.mxu0 %v2678
    %2751 = vmatpush.bf16.msra.mxu0 %v2676
    %2752 = vmatpush.bf16.msra.mxu0 %v2674
    %2753 = vmatpush.bf16.msra.mxu0 %v2672
    %2754 = vmatpush.bf16.msra.mxu0 %v2670
    %2755 = vmatpush.bf16.msra.mxu0 %v2668
    %2756 = vmatpush.bf16.msra.mxu0 %v2666
    %2757 = vmatpush.bf16.msra.mxu0 %v2664
    %2758 = vmatmul.bf16.gmra.mxu0 %v2550
    %v2759 = vpop.f32.mrf.mxu0
    %v2760 = vadd.f32 %v2747, %v2759
    %v2761 = vpop.f32.mrf.mxu0
    %2762 = vdwg.mxu0
    %v2764 = vunpack.c.l.b16 %v2544
    %v2765 = vunpack.c.h.b16 %v2544
    %v2766 = vpack.c.b16 %v2764, %v2764
    %v2767 = vpack.c.b16 %v2765, %v2765
    %2770 = vmatpush.bf16.msra.mxu0 %v2661
    %2771 = vmatpush.bf16.msra.mxu0 %v2659
    %2772 = vmatpush.bf16.msra.mxu0 %v2657
    %2773 = vmatpush.bf16.msra.mxu0 %v2655
    %2774 = vmatpush.bf16.msra.mxu0 %v2653
    %2775 = vmatpush.bf16.msra.mxu0 %v2651
    %2776 = vmatpush.bf16.msra.mxu0 %v2649
    %2777 = vmatpush.bf16.msra.mxu0 %v2647
    %2778 = vmatmul.bf16.gmra.mxu0 %v2766
    %v2779 = vpop.f32.mrf.mxu0
    %v2780 = vadd.f32 %v2734, %v2779
    %v2781 = vpop.f32.mrf.mxu0
    %2782 = vdwg.mxu0
    %2783 = vmatpush.bf16.msra.mxu0 %v2677
    %2784 = vmatpush.bf16.msra.mxu0 %v2675
    %2785 = vmatpush.bf16.msra.mxu0 %v2673
    %2786 = vmatpush.bf16.msra.mxu0 %v2671
    %2787 = vmatpush.bf16.msra.mxu0 %v2669
    %2788 = vmatpush.bf16.msra.mxu0 %v2667
    %2789 = vmatpush.bf16.msra.mxu0 %v2665
    %2790 = vmatpush.bf16.msra.mxu0 %v2663
    %2791 = vmatmul.bf16.gmra.mxu0 %v2767
    %v2792 = vpop.f32.mrf.mxu0
    %v2793 = vadd.f32 %v2780, %v2792
    %v2794 = vpop.f32.mrf.mxu0
    %2795 = vdwg.mxu0
    %2796 = vmatpush.bf16.msra.mxu0 %v2662
    %2797 = vmatpush.bf16.msra.mxu0 %v2660
    %2798 = vmatpush.bf16.msra.mxu0 %v2658
    %2799 = vmatpush.bf16.msra.mxu0 %v2656
    %2800 = vmatpush.bf16.msra.mxu0 %v2654
    %2801 = vmatpush.bf16.msra.mxu0 %v2652
    %2802 = vmatpush.bf16.msra.mxu0 %v2650
    %2803 = vmatpush.bf16.msra.mxu0 %v2648
    %2804 = vmatmul.bf16.gmra.mxu0 %v2766
    %v2805 = vpop.f32.mrf.mxu0
    %v2806 = vadd.f32 %v2760, %v2805
    %v2807 = vpop.f32.mrf.mxu0
    %2808 = vdwg.mxu0
    %2809 = vmatpush.bf16.msra.mxu0 %v2678
    %2810 = vmatpush.bf16.msra.mxu0 %v2676
    %2811 = vmatpush.bf16.msra.mxu0 %v2674
    %2812 = vmatpush.bf16.msra.mxu0 %v2672
    %2813 = vmatpush.bf16.msra.mxu0 %v2670
    %2814 = vmatpush.bf16.msra.mxu0 %v2668
    %2815 = vmatpush.bf16.msra.mxu0 %v2666
    %2816 = vmatpush.bf16.msra.mxu0 %v2664
    %2817 = vmatmul.bf16.gmra.mxu0 %v2767
    %v2818 = vpop.f32.mrf.mxu0
    %v2819 = vadd.f32 %v2806, %v2818
    %v2820 = vpop.f32.mrf.mxu0
    %2821 = vdwg.mxu0
    %v2822 = vmul.f32 %v2793, 0.016666668
    %v2823 = vmul.f32 %v2819, 0.016666668
    %v2824 = vsel %vm717, %v2822, 0.0
    %v2825 = vsel %vm717, %v2823, 0.0
    %v2826 = vsel %vm1002, %v2824, 0.0
    %v2827 = vrot.slane %v2826, 4
    %v2828 = vadd.f32 %v2826, %v2827
    %v2829 = vrot.slane %v2828, 2
    %v2830 = vadd.f32 %v2828, %v2829
    %v2831 = vrot.slane %v2830, 1
    %v2832 = vadd.f32 %v2830, %v2831
    %v2833 = vsel %vm1002, %v2825, 0.0
    %v2834 = vrot.slane %v2833, 4
    %v2835 = vadd.f32 %v2833, %v2834
    %v2836 = vrot.slane %v2835, 2
    %v2837 = vadd.f32 %v2835, %v2836
    %v2838 = vrot.slane %v2837, 1
    %v2839 = vadd.f32 %v2837, %v2838
    %v2840 = vsel %vm717, 0.0, %v2822
    %v2841 = vsel %vm717, 0.0, %v2823
    %v2842 = vsel %vm1002, %v2840, 0.0
    %v2843 = vrot.slane %v2842, 4
    %v2844 = vadd.f32 %v2842, %v2843
    %v2845 = vrot.slane %v2844, 2
    %v2846 = vadd.f32 %v2844, %v2845
    %v2847 = vrot.slane %v2846, 1
    %v2848 = vadd.f32 %v2846, %v2847
    %v2849 = vsel %vm1002, %v2841, 0.0
    %v2850 = vrot.slane %v2849, 4
    %v2851 = vadd.f32 %v2849, %v2850
    %v2852 = vrot.slane %v2851, 2
    %v2853 = vadd.f32 %v2851, %v2852
    %v2854 = vrot.slane %v2853, 1
    %v2855 = vadd.f32 %v2853, %v2854
    %v2856 = vmul.f32 %v2832, %v2832
    %v2857 = vmul.f32 %v2839, %v2839
    %v2858 = vsub.f32 %v2848, %v2856
    %v2859 = vsub.f32 %v2855, %v2857
    %v2860 = vsub.f32 %v2480, %v2832
    %v2861 = vsub.f32 %v2481, %v2839
    %v2862 = vadd.f32 %v2858, 1e-05
    %v2863 = vadd.f32 %v2859, 1e-05
    %v2864 = vrsqrt.pop %v2862
    %v2865 = vmul.f32 %v2864, %v2862
    %v2866 = vmul.f32 %v2865, %v2864
    %v2867 = vmul.f32 0.5, %v2866
    %v2868 = vsub.f32 1.5, %v2867
    %v2869 = vmul.f32 %v2864, %v2868
    %vm2870 = vweird.f32 %v2862
    %vm2871 = vweird.f32 %v2864
    %vm2872 = vmor %vm2870, %vm2871
    %v2873 = vsel %vm2872, %v2864, %v2869
    %v2874 = vrsqrt.pop %v2863
    %v2875 = vmul.f32 %v2874, %v2863
    %v2876 = vmul.f32 %v2875, %v2874
    %v2877 = vmul.f32 0.5, %v2876
    %v2878 = vsub.f32 1.5, %v2877
    %v2879 = vmul.f32 %v2874, %v2878
    %vm2880 = vweird.f32 %v2863
    %vm2881 = vweird.f32 %v2874
    %vm2882 = vmor %vm2880, %vm2881
    %v2883 = vsel %vm2882, %v2874, %v2879
    %v2884 = vmul.f32 %v2860, %v2873
    %v2885 = vmul.f32 %v2861, %v2883
    %v2886 = vmax.f32 %v2884, 0.0
    %v2887 = vmax.f32 %v2885, 0.0
    %v2888 = vld [vmem:[#allocation2 + $0x400] sm:$0xff]
    %v2889 = vld [vmem:[#allocation2 + $0x408] sm:$0xff]
    %v2890 = vld [vmem:[#allocation2 + $0x410] sm:$0xff]
    %v2891 = vld [vmem:[#allocation2 + $0x418] sm:$0xff]
    %v2892 = vld [vmem:[#allocation2 + $0x420] sm:$0xff]
    %v2893 = vld [vmem:[#allocation2 + $0x428] sm:$0xff]
    %v2894 = vld [vmem:[#allocation2 + $0x430] sm:$0xff]
    %v2895 = vld [vmem:[#allocation2 + $0x438] sm:$0xff]
    %v2896 = vld [vmem:[#allocation2 + $0x440] sm:$0xff]
    %v2897 = vld [vmem:[#allocation2 + $0x448] sm:$0xff]
    %v2898 = vld [vmem:[#allocation2 + $0x450] sm:$0xff]
    %v2899 = vld [vmem:[#allocation2 + $0x458] sm:$0xff]
    %v2900 = vld [vmem:[#allocation2 + $0x460] sm:$0xff]
    %v2901 = vld [vmem:[#allocation2 + $0x468] sm:$0xff]
    %v2902 = vld [vmem:[#allocation2 + $0x470] sm:$0xff]
    %v2903 = vld [vmem:[#allocation2 + $0x478] sm:$0xff]
    %v2904 = vld [vmem:[#allocation2 + $0x480] sm:$0xff]
    %v2905 = vld [vmem:[#allocation2 + $0x488] sm:$0xff]
    %v2906 = vld [vmem:[#allocation2 + $0x490] sm:$0xff]
    %v2907 = vld [vmem:[#allocation2 + $0x498] sm:$0xff]
    %v2908 = vld [vmem:[#allocation2 + $0x4a0] sm:$0xff]
    %v2909 = vld [vmem:[#allocation2 + $0x4a8] sm:$0xff]
    %v2910 = vld [vmem:[#allocation2 + $0x4b0] sm:$0xff]
    %v2911 = vld [vmem:[#allocation2 + $0x4b8] sm:$0xff]
    %v2912 = vld [vmem:[#allocation2 + $0x4c0] sm:$0xff]
    %v2913 = vld [vmem:[#allocation2 + $0x4c8] sm:$0xff]
    %v2914 = vld [vmem:[#allocation2 + $0x4d0] sm:$0xff]
    %v2915 = vld [vmem:[#allocation2 + $0x4d8] sm:$0xff]
    %v2916 = vld [vmem:[#allocation2 + $0x4e0] sm:$0xff]
    %v2917 = vld [vmem:[#allocation2 + $0x4e8] sm:$0xff]
    %v2918 = vld [vmem:[#allocation2 + $0x4f0] sm:$0xff]
    %v2919 = vld [vmem:[#allocation2 + $0x4f8] sm:$0xff]
    %v2920 = vld [vmem:[#allocation2 + $0x500] sm:$0xff]
    %v2921 = vld [vmem:[#allocation2 + $0x508] sm:$0xff]
    %v2922 = vld [vmem:[#allocation2 + $0x510] sm:$0xff]
    %v2923 = vld [vmem:[#allocation2 + $0x518] sm:$0xff]
    %v2924 = vld [vmem:[#allocation2 + $0x520] sm:$0xff]
    %v2925 = vld [vmem:[#allocation2 + $0x528] sm:$0xff]
    %v2926 = vld [vmem:[#allocation2 + $0x530] sm:$0xff]
    %v2927 = vld [vmem:[#allocation2 + $0x538] sm:$0xff]
    %v2928 = vld [vmem:[#allocation2 + $0x540] sm:$0xff]
    %v2929 = vld [vmem:[#allocation2 + $0x548] sm:$0xff]
    %v2930 = vld [vmem:[#allocation2 + $0x550] sm:$0xff]
    %v2931 = vld [vmem:[#allocation2 + $0x558] sm:$0xff]
    %v2932 = vld [vmem:[#allocation2 + $0x560] sm:$0xff]
    %v2933 = vld [vmem:[#allocation2 + $0x568] sm:$0xff]
    %v2934 = vld [vmem:[#allocation2 + $0x570] sm:$0xff]
    %v2935 = vld [vmem:[#allocation2 + $0x578] sm:$0xff]
    %v2936 = vld [vmem:[#allocation2 + $0x580] sm:$0xff]
    %v2937 = vld [vmem:[#allocation2 + $0x588] sm:$0xff]
    %v2938 = vld [vmem:[#allocation2 + $0x590] sm:$0xff]
    %v2939 = vld [vmem:[#allocation2 + $0x598] sm:$0xff]
    %v2940 = vld [vmem:[#allocation2 + $0x5a0] sm:$0xff]
    %v2941 = vld [vmem:[#allocation2 + $0x5a8] sm:$0xff]
    %v2942 = vld [vmem:[#allocation2 + $0x5b0] sm:$0xff]
    %v2943 = vld [vmem:[#allocation2 + $0x5b8] sm:$0xff]
    %v2944 = vld [vmem:[#allocation2 + $0x5c0] sm:$0xff]
    %v2945 = vld [vmem:[#allocation2 + $0x5c8] sm:$0xff]
    %v2946 = vld [vmem:[#allocation2 + $0x5d0] sm:$0xff]
    %v2947 = vld [vmem:[#allocation2 + $0x5d8] sm:$0xff]
    %v2948 = vld [vmem:[#allocation2 + $0x5e0] sm:$0xff]
    %v2949 = vld [vmem:[#allocation2 + $0x5e8] sm:$0xff]
    %v2950 = vld [vmem:[#allocation2 + $0x5f0] sm:$0xff]
    %v2951 = vld [vmem:[#allocation2 + $0x5f8] sm:$0xff]
    %v2952 = vld [vmem:[#allocation2 + $0x600] sm:$0xff]
    %v2953 = vld [vmem:[#allocation2 + $0x608] sm:$0xff]
    %v2954 = vld [vmem:[#allocation2 + $0x610] sm:$0xff]
    %v2955 = vld [vmem:[#allocation2 + $0x618] sm:$0xff]
    %v2956 = vld [vmem:[#allocation2 + $0x620] sm:$0xff]
    %v2957 = vld [vmem:[#allocation2 + $0x628] sm:$0xff]
    %v2958 = vld [vmem:[#allocation2 + $0x630] sm:$0xff]
    %v2959 = vld [vmem:[#allocation2 + $0x638] sm:$0xff]
    %v2960 = vld [vmem:[#allocation2 + $0x640] sm:$0xff]
    %v2961 = vld [vmem:[#allocation2 + $0x648] sm:$0xff]
    %v2962 = vld [vmem:[#allocation2 + $0x650] sm:$0xff]
    %v2963 = vld [vmem:[#allocation2 + $0x658] sm:$0xff]
    %v2964 = vld [vmem:[#allocation2 + $0x660] sm:$0xff]
    %v2965 = vld [vmem:[#allocation2 + $0x668] sm:$0xff]
    %v2966 = vld [vmem:[#allocation2 + $0x670] sm:$0xff]
    %v2967 = vld [vmem:[#allocation2 + $0x678] sm:$0xff]
    %v2968 = vld [vmem:[#allocation2 + $0x680] sm:$0xff]
    %v2969 = vld [vmem:[#allocation2 + $0x688] sm:$0xff]
    %v2970 = vld [vmem:[#allocation2 + $0x690] sm:$0xff]
    %v2971 = vld [vmem:[#allocation2 + $0x698] sm:$0xff]
    %v2972 = vld [vmem:[#allocation2 + $0x6a0] sm:$0xff]
    %v2973 = vld [vmem:[#allocation2 + $0x6a8] sm:$0xff]
    %v2974 = vld [vmem:[#allocation2 + $0x6b0] sm:$0xff]
    %v2975 = vld [vmem:[#allocation2 + $0x6b8] sm:$0xff]
    %v2976 = vld [vmem:[#allocation2 + $0x6c0] sm:$0xff]
    %v2977 = vld [vmem:[#allocation2 + $0x6c8] sm:$0xff]
    %v2978 = vld [vmem:[#allocation2 + $0x6d0] sm:$0xff]
    %v2979 = vld [vmem:[#allocation2 + $0x6d8] sm:$0xff]
    %v2980 = vld [vmem:[#allocation2 + $0x6e0] sm:$0xff]
    %v2981 = vld [vmem:[#allocation2 + $0x6e8] sm:$0xff]
    %v2982 = vld [vmem:[#allocation2 + $0x6f0] sm:$0xff]
    %v2983 = vld [vmem:[#allocation2 + $0x6f8] sm:$0xff]
    %v2984 = vld [vmem:[#allocation2 + $0x700] sm:$0xff]
    %v2985 = vld [vmem:[#allocation2 + $0x708] sm:$0xff]
    %v2986 = vld [vmem:[#allocation2 + $0x710] sm:$0xff]
    %v2987 = vld [vmem:[#allocation2 + $0x718] sm:$0xff]
    %v2988 = vld [vmem:[#allocation2 + $0x720] sm:$0xff]
    %v2989 = vld [vmem:[#allocation2 + $0x728] sm:$0xff]
    %v2990 = vld [vmem:[#allocation2 + $0x730] sm:$0xff]
    %v2991 = vld [vmem:[#allocation2 + $0x738] sm:$0xff]
    %v2992 = vld [vmem:[#allocation2 + $0x740] sm:$0xff]
    %v2993 = vld [vmem:[#allocation2 + $0x748] sm:$0xff]
    %v2994 = vld [vmem:[#allocation2 + $0x750] sm:$0xff]
    %v2995 = vld [vmem:[#allocation2 + $0x758] sm:$0xff]
    %v2996 = vld [vmem:[#allocation2 + $0x760] sm:$0xff]
    %v2997 = vld [vmem:[#allocation2 + $0x768] sm:$0xff]
    %v2998 = vld [vmem:[#allocation2 + $0x770] sm:$0xff]
    %v2999 = vld [vmem:[#allocation2 + $0x778] sm:$0xff]
    %v3000 = vld [vmem:[#allocation2 + $0x780] sm:$0xff]
    %v3001 = vld [vmem:[#allocation2 + $0x788] sm:$0xff]
    %v3002 = vld [vmem:[#allocation2 + $0x790] sm:$0xff]
    %v3003 = vld [vmem:[#allocation2 + $0x798] sm:$0xff]
    %v3004 = vld [vmem:[#allocation2 + $0x7a0] sm:$0xff]
    %v3005 = vld [vmem:[#allocation2 + $0x7a8] sm:$0xff]
    %v3006 = vld [vmem:[#allocation2 + $0x7b0] sm:$0xff]
    %v3007 = vld [vmem:[#allocation2 + $0x7b8] sm:$0xff]
    %v3008 = vld [vmem:[#allocation2 + $0x7c0] sm:$0xff]
    %v3009 = vld [vmem:[#allocation2 + $0x7c8] sm:$0xff]
    %v3010 = vld [vmem:[#allocation2 + $0x7d0] sm:$0xff]
    %v3011 = vld [vmem:[#allocation2 + $0x7d8] sm:$0xff]
    %v3012 = vld [vmem:[#allocation2 + $0x7e0] sm:$0xff]
    %v3013 = vld [vmem:[#allocation2 + $0x7e8] sm:$0xff]
    %v3014 = vld [vmem:[#allocation2 + $0x7f0] sm:$0xff]
    %v3015 = vld [vmem:[#allocation2 + $0x7f8] sm:$0xff]
    %v3016 = vpack.c.bf16 %v2887, %v2886
    %v3017 = vunpack.c.l.bf16 %v3016
    %v3018 = vunpack.c.h.bf16 %v3016
    %v3019 = vsub.f32 %v2886, %v3017
    %v3020 = vsub.f32 %v2887, %v3018
    %v3021 = vpack.c.bf16 %v3019, %v3019
    %v3022 = vpack.c.bf16 %v3020, %v3020
    %v3087 = vunpack.c.l.b16 %v2888
    %v3088 = vunpack.c.h.b16 %v2888
    %v3089 = vunpack.c.l.b16 %v2889
    %v3090 = vunpack.c.h.b16 %v2889
    %v3091 = vunpack.c.l.b16 %v2890
    %v3092 = vunpack.c.h.b16 %v2890
    %v3093 = vunpack.c.l.b16 %v2891
    %v3094 = vunpack.c.h.b16 %v2891
    %v3095 = vunpack.c.l.b16 %v2892
    %v3096 = vunpack.c.h.b16 %v2892
    %v3097 = vunpack.c.l.b16 %v2893
    %v3098 = vunpack.c.h.b16 %v2893
    %v3099 = vunpack.c.l.b16 %v2894
    %v3100 = vunpack.c.h.b16 %v2894
    %v3101 = vunpack.c.l.b16 %v2895
    %v3102 = vunpack.c.h.b16 %v2895
    %v3103 = vunpack.c.l.b16 %v2896
    %v3104 = vunpack.c.h.b16 %v2896
    %v3105 = vunpack.c.l.b16 %v2897
    %v3106 = vunpack.c.h.b16 %v2897
    %v3107 = vunpack.c.l.b16 %v2898
    %v3108 = vunpack.c.h.b16 %v2898
    %v3109 = vunpack.c.l.b16 %v2899
    %v3110 = vunpack.c.h.b16 %v2899
    %v3111 = vunpack.c.l.b16 %v2900
    %v3112 = vunpack.c.h.b16 %v2900
    %v3113 = vunpack.c.l.b16 %v2901
    %v3114 = vunpack.c.h.b16 %v2901
    %v3115 = vunpack.c.l.b16 %v2902
    %v3116 = vunpack.c.h.b16 %v2902
    %v3117 = vunpack.c.l.b16 %v2903
    %v3118 = vunpack.c.h.b16 %v2903
    %v3119 = vunpack.c.l.b16 %v2904
    %v3120 = vunpack.c.h.b16 %v2904
    %v3121 = vunpack.c.l.b16 %v2905
    %v3122 = vunpack.c.h.b16 %v2905
    %v3123 = vunpack.c.l.b16 %v2906
    %v3124 = vunpack.c.h.b16 %v2906
    %v3125 = vunpack.c.l.b16 %v2907
    %v3126 = vunpack.c.h.b16 %v2907
    %v3127 = vunpack.c.l.b16 %v2908
    %v3128 = vunpack.c.h.b16 %v2908
    %v3129 = vunpack.c.l.b16 %v2909
    %v3130 = vunpack.c.h.b16 %v2909
    %v3131 = vunpack.c.l.b16 %v2910
    %v3132 = vunpack.c.h.b16 %v2910
    %v3133 = vunpack.c.l.b16 %v2911
    %v3134 = vunpack.c.h.b16 %v2911
    %v3135 = vunpack.c.l.b16 %v2912
    %v3136 = vunpack.c.h.b16 %v2912
    %v3137 = vunpack.c.l.b16 %v2913
    %v3138 = vunpack.c.h.b16 %v2913
    %v3139 = vunpack.c.l.b16 %v2914
    %v3140 = vunpack.c.h.b16 %v2914
    %v3141 = vunpack.c.l.b16 %v2915
    %v3142 = vunpack.c.h.b16 %v2915
    %v3143 = vunpack.c.l.b16 %v2916
    %v3144 = vunpack.c.h.b16 %v2916
    %v3145 = vunpack.c.l.b16 %v2917
    %v3146 = vunpack.c.h.b16 %v2917
    %v3147 = vunpack.c.l.b16 %v2918
    %v3148 = vunpack.c.h.b16 %v2918
    %v3149 = vunpack.c.l.b16 %v2919
    %v3150 = vunpack.c.h.b16 %v2919
    %v3151 = vunpack.c.l.b16 %v2920
    %v3152 = vunpack.c.h.b16 %v2920
    %v3153 = vunpack.c.l.b16 %v2921
    %v3154 = vunpack.c.h.b16 %v2921
    %v3155 = vunpack.c.l.b16 %v2922
    %v3156 = vunpack.c.h.b16 %v2922
    %v3157 = vunpack.c.l.b16 %v2923
    %v3158 = vunpack.c.h.b16 %v2923
    %v3159 = vunpack.c.l.b16 %v2924
    %v3160 = vunpack.c.h.b16 %v2924
    %v3161 = vunpack.c.l.b16 %v2925
    %v3162 = vunpack.c.h.b16 %v2925
    %v3163 = vunpack.c.l.b16 %v2926
    %v3164 = vunpack.c.h.b16 %v2926
    %v3165 = vunpack.c.l.b16 %v2927
    %v3166 = vunpack.c.h.b16 %v2927
    %v3167 = vunpack.c.l.b16 %v2928
    %v3168 = vunpack.c.h.b16 %v2928
    %v3169 = vunpack.c.l.b16 %v2929
    %v3170 = vunpack.c.h.b16 %v2929
    %v3171 = vunpack.c.l.b16 %v2930
    %v3172 = vunpack.c.h.b16 %v2930
    %v3173 = vunpack.c.l.b16 %v2931
    %v3174 = vunpack.c.h.b16 %v2931
    %v3175 = vunpack.c.l.b16 %v2932
    %v3176 = vunpack.c.h.b16 %v2932
    %v3177 = vunpack.c.l.b16 %v2933
    %v3178 = vunpack.c.h.b16 %v2933
    %v3179 = vunpack.c.l.b16 %v2934
    %v3180 = vunpack.c.h.b16 %v2934
    %v3181 = vunpack.c.l.b16 %v2935
    %v3182 = vunpack.c.h.b16 %v2935
    %v3183 = vunpack.c.l.b16 %v2936
    %v3184 = vunpack.c.h.b16 %v2936
    %v3185 = vunpack.c.l.b16 %v2937
    %v3186 = vunpack.c.h.b16 %v2937
    %v3187 = vunpack.c.l.b16 %v2938
    %v3188 = vunpack.c.h.b16 %v2938
    %v3189 = vunpack.c.l.b16 %v2939
    %v3190 = vunpack.c.h.b16 %v2939
    %v3191 = vunpack.c.l.b16 %v2940
    %v3192 = vunpack.c.h.b16 %v2940
    %v3193 = vunpack.c.l.b16 %v2941
    %v3194 = vunpack.c.h.b16 %v2941
    %v3195 = vunpack.c.l.b16 %v2942
    %v3196 = vunpack.c.h.b16 %v2942
    %v3197 = vunpack.c.l.b16 %v2943
    %v3198 = vunpack.c.h.b16 %v2943
    %v3199 = vunpack.c.l.b16 %v2944
    %v3200 = vunpack.c.h.b16 %v2944
    %v3201 = vunpack.c.l.b16 %v2945
    %v3202 = vunpack.c.h.b16 %v2945
    %v3203 = vunpack.c.l.b16 %v2946
    %v3204 = vunpack.c.h.b16 %v2946
    %v3205 = vunpack.c.l.b16 %v2947
    %v3206 = vunpack.c.h.b16 %v2947
    %v3207 = vunpack.c.l.b16 %v2948
    %v3208 = vunpack.c.h.b16 %v2948
    %v3209 = vunpack.c.l.b16 %v2949
    %v3210 = vunpack.c.h.b16 %v2949
    %v3211 = vunpack.c.l.b16 %v2950
    %v3212 = vunpack.c.h.b16 %v2950
    %v3213 = vunpack.c.l.b16 %v2951
    %v3214 = vunpack.c.h.b16 %v2951
    %v3215 = vpack.c.b16 %v3091, %v3087
    %v3216 = vpack.c.b16 %v3092, %v3088
    %v3217 = vpack.c.b16 %v3093, %v3089
    %v3218 = vpack.c.b16 %v3094, %v3090
    %v3219 = vpack.c.b16 %v3099, %v3095
    %v3220 = vpack.c.b16 %v3100, %v3096
    %v3221 = vpack.c.b16 %v3101, %v3097
    %v3222 = vpack.c.b16 %v3102, %v3098
    %v3223 = vpack.c.b16 %v3107, %v3103
    %v3224 = vpack.c.b16 %v3108, %v3104
    %v3225 = vpack.c.b16 %v3109, %v3105
    %v3226 = vpack.c.b16 %v3110, %v3106
    %v3227 = vpack.c.b16 %v3115, %v3111
    %v3228 = vpack.c.b16 %v3116, %v3112
    %v3229 = vpack.c.b16 %v3117, %v3113
    %v3230 = vpack.c.b16 %v3118, %v3114
    %v3231 = vpack.c.b16 %v3123, %v3119
    %v3232 = vpack.c.b16 %v3124, %v3120
    %v3233 = vpack.c.b16 %v3125, %v3121
    %v3234 = vpack.c.b16 %v3126, %v3122
    %v3235 = vpack.c.b16 %v3131, %v3127
    %v3236 = vpack.c.b16 %v3132, %v3128
    %v3237 = vpack.c.b16 %v3133, %v3129
    %v3238 = vpack.c.b16 %v3134, %v3130
    %v3239 = vpack.c.b16 %v3139, %v3135
    %v3240 = vpack.c.b16 %v3140, %v3136
    %v3241 = vpack.c.b16 %v3141, %v3137
    %v3242 = vpack.c.b16 %v3142, %v3138
    %v3243 = vpack.c.b16 %v3147, %v3143
    %v3244 = vpack.c.b16 %v3148, %v3144
    %v3245 = vpack.c.b16 %v3149, %v3145
    %v3246 = vpack.c.b16 %v3150, %v3146
    %v3247 = vpack.c.b16 %v3155, %v3151
    %v3248 = vpack.c.b16 %v3156, %v3152
    %v3249 = vpack.c.b16 %v3157, %v3153
    %v3250 = vpack.c.b16 %v3158, %v3154
    %v3251 = vpack.c.b16 %v3163, %v3159
    %v3252 = vpack.c.b16 %v3164, %v3160
    %v3253 = vpack.c.b16 %v3165, %v3161
    %v3254 = vpack.c.b16 %v3166, %v3162
    %v3255 = vpack.c.b16 %v3171, %v3167
    %v3256 = vpack.c.b16 %v3172, %v3168
    %v3257 = vpack.c.b16 %v3173, %v3169
    %v3258 = vpack.c.b16 %v3174, %v3170
    %v3259 = vpack.c.b16 %v3179, %v3175
    %v3260 = vpack.c.b16 %v3180, %v3176
    %v3261 = vpack.c.b16 %v3181, %v3177
    %v3262 = vpack.c.b16 %v3182, %v3178
    %v3263 = vpack.c.b16 %v3187, %v3183
    %v3264 = vpack.c.b16 %v3188, %v3184
    %v3265 = vpack.c.b16 %v3189, %v3185
    %v3266 = vpack.c.b16 %v3190, %v3186
    %v3267 = vpack.c.b16 %v3195, %v3191
    %v3268 = vpack.c.b16 %v3196, %v3192
    %v3269 = vpack.c.b16 %v3197, %v3193
    %v3270 = vpack.c.b16 %v3198, %v3194
    %v3271 = vpack.c.b16 %v3203, %v3199
    %v3272 = vpack.c.b16 %v3204, %v3200
    %v3273 = vpack.c.b16 %v3205, %v3201
    %v3274 = vpack.c.b16 %v3206, %v3202
    %v3275 = vpack.c.b16 %v3211, %v3207
    %v3276 = vpack.c.b16 %v3212, %v3208
    %v3277 = vpack.c.b16 %v3213, %v3209
    %v3278 = vpack.c.b16 %v3214, %v3210
    %3343 = vmatpush.bf16.msra.mxu0 %v3243
    %3344 = vmatpush.bf16.msra.mxu0 %v3239
    %3345 = vmatpush.bf16.msra.mxu0 %v3235
    %3346 = vmatpush.bf16.msra.mxu0 %v3231
    %3347 = vmatpush.bf16.msra.mxu0 %v3227
    %3348 = vmatpush.bf16.msra.mxu0 %v3223
    %3349 = vmatpush.bf16.msra.mxu0 %v3219
    %3350 = vmatpush.bf16.msra.mxu0 %v3215
    %3351 = vmatmul.bf16.gmra.mxu0 %v3021
    %v3352 = vpop.f32.mrf.mxu0
    %v3353 = vadd.f32 0.0, %v3352
    %v3354 = vpop.f32.mrf.mxu0
    %3355 = vdwg.mxu0
    %3356 = vmatpush.bf16.msra.mxu0 %v3275
    %3357 = vmatpush.bf16.msra.mxu0 %v3271
    %3358 = vmatpush.bf16.msra.mxu0 %v3267
    %3359 = vmatpush.bf16.msra.mxu0 %v3263
    %3360 = vmatpush.bf16.msra.mxu0 %v3259
    %3361 = vmatpush.bf16.msra.mxu0 %v3255
    %3362 = vmatpush.bf16.msra.mxu0 %v3251
    %3363 = vmatpush.bf16.msra.mxu0 %v3247
    %3364 = vmatmul.bf16.gmra.mxu0 %v3022
    %v3365 = vpop.f32.mrf.mxu0
    %v3366 = vadd.f32 %v3353, %v3365
    %v3367 = vpop.f32.mrf.mxu0
    %3368 = vdwg.mxu0
    %3369 = vmatpush.bf16.msra.mxu0 %v3244
    %3370 = vmatpush.bf16.msra.mxu0 %v3240
    %3371 = vmatpush.bf16.msra.mxu0 %v3236
    %3372 = vmatpush.bf16.msra.mxu0 %v3232
    %3373 = vmatpush.bf16.msra.mxu0 %v3228
    %3374 = vmatpush.bf16.msra.mxu0 %v3224
    %3375 = vmatpush.bf16.msra.mxu0 %v3220
    %3376 = vmatpush.bf16.msra.mxu0 %v3216
    %3377 = vmatmul.bf16.gmra.mxu0 %v3021
    %v3378 = vpop.f32.mrf.mxu0
    %v3379 = vadd.f32 0.0, %v3378
    %v3380 = vpop.f32.mrf.mxu0
    %3381 = vdwg.mxu0
    %3382 = vmatpush.bf16.msra.mxu0 %v3276
    %3383 = vmatpush.bf16.msra.mxu0 %v3272
    %3384 = vmatpush.bf16.msra.mxu0 %v3268
    %3385 = vmatpush.bf16.msra.mxu0 %v3264
    %3386 = vmatpush.bf16.msra.mxu0 %v3260
    %3387 = vmatpush.bf16.msra.mxu0 %v3256
    %3388 = vmatpush.bf16.msra.mxu0 %v3252
    %3389 = vmatpush.bf16.msra.mxu0 %v3248
    %3390 = vmatmul.bf16.gmra.mxu0 %v3022
    %v3391 = vpop.f32.mrf.mxu0
    %v3392 = vadd.f32 %v3379, %v3391
    %v3393 = vpop.f32.mrf.mxu0
    %3394 = vdwg.mxu0
    %3395 = vmatpush.bf16.msra.mxu0 %v3245
    %3396 = vmatpush.bf16.msra.mxu0 %v3241
    %3397 = vmatpush.bf16.msra.mxu0 %v3237
    %3398 = vmatpush.bf16.msra.mxu0 %v3233
    %3399 = vmatpush.bf16.msra.mxu0 %v3229
    %3400 = vmatpush.bf16.msra.mxu0 %v3225
    %3401 = vmatpush.bf16.msra.mxu0 %v3221
    %3402 = vmatpush.bf16.msra.mxu0 %v3217
    %3403 = vmatmul.bf16.gmra.mxu0 %v3021
    %v3404 = vpop.f32.mrf.mxu0
    %v3405 = vadd.f32 0.0, %v3404
    %v3406 = vpop.f32.mrf.mxu0
    %3407 = vdwg.mxu0
    %3408 = vmatpush.bf16.msra.mxu0 %v3277
    %3409 = vmatpush.bf16.msra.mxu0 %v3273
    %3410 = vmatpush.bf16.msra.mxu0 %v3269
    %3411 = vmatpush.bf16.msra.mxu0 %v3265
    %3412 = vmatpush.bf16.msra.mxu0 %v3261
    %3413 = vmatpush.bf16.msra.mxu0 %v3257
    %3414 = vmatpush.bf16.msra.mxu0 %v3253
    %3415 = vmatpush.bf16.msra.mxu0 %v3249
    %3416 = vmatmul.bf16.gmra.mxu0 %v3022
    %v3417 = vpop.f32.mrf.mxu0
    %v3418 = vadd.f32 %v3405, %v3417
    %v3419 = vpop.f32.mrf.mxu0
    %3420 = vdwg.mxu0
    %3421 = vmatpush.bf16.msra.mxu0 %v3246
    %3422 = vmatpush.bf16.msra.mxu0 %v3242
    %3423 = vmatpush.bf16.msra.mxu0 %v3238
    %3424 = vmatpush.bf16.msra.mxu0 %v3234
    %3425 = vmatpush.bf16.msra.mxu0 %v3230
    %3426 = vmatpush.bf16.msra.mxu0 %v3226
    %3427 = vmatpush.bf16.msra.mxu0 %v3222
    %3428 = vmatpush.bf16.msra.mxu0 %v3218
    %3429 = vmatmul.bf16.gmra.mxu0 %v3021
    %v3430 = vpop.f32.mrf.mxu0
    %v3431 = vadd.f32 0.0, %v3430
    %v3432 = vpop.f32.mrf.mxu0
    %3433 = vdwg.mxu0
    %3434 = vmatpush.bf16.msra.mxu0 %v3278
    %3435 = vmatpush.bf16.msra.mxu0 %v3274
    %3436 = vmatpush.bf16.msra.mxu0 %v3270
    %3437 = vmatpush.bf16.msra.mxu0 %v3266
    %3438 = vmatpush.bf16.msra.mxu0 %v3262
    %3439 = vmatpush.bf16.msra.mxu0 %v3258
    %3440 = vmatpush.bf16.msra.mxu0 %v3254
    %3441 = vmatpush.bf16.msra.mxu0 %v3250
    %3442 = vmatmul.bf16.gmra.mxu0 %v3022
    %v3443 = vpop.f32.mrf.mxu0
    %v3444 = vadd.f32 %v3431, %v3443
    %v3445 = vpop.f32.mrf.mxu0
    %3446 = vdwg.mxu0
    %v3448 = vunpack.c.l.b16 %v3016
    %v3449 = vunpack.c.h.b16 %v3016
    %v3450 = vpack.c.b16 %v3448, %v3448
    %v3451 = vpack.c.b16 %v3449, %v3449
    %3454 = vmatpush.bf16.msra.mxu0 %v3243
    %3455 = vmatpush.bf16.msra.mxu0 %v3239
    %3456 = vmatpush.bf16.msra.mxu0 %v3235
    %3457 = vmatpush.bf16.msra.mxu0 %v3231
    %3458 = vmatpush.bf16.msra.mxu0 %v3227
    %3459 = vmatpush.bf16.msra.mxu0 %v3223
    %3460 = vmatpush.bf16.msra.mxu0 %v3219
    %3461 = vmatpush.bf16.msra.mxu0 %v3215
    %3462 = vmatmul.bf16.gmra.mxu0 %v3450
    %v3463 = vpop.f32.mrf.mxu0
    %v3464 = vadd.f32 %v3366, %v3463
    %v3465 = vpop.f32.mrf.mxu0
    %3466 = vdwg.mxu0
    %3467 = vmatpush.bf16.msra.mxu0 %v3275
    %3468 = vmatpush.bf16.msra.mxu0 %v3271
    %3469 = vmatpush.bf16.msra.mxu0 %v3267
    %3470 = vmatpush.bf16.msra.mxu0 %v3263
    %3471 = vmatpush.bf16.msra.mxu0 %v3259
    %3472 = vmatpush.bf16.msra.mxu0 %v3255
    %3473 = vmatpush.bf16.msra.mxu0 %v3251
    %3474 = vmatpush.bf16.msra.mxu0 %v3247
    %3475 = vmatmul.bf16.gmra.mxu0 %v3451
    %v3476 = vpop.f32.mrf.mxu0
    %v3477 = vadd.f32 %v3464, %v3476
    %v3478 = vpop.f32.mrf.mxu0
    %3479 = vdwg.mxu0
    %3480 = vmatpush.bf16.msra.mxu0 %v3244
    %3481 = vmatpush.bf16.msra.mxu0 %v3240
    %3482 = vmatpush.bf16.msra.mxu0 %v3236
    %3483 = vmatpush.bf16.msra.mxu0 %v3232
    %3484 = vmatpush.bf16.msra.mxu0 %v3228
    %3485 = vmatpush.bf16.msra.mxu0 %v3224
    %3486 = vmatpush.bf16.msra.mxu0 %v3220
    %3487 = vmatpush.bf16.msra.mxu0 %v3216
    %3488 = vmatmul.bf16.gmra.mxu0 %v3450
    %v3489 = vpop.f32.mrf.mxu0
    %v3490 = vadd.f32 %v3392, %v3489
    %v3491 = vpop.f32.mrf.mxu0
    %3492 = vdwg.mxu0
    %3493 = vmatpush.bf16.msra.mxu0 %v3276
    %3494 = vmatpush.bf16.msra.mxu0 %v3272
    %3495 = vmatpush.bf16.msra.mxu0 %v3268
    %3496 = vmatpush.bf16.msra.mxu0 %v3264
    %3497 = vmatpush.bf16.msra.mxu0 %v3260
    %3498 = vmatpush.bf16.msra.mxu0 %v3256
    %3499 = vmatpush.bf16.msra.mxu0 %v3252
    %3500 = vmatpush.bf16.msra.mxu0 %v3248
    %3501 = vmatmul.bf16.gmra.mxu0 %v3451
    %v3502 = vpop.f32.mrf.mxu0
    %v3503 = vadd.f32 %v3490, %v3502
    %v3504 = vpop.f32.mrf.mxu0
    %3505 = vdwg.mxu0
    %3506 = vmatpush.bf16.msra.mxu0 %v3245
    %3507 = vmatpush.bf16.msra.mxu0 %v3241
    %3508 = vmatpush.bf16.msra.mxu0 %v3237
    %3509 = vmatpush.bf16.msra.mxu0 %v3233
    %3510 = vmatpush.bf16.msra.mxu0 %v3229
    %3511 = vmatpush.bf16.msra.mxu0 %v3225
    %3512 = vmatpush.bf16.msra.mxu0 %v3221
    %3513 = vmatpush.bf16.msra.mxu0 %v3217
    %3514 = vmatmul.bf16.gmra.mxu0 %v3450
    %v3515 = vpop.f32.mrf.mxu0
    %v3516 = vadd.f32 %v3418, %v3515
    %v3517 = vpop.f32.mrf.mxu0
    %3518 = vdwg.mxu0
    %3519 = vmatpush.bf16.msra.mxu0 %v3277
    %3520 = vmatpush.bf16.msra.mxu0 %v3273
    %3521 = vmatpush.bf16.msra.mxu0 %v3269
    %3522 = vmatpush.bf16.msra.mxu0 %v3265
    %3523 = vmatpush.bf16.msra.mxu0 %v3261
    %3524 = vmatpush.bf16.msra.mxu0 %v3257
    %3525 = vmatpush.bf16.msra.mxu0 %v3253
    %3526 = vmatpush.bf16.msra.mxu0 %v3249
    %3527 = vmatmul.bf16.gmra.mxu0 %v3451
    %v3528 = vpop.f32.mrf.mxu0
    %v3529 = vadd.f32 %v3516, %v3528
    %v3530 = vpop.f32.mrf.mxu0
    %3531 = vdwg.mxu0
    %3532 = vmatpush.bf16.msra.mxu0 %v3246
    %3533 = vmatpush.bf16.msra.mxu0 %v3242
    %3534 = vmatpush.bf16.msra.mxu0 %v3238
    %3535 = vmatpush.bf16.msra.mxu0 %v3234
    %3536 = vmatpush.bf16.msra.mxu0 %v3230
    %3537 = vmatpush.bf16.msra.mxu0 %v3226
    %3538 = vmatpush.bf16.msra.mxu0 %v3222
    %3539 = vmatpush.bf16.msra.mxu0 %v3218
    %3540 = vmatmul.bf16.gmra.mxu0 %v3450
    %v3541 = vpop.f32.mrf.mxu0
    %v3542 = vadd.f32 %v3444, %v3541
    %v3543 = vpop.f32.mrf.mxu0
    %3544 = vdwg.mxu0
    %3545 = vmatpush.bf16.msra.mxu0 %v3278
    %3546 = vmatpush.bf16.msra.mxu0 %v3274
    %3547 = vmatpush.bf16.msra.mxu0 %v3270
    %3548 = vmatpush.bf16.msra.mxu0 %v3266
    %3549 = vmatpush.bf16.msra.mxu0 %v3262
    %3550 = vmatpush.bf16.msra.mxu0 %v3258
    %3551 = vmatpush.bf16.msra.mxu0 %v3254
    %3552 = vmatpush.bf16.msra.mxu0 %v3250
    %3553 = vmatmul.bf16.gmra.mxu0 %v3451
    %v3554 = vpop.f32.mrf.mxu0
    %v3555 = vadd.f32 %v3542, %v3554
    %v3556 = vpop.f32.mrf.mxu0
    %3557 = vdwg.mxu0
    %v3622 = vunpack.c.l.b16 %v2952
    %v3623 = vunpack.c.h.b16 %v2952
    %v3624 = vunpack.c.l.b16 %v2953
    %v3625 = vunpack.c.h.b16 %v2953
    %v3626 = vunpack.c.l.b16 %v2954
    %v3627 = vunpack.c.h.b16 %v2954
    %v3628 = vunpack.c.l.b16 %v2955
    %v3629 = vunpack.c.h.b16 %v2955
    %v3630 = vunpack.c.l.b16 %v2956
    %v3631 = vunpack.c.h.b16 %v2956
    %v3632 = vunpack.c.l.b16 %v2957
    %v3633 = vunpack.c.h.b16 %v2957
    %v3634 = vunpack.c.l.b16 %v2958
    %v3635 = vunpack.c.h.b16 %v2958
    %v3636 = vunpack.c.l.b16 %v2959
    %v3637 = vunpack.c.h.b16 %v2959
    %v3638 = vunpack.c.l.b16 %v2960
    %v3639 = vunpack.c.h.b16 %v2960
    %v3640 = vunpack.c.l.b16 %v2961
    %v3641 = vunpack.c.h.b16 %v2961
    %v3642 = vunpack.c.l.b16 %v2962
    %v3643 = vunpack.c.h.b16 %v2962
    %v3644 = vunpack.c.l.b16 %v2963
    %v3645 = vunpack.c.h.b16 %v2963
    %v3646 = vunpack.c.l.b16 %v2964
    %v3647 = vunpack.c.h.b16 %v2964
    %v3648 = vunpack.c.l.b16 %v2965
    %v3649 = vunpack.c.h.b16 %v2965
    %v3650 = vunpack.c.l.b16 %v2966
    %v3651 = vunpack.c.h.b16 %v2966
    %v3652 = vunpack.c.l.b16 %v2967
    %v3653 = vunpack.c.h.b16 %v2967
    %v3654 = vunpack.c.l.b16 %v2968
    %v3655 = vunpack.c.h.b16 %v2968
    %v3656 = vunpack.c.l.b16 %v2969
    %v3657 = vunpack.c.h.b16 %v2969
    %v3658 = vunpack.c.l.b16 %v2970
    %v3659 = vunpack.c.h.b16 %v2970
    %v3660 = vunpack.c.l.b16 %v2971
    %v3661 = vunpack.c.h.b16 %v2971
    %v3662 = vunpack.c.l.b16 %v2972
    %v3663 = vunpack.c.h.b16 %v2972
    %v3664 = vunpack.c.l.b16 %v2973
    %v3665 = vunpack.c.h.b16 %v2973
    %v3666 = vunpack.c.l.b16 %v2974
    %v3667 = vunpack.c.h.b16 %v2974
    %v3668 = vunpack.c.l.b16 %v2975
    %v3669 = vunpack.c.h.b16 %v2975
    %v3670 = vunpack.c.l.b16 %v2976
    %v3671 = vunpack.c.h.b16 %v2976
    %v3672 = vunpack.c.l.b16 %v2977
    %v3673 = vunpack.c.h.b16 %v2977
    %v3674 = vunpack.c.l.b16 %v2978
    %v3675 = vunpack.c.h.b16 %v2978
    %v3676 = vunpack.c.l.b16 %v2979
    %v3677 = vunpack.c.h.b16 %v2979
    %v3678 = vunpack.c.l.b16 %v2980
    %v3679 = vunpack.c.h.b16 %v2980
    %v3680 = vunpack.c.l.b16 %v2981
    %v3681 = vunpack.c.h.b16 %v2981
    %v3682 = vunpack.c.l.b16 %v2982
    %v3683 = vunpack.c.h.b16 %v2982
    %v3684 = vunpack.c.l.b16 %v2983
    %v3685 = vunpack.c.h.b16 %v2983
    %v3686 = vunpack.c.l.b16 %v2984
    %v3687 = vunpack.c.h.b16 %v2984
    %v3688 = vunpack.c.l.b16 %v2985
    %v3689 = vunpack.c.h.b16 %v2985
    %v3690 = vunpack.c.l.b16 %v2986
    %v3691 = vunpack.c.h.b16 %v2986
    %v3692 = vunpack.c.l.b16 %v2987
    %v3693 = vunpack.c.h.b16 %v2987
    %v3694 = vunpack.c.l.b16 %v2988
    %v3695 = vunpack.c.h.b16 %v2988
    %v3696 = vunpack.c.l.b16 %v2989
    %v3697 = vunpack.c.h.b16 %v2989
    %v3698 = vunpack.c.l.b16 %v2990
    %v3699 = vunpack.c.h.b16 %v2990
    %v3700 = vunpack.c.l.b16 %v2991
    %v3701 = vunpack.c.h.b16 %v2991
    %v3702 = vunpack.c.l.b16 %v2992
    %v3703 = vunpack.c.h.b16 %v2992
    %v3704 = vunpack.c.l.b16 %v2993
    %v3705 = vunpack.c.h.b16 %v2993
    %v3706 = vunpack.c.l.b16 %v2994
    %v3707 = vunpack.c.h.b16 %v2994
    %v3708 = vunpack.c.l.b16 %v2995
    %v3709 = vunpack.c.h.b16 %v2995
    %v3710 = vunpack.c.l.b16 %v2996
    %v3711 = vunpack.c.h.b16 %v2996
    %v3712 = vunpack.c.l.b16 %v2997
    %v3713 = vunpack.c.h.b16 %v2997
    %v3714 = vunpack.c.l.b16 %v2998
    %v3715 = vunpack.c.h.b16 %v2998
    %v3716 = vunpack.c.l.b16 %v2999
    %v3717 = vunpack.c.h.b16 %v2999
    %v3718 = vunpack.c.l.b16 %v3000
    %v3719 = vunpack.c.h.b16 %v3000
    %v3720 = vunpack.c.l.b16 %v3001
    %v3721 = vunpack.c.h.b16 %v3001
    %v3722 = vunpack.c.l.b16 %v3002
    %v3723 = vunpack.c.h.b16 %v3002
    %v3724 = vunpack.c.l.b16 %v3003
    %v3725 = vunpack.c.h.b16 %v3003
    %v3726 = vunpack.c.l.b16 %v3004
    %v3727 = vunpack.c.h.b16 %v3004
    %v3728 = vunpack.c.l.b16 %v3005
    %v3729 = vunpack.c.h.b16 %v3005
    %v3730 = vunpack.c.l.b16 %v3006
    %v3731 = vunpack.c.h.b16 %v3006
    %v3732 = vunpack.c.l.b16 %v3007
    %v3733 = vunpack.c.h.b16 %v3007
    %v3734 = vunpack.c.l.b16 %v3008
    %v3735 = vunpack.c.h.b16 %v3008
    %v3736 = vunpack.c.l.b16 %v3009
    %v3737 = vunpack.c.h.b16 %v3009
    %v3738 = vunpack.c.l.b16 %v3010
    %v3739 = vunpack.c.h.b16 %v3010
    %v3740 = vunpack.c.l.b16 %v3011
    %v3741 = vunpack.c.h.b16 %v3011
    %v3742 = vunpack.c.l.b16 %v3012
    %v3743 = vunpack.c.h.b16 %v3012
    %v3744 = vunpack.c.l.b16 %v3013
    %v3745 = vunpack.c.h.b16 %v3013
    %v3746 = vunpack.c.l.b16 %v3014
    %v3747 = vunpack.c.h.b16 %v3014
    %v3748 = vunpack.c.l.b16 %v3015
    %v3749 = vunpack.c.h.b16 %v3015
    %v3750 = vpack.c.b16 %v3626, %v3622
    %v3751 = vpack.c.b16 %v3627, %v3623
    %v3752 = vpack.c.b16 %v3628, %v3624
    %v3753 = vpack.c.b16 %v3629, %v3625
    %v3754 = vpack.c.b16 %v3634, %v3630
    %v3755 = vpack.c.b16 %v3635, %v3631
    %v3756 = vpack.c.b16 %v3636, %v3632
    %v3757 = vpack.c.b16 %v3637, %v3633
    %v3758 = vpack.c.b16 %v3642, %v3638
    %v3759 = vpack.c.b16 %v3643, %v3639
    %v3760 = vpack.c.b16 %v3644, %v3640
    %v3761 = vpack.c.b16 %v3645, %v3641
    %v3762 = vpack.c.b16 %v3650, %v3646
    %v3763 = vpack.c.b16 %v3651, %v3647
    %v3764 = vpack.c.b16 %v3652, %v3648
    %v3765 = vpack.c.b16 %v3653, %v3649
    %v3766 = vpack.c.b16 %v3658, %v3654
    %v3767 = vpack.c.b16 %v3659, %v3655
    %v3768 = vpack.c.b16 %v3660, %v3656
    %v3769 = vpack.c.b16 %v3661, %v3657
    %v3770 = vpack.c.b16 %v3666, %v3662
    %v3771 = vpack.c.b16 %v3667, %v3663
    %v3772 = vpack.c.b16 %v3668, %v3664
    %v3773 = vpack.c.b16 %v3669, %v3665
    %v3774 = vpack.c.b16 %v3674, %v3670
    %v3775 = vpack.c.b16 %v3675, %v3671
    %v3776 = vpack.c.b16 %v3676, %v3672
    %v3777 = vpack.c.b16 %v3677, %v3673
    %v3778 = vpack.c.b16 %v3682, %v3678
    %v3779 = vpack.c.b16 %v3683, %v3679
    %v3780 = vpack.c.b16 %v3684, %v3680
    %v3781 = vpack.c.b16 %v3685, %v3681
    %v3782 = vpack.c.b16 %v3690, %v3686
    %v3783 = vpack.c.b16 %v3691, %v3687
    %v3784 = vpack.c.b16 %v3692, %v3688
    %v3785 = vpack.c.b16 %v3693, %v3689
    %v3786 = vpack.c.b16 %v3698, %v3694
    %v3787 = vpack.c.b16 %v3699, %v3695
    %v3788 = vpack.c.b16 %v3700, %v3696
    %v3789 = vpack.c.b16 %v3701, %v3697
    %v3790 = vpack.c.b16 %v3706, %v3702
    %v3791 = vpack.c.b16 %v3707, %v3703
    %v3792 = vpack.c.b16 %v3708, %v3704
    %v3793 = vpack.c.b16 %v3709, %v3705
    %v3794 = vpack.c.b16 %v3714, %v3710
    %v3795 = vpack.c.b16 %v3715, %v3711
    %v3796 = vpack.c.b16 %v3716, %v3712
    %v3797 = vpack.c.b16 %v3717, %v3713
    %v3798 = vpack.c.b16 %v3722, %v3718
    %v3799 = vpack.c.b16 %v3723, %v3719
    %v3800 = vpack.c.b16 %v3724, %v3720
    %v3801 = vpack.c.b16 %v3725, %v3721
    %v3802 = vpack.c.b16 %v3730, %v3726
    %v3803 = vpack.c.b16 %v3731, %v3727
    %v3804 = vpack.c.b16 %v3732, %v3728
    %v3805 = vpack.c.b16 %v3733, %v3729
    %v3806 = vpack.c.b16 %v3738, %v3734
    %v3807 = vpack.c.b16 %v3739, %v3735
    %v3808 = vpack.c.b16 %v3740, %v3736
    %v3809 = vpack.c.b16 %v3741, %v3737
    %v3810 = vpack.c.b16 %v3746, %v3742
    %v3811 = vpack.c.b16 %v3747, %v3743
    %v3812 = vpack.c.b16 %v3748, %v3744
    %v3813 = vpack.c.b16 %v3749, %v3745
    %3878 = vmatpush.bf16.msra.mxu0 %v3778
    %3879 = vmatpush.bf16.msra.mxu0 %v3774
    %3880 = vmatpush.bf16.msra.mxu0 %v3770
    %3881 = vmatpush.bf16.msra.mxu0 %v3766
    %3882 = vmatpush.bf16.msra.mxu0 %v3762
    %3883 = vmatpush.bf16.msra.mxu0 %v3758
    %3884 = vmatpush.bf16.msra.mxu0 %v3754
    %3885 = vmatpush.bf16.msra.mxu0 %v3750
    %3886 = vmatmul.bf16.gmra.mxu0 %v3450
    %v3887 = vpop.f32.mrf.mxu0
    %v3888 = vadd.f32 0.0, %v3887
    %v3889 = vpop.f32.mrf.mxu0
    %3890 = vdwg.mxu0
    %3891 = vmatpush.bf16.msra.mxu0 %v3810
    %3892 = vmatpush.bf16.msra.mxu0 %v3806
    %3893 = vmatpush.bf16.msra.mxu0 %v3802
    %3894 = vmatpush.bf16.msra.mxu0 %v3798
    %3895 = vmatpush.bf16.msra.mxu0 %v3794
    %3896 = vmatpush.bf16.msra.mxu0 %v3790
    %3897 = vmatpush.bf16.msra.mxu0 %v3786
    %3898 = vmatpush.bf16.msra.mxu0 %v3782
    %3899 = vmatmul.bf16.gmra.mxu0 %v3451
    %v3900 = vpop.f32.mrf.mxu0
    %v3901 = vadd.f32 %v3888, %v3900
    %v3902 = vpop.f32.mrf.mxu0
    %3903 = vdwg.mxu0
    %3904 = vmatpush.bf16.msra.mxu0 %v3779
    %3905 = vmatpush.bf16.msra.mxu0 %v3775
    %3906 = vmatpush.bf16.msra.mxu0 %v3771
    %3907 = vmatpush.bf16.msra.mxu0 %v3767
    %3908 = vmatpush.bf16.msra.mxu0 %v3763
    %3909 = vmatpush.bf16.msra.mxu0 %v3759
    %3910 = vmatpush.bf16.msra.mxu0 %v3755
    %3911 = vmatpush.bf16.msra.mxu0 %v3751
    %3912 = vmatmul.bf16.gmra.mxu0 %v3450
    %v3913 = vpop.f32.mrf.mxu0
    %v3914 = vadd.f32 0.0, %v3913
    %v3915 = vpop.f32.mrf.mxu0
    %3916 = vdwg.mxu0
    %3917 = vmatpush.bf16.msra.mxu0 %v3811
    %3918 = vmatpush.bf16.msra.mxu0 %v3807
    %3919 = vmatpush.bf16.msra.mxu0 %v3803
    %3920 = vmatpush.bf16.msra.mxu0 %v3799
    %3921 = vmatpush.bf16.msra.mxu0 %v3795
    %3922 = vmatpush.bf16.msra.mxu0 %v3791
    %3923 = vmatpush.bf16.msra.mxu0 %v3787
    %3924 = vmatpush.bf16.msra.mxu0 %v3783
    %3925 = vmatmul.bf16.gmra.mxu0 %v3451
    %v3926 = vpop.f32.mrf.mxu0
    %v3927 = vadd.f32 %v3914, %v3926
    %v3928 = vpop.f32.mrf.mxu0
    %3929 = vdwg.mxu0
    %3930 = vmatpush.bf16.msra.mxu0 %v3780
    %3931 = vmatpush.bf16.msra.mxu0 %v3776
    %3932 = vmatpush.bf16.msra.mxu0 %v3772
    %3933 = vmatpush.bf16.msra.mxu0 %v3768
    %3934 = vmatpush.bf16.msra.mxu0 %v3764
    %3935 = vmatpush.bf16.msra.mxu0 %v3760
    %3936 = vmatpush.bf16.msra.mxu0 %v3756
    %3937 = vmatpush.bf16.msra.mxu0 %v3752
    %3938 = vmatmul.bf16.gmra.mxu0 %v3450
    %v3939 = vpop.f32.mrf.mxu0
    %v3940 = vadd.f32 0.0, %v3939
    %v3941 = vpop.f32.mrf.mxu0
    %3942 = vdwg.mxu0
    %3943 = vmatpush.bf16.msra.mxu0 %v3812
    %3944 = vmatpush.bf16.msra.mxu0 %v3808
    %3945 = vmatpush.bf16.msra.mxu0 %v3804
    %3946 = vmatpush.bf16.msra.mxu0 %v3800
    %3947 = vmatpush.bf16.msra.mxu0 %v3796
    %3948 = vmatpush.bf16.msra.mxu0 %v3792
    %3949 = vmatpush.bf16.msra.mxu0 %v3788
    %3950 = vmatpush.bf16.msra.mxu0 %v3784
    %3951 = vmatmul.bf16.gmra.mxu0 %v3451
    %v3952 = vpop.f32.mrf.mxu0
    %v3953 = vadd.f32 %v3940, %v3952
    %v3954 = vpop.f32.mrf.mxu0
    %3955 = vdwg.mxu0
    %3956 = vmatpush.bf16.msra.mxu0 %v3781
    %3957 = vmatpush.bf16.msra.mxu0 %v3777
    %3958 = vmatpush.bf16.msra.mxu0 %v3773
    %3959 = vmatpush.bf16.msra.mxu0 %v3769
    %3960 = vmatpush.bf16.msra.mxu0 %v3765
    %3961 = vmatpush.bf16.msra.mxu0 %v3761
    %3962 = vmatpush.bf16.msra.mxu0 %v3757
    %3963 = vmatpush.bf16.msra.mxu0 %v3753
    %3964 = vmatmul.bf16.gmra.mxu0 %v3450
    %v3965 = vpop.f32.mrf.mxu0
    %v3966 = vadd.f32 0.0, %v3965
    %v3967 = vpop.f32.mrf.mxu0
    %3968 = vdwg.mxu0
    %3969 = vmatpush.bf16.msra.mxu0 %v3813
    %3970 = vmatpush.bf16.msra.mxu0 %v3809
    %3971 = vmatpush.bf16.msra.mxu0 %v3805
    %3972 = vmatpush.bf16.msra.mxu0 %v3801
    %3973 = vmatpush.bf16.msra.mxu0 %v3797
    %3974 = vmatpush.bf16.msra.mxu0 %v3793
    %3975 = vmatpush.bf16.msra.mxu0 %v3789
    %3976 = vmatpush.bf16.msra.mxu0 %v3785
    %3977 = vmatmul.bf16.gmra.mxu0 %v3451
    %v3978 = vpop.f32.mrf.mxu0
    %v3979 = vadd.f32 %v3966, %v3978
    %v3980 = vpop.f32.mrf.mxu0
    %3981 = vdwg.mxu0
    %v3982 = vadd.f32 %v3477, %v3901
    %v3983 = vadd.f32 %v3503, %v3927
    %v3984 = vadd.f32 %v3529, %v3953
    %v3985 = vadd.f32 %v3555, %v3979
    %s3986 = scalar_lea.vmem [#allocation5], 160
    %v3987 = vld [vmem:[%s3986] ss:$8 sm:$0xf]
    %v3989 = vperm.slane %v3987, 0
    %v3990 = vperm.slane %v3987, 1
    %v3991 = vperm.slane %v3987, 2
    %v3992 = vperm.slane %v3987, 3
    %v3997 = vadd.f32 %v3982, %v3989
    %v3998 = vadd.f32 %v3983, %v3990
    %v3999 = vadd.f32 %v3984, %v3991
    %v4000 = vadd.f32 %v3985, %v3992
    %v4001 = vmax.f32 %v3997, 0.0
    %v4002 = vmax.f32 %v3998, 0.0
    %v4003 = vmax.f32 %v3999, 0.0
    %v4004 = vmax.f32 %v4000, 0.0
    %v4005 = vld [vmem:[#allocation2 + $0x800] sm:$0xff]
    %v4006 = vld [vmem:[#allocation2 + $0x810] sm:$0xff]
    %v4007 = vld [vmem:[#allocation2 + $0x820] sm:$0xff]
    %v4008 = vld [vmem:[#allocation2 + $0x830] sm:$0xff]
    %v4009 = vld [vmem:[#allocation2 + $0x840] sm:$0xff]
    %v4010 = vld [vmem:[#allocation2 + $0x850] sm:$0xff]
    %v4011 = vld [vmem:[#allocation2 + $0x860] sm:$0xff]
    %v4012 = vld [vmem:[#allocation2 + $0x870] sm:$0xff]
    %v4013 = vld [vmem:[#allocation2 + $0x880] sm:$0xff]
    %v4014 = vld [vmem:[#allocation2 + $0x890] sm:$0xff]
    %v4015 = vld [vmem:[#allocation2 + $0x8a0] sm:$0xff]
    %v4016 = vld [vmem:[#allocation2 + $0x8b0] sm:$0xff]
    %v4017 = vld [vmem:[#allocation2 + $0x8c0] sm:$0xff]
    %v4018 = vld [vmem:[#allocation2 + $0x8d0] sm:$0xff]
    %v4019 = vld [vmem:[#allocation2 + $0x8e0] sm:$0xff]
    %v4020 = vld [vmem:[#allocation2 + $0x8f0] sm:$0xff]
    %v4021 = vld [vmem:[#allocation2 + $0x900] sm:$0xff]
    %v4022 = vld [vmem:[#allocation2 + $0x910] sm:$0xff]
    %v4023 = vld [vmem:[#allocation2 + $0x920] sm:$0xff]
    %v4024 = vld [vmem:[#allocation2 + $0x930] sm:$0xff]
    %v4025 = vld [vmem:[#allocation2 + $0x940] sm:$0xff]
    %v4026 = vld [vmem:[#allocation2 + $0x950] sm:$0xff]
    %v4027 = vld [vmem:[#allocation2 + $0x960] sm:$0xff]
    %v4028 = vld [vmem:[#allocation2 + $0x970] sm:$0xff]
    %v4029 = vld [vmem:[#allocation2 + $0x980] sm:$0xff]
    %v4030 = vld [vmem:[#allocation2 + $0x990] sm:$0xff]
    %v4031 = vld [vmem:[#allocation2 + $0x9a0] sm:$0xff]
    %v4032 = vld [vmem:[#allocation2 + $0x9b0] sm:$0xff]
    %v4033 = vld [vmem:[#allocation2 + $0x9c0] sm:$0xff]
    %v4034 = vld [vmem:[#allocation2 + $0x9d0] sm:$0xff]
    %v4035 = vld [vmem:[#allocation2 + $0x9e0] sm:$0xff]
    %v4036 = vld [vmem:[#allocation2 + $0x9f0] sm:$0xff]
    %v4037 = vld [vmem:[#allocation2 + $0xa00] sm:$0xff]
    %v4038 = vld [vmem:[#allocation2 + $0xa10] sm:$0xff]
    %v4039 = vld [vmem:[#allocation2 + $0xa20] sm:$0xff]
    %v4040 = vld [vmem:[#allocation2 + $0xa30] sm:$0xff]
    %v4041 = vld [vmem:[#allocation2 + $0xa40] sm:$0xff]
    %v4042 = vld [vmem:[#allocation2 + $0xa50] sm:$0xff]
    %v4043 = vld [vmem:[#allocation2 + $0xa60] sm:$0xff]
    %v4044 = vld [vmem:[#allocation2 + $0xa70] sm:$0xff]
    %v4045 = vld [vmem:[#allocation2 + $0xa80] sm:$0xff]
    %v4046 = vld [vmem:[#allocation2 + $0xa90] sm:$0xff]
    %v4047 = vld [vmem:[#allocation2 + $0xaa0] sm:$0xff]
    %v4048 = vld [vmem:[#allocation2 + $0xab0] sm:$0xff]
    %v4049 = vld [vmem:[#allocation2 + $0xac0] sm:$0xff]
    %v4050 = vld [vmem:[#allocation2 + $0xad0] sm:$0xff]
    %v4051 = vld [vmem:[#allocation2 + $0xae0] sm:$0xff]
    %v4052 = vld [vmem:[#allocation2 + $0xaf0] sm:$0xff]
    %v4053 = vld [vmem:[#allocation2 + $0xb00] sm:$0xff]
    %v4054 = vld [vmem:[#allocation2 + $0xb10] sm:$0xff]
    %v4055 = vld [vmem:[#allocation2 + $0xb20] sm:$0xff]
    %v4056 = vld [vmem:[#allocation2 + $0xb30] sm:$0xff]
    %v4057 = vld [vmem:[#allocation2 + $0xb40] sm:$0xff]
    %v4058 = vld [vmem:[#allocation2 + $0xb50] sm:$0xff]
    %v4059 = vld [vmem:[#allocation2 + $0xb60] sm:$0xff]
    %v4060 = vld [vmem:[#allocation2 + $0xb70] sm:$0xff]
    %v4061 = vld [vmem:[#allocation2 + $0xb80] sm:$0xff]
    %v4062 = vld [vmem:[#allocation2 + $0xb90] sm:$0xff]
    %v4063 = vld [vmem:[#allocation2 + $0xba0] sm:$0xff]
    %v4064 = vld [vmem:[#allocation2 + $0xbb0] sm:$0xff]
    %v4065 = vld [vmem:[#allocation2 + $0xbc0] sm:$0xff]
    %v4066 = vld [vmem:[#allocation2 + $0xbd0] sm:$0xff]
    %v4067 = vld [vmem:[#allocation2 + $0xbe0] sm:$0xff]
    %v4068 = vld [vmem:[#allocation2 + $0xbf0] sm:$0xff]
    %v4069 = vld [vmem:[#allocation2 + $0xc00] sm:$0xff]
    %v4070 = vld [vmem:[#allocation2 + $0xc10] sm:$0xff]
    %v4071 = vld [vmem:[#allocation2 + $0xc20] sm:$0xff]
    %v4072 = vld [vmem:[#allocation2 + $0xc30] sm:$0xff]
    %v4073 = vld [vmem:[#allocation2 + $0xc40] sm:$0xff]
    %v4074 = vld [vmem:[#allocation2 + $0xc50] sm:$0xff]
    %v4075 = vld [vmem:[#allocation2 + $0xc60] sm:$0xff]
    %v4076 = vld [vmem:[#allocation2 + $0xc70] sm:$0xff]
    %v4077 = vld [vmem:[#allocation2 + $0xc80] sm:$0xff]
    %v4078 = vld [vmem:[#allocation2 + $0xc90] sm:$0xff]
    %v4079 = vld [vmem:[#allocation2 + $0xca0] sm:$0xff]
    %v4080 = vld [vmem:[#allocation2 + $0xcb0] sm:$0xff]
    %v4081 = vld [vmem:[#allocation2 + $0xcc0] sm:$0xff]
    %v4082 = vld [vmem:[#allocation2 + $0xcd0] sm:$0xff]
    %v4083 = vld [vmem:[#allocation2 + $0xce0] sm:$0xff]
    %v4084 = vld [vmem:[#allocation2 + $0xcf0] sm:$0xff]
    %v4085 = vld [vmem:[#allocation2 + $0xd00] sm:$0xff]
    %v4086 = vld [vmem:[#allocation2 + $0xd10] sm:$0xff]
    %v4087 = vld [vmem:[#allocation2 + $0xd20] sm:$0xff]
    %v4088 = vld [vmem:[#allocation2 + $0xd30] sm:$0xff]
    %v4089 = vld [vmem:[#allocation2 + $0xd40] sm:$0xff]
    %v4090 = vld [vmem:[#allocation2 + $0xd50] sm:$0xff]
    %v4091 = vld [vmem:[#allocation2 + $0xd60] sm:$0xff]
    %v4092 = vld [vmem:[#allocation2 + $0xd70] sm:$0xff]
    %v4093 = vld [vmem:[#allocation2 + $0xd80] sm:$0xff]
    %v4094 = vld [vmem:[#allocation2 + $0xd90] sm:$0xff]
    %v4095 = vld [vmem:[#allocation2 + $0xda0] sm:$0xff]
    %v4096 = vld [vmem:[#allocation2 + $0xdb0] sm:$0xff]
    %v4097 = vld [vmem:[#allocation2 + $0xdc0] sm:$0xff]
    %v4098 = vld [vmem:[#allocation2 + $0xdd0] sm:$0xff]
    %v4099 = vld [vmem:[#allocation2 + $0xde0] sm:$0xff]
    %v4100 = vld [vmem:[#allocation2 + $0xdf0] sm:$0xff]
    %v4101 = vld [vmem:[#allocation2 + $0xe00] sm:$0xff]
    %v4102 = vld [vmem:[#allocation2 + $0xe10] sm:$0xff]
    %v4103 = vld [vmem:[#allocation2 + $0xe20] sm:$0xff]
    %v4104 = vld [vmem:[#allocation2 + $0xe30] sm:$0xff]
    %v4105 = vld [vmem:[#allocation2 + $0xe40] sm:$0xff]
    %v4106 = vld [vmem:[#allocation2 + $0xe50] sm:$0xff]
    %v4107 = vld [vmem:[#allocation2 + $0xe60] sm:$0xff]
    %v4108 = vld [vmem:[#allocation2 + $0xe70] sm:$0xff]
    %v4109 = vld [vmem:[#allocation2 + $0xe80] sm:$0xff]
    %v4110 = vld [vmem:[#allocation2 + $0xe90] sm:$0xff]
    %v4111 = vld [vmem:[#allocation2 + $0xea0] sm:$0xff]
    %v4112 = vld [vmem:[#allocation2 + $0xeb0] sm:$0xff]
    %v4113 = vld [vmem:[#allocation2 + $0xec0] sm:$0xff]
    %v4114 = vld [vmem:[#allocation2 + $0xed0] sm:$0xff]
    %v4115 = vld [vmem:[#allocation2 + $0xee0] sm:$0xff]
    %v4116 = vld [vmem:[#allocation2 + $0xef0] sm:$0xff]
    %v4117 = vld [vmem:[#allocation2 + $0xf00] sm:$0xff]
    %v4118 = vld [vmem:[#allocation2 + $0xf10] sm:$0xff]
    %v4119 = vld [vmem:[#allocation2 + $0xf20] sm:$0xff]
    %v4120 = vld [vmem:[#allocation2 + $0xf30] sm:$0xff]
    %v4121 = vld [vmem:[#allocation2 + $0xf40] sm:$0xff]
    %v4122 = vld [vmem:[#allocation2 + $0xf50] sm:$0xff]
    %v4123 = vld [vmem:[#allocation2 + $0xf60] sm:$0xff]
    %v4124 = vld [vmem:[#allocation2 + $0xf70] sm:$0xff]
    %v4125 = vld [vmem:[#allocation2 + $0xf80] sm:$0xff]
    %v4126 = vld [vmem:[#allocation2 + $0xf90] sm:$0xff]
    %v4127 = vld [vmem:[#allocation2 + $0xfa0] sm:$0xff]
    %v4128 = vld [vmem:[#allocation2 + $0xfb0] sm:$0xff]
    %v4129 = vld [vmem:[#allocation2 + $0xfc0] sm:$0xff]
    %v4130 = vld [vmem:[#allocation2 + $0xfd0] sm:$0xff]
    %v4131 = vld [vmem:[#allocation2 + $0xfe0] sm:$0xff]
    %v4132 = vld [vmem:[#allocation2 + $0xff0] sm:$0xff]
    %v4133 = vpack.c.bf16 %v4002, %v4001
    %v4134 = vpack.c.bf16 %v4004, %v4003
    %v4135 = vunpack.c.l.bf16 %v4133
    %v4136 = vunpack.c.h.bf16 %v4133
    %v4137 = vunpack.c.l.bf16 %v4134
    %v4138 = vunpack.c.h.bf16 %v4134
    %v4139 = vsub.f32 %v4001, %v4135
    %v4140 = vsub.f32 %v4002, %v4136
    %v4141 = vsub.f32 %v4003, %v4137
    %v4142 = vsub.f32 %v4004, %v4138
    %v4143 = vpack.c.bf16 %v4139, %v4139
    %v4144 = vpack.c.bf16 %v4140, %v4140
    %v4145 = vpack.c.bf16 %v4141, %v4141
    %v4146 = vpack.c.bf16 %v4142, %v4142
    %v4211 = vunpack.c.l.b16 %v4005
    %v4212 = vunpack.c.h.b16 %v4005
    %v4213 = vunpack.c.l.b16 %v4006
    %v4214 = vunpack.c.h.b16 %v4006
    %v4215 = vunpack.c.l.b16 %v4007
    %v4216 = vunpack.c.h.b16 %v4007
    %v4217 = vunpack.c.l.b16 %v4008
    %v4218 = vunpack.c.h.b16 %v4008
    %v4219 = vunpack.c.l.b16 %v4009
    %v4220 = vunpack.c.h.b16 %v4009
    %v4221 = vunpack.c.l.b16 %v4010
    %v4222 = vunpack.c.h.b16 %v4010
    %v4223 = vunpack.c.l.b16 %v4011
    %v4224 = vunpack.c.h.b16 %v4011
    %v4225 = vunpack.c.l.b16 %v4012
    %v4226 = vunpack.c.h.b16 %v4012
    %v4227 = vunpack.c.l.b16 %v4013
    %v4228 = vunpack.c.h.b16 %v4013
    %v4229 = vunpack.c.l.b16 %v4014
    %v4230 = vunpack.c.h.b16 %v4014
    %v4231 = vunpack.c.l.b16 %v4015
    %v4232 = vunpack.c.h.b16 %v4015
    %v4233 = vunpack.c.l.b16 %v4016
    %v4234 = vunpack.c.h.b16 %v4016
    %v4235 = vunpack.c.l.b16 %v4017
    %v4236 = vunpack.c.h.b16 %v4017
    %v4237 = vunpack.c.l.b16 %v4018
    %v4238 = vunpack.c.h.b16 %v4018
    %v4239 = vunpack.c.l.b16 %v4019
    %v4240 = vunpack.c.h.b16 %v4019
    %v4241 = vunpack.c.l.b16 %v4020
    %v4242 = vunpack.c.h.b16 %v4020
    %v4243 = vunpack.c.l.b16 %v4021
    %v4244 = vunpack.c.h.b16 %v4021
    %v4245 = vunpack.c.l.b16 %v4022
    %v4246 = vunpack.c.h.b16 %v4022
    %v4247 = vunpack.c.l.b16 %v4023
    %v4248 = vunpack.c.h.b16 %v4023
    %v4249 = vunpack.c.l.b16 %v4024
    %v4250 = vunpack.c.h.b16 %v4024
    %v4251 = vunpack.c.l.b16 %v4025
    %v4252 = vunpack.c.h.b16 %v4025
    %v4253 = vunpack.c.l.b16 %v4026
    %v4254 = vunpack.c.h.b16 %v4026
    %v4255 = vunpack.c.l.b16 %v4027
    %v4256 = vunpack.c.h.b16 %v4027
    %v4257 = vunpack.c.l.b16 %v4028
    %v4258 = vunpack.c.h.b16 %v4028
    %v4259 = vunpack.c.l.b16 %v4029
    %v4260 = vunpack.c.h.b16 %v4029
    %v4261 = vunpack.c.l.b16 %v4030
    %v4262 = vunpack.c.h.b16 %v4030
    %v4263 = vunpack.c.l.b16 %v4031
    %v4264 = vunpack.c.h.b16 %v4031
    %v4265 = vunpack.c.l.b16 %v4032
    %v4266 = vunpack.c.h.b16 %v4032
    %v4267 = vunpack.c.l.b16 %v4033
    %v4268 = vunpack.c.h.b16 %v4033
    %v4269 = vunpack.c.l.b16 %v4034
    %v4270 = vunpack.c.h.b16 %v4034
    %v4271 = vunpack.c.l.b16 %v4035
    %v4272 = vunpack.c.h.b16 %v4035
    %v4273 = vunpack.c.l.b16 %v4036
    %v4274 = vunpack.c.h.b16 %v4036
    %v4275 = vunpack.c.l.b16 %v4037
    %v4276 = vunpack.c.h.b16 %v4037
    %v4277 = vunpack.c.l.b16 %v4038
    %v4278 = vunpack.c.h.b16 %v4038
    %v4279 = vunpack.c.l.b16 %v4039
    %v4280 = vunpack.c.h.b16 %v4039
    %v4281 = vunpack.c.l.b16 %v4040
    %v4282 = vunpack.c.h.b16 %v4040
    %v4283 = vunpack.c.l.b16 %v4041
    %v4284 = vunpack.c.h.b16 %v4041
    %v4285 = vunpack.c.l.b16 %v4042
    %v4286 = vunpack.c.h.b16 %v4042
    %v4287 = vunpack.c.l.b16 %v4043
    %v4288 = vunpack.c.h.b16 %v4043
    %v4289 = vunpack.c.l.b16 %v4044
    %v4290 = vunpack.c.h.b16 %v4044
    %v4291 = vunpack.c.l.b16 %v4045
    %v4292 = vunpack.c.h.b16 %v4045
    %v4293 = vunpack.c.l.b16 %v4046
    %v4294 = vunpack.c.h.b16 %v4046
    %v4295 = vunpack.c.l.b16 %v4047
    %v4296 = vunpack.c.h.b16 %v4047
    %v4297 = vunpack.c.l.b16 %v4048
    %v4298 = vunpack.c.h.b16 %v4048
    %v4299 = vunpack.c.l.b16 %v4049
    %v4300 = vunpack.c.h.b16 %v4049
    %v4301 = vunpack.c.l.b16 %v4050
    %v4302 = vunpack.c.h.b16 %v4050
    %v4303 = vunpack.c.l.b16 %v4051
    %v4304 = vunpack.c.h.b16 %v4051
    %v4305 = vunpack.c.l.b16 %v4052
    %v4306 = vunpack.c.h.b16 %v4052
    %v4307 = vunpack.c.l.b16 %v4053
    %v4308 = vunpack.c.h.b16 %v4053
    %v4309 = vunpack.c.l.b16 %v4054
    %v4310 = vunpack.c.h.b16 %v4054
    %v4311 = vunpack.c.l.b16 %v4055
    %v4312 = vunpack.c.h.b16 %v4055
    %v4313 = vunpack.c.l.b16 %v4056
    %v4314 = vunpack.c.h.b16 %v4056
    %v4315 = vunpack.c.l.b16 %v4057
    %v4316 = vunpack.c.h.b16 %v4057
    %v4317 = vunpack.c.l.b16 %v4058
    %v4318 = vunpack.c.h.b16 %v4058
    %v4319 = vunpack.c.l.b16 %v4059
    %v4320 = vunpack.c.h.b16 %v4059
    %v4321 = vunpack.c.l.b16 %v4060
    %v4322 = vunpack.c.h.b16 %v4060
    %v4323 = vunpack.c.l.b16 %v4061
    %v4324 = vunpack.c.h.b16 %v4061
    %v4325 = vunpack.c.l.b16 %v4062
    %v4326 = vunpack.c.h.b16 %v4062
    %v4327 = vunpack.c.l.b16 %v4063
    %v4328 = vunpack.c.h.b16 %v4063
    %v4329 = vunpack.c.l.b16 %v4064
    %v4330 = vunpack.c.h.b16 %v4064
    %v4331 = vunpack.c.l.b16 %v4065
    %v4332 = vunpack.c.h.b16 %v4065
    %v4333 = vunpack.c.l.b16 %v4066
    %v4334 = vunpack.c.h.b16 %v4066
    %v4335 = vunpack.c.l.b16 %v4067
    %v4336 = vunpack.c.h.b16 %v4067
    %v4337 = vunpack.c.l.b16 %v4068
    %v4338 = vunpack.c.h.b16 %v4068
    %v4339 = vpack.c.b16 %v4213, %v4211
    %v4340 = vpack.c.b16 %v4214, %v4212
    %v4341 = vpack.c.b16 %v4217, %v4215
    %v4342 = vpack.c.b16 %v4218, %v4216
    %v4343 = vpack.c.b16 %v4221, %v4219
    %v4344 = vpack.c.b16 %v4222, %v4220
    %v4345 = vpack.c.b16 %v4225, %v4223
    %v4346 = vpack.c.b16 %v4226, %v4224
    %v4347 = vpack.c.b16 %v4229, %v4227
    %v4348 = vpack.c.b16 %v4230, %v4228
    %v4349 = vpack.c.b16 %v4233, %v4231
    %v4350 = vpack.c.b16 %v4234, %v4232
    %v4351 = vpack.c.b16 %v4237, %v4235
    %v4352 = vpack.c.b16 %v4238, %v4236
    %v4353 = vpack.c.b16 %v4241, %v4239
    %v4354 = vpack.c.b16 %v4242, %v4240
    %v4355 = vpack.c.b16 %v4245, %v4243
    %v4356 = vpack.c.b16 %v4246, %v4244
    %v4357 = vpack.c.b16 %v4249, %v4247
    %v4358 = vpack.c.b16 %v4250, %v4248
    %v4359 = vpack.c.b16 %v4253, %v4251
    %v4360 = vpack.c.b16 %v4254, %v4252
    %v4361 = vpack.c.b16 %v4257, %v4255
    %v4362 = vpack.c.b16 %v4258, %v4256
    %v4363 = vpack.c.b16 %v4261, %v4259
    %v4364 = vpack.c.b16 %v4262, %v4260
    %v4365 = vpack.c.b16 %v4265, %v4263
    %v4366 = vpack.c.b16 %v4266, %v4264
    %v4367 = vpack.c.b16 %v4269, %v4267
    %v4368 = vpack.c.b16 %v4270, %v4268
    %v4369 = vpack.c.b16 %v4273, %v4271
    %v4370 = vpack.c.b16 %v4274, %v4272
    %v4371 = vpack.c.b16 %v4277, %v4275
    %v4372 = vpack.c.b16 %v4278, %v4276
    %v4373 = vpack.c.b16 %v4281, %v4279
    %v4374 = vpack.c.b16 %v4282, %v4280
    %v4375 = vpack.c.b16 %v4285, %v4283
    %v4376 = vpack.c.b16 %v4286, %v4284
    %v4377 = vpack.c.b16 %v4289, %v4287
    %v4378 = vpack.c.b16 %v4290, %v4288
    %v4379 = vpack.c.b16 %v4293, %v4291
    %v4380 = vpack.c.b16 %v4294, %v4292
    %v4381 = vpack.c.b16 %v4297, %v4295
    %v4382 = vpack.c.b16 %v4298, %v4296
    %v4383 = vpack.c.b16 %v4301, %v4299
    %v4384 = vpack.c.b16 %v4302, %v4300
    %v4385 = vpack.c.b16 %v4305, %v4303
    %v4386 = vpack.c.b16 %v4306, %v4304
    %v4387 = vpack.c.b16 %v4309, %v4307
    %v4388 = vpack.c.b16 %v4310, %v4308
    %v4389 = vpack.c.b16 %v4313, %v4311
    %v4390 = vpack.c.b16 %v4314, %v4312
    %v4391 = vpack.c.b16 %v4317, %v4315
    %v4392 = vpack.c.b16 %v4318, %v4316
    %v4393 = vpack.c.b16 %v4321, %v4319
    %v4394 = vpack.c.b16 %v4322, %v4320
    %v4395 = vpack.c.b16 %v4325, %v4323
    %v4396 = vpack.c.b16 %v4326, %v4324
    %v4397 = vpack.c.b16 %v4329, %v4327
    %v4398 = vpack.c.b16 %v4330, %v4328
    %v4399 = vpack.c.b16 %v4333, %v4331
    %v4400 = vpack.c.b16 %v4334, %v4332
    %v4401 = vpack.c.b16 %v4337, %v4335
    %v4402 = vpack.c.b16 %v4338, %v4336
    %4467 = vmatpush.bf16.msra.mxu0 %v4353
    %4468 = vmatpush.bf16.msra.mxu0 %v4351
    %4469 = vmatpush.bf16.msra.mxu0 %v4349
    %4470 = vmatpush.bf16.msra.mxu0 %v4347
    %4471 = vmatpush.bf16.msra.mxu0 %v4345
    %4472 = vmatpush.bf16.msra.mxu0 %v4343
    %4473 = vmatpush.bf16.msra.mxu0 %v4341
    %4474 = vmatpush.bf16.msra.mxu0 %v4339
    %4475 = vmatmul.bf16.gmra.mxu0 %v4143
    %v4476 = vpop.f32.mrf.mxu0
    %v4477 = vadd.f32 0.0, %v4476
    %v4478 = vpop.f32.mrf.mxu0
    %4479 = vdwg.mxu0
    %4480 = vmatpush.bf16.msra.mxu0 %v4369
    %4481 = vmatpush.bf16.msra.mxu0 %v4367
    %4482 = vmatpush.bf16.msra.mxu0 %v4365
    %4483 = vmatpush.bf16.msra.mxu0 %v4363
    %4484 = vmatpush.bf16.msra.mxu0 %v4361
    %4485 = vmatpush.bf16.msra.mxu0 %v4359
    %4486 = vmatpush.bf16.msra.mxu0 %v4357
    %4487 = vmatpush.bf16.msra.mxu0 %v4355
    %4488 = vmatmul.bf16.gmra.mxu0 %v4144
    %v4489 = vpop.f32.mrf.mxu0
    %v4490 = vadd.f32 %v4477, %v4489
    %v4491 = vpop.f32.mrf.mxu0
    %4492 = vdwg.mxu0
    %4493 = vmatpush.bf16.msra.mxu0 %v4385
    %4494 = vmatpush.bf16.msra.mxu0 %v4383
    %4495 = vmatpush.bf16.msra.mxu0 %v4381
    %4496 = vmatpush.bf16.msra.mxu0 %v4379
    %4497 = vmatpush.bf16.msra.mxu0 %v4377
    %4498 = vmatpush.bf16.msra.mxu0 %v4375
    %4499 = vmatpush.bf16.msra.mxu0 %v4373
    %4500 = vmatpush.bf16.msra.mxu0 %v4371
    %4501 = vmatmul.bf16.gmra.mxu0 %v4145
    %v4502 = vpop.f32.mrf.mxu0
    %v4503 = vadd.f32 %v4490, %v4502
    %v4504 = vpop.f32.mrf.mxu0
    %4505 = vdwg.mxu0
    %4506 = vmatpush.bf16.msra.mxu0 %v4401
    %4507 = vmatpush.bf16.msra.mxu0 %v4399
    %4508 = vmatpush.bf16.msra.mxu0 %v4397
    %4509 = vmatpush.bf16.msra.mxu0 %v4395
    %4510 = vmatpush.bf16.msra.mxu0 %v4393
    %4511 = vmatpush.bf16.msra.mxu0 %v4391
    %4512 = vmatpush.bf16.msra.mxu0 %v4389
    %4513 = vmatpush.bf16.msra.mxu0 %v4387
    %4514 = vmatmul.bf16.gmra.mxu0 %v4146
    %v4515 = vpop.f32.mrf.mxu0
    %v4516 = vadd.f32 %v4503, %v4515
    %v4517 = vpop.f32.mrf.mxu0
    %4518 = vdwg.mxu0
    %4519 = vmatpush.bf16.msra.mxu0 %v4354
    %4520 = vmatpush.bf16.msra.mxu0 %v4352
    %4521 = vmatpush.bf16.msra.mxu0 %v4350
    %4522 = vmatpush.bf16.msra.mxu0 %v4348
    %4523 = vmatpush.bf16.msra.mxu0 %v4346
    %4524 = vmatpush.bf16.msra.mxu0 %v4344
    %4525 = vmatpush.bf16.msra.mxu0 %v4342
    %4526 = vmatpush.bf16.msra.mxu0 %v4340
    %4527 = vmatmul.bf16.gmra.mxu0 %v4143
    %v4528 = vpop.f32.mrf.mxu0
    %v4529 = vadd.f32 0.0, %v4528
    %v4530 = vpop.f32.mrf.mxu0
    %4531 = vdwg.mxu0
    %4532 = vmatpush.bf16.msra.mxu0 %v4370
    %4533 = vmatpush.bf16.msra.mxu0 %v4368
    %4534 = vmatpush.bf16.msra.mxu0 %v4366
    %4535 = vmatpush.bf16.msra.mxu0 %v4364
    %4536 = vmatpush.bf16.msra.mxu0 %v4362
    %4537 = vmatpush.bf16.msra.mxu0 %v4360
    %4538 = vmatpush.bf16.msra.mxu0 %v4358
    %4539 = vmatpush.bf16.msra.mxu0 %v4356
    %4540 = vmatmul.bf16.gmra.mxu0 %v4144
    %v4541 = vpop.f32.mrf.mxu0
    %v4542 = vadd.f32 %v4529, %v4541
    %v4543 = vpop.f32.mrf.mxu0
    %4544 = vdwg.mxu0
    %4545 = vmatpush.bf16.msra.mxu0 %v4386
    %4546 = vmatpush.bf16.msra.mxu0 %v4384
    %4547 = vmatpush.bf16.msra.mxu0 %v4382
    %4548 = vmatpush.bf16.msra.mxu0 %v4380
    %4549 = vmatpush.bf16.msra.mxu0 %v4378
    %4550 = vmatpush.bf16.msra.mxu0 %v4376
    %4551 = vmatpush.bf16.msra.mxu0 %v4374
    %4552 = vmatpush.bf16.msra.mxu0 %v4372
    %4553 = vmatmul.bf16.gmra.mxu0 %v4145
    %v4554 = vpop.f32.mrf.mxu0
    %v4555 = vadd.f32 %v4542, %v4554
    %v4556 = vpop.f32.mrf.mxu0
    %4557 = vdwg.mxu0
    %4558 = vmatpush.bf16.msra.mxu0 %v4402
    %4559 = vmatpush.bf16.msra.mxu0 %v4400
    %4560 = vmatpush.bf16.msra.mxu0 %v4398
    %4561 = vmatpush.bf16.msra.mxu0 %v4396
    %4562 = vmatpush.bf16.msra.mxu0 %v4394
    %4563 = vmatpush.bf16.msra.mxu0 %v4392
    %4564 = vmatpush.bf16.msra.mxu0 %v4390
    %4565 = vmatpush.bf16.msra.mxu0 %v4388
    %4566 = vmatmul.bf16.gmra.mxu0 %v4146
    %v4567 = vpop.f32.mrf.mxu0
    %v4568 = vadd.f32 %v4555, %v4567
    %v4569 = vpop.f32.mrf.mxu0
    %4570 = vdwg.mxu0
    %v4573 = vunpack.c.l.b16 %v4133
    %v4574 = vunpack.c.h.b16 %v4133
    %v4575 = vunpack.c.l.b16 %v4134
    %v4576 = vunpack.c.h.b16 %v4134
    %v4577 = vpack.c.b16 %v4573, %v4573
    %v4578 = vpack.c.b16 %v4574, %v4574
    %v4579 = vpack.c.b16 %v4575, %v4575
    %v4580 = vpack.c.b16 %v4576, %v4576
    %4585 = vmatpush.bf16.msra.mxu0 %v4353
    %4586 = vmatpush.bf16.msra.mxu0 %v4351
    %4587 = vmatpush.bf16.msra.mxu0 %v4349
    %4588 = vmatpush.bf16.msra.mxu0 %v4347
    %4589 = vmatpush.bf16.msra.mxu0 %v4345
    %4590 = vmatpush.bf16.msra.mxu0 %v4343
    %4591 = vmatpush.bf16.msra.mxu0 %v4341
    %4592 = vmatpush.bf16.msra.mxu0 %v4339
    %4593 = vmatmul.bf16.gmra.mxu0 %v4577
    %v4594 = vpop.f32.mrf.mxu0
    %v4595 = vadd.f32 %v4516, %v4594
    %v4596 = vpop.f32.mrf.mxu0
    %4597 = vdwg.mxu0
    %4598 = vmatpush.bf16.msra.mxu0 %v4369
    %4599 = vmatpush.bf16.msra.mxu0 %v4367
    %4600 = vmatpush.bf16.msra.mxu0 %v4365
    %4601 = vmatpush.bf16.msra.mxu0 %v4363
    %4602 = vmatpush.bf16.msra.mxu0 %v4361
    %4603 = vmatpush.bf16.msra.mxu0 %v4359
    %4604 = vmatpush.bf16.msra.mxu0 %v4357
    %4605 = vmatpush.bf16.msra.mxu0 %v4355
    %4606 = vmatmul.bf16.gmra.mxu0 %v4578
    %v4607 = vpop.f32.mrf.mxu0
    %v4608 = vadd.f32 %v4595, %v4607
    %v4609 = vpop.f32.mrf.mxu0
    %4610 = vdwg.mxu0
    %4611 = vmatpush.bf16.msra.mxu0 %v4385
    %4612 = vmatpush.bf16.msra.mxu0 %v4383
    %4613 = vmatpush.bf16.msra.mxu0 %v4381
    %4614 = vmatpush.bf16.msra.mxu0 %v4379
    %4615 = vmatpush.bf16.msra.mxu0 %v4377
    %4616 = vmatpush.bf16.msra.mxu0 %v4375
    %4617 = vmatpush.bf16.msra.mxu0 %v4373
    %4618 = vmatpush.bf16.msra.mxu0 %v4371
    %4619 = vmatmul.bf16.gmra.mxu0 %v4579
    %v4620 = vpop.f32.mrf.mxu0
    %v4621 = vadd.f32 %v4608, %v4620
    %v4622 = vpop.f32.mrf.mxu0
    %4623 = vdwg.mxu0
    %4624 = vmatpush.bf16.msra.mxu0 %v4401
    %4625 = vmatpush.bf16.msra.mxu0 %v4399
    %4626 = vmatpush.bf16.msra.mxu0 %v4397
    %4627 = vmatpush.bf16.msra.mxu0 %v4395
    %4628 = vmatpush.bf16.msra.mxu0 %v4393
    %4629 = vmatpush.bf16.msra.mxu0 %v4391
    %4630 = vmatpush.bf16.msra.mxu0 %v4389
    %4631 = vmatpush.bf16.msra.mxu0 %v4387
    %4632 = vmatmul.bf16.gmra.mxu0 %v4580
    %v4633 = vpop.f32.mrf.mxu0
    %v4634 = vadd.f32 %v4621, %v4633
    %v4635 = vpop.f32.mrf.mxu0
    %4636 = vdwg.mxu0
    %4637 = vmatpush.bf16.msra.mxu0 %v4354
    %4638 = vmatpush.bf16.msra.mxu0 %v4352
    %4639 = vmatpush.bf16.msra.mxu0 %v4350
    %4640 = vmatpush.bf16.msra.mxu0 %v4348
    %4641 = vmatpush.bf16.msra.mxu0 %v4346
    %4642 = vmatpush.bf16.msra.mxu0 %v4344
    %4643 = vmatpush.bf16.msra.mxu0 %v4342
    %4644 = vmatpush.bf16.msra.mxu0 %v4340
    %4645 = vmatmul.bf16.gmra.mxu0 %v4577
    %v4646 = vpop.f32.mrf.mxu0
    %v4647 = vadd.f32 %v4568, %v4646
    %v4648 = vpop.f32.mrf.mxu0
    %4649 = vdwg.mxu0
    %4650 = vmatpush.bf16.msra.mxu0 %v4370
    %4651 = vmatpush.bf16.msra.mxu0 %v4368
    %4652 = vmatpush.bf16.msra.mxu0 %v4366
    %4653 = vmatpush.bf16.msra.mxu0 %v4364
    %4654 = vmatpush.bf16.msra.mxu0 %v4362
    %4655 = vmatpush.bf16.msra.mxu0 %v4360
    %4656 = vmatpush.bf16.msra.mxu0 %v4358
    %4657 = vmatpush.bf16.msra.mxu0 %v4356
    %4658 = vmatmul.bf16.gmra.mxu0 %v4578
    %v4659 = vpop.f32.mrf.mxu0
    %v4660 = vadd.f32 %v4647, %v4659
    %v4661 = vpop.f32.mrf.mxu0
    %4662 = vdwg.mxu0
    %4663 = vmatpush.bf16.msra.mxu0 %v4386
    %4664 = vmatpush.bf16.msra.mxu0 %v4384
    %4665 = vmatpush.bf16.msra.mxu0 %v4382
    %4666 = vmatpush.bf16.msra.mxu0 %v4380
    %4667 = vmatpush.bf16.msra.mxu0 %v4378
    %4668 = vmatpush.bf16.msra.mxu0 %v4376
    %4669 = vmatpush.bf16.msra.mxu0 %v4374
    %4670 = vmatpush.bf16.msra.mxu0 %v4372
    %4671 = vmatmul.bf16.gmra.mxu0 %v4579
    %v4672 = vpop.f32.mrf.mxu0
    %v4673 = vadd.f32 %v4660, %v4672
    %v4674 = vpop.f32.mrf.mxu0
    %4675 = vdwg.mxu0
    %4676 = vmatpush.bf16.msra.mxu0 %v4402
    %4677 = vmatpush.bf16.msra.mxu0 %v4400
    %4678 = vmatpush.bf16.msra.mxu0 %v4398
    %4679 = vmatpush.bf16.msra.mxu0 %v4396
    %4680 = vmatpush.bf16.msra.mxu0 %v4394
    %4681 = vmatpush.bf16.msra.mxu0 %v4392
    %4682 = vmatpush.bf16.msra.mxu0 %v4390
    %4683 = vmatpush.bf16.msra.mxu0 %v4388
    %4684 = vmatmul.bf16.gmra.mxu0 %v4580
    %v4685 = vpop.f32.mrf.mxu0
    %v4686 = vadd.f32 %v4673, %v4685
    %v4687 = vpop.f32.mrf.mxu0
    %4688 = vdwg.mxu0
    %v4753 = vunpack.c.l.b16 %v4069
    %v4754 = vunpack.c.h.b16 %v4069
    %v4755 = vunpack.c.l.b16 %v4070
    %v4756 = vunpack.c.h.b16 %v4070
    %v4757 = vunpack.c.l.b16 %v4071
    %v4758 = vunpack.c.h.b16 %v4071
    %v4759 = vunpack.c.l.b16 %v4072
    %v4760 = vunpack.c.h.b16 %v4072
    %v4761 = vunpack.c.l.b16 %v4073
    %v4762 = vunpack.c.h.b16 %v4073
    %v4763 = vunpack.c.l.b16 %v4074
    %v4764 = vunpack.c.h.b16 %v4074
    %v4765 = vunpack.c.l.b16 %v4075
    %v4766 = vunpack.c.h.b16 %v4075
    %v4767 = vunpack.c.l.b16 %v4076
    %v4768 = vunpack.c.h.b16 %v4076
    %v4769 = vunpack.c.l.b16 %v4077
    %v4770 = vunpack.c.h.b16 %v4077
    %v4771 = vunpack.c.l.b16 %v4078
    %v4772 = vunpack.c.h.b16 %v4078
    %v4773 = vunpack.c.l.b16 %v4079
    %v4774 = vunpack.c.h.b16 %v4079
    %v4775 = vunpack.c.l.b16 %v4080
    %v4776 = vunpack.c.h.b16 %v4080
    %v4777 = vunpack.c.l.b16 %v4081
    %v4778 = vunpack.c.h.b16 %v4081
    %v4779 = vunpack.c.l.b16 %v4082
    %v4780 = vunpack.c.h.b16 %v4082
    %v4781 = vunpack.c.l.b16 %v4083
    %v4782 = vunpack.c.h.b16 %v4083
    %v4783 = vunpack.c.l.b16 %v4084
    %v4784 = vunpack.c.h.b16 %v4084
    %v4785 = vunpack.c.l.b16 %v4085
    %v4786 = vunpack.c.h.b16 %v4085
    %v4787 = vunpack.c.l.b16 %v4086
    %v4788 = vunpack.c.h.b16 %v4086
    %v4789 = vunpack.c.l.b16 %v4087
    %v4790 = vunpack.c.h.b16 %v4087
    %v4791 = vunpack.c.l.b16 %v4088
    %v4792 = vunpack.c.h.b16 %v4088
    %v4793 = vunpack.c.l.b16 %v4089
    %v4794 = vunpack.c.h.b16 %v4089
    %v4795 = vunpack.c.l.b16 %v4090
    %v4796 = vunpack.c.h.b16 %v4090
    %v4797 = vunpack.c.l.b16 %v4091
    %v4798 = vunpack.c.h.b16 %v4091
    %v4799 = vunpack.c.l.b16 %v4092
    %v4800 = vunpack.c.h.b16 %v4092
    %v4801 = vunpack.c.l.b16 %v4093
    %v4802 = vunpack.c.h.b16 %v4093
    %v4803 = vunpack.c.l.b16 %v4094
    %v4804 = vunpack.c.h.b16 %v4094
    %v4805 = vunpack.c.l.b16 %v4095
    %v4806 = vunpack.c.h.b16 %v4095
    %v4807 = vunpack.c.l.b16 %v4096
    %v4808 = vunpack.c.h.b16 %v4096
    %v4809 = vunpack.c.l.b16 %v4097
    %v4810 = vunpack.c.h.b16 %v4097
    %v4811 = vunpack.c.l.b16 %v4098
    %v4812 = vunpack.c.h.b16 %v4098
    %v4813 = vunpack.c.l.b16 %v4099
    %v4814 = vunpack.c.h.b16 %v4099
    %v4815 = vunpack.c.l.b16 %v4100
    %v4816 = vunpack.c.h.b16 %v4100
    %v4817 = vunpack.c.l.b16 %v4101
    %v4818 = vunpack.c.h.b16 %v4101
    %v4819 = vunpack.c.l.b16 %v4102
    %v4820 = vunpack.c.h.b16 %v4102
    %v4821 = vunpack.c.l.b16 %v4103
    %v4822 = vunpack.c.h.b16 %v4103
    %v4823 = vunpack.c.l.b16 %v4104
    %v4824 = vunpack.c.h.b16 %v4104
    %v4825 = vunpack.c.l.b16 %v4105
    %v4826 = vunpack.c.h.b16 %v4105
    %v4827 = vunpack.c.l.b16 %v4106
    %v4828 = vunpack.c.h.b16 %v4106
    %v4829 = vunpack.c.l.b16 %v4107
    %v4830 = vunpack.c.h.b16 %v4107
    %v4831 = vunpack.c.l.b16 %v4108
    %v4832 = vunpack.c.h.b16 %v4108
    %v4833 = vunpack.c.l.b16 %v4109
    %v4834 = vunpack.c.h.b16 %v4109
    %v4835 = vunpack.c.l.b16 %v4110
    %v4836 = vunpack.c.h.b16 %v4110
    %v4837 = vunpack.c.l.b16 %v4111
    %v4838 = vunpack.c.h.b16 %v4111
    %v4839 = vunpack.c.l.b16 %v4112
    %v4840 = vunpack.c.h.b16 %v4112
    %v4841 = vunpack.c.l.b16 %v4113
    %v4842 = vunpack.c.h.b16 %v4113
    %v4843 = vunpack.c.l.b16 %v4114
    %v4844 = vunpack.c.h.b16 %v4114
    %v4845 = vunpack.c.l.b16 %v4115
    %v4846 = vunpack.c.h.b16 %v4115
    %v4847 = vunpack.c.l.b16 %v4116
    %v4848 = vunpack.c.h.b16 %v4116
    %v4849 = vunpack.c.l.b16 %v4117
    %v4850 = vunpack.c.h.b16 %v4117
    %v4851 = vunpack.c.l.b16 %v4118
    %v4852 = vunpack.c.h.b16 %v4118
    %v4853 = vunpack.c.l.b16 %v4119
    %v4854 = vunpack.c.h.b16 %v4119
    %v4855 = vunpack.c.l.b16 %v4120
    %v4856 = vunpack.c.h.b16 %v4120
    %v4857 = vunpack.c.l.b16 %v4121
    %v4858 = vunpack.c.h.b16 %v4121
    %v4859 = vunpack.c.l.b16 %v4122
    %v4860 = vunpack.c.h.b16 %v4122
    %v4861 = vunpack.c.l.b16 %v4123
    %v4862 = vunpack.c.h.b16 %v4123
    %v4863 = vunpack.c.l.b16 %v4124
    %v4864 = vunpack.c.h.b16 %v4124
    %v4865 = vunpack.c.l.b16 %v4125
    %v4866 = vunpack.c.h.b16 %v4125
    %v4867 = vunpack.c.l.b16 %v4126
    %v4868 = vunpack.c.h.b16 %v4126
    %v4869 = vunpack.c.l.b16 %v4127
    %v4870 = vunpack.c.h.b16 %v4127
    %v4871 = vunpack.c.l.b16 %v4128
    %v4872 = vunpack.c.h.b16 %v4128
    %v4873 = vunpack.c.l.b16 %v4129
    %v4874 = vunpack.c.h.b16 %v4129
    %v4875 = vunpack.c.l.b16 %v4130
    %v4876 = vunpack.c.h.b16 %v4130
    %v4877 = vunpack.c.l.b16 %v4131
    %v4878 = vunpack.c.h.b16 %v4131
    %v4879 = vunpack.c.l.b16 %v4132
    %v4880 = vunpack.c.h.b16 %v4132
    %v4881 = vpack.c.b16 %v4755, %v4753
    %v4882 = vpack.c.b16 %v4756, %v4754
    %v4883 = vpack.c.b16 %v4759, %v4757
    %v4884 = vpack.c.b16 %v4760, %v4758
    %v4885 = vpack.c.b16 %v4763, %v4761
    %v4886 = vpack.c.b16 %v4764, %v4762
    %v4887 = vpack.c.b16 %v4767, %v4765
    %v4888 = vpack.c.b16 %v4768, %v4766
    %v4889 = vpack.c.b16 %v4771, %v4769
    %v4890 = vpack.c.b16 %v4772, %v4770
    %v4891 = vpack.c.b16 %v4775, %v4773
    %v4892 = vpack.c.b16 %v4776, %v4774
    %v4893 = vpack.c.b16 %v4779, %v4777
    %v4894 = vpack.c.b16 %v4780, %v4778
    %v4895 = vpack.c.b16 %v4783, %v4781
    %v4896 = vpack.c.b16 %v4784, %v4782
    %v4897 = vpack.c.b16 %v4787, %v4785
    %v4898 = vpack.c.b16 %v4788, %v4786
    %v4899 = vpack.c.b16 %v4791, %v4789
    %v4900 = vpack.c.b16 %v4792, %v4790
    %v4901 = vpack.c.b16 %v4795, %v4793
    %v4902 = vpack.c.b16 %v4796, %v4794
    %v4903 = vpack.c.b16 %v4799, %v4797
    %v4904 = vpack.c.b16 %v4800, %v4798
    %v4905 = vpack.c.b16 %v4803, %v4801
    %v4906 = vpack.c.b16 %v4804, %v4802
    %v4907 = vpack.c.b16 %v4807, %v4805
    %v4908 = vpack.c.b16 %v4808, %v4806
    %v4909 = vpack.c.b16 %v4811, %v4809
    %v4910 = vpack.c.b16 %v4812, %v4810
    %v4911 = vpack.c.b16 %v4815, %v4813
    %v4912 = vpack.c.b16 %v4816, %v4814
    %v4913 = vpack.c.b16 %v4819, %v4817
    %v4914 = vpack.c.b16 %v4820, %v4818
    %v4915 = vpack.c.b16 %v4823, %v4821
    %v4916 = vpack.c.b16 %v4824, %v4822
    %v4917 = vpack.c.b16 %v4827, %v4825
    %v4918 = vpack.c.b16 %v4828, %v4826
    %v4919 = vpack.c.b16 %v4831, %v4829
    %v4920 = vpack.c.b16 %v4832, %v4830
    %v4921 = vpack.c.b16 %v4835, %v4833
    %v4922 = vpack.c.b16 %v4836, %v4834
    %v4923 = vpack.c.b16 %v4839, %v4837
    %v4924 = vpack.c.b16 %v4840, %v4838
    %v4925 = vpack.c.b16 %v4843, %v4841
    %v4926 = vpack.c.b16 %v4844, %v4842
    %v4927 = vpack.c.b16 %v4847, %v4845
    %v4928 = vpack.c.b16 %v4848, %v4846
    %v4929 = vpack.c.b16 %v4851, %v4849
    %v4930 = vpack.c.b16 %v4852, %v4850
    %v4931 = vpack.c.b16 %v4855, %v4853
    %v4932 = vpack.c.b16 %v4856, %v4854
    %v4933 = vpack.c.b16 %v4859, %v4857
    %v4934 = vpack.c.b16 %v4860, %v4858
    %v4935 = vpack.c.b16 %v4863, %v4861
    %v4936 = vpack.c.b16 %v4864, %v4862
    %v4937 = vpack.c.b16 %v4867, %v4865
    %v4938 = vpack.c.b16 %v4868, %v4866
    %v4939 = vpack.c.b16 %v4871, %v4869
    %v4940 = vpack.c.b16 %v4872, %v4870
    %v4941 = vpack.c.b16 %v4875, %v4873
    %v4942 = vpack.c.b16 %v4876, %v4874
    %v4943 = vpack.c.b16 %v4879, %v4877
    %v4944 = vpack.c.b16 %v4880, %v4878
    %5009 = vmatpush.bf16.msra.mxu0 %v4895
    %5010 = vmatpush.bf16.msra.mxu0 %v4893
    %5011 = vmatpush.bf16.msra.mxu0 %v4891
    %5012 = vmatpush.bf16.msra.mxu0 %v4889
    %5013 = vmatpush.bf16.msra.mxu0 %v4887
    %5014 = vmatpush.bf16.msra.mxu0 %v4885
    %5015 = vmatpush.bf16.msra.mxu0 %v4883
    %5016 = vmatpush.bf16.msra.mxu0 %v4881
    %5017 = vmatmul.bf16.gmra.mxu0 %v4577
    %v5018 = vpop.f32.mrf.mxu0
    %v5019 = vadd.f32 0.0, %v5018
    %v5020 = vpop.f32.mrf.mxu0
    %5021 = vdwg.mxu0
    %5022 = vmatpush.bf16.msra.mxu0 %v4911
    %5023 = vmatpush.bf16.msra.mxu0 %v4909
    %5024 = vmatpush.bf16.msra.mxu0 %v4907
    %5025 = vmatpush.bf16.msra.mxu0 %v4905
    %5026 = vmatpush.bf16.msra.mxu0 %v4903
    %5027 = vmatpush.bf16.msra.mxu0 %v4901
    %5028 = vmatpush.bf16.msra.mxu0 %v4899
    %5029 = vmatpush.bf16.msra.mxu0 %v4897
    %5030 = vmatmul.bf16.gmra.mxu0 %v4578
    %v5031 = vpop.f32.mrf.mxu0
    %v5032 = vadd.f32 %v5019, %v5031
    %v5033 = vpop.f32.mrf.mxu0
    %5034 = vdwg.mxu0
    %5035 = vmatpush.bf16.msra.mxu0 %v4927
    %5036 = vmatpush.bf16.msra.mxu0 %v4925
    %5037 = vmatpush.bf16.msra.mxu0 %v4923
    %5038 = vmatpush.bf16.msra.mxu0 %v4921
    %5039 = vmatpush.bf16.msra.mxu0 %v4919
    %5040 = vmatpush.bf16.msra.mxu0 %v4917
    %5041 = vmatpush.bf16.msra.mxu0 %v4915
    %5042 = vmatpush.bf16.msra.mxu0 %v4913
    %5043 = vmatmul.bf16.gmra.mxu0 %v4579
    %v5044 = vpop.f32.mrf.mxu0
    %v5045 = vadd.f32 %v5032, %v5044
    %v5046 = vpop.f32.mrf.mxu0
    %5047 = vdwg.mxu0
    %5048 = vmatpush.bf16.msra.mxu0 %v4943
    %5049 = vmatpush.bf16.msra.mxu0 %v4941
    %5050 = vmatpush.bf16.msra.mxu0 %v4939
    %5051 = vmatpush.bf16.msra.mxu0 %v4937
    %5052 = vmatpush.bf16.msra.mxu0 %v4935
    %5053 = vmatpush.bf16.msra.mxu0 %v4933
    %5054 = vmatpush.bf16.msra.mxu0 %v4931
    %5055 = vmatpush.bf16.msra.mxu0 %v4929
    %5056 = vmatmul.bf16.gmra.mxu0 %v4580
    %v5057 = vpop.f32.mrf.mxu0
    %v5058 = vadd.f32 %v5045, %v5057
    %v5059 = vpop.f32.mrf.mxu0
    %5060 = vdwg.mxu0
    %5061 = vmatpush.bf16.msra.mxu0 %v4896
    %5062 = vmatpush.bf16.msra.mxu0 %v4894
    %5063 = vmatpush.bf16.msra.mxu0 %v4892
    %5064 = vmatpush.bf16.msra.mxu0 %v4890
    %5065 = vmatpush.bf16.msra.mxu0 %v4888
    %5066 = vmatpush.bf16.msra.mxu0 %v4886
    %5067 = vmatpush.bf16.msra.mxu0 %v4884
    %5068 = vmatpush.bf16.msra.mxu0 %v4882
    %5069 = vmatmul.bf16.gmra.mxu0 %v4577
    %v5070 = vpop.f32.mrf.mxu0
    %v5071 = vadd.f32 0.0, %v5070
    %v5072 = vpop.f32.mrf.mxu0
    %5073 = vdwg.mxu0
    %5074 = vmatpush.bf16.msra.mxu0 %v4912
    %5075 = vmatpush.bf16.msra.mxu0 %v4910
    %5076 = vmatpush.bf16.msra.mxu0 %v4908
    %5077 = vmatpush.bf16.msra.mxu0 %v4906
    %5078 = vmatpush.bf16.msra.mxu0 %v4904
    %5079 = vmatpush.bf16.msra.mxu0 %v4902
    %5080 = vmatpush.bf16.msra.mxu0 %v4900
    %5081 = vmatpush.bf16.msra.mxu0 %v4898
    %5082 = vmatmul.bf16.gmra.mxu0 %v4578
    %v5083 = vpop.f32.mrf.mxu0
    %v5084 = vadd.f32 %v5071, %v5083
    %v5085 = vpop.f32.mrf.mxu0
    %5086 = vdwg.mxu0
    %5087 = vmatpush.bf16.msra.mxu0 %v4928
    %5088 = vmatpush.bf16.msra.mxu0 %v4926
    %5089 = vmatpush.bf16.msra.mxu0 %v4924
    %5090 = vmatpush.bf16.msra.mxu0 %v4922
    %5091 = vmatpush.bf16.msra.mxu0 %v4920
    %5092 = vmatpush.bf16.msra.mxu0 %v4918
    %5093 = vmatpush.bf16.msra.mxu0 %v4916
    %5094 = vmatpush.bf16.msra.mxu0 %v4914
    %5095 = vmatmul.bf16.gmra.mxu0 %v4579
    %v5096 = vpop.f32.mrf.mxu0
    %v5097 = vadd.f32 %v5084, %v5096
    %v5098 = vpop.f32.mrf.mxu0
    %5099 = vdwg.mxu0
    %5100 = vmatpush.bf16.msra.mxu0 %v4944
    %5101 = vmatpush.bf16.msra.mxu0 %v4942
    %5102 = vmatpush.bf16.msra.mxu0 %v4940
    %5103 = vmatpush.bf16.msra.mxu0 %v4938
    %5104 = vmatpush.bf16.msra.mxu0 %v4936
    %5105 = vmatpush.bf16.msra.mxu0 %v4934
    %5106 = vmatpush.bf16.msra.mxu0 %v4932
    %5107 = vmatpush.bf16.msra.mxu0 %v4930
    %5108 = vmatmul.bf16.gmra.mxu0 %v4580
    %v5109 = vpop.f32.mrf.mxu0
    %v5110 = vadd.f32 %v5097, %v5109
    %v5111 = vpop.f32.mrf.mxu0
    %5112 = vdwg.mxu0
    %v5113 = vadd.f32 %v4634, %v5058
    %v5114 = vadd.f32 %v4686, %v5110
    %s5115 = scalar_lea.vmem [#allocation5], 192
    %v5116 = vld [vmem:[%s5115] ss:$8 sm:$0x3]
    %v5118 = vperm.slane %v5116, 0
    %v5119 = vperm.slane %v5116, 1
    %v5122 = vadd.f32 %v5113, %v5118
    %v5123 = vadd.f32 %v5114, %v5119
    %5124 = vst [vmem:[%s5] sm:$0xff] %v5122
    %5125 = vst [vmem:[%s5 + $0x8] sm:$0xff] %v5123
    %s5126 = smul.u32 4, 160
    %s5127 = smul.u32 %s5126, 2
    %s5128 = sshll.u32 %s5127, 4
    %5129 = dma.done %s64, %s5128
    %v5130 = vld [vmem:[#allocation3] sm:$0xff]
    %v5131 = vld [vmem:[#allocation3 + $0x8] sm:$0xff]
    %v5132 = vld [vmem:[#allocation3 + $0x10] sm:$0xff]
    %v5133 = vld [vmem:[#allocation3 + $0x18] sm:$0xff]
    %v5134 = vld [vmem:[#allocation3 + $0x20] sm:$0xff]
    %v5135 = vld [vmem:[#allocation3 + $0x28] sm:$0xff]
    %v5136 = vld [vmem:[#allocation3 + $0x30] sm:$0xff]
    %v5137 = vld [vmem:[#allocation3 + $0x38] sm:$0xff]
    %v5138 = vld [vmem:[#allocation3 + $0x40] sm:$0xff]
    %v5139 = vld [vmem:[#allocation3 + $0x48] sm:$0xff]
    %v5140 = vld [vmem:[#allocation3 + $0x50] sm:$0xff]
    %v5141 = vld [vmem:[#allocation3 + $0x58] sm:$0xff]
    %v5142 = vld [vmem:[#allocation3 + $0x60] sm:$0xff]
    %v5143 = vld [vmem:[#allocation3 + $0x68] sm:$0xff]
    %v5144 = vld [vmem:[#allocation3 + $0x70] sm:$0xff]
    %v5145 = vld [vmem:[#allocation3 + $0x78] sm:$0xff]
    %v5146 = vld [vmem:[#allocation3 + $0x80] sm:$0xff]
    %v5147 = vld [vmem:[#allocation3 + $0x88] sm:$0xff]
    %v5148 = vld [vmem:[#allocation3 + $0x90] sm:$0xff]
    %v5149 = vld [vmem:[#allocation3 + $0x98] sm:$0xff]
    %v5150 = vld [vmem:[#allocation3 + $0xa0] sm:$0xff]
    %v5151 = vld [vmem:[#allocation3 + $0xa8] sm:$0xff]
    %v5152 = vld [vmem:[#allocation3 + $0xb0] sm:$0xff]
    %v5153 = vld [vmem:[#allocation3 + $0xb8] sm:$0xff]
    %v5154 = vld [vmem:[#allocation3 + $0xc0] sm:$0xff]
    %v5155 = vld [vmem:[#allocation3 + $0xc8] sm:$0xff]
    %v5156 = vld [vmem:[#allocation3 + $0xd0] sm:$0xff]
    %v5157 = vld [vmem:[#allocation3 + $0xd8] sm:$0xff]
    %v5158 = vld [vmem:[#allocation3 + $0xe0] sm:$0xff]
    %v5159 = vld [vmem:[#allocation3 + $0xe8] sm:$0xff]
    %v5160 = vld [vmem:[#allocation3 + $0xf0] sm:$0xff]
    %v5161 = vld [vmem:[#allocation3 + $0xf8] sm:$0xff]
    %v5162 = vld [vmem:[#allocation3 + $0x100] sm:$0xff]
    %v5163 = vld [vmem:[#allocation3 + $0x108] sm:$0xff]
    %v5164 = vld [vmem:[#allocation3 + $0x110] sm:$0xff]
    %v5165 = vld [vmem:[#allocation3 + $0x118] sm:$0xff]
    %v5166 = vld [vmem:[#allocation3 + $0x120] sm:$0xff]
    %v5167 = vld [vmem:[#allocation3 + $0x128] sm:$0xff]
    %v5168 = vld [vmem:[#allocation3 + $0x130] sm:$0xff]
    %v5169 = vld [vmem:[#allocation3 + $0x138] sm:$0xff]
    %v5170 = vld [vmem:[#allocation3 + $0x140] sm:$0xff]
    %v5171 = vld [vmem:[#allocation3 + $0x148] sm:$0xff]
    %v5172 = vld [vmem:[#allocation3 + $0x150] sm:$0xff]
    %v5173 = vld [vmem:[#allocation3 + $0x158] sm:$0xff]
    %v5174 = vld [vmem:[#allocation3 + $0x160] sm:$0xff]
    %v5175 = vld [vmem:[#allocation3 + $0x168] sm:$0xff]
    %v5176 = vld [vmem:[#allocation3 + $0x170] sm:$0xff]
    %v5177 = vld [vmem:[#allocation3 + $0x178] sm:$0xff]
    %v5178 = vld [vmem:[#allocation3 + $0x180] sm:$0xff]
    %v5179 = vld [vmem:[#allocation3 + $0x188] sm:$0xff]
    %v5180 = vld [vmem:[#allocation3 + $0x190] sm:$0xff]
    %v5181 = vld [vmem:[#allocation3 + $0x198] sm:$0xff]
    %v5182 = vld [vmem:[#allocation3 + $0x1a0] sm:$0xff]
    %v5183 = vld [vmem:[#allocation3 + $0x1a8] sm:$0xff]
    %v5184 = vld [vmem:[#allocation3 + $0x1b0] sm:$0xff]
    %v5185 = vld [vmem:[#allocation3 + $0x1b8] sm:$0xff]
    %v5186 = vld [vmem:[#allocation3 + $0x1c0] sm:$0xff]
    %v5187 = vld [vmem:[#allocation3 + $0x1c8] sm:$0xff]
    %v5188 = vld [vmem:[#allocation3 + $0x1d0] sm:$0xff]
    %v5189 = vld [vmem:[#allocation3 + $0x1d8] sm:$0xff]
    %v5190 = vld [vmem:[#allocation3 + $0x1e0] sm:$0xff]
    %v5191 = vld [vmem:[#allocation3 + $0x1e8] sm:$0xff]
    %v5192 = vld [vmem:[#allocation3 + $0x1f0] sm:$0xff]
    %v5193 = vld [vmem:[#allocation3 + $0x1f8] sm:$0xff]
    %v5194 = vpack.c.bf16 %v5123, %v5122
    %v5195 = vunpack.c.l.bf16 %v5194
    %v5196 = vunpack.c.h.bf16 %v5194
    %v5197 = vsub.f32 %v5122, %v5195
    %v5198 = vsub.f32 %v5123, %v5196
    %v5199 = vpack.c.bf16 %v5197, %v5197
    %v5200 = vpack.c.bf16 %v5198, %v5198
    %v5233 = vunpack.c.l.b16 %v5130
    %v5234 = vunpack.c.h.b16 %v5130
    %v5235 = vunpack.c.l.b16 %v5131
    %v5236 = vunpack.c.h.b16 %v5131
    %v5237 = vunpack.c.l.b16 %v5132
    %v5238 = vunpack.c.h.b16 %v5132
    %v5239 = vunpack.c.l.b16 %v5133
    %v5240 = vunpack.c.h.b16 %v5133
    %v5241 = vunpack.c.l.b16 %v5134
    %v5242 = vunpack.c.h.b16 %v5134
    %v5243 = vunpack.c.l.b16 %v5135
    %v5244 = vunpack.c.h.b16 %v5135
    %v5245 = vunpack.c.l.b16 %v5136
    %v5246 = vunpack.c.h.b16 %v5136
    %v5247 = vunpack.c.l.b16 %v5137
    %v5248 = vunpack.c.h.b16 %v5137
    %v5249 = vunpack.c.l.b16 %v5138
    %v5250 = vunpack.c.h.b16 %v5138
    %v5251 = vunpack.c.l.b16 %v5139
    %v5252 = vunpack.c.h.b16 %v5139
    %v5253 = vunpack.c.l.b16 %v5140
    %v5254 = vunpack.c.h.b16 %v5140
    %v5255 = vunpack.c.l.b16 %v5141
    %v5256 = vunpack.c.h.b16 %v5141
    %v5257 = vunpack.c.l.b16 %v5142
    %v5258 = vunpack.c.h.b16 %v5142
    %v5259 = vunpack.c.l.b16 %v5143
    %v5260 = vunpack.c.h.b16 %v5143
    %v5261 = vunpack.c.l.b16 %v5144
    %v5262 = vunpack.c.h.b16 %v5144
    %v5263 = vunpack.c.l.b16 %v5145
    %v5264 = vunpack.c.h.b16 %v5145
    %v5265 = vunpack.c.l.b16 %v5146
    %v5266 = vunpack.c.h.b16 %v5146
    %v5267 = vunpack.c.l.b16 %v5147
    %v5268 = vunpack.c.h.b16 %v5147
    %v5269 = vunpack.c.l.b16 %v5148
    %v5270 = vunpack.c.h.b16 %v5148
    %v5271 = vunpack.c.l.b16 %v5149
    %v5272 = vunpack.c.h.b16 %v5149
    %v5273 = vunpack.c.l.b16 %v5150
    %v5274 = vunpack.c.h.b16 %v5150
    %v5275 = vunpack.c.l.b16 %v5151
    %v5276 = vunpack.c.h.b16 %v5151
    %v5277 = vunpack.c.l.b16 %v5152
    %v5278 = vunpack.c.h.b16 %v5152
    %v5279 = vunpack.c.l.b16 %v5153
    %v5280 = vunpack.c.h.b16 %v5153
    %v5281 = vunpack.c.l.b16 %v5154
    %v5282 = vunpack.c.h.b16 %v5154
    %v5283 = vunpack.c.l.b16 %v5155
    %v5284 = vunpack.c.h.b16 %v5155
    %v5285 = vunpack.c.l.b16 %v5156
    %v5286 = vunpack.c.h.b16 %v5156
    %v5287 = vunpack.c.l.b16 %v5157
    %v5288 = vunpack.c.h.b16 %v5157
    %v5289 = vunpack.c.l.b16 %v5158
    %v5290 = vunpack.c.h.b16 %v5158
    %v5291 = vunpack.c.l.b16 %v5159
    %v5292 = vunpack.c.h.b16 %v5159
    %v5293 = vunpack.c.l.b16 %v5160
    %v5294 = vunpack.c.h.b16 %v5160
    %v5295 = vunpack.c.l.b16 %v5161
    %v5296 = vunpack.c.h.b16 %v5161
    %v5297 = vpack.c.b16 %v5235, %v5233
    %v5298 = vpack.c.b16 %v5236, %v5234
    %v5299 = vpack.c.b16 %v5239, %v5237
    %v5300 = vpack.c.b16 %v5240, %v5238
    %v5301 = vpack.c.b16 %v5243, %v5241
    %v5302 = vpack.c.b16 %v5244, %v5242
    %v5303 = vpack.c.b16 %v5247, %v5245
    %v5304 = vpack.c.b16 %v5248, %v5246
    %v5305 = vpack.c.b16 %v5251, %v5249
    %v5306 = vpack.c.b16 %v5252, %v5250
    %v5307 = vpack.c.b16 %v5255, %v5253
    %v5308 = vpack.c.b16 %v5256, %v5254
    %v5309 = vpack.c.b16 %v5259, %v5257
    %v5310 = vpack.c.b16 %v5260, %v5258
    %v5311 = vpack.c.b16 %v5263, %v5261
    %v5312 = vpack.c.b16 %v5264, %v5262
    %v5313 = vpack.c.b16 %v5267, %v5265
    %v5314 = vpack.c.b16 %v5268, %v5266
    %v5315 = vpack.c.b16 %v5271, %v5269
    %v5316 = vpack.c.b16 %v5272, %v5270
    %v5317 = vpack.c.b16 %v5275, %v5273
    %v5318 = vpack.c.b16 %v5276, %v5274
    %v5319 = vpack.c.b16 %v5279, %v5277
    %v5320 = vpack.c.b16 %v5280, %v5278
    %v5321 = vpack.c.b16 %v5283, %v5281
    %v5322 = vpack.c.b16 %v5284, %v5282
    %v5323 = vpack.c.b16 %v5287, %v5285
    %v5324 = vpack.c.b16 %v5288, %v5286
    %v5325 = vpack.c.b16 %v5291, %v5289
    %v5326 = vpack.c.b16 %v5292, %v5290
    %v5327 = vpack.c.b16 %v5295, %v5293
    %v5328 = vpack.c.b16 %v5296, %v5294
    %5361 = vmatpush.bf16.msra.mxu0 %v5311
    %5362 = vmatpush.bf16.msra.mxu0 %v5309
    %5363 = vmatpush.bf16.msra.mxu0 %v5307
    %5364 = vmatpush.bf16.msra.mxu0 %v5305
    %5365 = vmatpush.bf16.msra.mxu0 %v5303
    %5366 = vmatpush.bf16.msra.mxu0 %v5301
    %5367 = vmatpush.bf16.msra.mxu0 %v5299
    %5368 = vmatpush.bf16.msra.mxu0 %v5297
    %5369 = vmatmul.bf16.gmra.mxu0 %v5199
    %v5370 = vpop.f32.mrf.mxu0
    %v5371 = vadd.f32 0.0, %v5370
    %v5372 = vpop.f32.mrf.mxu0
    %5373 = vdwg.mxu0
    %5374 = vmatpush.bf16.msra.mxu0 %v5327
    %5375 = vmatpush.bf16.msra.mxu0 %v5325
    %5376 = vmatpush.bf16.msra.mxu0 %v5323
    %5377 = vmatpush.bf16.msra.mxu0 %v5321
    %5378 = vmatpush.bf16.msra.mxu0 %v5319
    %5379 = vmatpush.bf16.msra.mxu0 %v5317
    %5380 = vmatpush.bf16.msra.mxu0 %v5315
    %5381 = vmatpush.bf16.msra.mxu0 %v5313
    %5382 = vmatmul.bf16.gmra.mxu0 %v5200
    %v5383 = vpop.f32.mrf.mxu0
    %v5384 = vadd.f32 %v5371, %v5383
    %v5385 = vpop.f32.mrf.mxu0
    %5386 = vdwg.mxu0
    %5387 = vmatpush.bf16.msra.mxu0 %v5312
    %5388 = vmatpush.bf16.msra.mxu0 %v5310
    %5389 = vmatpush.bf16.msra.mxu0 %v5308
    %5390 = vmatpush.bf16.msra.mxu0 %v5306
    %5391 = vmatpush.bf16.msra.mxu0 %v5304
    %5392 = vmatpush.bf16.msra.mxu0 %v5302
    %5393 = vmatpush.bf16.msra.mxu0 %v5300
    %5394 = vmatpush.bf16.msra.mxu0 %v5298
    %5395 = vmatmul.bf16.gmra.mxu0 %v5199
    %v5396 = vpop.f32.mrf.mxu0
    %v5397 = vadd.f32 0.0, %v5396
    %v5398 = vpop.f32.mrf.mxu0
    %5399 = vdwg.mxu0
    %5400 = vmatpush.bf16.msra.mxu0 %v5328
    %5401 = vmatpush.bf16.msra.mxu0 %v5326
    %5402 = vmatpush.bf16.msra.mxu0 %v5324
    %5403 = vmatpush.bf16.msra.mxu0 %v5322
    %5404 = vmatpush.bf16.msra.mxu0 %v5320
    %5405 = vmatpush.bf16.msra.mxu0 %v5318
    %5406 = vmatpush.bf16.msra.mxu0 %v5316
    %5407 = vmatpush.bf16.msra.mxu0 %v5314
    %5408 = vmatmul.bf16.gmra.mxu0 %v5200
    %v5409 = vpop.f32.mrf.mxu0
    %v5410 = vadd.f32 %v5397, %v5409
    %v5411 = vpop.f32.mrf.mxu0
    %5412 = vdwg.mxu0
    %v5414 = vunpack.c.l.b16 %v5194
    %v5415 = vunpack.c.h.b16 %v5194
    %v5416 = vpack.c.b16 %v5414, %v5414
    %v5417 = vpack.c.b16 %v5415, %v5415
    %5420 = vmatpush.bf16.msra.mxu0 %v5311
    %5421 = vmatpush.bf16.msra.mxu0 %v5309
    %5422 = vmatpush.bf16.msra.mxu0 %v5307
    %5423 = vmatpush.bf16.msra.mxu0 %v5305
    %5424 = vmatpush.bf16.msra.mxu0 %v5303
    %5425 = vmatpush.bf16.msra.mxu0 %v5301
    %5426 = vmatpush.bf16.msra.mxu0 %v5299
    %5427 = vmatpush.bf16.msra.mxu0 %v5297
    %5428 = vmatmul.bf16.gmra.mxu0 %v5416
    %v5429 = vpop.f32.mrf.mxu0
    %v5430 = vadd.f32 %v5384, %v5429
    %v5431 = vpop.f32.mrf.mxu0
    %5432 = vdwg.mxu0
    %5433 = vmatpush.bf16.msra.mxu0 %v5327
    %5434 = vmatpush.bf16.msra.mxu0 %v5325
    %5435 = vmatpush.bf16.msra.mxu0 %v5323
    %5436 = vmatpush.bf16.msra.mxu0 %v5321
    %5437 = vmatpush.bf16.msra.mxu0 %v5319
    %5438 = vmatpush.bf16.msra.mxu0 %v5317
    %5439 = vmatpush.bf16.msra.mxu0 %v5315
    %5440 = vmatpush.bf16.msra.mxu0 %v5313
    %5441 = vmatmul.bf16.gmra.mxu0 %v5417
    %v5442 = vpop.f32.mrf.mxu0
    %v5443 = vadd.f32 %v5430, %v5442
    %v5444 = vpop.f32.mrf.mxu0
    %5445 = vdwg.mxu0
    %5446 = vmatpush.bf16.msra.mxu0 %v5312
    %5447 = vmatpush.bf16.msra.mxu0 %v5310
    %5448 = vmatpush.bf16.msra.mxu0 %v5308
    %5449 = vmatpush.bf16.msra.mxu0 %v5306
    %5450 = vmatpush.bf16.msra.mxu0 %v5304
    %5451 = vmatpush.bf16.msra.mxu0 %v5302
    %5452 = vmatpush.bf16.msra.mxu0 %v5300
    %5453 = vmatpush.bf16.msra.mxu0 %v5298
    %5454 = vmatmul.bf16.gmra.mxu0 %v5416
    %v5455 = vpop.f32.mrf.mxu0
    %v5456 = vadd.f32 %v5410, %v5455
    %v5457 = vpop.f32.mrf.mxu0
    %5458 = vdwg.mxu0
    %5459 = vmatpush.bf16.msra.mxu0 %v5328
    %5460 = vmatpush.bf16.msra.mxu0 %v5326
    %5461 = vmatpush.bf16.msra.mxu0 %v5324
    %5462 = vmatpush.bf16.msra.mxu0 %v5322
    %5463 = vmatpush.bf16.msra.mxu0 %v5320
    %5464 = vmatpush.bf16.msra.mxu0 %v5318
    %5465 = vmatpush.bf16.msra.mxu0 %v5316
    %5466 = vmatpush.bf16.msra.mxu0 %v5314
    %5467 = vmatmul.bf16.gmra.mxu0 %v5417
    %v5468 = vpop.f32.mrf.mxu0
    %v5469 = vadd.f32 %v5456, %v5468
    %v5470 = vpop.f32.mrf.mxu0
    %5471 = vdwg.mxu0
    %v5504 = vunpack.c.l.b16 %v5162
    %v5505 = vunpack.c.h.b16 %v5162
    %v5506 = vunpack.c.l.b16 %v5163
    %v5507 = vunpack.c.h.b16 %v5163
    %v5508 = vunpack.c.l.b16 %v5164
    %v5509 = vunpack.c.h.b16 %v5164
    %v5510 = vunpack.c.l.b16 %v5165
    %v5511 = vunpack.c.h.b16 %v5165
    %v5512 = vunpack.c.l.b16 %v5166
    %v5513 = vunpack.c.h.b16 %v5166
    %v5514 = vunpack.c.l.b16 %v5167
    %v5515 = vunpack.c.h.b16 %v5167
    %v5516 = vunpack.c.l.b16 %v5168
    %v5517 = vunpack.c.h.b16 %v5168
    %v5518 = vunpack.c.l.b16 %v5169
    %v5519 = vunpack.c.h.b16 %v5169
    %v5520 = vunpack.c.l.b16 %v5170
    %v5521 = vunpack.c.h.b16 %v5170
    %v5522 = vunpack.c.l.b16 %v5171
    %v5523 = vunpack.c.h.b16 %v5171
    %v5524 = vunpack.c.l.b16 %v5172
    %v5525 = vunpack.c.h.b16 %v5172
    %v5526 = vunpack.c.l.b16 %v5173
    %v5527 = vunpack.c.h.b16 %v5173
    %v5528 = vunpack.c.l.b16 %v5174
    %v5529 = vunpack.c.h.b16 %v5174
    %v5530 = vunpack.c.l.b16 %v5175
    %v5531 = vunpack.c.h.b16 %v5175
    %v5532 = vunpack.c.l.b16 %v5176
    %v5533 = vunpack.c.h.b16 %v5176
    %v5534 = vunpack.c.l.b16 %v5177
    %v5535 = vunpack.c.h.b16 %v5177
    %v5536 = vunpack.c.l.b16 %v5178
    %v5537 = vunpack.c.h.b16 %v5178
    %v5538 = vunpack.c.l.b16 %v5179
    %v5539 = vunpack.c.h.b16 %v5179
    %v5540 = vunpack.c.l.b16 %v5180
    %v5541 = vunpack.c.h.b16 %v5180
    %v5542 = vunpack.c.l.b16 %v5181
    %v5543 = vunpack.c.h.b16 %v5181
    %v5544 = vunpack.c.l.b16 %v5182
    %v5545 = vunpack.c.h.b16 %v5182
    %v5546 = vunpack.c.l.b16 %v5183
    %v5547 = vunpack.c.h.b16 %v5183
    %v5548 = vunpack.c.l.b16 %v5184
    %v5549 = vunpack.c.h.b16 %v5184
    %v5550 = vunpack.c.l.b16 %v5185
    %v5551 = vunpack.c.h.b16 %v5185
    %v5552 = vunpack.c.l.b16 %v5186
    %v5553 = vunpack.c.h.b16 %v5186
    %v5554 = vunpack.c.l.b16 %v5187
    %v5555 = vunpack.c.h.b16 %v5187
    %v5556 = vunpack.c.l.b16 %v5188
    %v5557 = vunpack.c.h.b16 %v5188
    %v5558 = vunpack.c.l.b16 %v5189
    %v5559 = vunpack.c.h.b16 %v5189
    %v5560 = vunpack.c.l.b16 %v5190
    %v5561 = vunpack.c.h.b16 %v5190
    %v5562 = vunpack.c.l.b16 %v5191
    %v5563 = vunpack.c.h.b16 %v5191
    %v5564 = vunpack.c.l.b16 %v5192
    %v5565 = vunpack.c.h.b16 %v5192
    %v5566 = vunpack.c.l.b16 %v5193
    %v5567 = vunpack.c.h.b16 %v5193
    %v5568 = vpack.c.b16 %v5506, %v5504
    %v5569 = vpack.c.b16 %v5507, %v5505
    %v5570 = vpack.c.b16 %v5510, %v5508
    %v5571 = vpack.c.b16 %v5511, %v5509
    %v5572 = vpack.c.b16 %v5514, %v5512
    %v5573 = vpack.c.b16 %v5515, %v5513
    %v5574 = vpack.c.b16 %v5518, %v5516
    %v5575 = vpack.c.b16 %v5519, %v5517
    %v5576 = vpack.c.b16 %v5522, %v5520
    %v5577 = vpack.c.b16 %v5523, %v5521
    %v5578 = vpack.c.b16 %v5526, %v5524
    %v5579 = vpack.c.b16 %v5527, %v5525
    %v5580 = vpack.c.b16 %v5530, %v5528
    %v5581 = vpack.c.b16 %v5531, %v5529
    %v5582 = vpack.c.b16 %v5534, %v5532
    %v5583 = vpack.c.b16 %v5535, %v5533
    %v5584 = vpack.c.b16 %v5538, %v5536
    %v5585 = vpack.c.b16 %v5539, %v5537
    %v5586 = vpack.c.b16 %v5542, %v5540
    %v5587 = vpack.c.b16 %v5543, %v5541
    %v5588 = vpack.c.b16 %v5546, %v5544
    %v5589 = vpack.c.b16 %v5547, %v5545
    %v5590 = vpack.c.b16 %v5550, %v5548
    %v5591 = vpack.c.b16 %v5551, %v5549
    %v5592 = vpack.c.b16 %v5554, %v5552
    %v5593 = vpack.c.b16 %v5555, %v5553
    %v5594 = vpack.c.b16 %v5558, %v5556
    %v5595 = vpack.c.b16 %v5559, %v5557
    %v5596 = vpack.c.b16 %v5562, %v5560
    %v5597 = vpack.c.b16 %v5563, %v5561
    %v5598 = vpack.c.b16 %v5566, %v5564
    %v5599 = vpack.c.b16 %v5567, %v5565
    %5632 = vmatpush.bf16.msra.mxu0 %v5582
    %5633 = vmatpush.bf16.msra.mxu0 %v5580
    %5634 = vmatpush.bf16.msra.mxu0 %v5578
    %5635 = vmatpush.bf16.msra.mxu0 %v5576
    %5636 = vmatpush.bf16.msra.mxu0 %v5574
    %5637 = vmatpush.bf16.msra.mxu0 %v5572
    %5638 = vmatpush.bf16.msra.mxu0 %v5570
    %5639 = vmatpush.bf16.msra.mxu0 %v5568
    %5640 = vmatmul.bf16.gmra.mxu0 %v5416
    %v5641 = vpop.f32.mrf.mxu0
    %v5642 = vadd.f32 0.0, %v5641
    %v5643 = vpop.f32.mrf.mxu0
    %5644 = vdwg.mxu0
    %5645 = vmatpush.bf16.msra.mxu0 %v5598
    %5646 = vmatpush.bf16.msra.mxu0 %v5596
    %5647 = vmatpush.bf16.msra.mxu0 %v5594
    %5648 = vmatpush.bf16.msra.mxu0 %v5592
    %5649 = vmatpush.bf16.msra.mxu0 %v5590
    %5650 = vmatpush.bf16.msra.mxu0 %v5588
    %5651 = vmatpush.bf16.msra.mxu0 %v5586
    %5652 = vmatpush.bf16.msra.mxu0 %v5584
    %5653 = vmatmul.bf16.gmra.mxu0 %v5417
    %v5654 = vpop.f32.mrf.mxu0
    %v5655 = vadd.f32 %v5642, %v5654
    %v5656 = vpop.f32.mrf.mxu0
    %5657 = vdwg.mxu0
    %5658 = vmatpush.bf16.msra.mxu0 %v5583
    %5659 = vmatpush.bf16.msra.mxu0 %v5581
    %5660 = vmatpush.bf16.msra.mxu0 %v5579
    %5661 = vmatpush.bf16.msra.mxu0 %v5577
    %5662 = vmatpush.bf16.msra.mxu0 %v5575
    %5663 = vmatpush.bf16.msra.mxu0 %v5573
    %5664 = vmatpush.bf16.msra.mxu0 %v5571
    %5665 = vmatpush.bf16.msra.mxu0 %v5569
    %5666 = vmatmul.bf16.gmra.mxu0 %v5416
    %v5667 = vpop.f32.mrf.mxu0
    %v5668 = vadd.f32 0.0, %v5667
    %v5669 = vpop.f32.mrf.mxu0
    %5670 = vdwg.mxu0
    %5671 = vmatpush.bf16.msra.mxu0 %v5599
    %5672 = vmatpush.bf16.msra.mxu0 %v5597
    %5673 = vmatpush.bf16.msra.mxu0 %v5595
    %5674 = vmatpush.bf16.msra.mxu0 %v5593
    %5675 = vmatpush.bf16.msra.mxu0 %v5591
    %5676 = vmatpush.bf16.msra.mxu0 %v5589
    %5677 = vmatpush.bf16.msra.mxu0 %v5587
    %5678 = vmatpush.bf16.msra.mxu0 %v5585
    %5679 = vmatmul.bf16.gmra.mxu0 %v5417
    %v5680 = vpop.f32.mrf.mxu0
    %v5681 = vadd.f32 %v5668, %v5680
    %v5682 = vpop.f32.mrf.mxu0
    %5683 = vdwg.mxu0
    %v5684 = vadd.f32 %v5443, %v5655
    %v5685 = vadd.f32 %v5469, %v5681
    %s5686 = scalar_lea.vmem [#allocation5], 224
    %v5687 = vld [vmem:[%s5686] ss:$8 sm:$0x3]
    %v5689 = vperm.slane %v5687, 0
    %v5690 = vperm.slane %v5687, 1
    %v5693 = vadd.f32 %v5684, %v5689
    %v5694 = vadd.f32 %v5685, %v5690
    %v5695 = vld [vmem:[#allocation7 + $0x200] sm:$0xff]
    %v5696 = vld [vmem:[#allocation7 + $0x208] sm:$0xff]
    %v5697 = vld [vmem:[#allocation7 + $0x210] sm:$0xff]
    %v5698 = vld [vmem:[#allocation7 + $0x218] sm:$0xff]
    %v5699 = vld [vmem:[#allocation7 + $0x220] sm:$0xff]
    %v5700 = vld [vmem:[#allocation7 + $0x228] sm:$0xff]
    %v5701 = vld [vmem:[#allocation7 + $0x230] sm:$0xff]
    %v5702 = vld [vmem:[#allocation7 + $0x238] sm:$0xff]
    %v5703 = vld [vmem:[#allocation7 + $0x240] sm:$0xff]
    %v5704 = vld [vmem:[#allocation7 + $0x248] sm:$0xff]
    %v5705 = vld [vmem:[#allocation7 + $0x250] sm:$0xff]
    %v5706 = vld [vmem:[#allocation7 + $0x258] sm:$0xff]
    %v5707 = vld [vmem:[#allocation7 + $0x260] sm:$0xff]
    %v5708 = vld [vmem:[#allocation7 + $0x268] sm:$0xff]
    %v5709 = vld [vmem:[#allocation7 + $0x270] sm:$0xff]
    %v5710 = vld [vmem:[#allocation7 + $0x278] sm:$0xff]
    %v5711 = vld [vmem:[#allocation7 + $0x280] sm:$0xff]
    %v5712 = vld [vmem:[#allocation7 + $0x288] sm:$0xff]
    %v5713 = vld [vmem:[#allocation7 + $0x290] sm:$0xff]
    %v5714 = vld [vmem:[#allocation7 + $0x298] sm:$0xff]
    %v5715 = vld [vmem:[#allocation7 + $0x2a0] sm:$0xff]
    %v5716 = vld [vmem:[#allocation7 + $0x2a8] sm:$0xff]
    %v5717 = vld [vmem:[#allocation7 + $0x2b0] sm:$0xff]
    %v5718 = vld [vmem:[#allocation7 + $0x2b8] sm:$0xff]
    %v5719 = vld [vmem:[#allocation7 + $0x2c0] sm:$0xff]
    %v5720 = vld [vmem:[#allocation7 + $0x2c8] sm:$0xff]
    %v5721 = vld [vmem:[#allocation7 + $0x2d0] sm:$0xff]
    %v5722 = vld [vmem:[#allocation7 + $0x2d8] sm:$0xff]
    %v5723 = vld [vmem:[#allocation7 + $0x2e0] sm:$0xff]
    %v5724 = vld [vmem:[#allocation7 + $0x2e8] sm:$0xff]
    %v5725 = vld [vmem:[#allocation7 + $0x2f0] sm:$0xff]
    %v5726 = vld [vmem:[#allocation7 + $0x2f8] sm:$0xff]
    %vm5727 = vcmp.ge.f32.partialorder %v5693, 0.0
    %vm5728 = vcmp.ge.f32.partialorder %v5694, 0.0
    %v5729 = vmul.f32 %v5693, 0.01
    %v5730 = vmul.f32 %v5694, 0.01
    %v5731 = vsel %vm5727, %v5693, %v5729
    %v5732 = vsel %vm5728, %v5694, %v5730
    %v5733 = vmul.f32 %v5731, %v82
    %v5734 = vmul.f32 %v5732, %v82
    %v5735 = vrot.slane %v5733, 4
    %v5736 = vadd.f32 %v5733, %v5735
    %v5737 = vrot.slane %v5736, 2
    %v5738 = vadd.f32 %v5736, %v5737
    %v5739 = vrot.slane %v5738, 1
    %v5740 = vadd.f32 %v5738, %v5739
    %v5741 = vrot.slane %v5734, 4
    %v5742 = vadd.f32 %v5734, %v5741
    %v5743 = vrot.slane %v5742, 2
    %v5744 = vadd.f32 %v5742, %v5743
    %v5745 = vrot.slane %v5744, 1
    %v5746 = vadd.f32 %v5744, %v5745
    %v5747 = vmul.f32 %v5733, %v5731
    %v5748 = vmul.f32 %v5734, %v5732
    %v5749 = vrot.slane %v5747, 4
    %v5750 = vadd.f32 %v5747, %v5749
    %v5751 = vrot.slane %v5750, 2
    %v5752 = vadd.f32 %v5750, %v5751
    %v5753 = vrot.slane %v5752, 1
    %v5754 = vadd.f32 %v5752, %v5753
    %v5755 = vrot.slane %v5748, 4
    %v5756 = vadd.f32 %v5748, %v5755
    %v5757 = vrot.slane %v5756, 2
    %v5758 = vadd.f32 %v5756, %v5757
    %v5759 = vrot.slane %v5758, 1
    %v5760 = vadd.f32 %v5758, %v5759
    %v5761 = vsel %vm717, %v5740, %v5754
    %v5762 = vsel %vm717, %v5746, %v5760
    %v5763 = vpack.c.bf16 %v5762, %v5761
    %v5764 = vunpack.c.l.bf16 %v5763
    %v5765 = vunpack.c.h.bf16 %v5763
    %v5766 = vsub.f32 %v5761, %v5764
    %v5767 = vsub.f32 %v5762, %v5765
    %v5768 = vpack.c.bf16 %v5766, %v5766
    %v5769 = vpack.c.bf16 %v5767, %v5767
    %v5802 = vunpack.c.l.b16 %v5695
    %v5803 = vunpack.c.h.b16 %v5695
    %v5804 = vunpack.c.l.b16 %v5696
    %v5805 = vunpack.c.h.b16 %v5696
    %v5806 = vunpack.c.l.b16 %v5697
    %v5807 = vunpack.c.h.b16 %v5697
    %v5808 = vunpack.c.l.b16 %v5698
    %v5809 = vunpack.c.h.b16 %v5698
    %v5810 = vunpack.c.l.b16 %v5699
    %v5811 = vunpack.c.h.b16 %v5699
    %v5812 = vunpack.c.l.b16 %v5700
    %v5813 = vunpack.c.h.b16 %v5700
    %v5814 = vunpack.c.l.b16 %v5701
    %v5815 = vunpack.c.h.b16 %v5701
    %v5816 = vunpack.c.l.b16 %v5702
    %v5817 = vunpack.c.h.b16 %v5702
    %v5818 = vunpack.c.l.b16 %v5703
    %v5819 = vunpack.c.h.b16 %v5703
    %v5820 = vunpack.c.l.b16 %v5704
    %v5821 = vunpack.c.h.b16 %v5704
    %v5822 = vunpack.c.l.b16 %v5705
    %v5823 = vunpack.c.h.b16 %v5705
    %v5824 = vunpack.c.l.b16 %v5706
    %v5825 = vunpack.c.h.b16 %v5706
    %v5826 = vunpack.c.l.b16 %v5707
    %v5827 = vunpack.c.h.b16 %v5707
    %v5828 = vunpack.c.l.b16 %v5708
    %v5829 = vunpack.c.h.b16 %v5708
    %v5830 = vunpack.c.l.b16 %v5709
    %v5831 = vunpack.c.h.b16 %v5709
    %v5832 = vunpack.c.l.b16 %v5710
    %v5833 = vunpack.c.h.b16 %v5710
    %v5834 = vunpack.c.l.b16 %v5711
    %v5835 = vunpack.c.h.b16 %v5711
    %v5836 = vunpack.c.l.b16 %v5712
    %v5837 = vunpack.c.h.b16 %v5712
    %v5838 = vunpack.c.l.b16 %v5713
    %v5839 = vunpack.c.h.b16 %v5713
    %v5840 = vunpack.c.l.b16 %v5714
    %v5841 = vunpack.c.h.b16 %v5714
    %v5842 = vunpack.c.l.b16 %v5715
    %v5843 = vunpack.c.h.b16 %v5715
    %v5844 = vunpack.c.l.b16 %v5716
    %v5845 = vunpack.c.h.b16 %v5716
    %v5846 = vunpack.c.l.b16 %v5717
    %v5847 = vunpack.c.h.b16 %v5717
    %v5848 = vunpack.c.l.b16 %v5718
    %v5849 = vunpack.c.h.b16 %v5718
    %v5850 = vunpack.c.l.b16 %v5719
    %v5851 = vunpack.c.h.b16 %v5719
    %v5852 = vunpack.c.l.b16 %v5720
    %v5853 = vunpack.c.h.b16 %v5720
    %v5854 = vunpack.c.l.b16 %v5721
    %v5855 = vunpack.c.h.b16 %v5721
    %v5856 = vunpack.c.l.b16 %v5722
    %v5857 = vunpack.c.h.b16 %v5722
    %v5858 = vunpack.c.l.b16 %v5723
    %v5859 = vunpack.c.h.b16 %v5723
    %v5860 = vunpack.c.l.b16 %v5724
    %v5861 = vunpack.c.h.b16 %v5724
    %v5862 = vunpack.c.l.b16 %v5725
    %v5863 = vunpack.c.h.b16 %v5725
    %v5864 = vunpack.c.l.b16 %v5726
    %v5865 = vunpack.c.h.b16 %v5726
    %v5866 = vpack.c.b16 %v5804, %v5802
    %v5867 = vpack.c.b16 %v5805, %v5803
    %v5868 = vpack.c.b16 %v5808, %v5806
    %v5869 = vpack.c.b16 %v5809, %v5807
    %v5870 = vpack.c.b16 %v5812, %v5810
    %v5871 = vpack.c.b16 %v5813, %v5811
    %v5872 = vpack.c.b16 %v5816, %v5814
    %v5873 = vpack.c.b16 %v5817, %v5815
    %v5874 = vpack.c.b16 %v5820, %v5818
    %v5875 = vpack.c.b16 %v5821, %v5819
    %v5876 = vpack.c.b16 %v5824, %v5822
    %v5877 = vpack.c.b16 %v5825, %v5823
    %v5878 = vpack.c.b16 %v5828, %v5826
    %v5879 = vpack.c.b16 %v5829, %v5827
    %v5880 = vpack.c.b16 %v5832, %v5830
    %v5881 = vpack.c.b16 %v5833, %v5831
    %v5882 = vpack.c.b16 %v5836, %v5834
    %v5883 = vpack.c.b16 %v5837, %v5835
    %v5884 = vpack.c.b16 %v5840, %v5838
    %v5885 = vpack.c.b16 %v5841, %v5839
    %v5886 = vpack.c.b16 %v5844, %v5842
    %v5887 = vpack.c.b16 %v5845, %v5843
    %v5888 = vpack.c.b16 %v5848, %v5846
    %v5889 = vpack.c.b16 %v5849, %v5847
    %v5890 = vpack.c.b16 %v5852, %v5850
    %v5891 = vpack.c.b16 %v5853, %v5851
    %v5892 = vpack.c.b16 %v5856, %v5854
    %v5893 = vpack.c.b16 %v5857, %v5855
    %v5894 = vpack.c.b16 %v5860, %v5858
    %v5895 = vpack.c.b16 %v5861, %v5859
    %v5896 = vpack.c.b16 %v5864, %v5862
    %v5897 = vpack.c.b16 %v5865, %v5863
    %5930 = vmatpush.bf16.msra.mxu0 %v5880
    %5931 = vmatpush.bf16.msra.mxu0 %v5878
    %5932 = vmatpush.bf16.msra.mxu0 %v5876
    %5933 = vmatpush.bf16.msra.mxu0 %v5874
    %5934 = vmatpush.bf16.msra.mxu0 %v5872
    %5935 = vmatpush.bf16.msra.mxu0 %v5870
    %5936 = vmatpush.bf16.msra.mxu0 %v5868
    %5937 = vmatpush.bf16.msra.mxu0 %v5866
    %5938 = vmatmul.bf16.gmra.mxu0 %v5768
    %v5939 = vpop.f32.mrf.mxu0
    %v5940 = vadd.f32 0.0, %v5939
    %v5941 = vpop.f32.mrf.mxu0
    %5942 = vdwg.mxu0
    %5943 = vmatpush.bf16.msra.mxu0 %v5896
    %5944 = vmatpush.bf16.msra.mxu0 %v5894
    %5945 = vmatpush.bf16.msra.mxu0 %v5892
    %5946 = vmatpush.bf16.msra.mxu0 %v5890
    %5947 = vmatpush.bf16.msra.mxu0 %v5888
    %5948 = vmatpush.bf16.msra.mxu0 %v5886
    %5949 = vmatpush.bf16.msra.mxu0 %v5884
    %5950 = vmatpush.bf16.msra.mxu0 %v5882
    %5951 = vmatmul.bf16.gmra.mxu0 %v5769
    %v5952 = vpop.f32.mrf.mxu0
    %v5953 = vadd.f32 %v5940, %v5952
    %v5954 = vpop.f32.mrf.mxu0
    %5955 = vdwg.mxu0
    %5956 = vmatpush.bf16.msra.mxu0 %v5881
    %5957 = vmatpush.bf16.msra.mxu0 %v5879
    %5958 = vmatpush.bf16.msra.mxu0 %v5877
    %5959 = vmatpush.bf16.msra.mxu0 %v5875
    %5960 = vmatpush.bf16.msra.mxu0 %v5873
    %5961 = vmatpush.bf16.msra.mxu0 %v5871
    %5962 = vmatpush.bf16.msra.mxu0 %v5869
    %5963 = vmatpush.bf16.msra.mxu0 %v5867
    %5964 = vmatmul.bf16.gmra.mxu0 %v5768
    %v5965 = vpop.f32.mrf.mxu0
    %v5966 = vadd.f32 0.0, %v5965
    %v5967 = vpop.f32.mrf.mxu0
    %5968 = vdwg.mxu0
    %5969 = vmatpush.bf16.msra.mxu0 %v5897
    %5970 = vmatpush.bf16.msra.mxu0 %v5895
    %5971 = vmatpush.bf16.msra.mxu0 %v5893
    %5972 = vmatpush.bf16.msra.mxu0 %v5891
    %5973 = vmatpush.bf16.msra.mxu0 %v5889
    %5974 = vmatpush.bf16.msra.mxu0 %v5887
    %5975 = vmatpush.bf16.msra.mxu0 %v5885
    %5976 = vmatpush.bf16.msra.mxu0 %v5883
    %5977 = vmatmul.bf16.gmra.mxu0 %v5769
    %v5978 = vpop.f32.mrf.mxu0
    %v5979 = vadd.f32 %v5966, %v5978
    %v5980 = vpop.f32.mrf.mxu0
    %5981 = vdwg.mxu0
    %v5983 = vunpack.c.l.b16 %v5763
    %v5984 = vunpack.c.h.b16 %v5763
    %v5985 = vpack.c.b16 %v5983, %v5983
    %v5986 = vpack.c.b16 %v5984, %v5984
    %5989 = vmatpush.bf16.msra.mxu0 %v5880
    %5990 = vmatpush.bf16.msra.mxu0 %v5878
    %5991 = vmatpush.bf16.msra.mxu0 %v5876
    %5992 = vmatpush.bf16.msra.mxu0 %v5874
    %5993 = vmatpush.bf16.msra.mxu0 %v5872
    %5994 = vmatpush.bf16.msra.mxu0 %v5870
    %5995 = vmatpush.bf16.msra.mxu0 %v5868
    %5996 = vmatpush.bf16.msra.mxu0 %v5866
    %5997 = vmatmul.bf16.gmra.mxu0 %v5985
    %v5998 = vpop.f32.mrf.mxu0
    %v5999 = vadd.f32 %v5953, %v5998
    %v6000 = vpop.f32.mrf.mxu0
    %6001 = vdwg.mxu0
    %6002 = vmatpush.bf16.msra.mxu0 %v5896
    %6003 = vmatpush.bf16.msra.mxu0 %v5894
    %6004 = vmatpush.bf16.msra.mxu0 %v5892
    %6005 = vmatpush.bf16.msra.mxu0 %v5890
    %6006 = vmatpush.bf16.msra.mxu0 %v5888
    %6007 = vmatpush.bf16.msra.mxu0 %v5886
    %6008 = vmatpush.bf16.msra.mxu0 %v5884
    %6009 = vmatpush.bf16.msra.mxu0 %v5882
    %6010 = vmatmul.bf16.gmra.mxu0 %v5986
    %v6011 = vpop.f32.mrf.mxu0
    %v6012 = vadd.f32 %v5999, %v6011
    %v6013 = vpop.f32.mrf.mxu0
    %6014 = vdwg.mxu0
    %6015 = vmatpush.bf16.msra.mxu0 %v5881
    %6016 = vmatpush.bf16.msra.mxu0 %v5879
    %6017 = vmatpush.bf16.msra.mxu0 %v5877
    %6018 = vmatpush.bf16.msra.mxu0 %v5875
    %6019 = vmatpush.bf16.msra.mxu0 %v5873
    %6020 = vmatpush.bf16.msra.mxu0 %v5871
    %6021 = vmatpush.bf16.msra.mxu0 %v5869
    %6022 = vmatpush.bf16.msra.mxu0 %v5867
    %6023 = vmatmul.bf16.gmra.mxu0 %v5985
    %v6024 = vpop.f32.mrf.mxu0
    %v6025 = vadd.f32 %v5979, %v6024
    %v6026 = vpop.f32.mrf.mxu0
    %6027 = vdwg.mxu0
    %6028 = vmatpush.bf16.msra.mxu0 %v5897
    %6029 = vmatpush.bf16.msra.mxu0 %v5895
    %6030 = vmatpush.bf16.msra.mxu0 %v5893
    %6031 = vmatpush.bf16.msra.mxu0 %v5891
    %6032 = vmatpush.bf16.msra.mxu0 %v5889
    %6033 = vmatpush.bf16.msra.mxu0 %v5887
    %6034 = vmatpush.bf16.msra.mxu0 %v5885
    %6035 = vmatpush.bf16.msra.mxu0 %v5883
    %6036 = vmatmul.bf16.gmra.mxu0 %v5986
    %v6037 = vpop.f32.mrf.mxu0
    %v6038 = vadd.f32 %v6025, %v6037
    %v6039 = vpop.f32.mrf.mxu0
    %6040 = vdwg.mxu0
    %v6041 = vmul.f32 %v6012, 0.016666668
    %v6042 = vmul.f32 %v6038, 0.016666668
    %v6043 = vsel %vm717, %v6041, 0.0
    %v6044 = vsel %vm717, %v6042, 0.0
    %v6045 = vsel %vm1002, %v6043, 0.0
    %v6046 = vrot.slane %v6045, 4
    %v6047 = vadd.f32 %v6045, %v6046
    %v6048 = vrot.slane %v6047, 2
    %v6049 = vadd.f32 %v6047, %v6048
    %v6050 = vrot.slane %v6049, 1
    %v6051 = vadd.f32 %v6049, %v6050
    %v6052 = vsel %vm1002, %v6044, 0.0
    %v6053 = vrot.slane %v6052, 4
    %v6054 = vadd.f32 %v6052, %v6053
    %v6055 = vrot.slane %v6054, 2
    %v6056 = vadd.f32 %v6054, %v6055
    %v6057 = vrot.slane %v6056, 1
    %v6058 = vadd.f32 %v6056, %v6057
    %v6059 = vsel %vm717, 0.0, %v6041
    %v6060 = vsel %vm717, 0.0, %v6042
    %v6061 = vsel %vm1002, %v6059, 0.0
    %v6062 = vrot.slane %v6061, 4
    %v6063 = vadd.f32 %v6061, %v6062
    %v6064 = vrot.slane %v6063, 2
    %v6065 = vadd.f32 %v6063, %v6064
    %v6066 = vrot.slane %v6065, 1
    %v6067 = vadd.f32 %v6065, %v6066
    %v6068 = vsel %vm1002, %v6060, 0.0
    %v6069 = vrot.slane %v6068, 4
    %v6070 = vadd.f32 %v6068, %v6069
    %v6071 = vrot.slane %v6070, 2
    %v6072 = vadd.f32 %v6070, %v6071
    %v6073 = vrot.slane %v6072, 1
    %v6074 = vadd.f32 %v6072, %v6073
    %v6075 = vmul.f32 %v6051, %v6051
    %v6076 = vmul.f32 %v6058, %v6058
    %v6077 = vsub.f32 %v6067, %v6075
    %v6078 = vsub.f32 %v6074, %v6076
    %v6079 = vsub.f32 %v5731, %v6051
    %v6080 = vsub.f32 %v5732, %v6058
    %v6081 = vadd.f32 %v6077, 1e-05
    %v6082 = vadd.f32 %v6078, 1e-05
    %v6083 = vrsqrt.pop %v6081
    %v6084 = vmul.f32 %v6083, %v6081
    %v6085 = vmul.f32 %v6084, %v6083
    %v6086 = vmul.f32 0.5, %v6085
    %v6087 = vsub.f32 1.5, %v6086
    %v6088 = vmul.f32 %v6083, %v6087
    %vm6089 = vweird.f32 %v6081
    %vm6090 = vweird.f32 %v6083
    %vm6091 = vmor %vm6089, %vm6090
    %v6092 = vsel %vm6091, %v6083, %v6088
    %v6093 = vrsqrt.pop %v6082
    %v6094 = vmul.f32 %v6093, %v6082
    %v6095 = vmul.f32 %v6094, %v6093
    %v6096 = vmul.f32 0.5, %v6095
    %v6097 = vsub.f32 1.5, %v6096
    %v6098 = vmul.f32 %v6093, %v6097
    %vm6099 = vweird.f32 %v6082
    %vm6100 = vweird.f32 %v6093
    %vm6101 = vmor %vm6099, %vm6100
    %v6102 = vsel %vm6101, %v6093, %v6098
    %v6103 = vmul.f32 %v6079, %v6092
    %v6104 = vmul.f32 %v6080, %v6102
    %v6105 = vld [vmem:[#allocation3 + $0x200] sm:$0xf]
    %v6106 = vld [vmem:[#allocation3 + $0x208] sm:$0xf]
    %v6107 = vld [vmem:[#allocation3 + $0x210] sm:$0xf]
    %v6108 = vld [vmem:[#allocation3 + $0x218] sm:$0xf]
    %v6109 = vld [vmem:[#allocation3 + $0x220] sm:$0xf]
    %v6110 = vld [vmem:[#allocation3 + $0x228] sm:$0xf]
    %v6111 = vld [vmem:[#allocation3 + $0x230] sm:$0xf]
    %v6112 = vld [vmem:[#allocation3 + $0x238] sm:$0xf]
    %v6113 = vld [vmem:[#allocation3 + $0x240] sm:$0xf]
    %v6114 = vld [vmem:[#allocation3 + $0x248] sm:$0xf]
    %v6115 = vld [vmem:[#allocation3 + $0x250] sm:$0xf]
    %v6116 = vld [vmem:[#allocation3 + $0x258] sm:$0xf]
    %v6117 = vld [vmem:[#allocation3 + $0x260] sm:$0xf]
    %v6118 = vld [vmem:[#allocation3 + $0x268] sm:$0xf]
    %v6119 = vld [vmem:[#allocation3 + $0x270] sm:$0xf]
    %v6120 = vld [vmem:[#allocation3 + $0x278] sm:$0xf]
    %v6121 = vld [vmem:[#allocation3 + $0x280] sm:$0xf]
    %v6122 = vld [vmem:[#allocation3 + $0x288] sm:$0xf]
    %v6123 = vld [vmem:[#allocation3 + $0x290] sm:$0xf]
    %v6124 = vld [vmem:[#allocation3 + $0x298] sm:$0xf]
    %v6125 = vld [vmem:[#allocation3 + $0x2a0] sm:$0xf]
    %v6126 = vld [vmem:[#allocation3 + $0x2a8] sm:$0xf]
    %v6127 = vld [vmem:[#allocation3 + $0x2b0] sm:$0xf]
    %v6128 = vld [vmem:[#allocation3 + $0x2b8] sm:$0xf]
    %v6129 = vld [vmem:[#allocation3 + $0x2c0] sm:$0xf]
    %v6130 = vld [vmem:[#allocation3 + $0x2c8] sm:$0xf]
    %v6131 = vld [vmem:[#allocation3 + $0x2d0] sm:$0xf]
    %v6132 = vld [vmem:[#allocation3 + $0x2d8] sm:$0xf]
    %v6133 = vld [vmem:[#allocation3 + $0x2e0] sm:$0xf]
    %v6134 = vld [vmem:[#allocation3 + $0x2e8] sm:$0xf]
    %v6135 = vld [vmem:[#allocation3 + $0x2f0] sm:$0xf]
    %v6136 = vld [vmem:[#allocation3 + $0x2f8] sm:$0xf]
    %v6137 = vld [vmem:[#allocation3 + $0x300] sm:$0xf]
    %v6138 = vld [vmem:[#allocation3 + $0x308] sm:$0xf]
    %v6139 = vld [vmem:[#allocation3 + $0x310] sm:$0xf]
    %v6140 = vld [vmem:[#allocation3 + $0x318] sm:$0xf]
    %v6141 = vld [vmem:[#allocation3 + $0x320] sm:$0xf]
    %v6142 = vld [vmem:[#allocation3 + $0x328] sm:$0xf]
    %v6143 = vld [vmem:[#allocation3 + $0x330] sm:$0xf]
    %v6144 = vld [vmem:[#allocation3 + $0x338] sm:$0xf]
    %v6145 = vld [vmem:[#allocation3 + $0x340] sm:$0xf]
    %v6146 = vld [vmem:[#allocation3 + $0x348] sm:$0xf]
    %v6147 = vld [vmem:[#allocation3 + $0x350] sm:$0xf]
    %v6148 = vld [vmem:[#allocation3 + $0x358] sm:$0xf]
    %v6149 = vld [vmem:[#allocation3 + $0x360] sm:$0xf]
    %v6150 = vld [vmem:[#allocation3 + $0x368] sm:$0xf]
    %v6151 = vld [vmem:[#allocation3 + $0x370] sm:$0xf]
    %v6152 = vld [vmem:[#allocation3 + $0x378] sm:$0xf]
    %v6153 = vld [vmem:[#allocation3 + $0x380] sm:$0xf]
    %v6154 = vld [vmem:[#allocation3 + $0x388] sm:$0xf]
    %v6155 = vld [vmem:[#allocation3 + $0x390] sm:$0xf]
    %v6156 = vld [vmem:[#allocation3 + $0x398] sm:$0xf]
    %v6157 = vld [vmem:[#allocation3 + $0x3a0] sm:$0xf]
    %v6158 = vld [vmem:[#allocation3 + $0x3a8] sm:$0xf]
    %v6159 = vld [vmem:[#allocation3 + $0x3b0] sm:$0xf]
    %v6160 = vld [vmem:[#allocation3 + $0x3b8] sm:$0xf]
    %v6161 = vld [vmem:[#allocation3 + $0x3c0] sm:$0xf]
    %v6162 = vld [vmem:[#allocation3 + $0x3c8] sm:$0xf]
    %v6163 = vld [vmem:[#allocation3 + $0x3d0] sm:$0xf]
    %v6164 = vld [vmem:[#allocation3 + $0x3d8] sm:$0xf]
    %v6165 = vld [vmem:[#allocation3 + $0x3e0] sm:$0xf]
    %v6166 = vld [vmem:[#allocation3 + $0x3e8] sm:$0xf]
    %v6167 = vld [vmem:[#allocation3 + $0x3f0] sm:$0xf]
    %v6168 = vld [vmem:[#allocation3 + $0x3f8] sm:$0xf]
    %v6169 = vpack.c.bf16 %v6104, %v6103
    %v6170 = vunpack.c.l.bf16 %v6169
    %v6171 = vunpack.c.h.bf16 %v6169
    %v6172 = vsub.f32 %v6103, %v6170
    %v6173 = vsub.f32 %v6104, %v6171
    %v6174 = vpack.c.bf16 %v6172, %v6172
    %v6175 = vpack.c.bf16 %v6173, %v6173
    %v6208 = vunpack.c.l.b16 %v6105
    %v6209 = vunpack.c.l.b16 %v6106
    %v6210 = vunpack.c.l.b16 %v6107
    %v6211 = vunpack.c.l.b16 %v6108
    %v6212 = vunpack.c.l.b16 %v6109
    %v6213 = vunpack.c.l.b16 %v6110
    %v6214 = vunpack.c.l.b16 %v6111
    %v6215 = vunpack.c.l.b16 %v6112
    %v6216 = vunpack.c.l.b16 %v6113
    %v6217 = vunpack.c.l.b16 %v6114
    %v6218 = vunpack.c.l.b16 %v6115
    %v6219 = vunpack.c.l.b16 %v6116
    %v6220 = vunpack.c.l.b16 %v6117
    %v6221 = vunpack.c.l.b16 %v6118
    %v6222 = vunpack.c.l.b16 %v6119
    %v6223 = vunpack.c.l.b16 %v6120
    %v6224 = vunpack.c.l.b16 %v6121
    %v6225 = vunpack.c.l.b16 %v6122
    %v6226 = vunpack.c.l.b16 %v6123
    %v6227 = vunpack.c.l.b16 %v6124
    %v6228 = vunpack.c.l.b16 %v6125
    %v6229 = vunpack.c.l.b16 %v6126
    %v6230 = vunpack.c.l.b16 %v6127
    %v6231 = vunpack.c.l.b16 %v6128
    %v6232 = vunpack.c.l.b16 %v6129
    %v6233 = vunpack.c.l.b16 %v6130
    %v6234 = vunpack.c.l.b16 %v6131
    %v6235 = vunpack.c.l.b16 %v6132
    %v6236 = vunpack.c.l.b16 %v6133
    %v6237 = vunpack.c.l.b16 %v6134
    %v6238 = vunpack.c.l.b16 %v6135
    %v6239 = vunpack.c.l.b16 %v6136
    %v6240 = vpack.c.b16 %v6209, %v6208
    %v6241 = vpack.c.b16 %v6211, %v6210
    %v6242 = vpack.c.b16 %v6213, %v6212
    %v6243 = vpack.c.b16 %v6215, %v6214
    %v6244 = vpack.c.b16 %v6217, %v6216
    %v6245 = vpack.c.b16 %v6219, %v6218
    %v6246 = vpack.c.b16 %v6221, %v6220
    %v6247 = vpack.c.b16 %v6223, %v6222
    %v6248 = vpack.c.b16 %v6225, %v6224
    %v6249 = vpack.c.b16 %v6227, %v6226
    %v6250 = vpack.c.b16 %v6229, %v6228
    %v6251 = vpack.c.b16 %v6231, %v6230
    %v6252 = vpack.c.b16 %v6233, %v6232
    %v6253 = vpack.c.b16 %v6235, %v6234
    %v6254 = vpack.c.b16 %v6237, %v6236
    %v6255 = vpack.c.b16 %v6239, %v6238
    %6272 = vmatpush.bf16.msra.mxu0 %v6247
    %6273 = vmatpush.bf16.msra.mxu0 %v6246
    %6274 = vmatpush.bf16.msra.mxu0 %v6245
    %6275 = vmatpush.bf16.msra.mxu0 %v6244
    %6276 = vmatpush.bf16.msra.mxu0 %v6243
    %6277 = vmatpush.bf16.msra.mxu0 %v6242
    %6278 = vmatpush.bf16.msra.mxu0 %v6241
    %6279 = vmatpush.bf16.msra.mxu0 %v6240
    %6280 = vmatmul.bf16.gmra.mxu0 %v6174
    %v6281 = vpop.f32.mrf.mxu0
    %v6282 = vadd.f32 0.0, %v6281
    %v6283 = vpop.f32.mrf.mxu0
    %6284 = vdwg.mxu0
    %6285 = vmatpush.bf16.msra.mxu0 %v6255
    %6286 = vmatpush.bf16.msra.mxu0 %v6254
    %6287 = vmatpush.bf16.msra.mxu0 %v6253
    %6288 = vmatpush.bf16.msra.mxu0 %v6252
    %6289 = vmatpush.bf16.msra.mxu0 %v6251
    %6290 = vmatpush.bf16.msra.mxu0 %v6250
    %6291 = vmatpush.bf16.msra.mxu0 %v6249
    %6292 = vmatpush.bf16.msra.mxu0 %v6248
    %6293 = vmatmul.bf16.gmra.mxu0 %v6175
    %v6294 = vpop.f32.mrf.mxu0
    %v6295 = vadd.f32 %v6282, %v6294
    %v6296 = vpop.f32.mrf.mxu0
    %6297 = vdwg.mxu0
    %v6299 = vunpack.c.l.b16 %v6169
    %v6300 = vunpack.c.h.b16 %v6169
    %v6301 = vpack.c.b16 %v6299, %v6299
    %v6302 = vpack.c.b16 %v6300, %v6300
    %6305 = vmatpush.bf16.msra.mxu0 %v6247
    %6306 = vmatpush.bf16.msra.mxu0 %v6246
    %6307 = vmatpush.bf16.msra.mxu0 %v6245
    %6308 = vmatpush.bf16.msra.mxu0 %v6244
    %6309 = vmatpush.bf16.msra.mxu0 %v6243
    %6310 = vmatpush.bf16.msra.mxu0 %v6242
    %6311 = vmatpush.bf16.msra.mxu0 %v6241
    %6312 = vmatpush.bf16.msra.mxu0 %v6240
    %6313 = vmatmul.bf16.gmra.mxu0 %v6301
    %v6314 = vpop.f32.mrf.mxu0
    %v6315 = vadd.f32 %v6295, %v6314
    %v6316 = vpop.f32.mrf.mxu0
    %6317 = vdwg.mxu0
    %6318 = vmatpush.bf16.msra.mxu0 %v6255
    %6319 = vmatpush.bf16.msra.mxu0 %v6254
    %6320 = vmatpush.bf16.msra.mxu0 %v6253
    %6321 = vmatpush.bf16.msra.mxu0 %v6252
    %6322 = vmatpush.bf16.msra.mxu0 %v6251
    %6323 = vmatpush.bf16.msra.mxu0 %v6250
    %6324 = vmatpush.bf16.msra.mxu0 %v6249
    %6325 = vmatpush.bf16.msra.mxu0 %v6248
    %6326 = vmatmul.bf16.gmra.mxu0 %v6302
    %v6327 = vpop.f32.mrf.mxu0
    %v6328 = vadd.f32 %v6315, %v6327
    %v6329 = vpop.f32.mrf.mxu0
    %6330 = vdwg.mxu0
    %v6363 = vunpack.c.l.b16 %v6137
    %v6364 = vunpack.c.l.b16 %v6138
    %v6365 = vunpack.c.l.b16 %v6139
    %v6366 = vunpack.c.l.b16 %v6140
    %v6367 = vunpack.c.l.b16 %v6141
    %v6368 = vunpack.c.l.b16 %v6142
    %v6369 = vunpack.c.l.b16 %v6143
    %v6370 = vunpack.c.l.b16 %v6144
    %v6371 = vunpack.c.l.b16 %v6145
    %v6372 = vunpack.c.l.b16 %v6146
    %v6373 = vunpack.c.l.b16 %v6147
    %v6374 = vunpack.c.l.b16 %v6148
    %v6375 = vunpack.c.l.b16 %v6149
    %v6376 = vunpack.c.l.b16 %v6150
    %v6377 = vunpack.c.l.b16 %v6151
    %v6378 = vunpack.c.l.b16 %v6152
    %v6379 = vunpack.c.l.b16 %v6153
    %v6380 = vunpack.c.l.b16 %v6154
    %v6381 = vunpack.c.l.b16 %v6155
    %v6382 = vunpack.c.l.b16 %v6156
    %v6383 = vunpack.c.l.b16 %v6157
    %v6384 = vunpack.c.l.b16 %v6158
    %v6385 = vunpack.c.l.b16 %v6159
    %v6386 = vunpack.c.l.b16 %v6160
    %v6387 = vunpack.c.l.b16 %v6161
    %v6388 = vunpack.c.l.b16 %v6162
    %v6389 = vunpack.c.l.b16 %v6163
    %v6390 = vunpack.c.l.b16 %v6164
    %v6391 = vunpack.c.l.b16 %v6165
    %v6392 = vunpack.c.l.b16 %v6166
    %v6393 = vunpack.c.l.b16 %v6167
    %v6394 = vunpack.c.l.b16 %v6168
    %v6395 = vpack.c.b16 %v6364, %v6363
    %v6396 = vpack.c.b16 %v6366, %v6365
    %v6397 = vpack.c.b16 %v6368, %v6367
    %v6398 = vpack.c.b16 %v6370, %v6369
    %v6399 = vpack.c.b16 %v6372, %v6371
    %v6400 = vpack.c.b16 %v6374, %v6373
    %v6401 = vpack.c.b16 %v6376, %v6375
    %v6402 = vpack.c.b16 %v6378, %v6377
    %v6403 = vpack.c.b16 %v6380, %v6379
    %v6404 = vpack.c.b16 %v6382, %v6381
    %v6405 = vpack.c.b16 %v6384, %v6383
    %v6406 = vpack.c.b16 %v6386, %v6385
    %v6407 = vpack.c.b16 %v6388, %v6387
    %v6408 = vpack.c.b16 %v6390, %v6389
    %v6409 = vpack.c.b16 %v6392, %v6391
    %v6410 = vpack.c.b16 %v6394, %v6393
    %6427 = vmatpush.bf16.msra.mxu0 %v6402
    %6428 = vmatpush.bf16.msra.mxu0 %v6401
    %6429 = vmatpush.bf16.msra.mxu0 %v6400
    %6430 = vmatpush.bf16.msra.mxu0 %v6399
    %6431 = vmatpush.bf16.msra.mxu0 %v6398
    %6432 = vmatpush.bf16.msra.mxu0 %v6397
    %6433 = vmatpush.bf16.msra.mxu0 %v6396
    %6434 = vmatpush.bf16.msra.mxu0 %v6395
    %6435 = vmatmul.bf16.gmra.mxu0 %v6301
    %v6436 = vpop.f32.mrf.mxu0
    %v6437 = vadd.f32 0.0, %v6436
    %v6438 = vpop.f32.mrf.mxu0
    %6439 = vdwg.mxu0
    %6440 = vmatpush.bf16.msra.mxu0 %v6410
    %6441 = vmatpush.bf16.msra.mxu0 %v6409
    %6442 = vmatpush.bf16.msra.mxu0 %v6408
    %6443 = vmatpush.bf16.msra.mxu0 %v6407
    %6444 = vmatpush.bf16.msra.mxu0 %v6406
    %6445 = vmatpush.bf16.msra.mxu0 %v6405
    %6446 = vmatpush.bf16.msra.mxu0 %v6404
    %6447 = vmatpush.bf16.msra.mxu0 %v6403
    %6448 = vmatmul.bf16.gmra.mxu0 %v6302
    %v6449 = vpop.f32.mrf.mxu0
    %v6450 = vadd.f32 %v6437, %v6449
    %v6451 = vpop.f32.mrf.mxu0
    %6452 = vdwg.mxu0
    %v6453 = vadd.f32 %v6328, %v6450
    %v6454 = vld [vmem:[#allocation5 + $0x100] ss:$0 sm:$0xff]
    %v6455 = vadd.f32 %v6453, %v6454
    %v6456 = vld [vmem:[#allocation7 + $0x500] sm:$0xf]
    %v6457 = vld [vmem:[#allocation7 + $0x508] sm:$0xf]
    %v6458 = vld [vmem:[#allocation7 + $0x510] sm:$0xf]
    %v6459 = vld [vmem:[#allocation7 + $0x518] sm:$0xf]
    %v6460 = vld [vmem:[#allocation7 + $0x520] sm:$0xf]
    %v6461 = vld [vmem:[#allocation7 + $0x528] sm:$0xf]
    %v6462 = vld [vmem:[#allocation7 + $0x530] sm:$0xf]
    %v6463 = vld [vmem:[#allocation7 + $0x538] sm:$0xf]
    %v6464 = vld [vmem:[#allocation7 + $0x540] sm:$0xf]
    %v6465 = vld [vmem:[#allocation7 + $0x548] sm:$0xf]
    %v6466 = vld [vmem:[#allocation7 + $0x550] sm:$0xf]
    %v6467 = vld [vmem:[#allocation7 + $0x558] sm:$0xf]
    %v6468 = vld [vmem:[#allocation7 + $0x560] sm:$0xf]
    %v6469 = vld [vmem:[#allocation7 + $0x568] sm:$0xf]
    %v6470 = vld [vmem:[#allocation7 + $0x570] sm:$0xf]
    %v6471 = vld [vmem:[#allocation7 + $0x578] sm:$0xf]
    %vm6472 = vcmp.ge.f32.partialorder %v6455, 0.0
    %v6473 = vmul.f32 %v6455, 0.01
    %v6474 = vsel %vm6472, %v6455, %v6473
    %v6475 = vmul.f32 %v6474, %v82
    %v6476 = vrot.slane %v6475, 4
    %v6477 = vadd.f32 %v6475, %v6476
    %v6478 = vrot.slane %v6477, 2
    %v6479 = vadd.f32 %v6477, %v6478
    %v6480 = vrot.slane %v6479, 1
    %v6481 = vadd.f32 %v6479, %v6480
    %v6482 = vmul.f32 %v6475, %v6474
    %v6483 = vrot.slane %v6482, 4
    %v6484 = vadd.f32 %v6482, %v6483
    %v6485 = vrot.slane %v6484, 2
    %v6486 = vadd.f32 %v6484, %v6485
    %v6487 = vrot.slane %v6486, 1
    %v6488 = vadd.f32 %v6486, %v6487
    %v6489 = vsel %vm717, %v6481, %v6488
    %v6490 = vpack.c.bf16 %v6489, %v6489
    %v6491 = vunpack.c.l.bf16 %v6490
    %v6492 = vsub.f32 %v6489, %v6491
    %v6493 = vpack.c.bf16 %v6492, %v6492
    %v6510 = vunpack.c.l.b16 %v6456
    %v6511 = vunpack.c.l.b16 %v6457
    %v6512 = vunpack.c.l.b16 %v6458
    %v6513 = vunpack.c.l.b16 %v6459
    %v6514 = vunpack.c.l.b16 %v6460
    %v6515 = vunpack.c.l.b16 %v6461
    %v6516 = vunpack.c.l.b16 %v6462
    %v6517 = vunpack.c.l.b16 %v6463
    %v6518 = vunpack.c.l.b16 %v6464
    %v6519 = vunpack.c.l.b16 %v6465
    %v6520 = vunpack.c.l.b16 %v6466
    %v6521 = vunpack.c.l.b16 %v6467
    %v6522 = vunpack.c.l.b16 %v6468
    %v6523 = vunpack.c.l.b16 %v6469
    %v6524 = vunpack.c.l.b16 %v6470
    %v6525 = vunpack.c.l.b16 %v6471
    %v6526 = vpack.c.b16 %v6511, %v6510
    %v6527 = vpack.c.b16 %v6513, %v6512
    %v6528 = vpack.c.b16 %v6515, %v6514
    %v6529 = vpack.c.b16 %v6517, %v6516
    %v6530 = vpack.c.b16 %v6519, %v6518
    %v6531 = vpack.c.b16 %v6521, %v6520
    %v6532 = vpack.c.b16 %v6523, %v6522
    %v6533 = vpack.c.b16 %v6525, %v6524
    %6542 = vmatpush.bf16.msra.mxu0 %v6533
    %6543 = vmatpush.bf16.msra.mxu0 %v6532
    %6544 = vmatpush.bf16.msra.mxu0 %v6531
    %6545 = vmatpush.bf16.msra.mxu0 %v6530
    %6546 = vmatpush.bf16.msra.mxu0 %v6529
    %6547 = vmatpush.bf16.msra.mxu0 %v6528
    %6548 = vmatpush.bf16.msra.mxu0 %v6527
    %6549 = vmatpush.bf16.msra.mxu0 %v6526
    %6550 = vmatmul.bf16.gmra.mxu0 %v6493
    %v6551 = vpop.f32.mrf.mxu0
    %v6552 = vadd.f32 0.0, %v6551
    %v6553 = vpop.f32.mrf.mxu0
    %6554 = vdwg.mxu0
    %6555 = vmatpush.bf16.msra.mxu0 %v6533
    %6556 = vmatpush.bf16.msra.mxu0 %v6532
    %6557 = vmatpush.bf16.msra.mxu0 %v6531
    %6558 = vmatpush.bf16.msra.mxu0 %v6530
    %6559 = vmatpush.bf16.msra.mxu0 %v6529
    %6560 = vmatpush.bf16.msra.mxu0 %v6528
    %6561 = vmatpush.bf16.msra.mxu0 %v6527
    %6562 = vmatpush.bf16.msra.mxu0 %v6526
    %6563 = vmatmul.bf16.gmra.mxu0 %v6490
    %v6564 = vpop.f32.mrf.mxu0
    %v6565 = vadd.f32 %v6552, %v6564
    %v6566 = vpop.f32.mrf.mxu0
    %6567 = vdwg.mxu0
    %v6568 = vmul.f32 %v6565, 0.0625
    %v6569 = vsel %vm717, %v6568, 0.0
    %v6570 = vsel %vm1002, %v6569, 0.0
    %v6571 = vrot.slane %v6570, 4
    %v6572 = vadd.f32 %v6570, %v6571
    %v6573 = vrot.slane %v6572, 2
    %v6574 = vadd.f32 %v6572, %v6573
    %v6575 = vrot.slane %v6574, 1
    %v6576 = vadd.f32 %v6574, %v6575
    %v6577 = vsel %vm717, 0.0, %v6568
    %v6578 = vsel %vm1002, %v6577, 0.0
    %v6579 = vrot.slane %v6578, 4
    %v6580 = vadd.f32 %v6578, %v6579
    %v6581 = vrot.slane %v6580, 2
    %v6582 = vadd.f32 %v6580, %v6581
    %v6583 = vrot.slane %v6582, 1
    %v6584 = vadd.f32 %v6582, %v6583
    %v6585 = vmul.f32 %v6576, %v6576
    %v6586 = vsub.f32 %v6584, %v6585
    %v6587 = vsub.f32 %v6474, %v6576
    %v6588 = vadd.f32 %v6586, 1e-05
    %v6589 = vrsqrt.pop %v6588
    %v6590 = vmul.f32 %v6589, %v6588
    %v6591 = vmul.f32 %v6590, %v6589
    %v6592 = vmul.f32 0.5, %v6591
    %v6593 = vsub.f32 1.5, %v6592
    %v6594 = vmul.f32 %v6589, %v6593
    %vm6595 = vweird.f32 %v6588
    %vm6596 = vweird.f32 %v6589
    %vm6597 = vmor %vm6595, %vm6596
    %v6598 = vsel %vm6597, %v6589, %v6594
    %v6599 = vmul.f32 %v6587, %v6598
    %v6600 = vld [vmem:[#allocation3 + $0x400] sm:$0xf]
    %v6601 = vld [vmem:[#allocation3 + $0x408] sm:$0xf]
    %v6602 = vld [vmem:[#allocation3 + $0x410] sm:$0xf]
    %v6603 = vld [vmem:[#allocation3 + $0x418] sm:$0xf]
    %v6604 = vld [vmem:[#allocation3 + $0x420] sm:$0xf]
    %v6605 = vld [vmem:[#allocation3 + $0x428] sm:$0xf]
    %v6606 = vld [vmem:[#allocation3 + $0x430] sm:$0xf]
    %v6607 = vld [vmem:[#allocation3 + $0x438] sm:$0xf]
    %v6608 = vld [vmem:[#allocation3 + $0x440] sm:$0xf]
    %v6609 = vld [vmem:[#allocation3 + $0x448] sm:$0xf]
    %v6610 = vld [vmem:[#allocation3 + $0x450] sm:$0xf]
    %v6611 = vld [vmem:[#allocation3 + $0x458] sm:$0xf]
    %v6612 = vld [vmem:[#allocation3 + $0x460] sm:$0xf]
    %v6613 = vld [vmem:[#allocation3 + $0x468] sm:$0xf]
    %v6614 = vld [vmem:[#allocation3 + $0x470] sm:$0xf]
    %v6615 = vld [vmem:[#allocation3 + $0x478] sm:$0xf]
    %v6616 = vld [vmem:[#allocation3 + $0x480] sm:$0xf]
    %v6617 = vld [vmem:[#allocation3 + $0x488] sm:$0xf]
    %v6618 = vld [vmem:[#allocation3 + $0x490] sm:$0xf]
    %v6619 = vld [vmem:[#allocation3 + $0x498] sm:$0xf]
    %v6620 = vld [vmem:[#allocation3 + $0x4a0] sm:$0xf]
    %v6621 = vld [vmem:[#allocation3 + $0x4a8] sm:$0xf]
    %v6622 = vld [vmem:[#allocation3 + $0x4b0] sm:$0xf]
    %v6623 = vld [vmem:[#allocation3 + $0x4b8] sm:$0xf]
    %v6624 = vld [vmem:[#allocation3 + $0x4c0] sm:$0xf]
    %v6625 = vld [vmem:[#allocation3 + $0x4c8] sm:$0xf]
    %v6626 = vld [vmem:[#allocation3 + $0x4d0] sm:$0xf]
    %v6627 = vld [vmem:[#allocation3 + $0x4d8] sm:$0xf]
    %v6628 = vld [vmem:[#allocation3 + $0x4e0] sm:$0xf]
    %v6629 = vld [vmem:[#allocation3 + $0x4e8] sm:$0xf]
    %v6630 = vld [vmem:[#allocation3 + $0x4f0] sm:$0xf]
    %v6631 = vld [vmem:[#allocation3 + $0x4f8] sm:$0xf]
    %v6632 = vpack.c.bf16 %v6599, %v6599
    %v6633 = vunpack.c.l.bf16 %v6632
    %v6634 = vsub.f32 %v6599, %v6633
    %v6635 = vpack.c.bf16 %v6634, %v6634
    %v6652 = vunpack.c.l.b16 %v6600
    %v6653 = vunpack.c.l.b16 %v6601
    %v6654 = vunpack.c.l.b16 %v6602
    %v6655 = vunpack.c.l.b16 %v6603
    %v6656 = vunpack.c.l.b16 %v6604
    %v6657 = vunpack.c.l.b16 %v6605
    %v6658 = vunpack.c.l.b16 %v6606
    %v6659 = vunpack.c.l.b16 %v6607
    %v6660 = vunpack.c.l.b16 %v6608
    %v6661 = vunpack.c.l.b16 %v6609
    %v6662 = vunpack.c.l.b16 %v6610
    %v6663 = vunpack.c.l.b16 %v6611
    %v6664 = vunpack.c.l.b16 %v6612
    %v6665 = vunpack.c.l.b16 %v6613
    %v6666 = vunpack.c.l.b16 %v6614
    %v6667 = vunpack.c.l.b16 %v6615
    %v6668 = vpack.c.b16 %v6653, %v6652
    %v6669 = vpack.c.b16 %v6655, %v6654
    %v6670 = vpack.c.b16 %v6657, %v6656
    %v6671 = vpack.c.b16 %v6659, %v6658
    %v6672 = vpack.c.b16 %v6661, %v6660
    %v6673 = vpack.c.b16 %v6663, %v6662
    %v6674 = vpack.c.b16 %v6665, %v6664
    %v6675 = vpack.c.b16 %v6667, %v6666
    %6684 = vmatpush.bf16.msra.mxu0 %v6675
    %6685 = vmatpush.bf16.msra.mxu0 %v6674
    %6686 = vmatpush.bf16.msra.mxu0 %v6673
    %6687 = vmatpush.bf16.msra.mxu0 %v6672
    %6688 = vmatpush.bf16.msra.mxu0 %v6671
    %6689 = vmatpush.bf16.msra.mxu0 %v6670
    %6690 = vmatpush.bf16.msra.mxu0 %v6669
    %6691 = vmatpush.bf16.msra.mxu0 %v6668
    %6692 = vmatmul.bf16.gmra.mxu0 %v6635
    %v6693 = vpop.f32.mrf.mxu0
    %v6694 = vadd.f32 0.0, %v6693
    %v6695 = vpop.f32.mrf.mxu0
    %6696 = vdwg.mxu0
    %6697 = vmatpush.bf16.msra.mxu0 %v6675
    %6698 = vmatpush.bf16.msra.mxu0 %v6674
    %6699 = vmatpush.bf16.msra.mxu0 %v6673
    %6700 = vmatpush.bf16.msra.mxu0 %v6672
    %6701 = vmatpush.bf16.msra.mxu0 %v6671
    %6702 = vmatpush.bf16.msra.mxu0 %v6670
    %6703 = vmatpush.bf16.msra.mxu0 %v6669
    %6704 = vmatpush.bf16.msra.mxu0 %v6668
    %6705 = vmatmul.bf16.gmra.mxu0 %v6632
    %v6706 = vpop.f32.mrf.mxu0
    %v6707 = vadd.f32 %v6694, %v6706
    %v6708 = vpop.f32.mrf.mxu0
    %6709 = vdwg.mxu0
    %v6726 = vunpack.c.l.b16 %v6616
    %v6727 = vunpack.c.l.b16 %v6617
    %v6728 = vunpack.c.l.b16 %v6618
    %v6729 = vunpack.c.l.b16 %v6619
    %v6730 = vunpack.c.l.b16 %v6620
    %v6731 = vunpack.c.l.b16 %v6621
    %v6732 = vunpack.c.l.b16 %v6622
    %v6733 = vunpack.c.l.b16 %v6623
    %v6734 = vunpack.c.l.b16 %v6624
    %v6735 = vunpack.c.l.b16 %v6625
    %v6736 = vunpack.c.l.b16 %v6626
    %v6737 = vunpack.c.l.b16 %v6627
    %v6738 = vunpack.c.l.b16 %v6628
    %v6739 = vunpack.c.l.b16 %v6629
    %v6740 = vunpack.c.l.b16 %v6630
    %v6741 = vunpack.c.l.b16 %v6631
    %v6742 = vpack.c.b16 %v6727, %v6726
    %v6743 = vpack.c.b16 %v6729, %v6728
    %v6744 = vpack.c.b16 %v6731, %v6730
    %v6745 = vpack.c.b16 %v6733, %v6732
    %v6746 = vpack.c.b16 %v6735, %v6734
    %v6747 = vpack.c.b16 %v6737, %v6736
    %v6748 = vpack.c.b16 %v6739, %v6738
    %v6749 = vpack.c.b16 %v6741, %v6740
    %6758 = vmatpush.bf16.msra.mxu0 %v6749
    %6759 = vmatpush.bf16.msra.mxu0 %v6748
    %6760 = vmatpush.bf16.msra.mxu0 %v6747
    %6761 = vmatpush.bf16.msra.mxu0 %v6746
    %6762 = vmatpush.bf16.msra.mxu0 %v6745
    %6763 = vmatpush.bf16.msra.mxu0 %v6744
    %6764 = vmatpush.bf16.msra.mxu0 %v6743
    %6765 = vmatpush.bf16.msra.mxu0 %v6742
    %6766 = vmatmul.bf16.gmra.mxu0 %v6632
    %v6767 = vpop.f32.mrf.mxu0
    %v6768 = vadd.f32 0.0, %v6767
    %v6769 = vpop.f32.mrf.mxu0
    %6770 = vdwg.mxu0
    %v6771 = vadd.f32 %v6707, %v6768
    %v6772 = vld [vmem:[#allocation5 + $0x120] ss:$0 sm:$0xff]
    %v6773 = vadd.f32 %v6771, %v6772
    %v6774 = vld [vmem:[#allocation7 + $0x680] sm:$0xf]
    %v6775 = vld [vmem:[#allocation7 + $0x688] sm:$0xf]
    %v6776 = vld [vmem:[#allocation7 + $0x690] sm:$0xf]
    %v6777 = vld [vmem:[#allocation7 + $0x698] sm:$0xf]
    %v6778 = vld [vmem:[#allocation7 + $0x6a0] sm:$0xf]
    %v6779 = vld [vmem:[#allocation7 + $0x6a8] sm:$0xf]
    %v6780 = vld [vmem:[#allocation7 + $0x6b0] sm:$0xf]
    %v6781 = vld [vmem:[#allocation7 + $0x6b8] sm:$0xf]
    %v6782 = vld [vmem:[#allocation7 + $0x6c0] sm:$0xf]
    %v6783 = vld [vmem:[#allocation7 + $0x6c8] sm:$0xf]
    %v6784 = vld [vmem:[#allocation7 + $0x6d0] sm:$0xf]
    %v6785 = vld [vmem:[#allocation7 + $0x6d8] sm:$0xf]
    %v6786 = vld [vmem:[#allocation7 + $0x6e0] sm:$0xf]
    %v6787 = vld [vmem:[#allocation7 + $0x6e8] sm:$0xf]
    %v6788 = vld [vmem:[#allocation7 + $0x6f0] sm:$0xf]
    %v6789 = vld [vmem:[#allocation7 + $0x6f8] sm:$0xf]
    %vm6790 = vcmp.ge.f32.partialorder %v6773, 0.0
    %v6791 = vmul.f32 %v6773, 0.01
    %v6792 = vsel %vm6790, %v6773, %v6791
    %v6793 = vmul.f32 %v6792, %v82
    %v6794 = vrot.slane %v6793, 4
    %v6795 = vadd.f32 %v6793, %v6794
    %v6796 = vrot.slane %v6795, 2
    %v6797 = vadd.f32 %v6795, %v6796
    %v6798 = vrot.slane %v6797, 1
    %v6799 = vadd.f32 %v6797, %v6798
    %v6800 = vmul.f32 %v6793, %v6792
    %v6801 = vrot.slane %v6800, 4
    %v6802 = vadd.f32 %v6800, %v6801
    %v6803 = vrot.slane %v6802, 2
    %v6804 = vadd.f32 %v6802, %v6803
    %v6805 = vrot.slane %v6804, 1
    %v6806 = vadd.f32 %v6804, %v6805
    %v6807 = vsel %vm717, %v6799, %v6806
    %v6808 = vpack.c.bf16 %v6807, %v6807
    %v6809 = vunpack.c.l.bf16 %v6808
    %v6810 = vsub.f32 %v6807, %v6809
    %v6811 = vpack.c.bf16 %v6810, %v6810
    %v6828 = vunpack.c.l.b16 %v6774
    %v6829 = vunpack.c.l.b16 %v6775
    %v6830 = vunpack.c.l.b16 %v6776
    %v6831 = vunpack.c.l.b16 %v6777
    %v6832 = vunpack.c.l.b16 %v6778
    %v6833 = vunpack.c.l.b16 %v6779
    %v6834 = vunpack.c.l.b16 %v6780
    %v6835 = vunpack.c.l.b16 %v6781
    %v6836 = vunpack.c.l.b16 %v6782
    %v6837 = vunpack.c.l.b16 %v6783
    %v6838 = vunpack.c.l.b16 %v6784
    %v6839 = vunpack.c.l.b16 %v6785
    %v6840 = vunpack.c.l.b16 %v6786
    %v6841 = vunpack.c.l.b16 %v6787
    %v6842 = vunpack.c.l.b16 %v6788
    %v6843 = vunpack.c.l.b16 %v6789
    %v6844 = vpack.c.b16 %v6829, %v6828
    %v6845 = vpack.c.b16 %v6831, %v6830
    %v6846 = vpack.c.b16 %v6833, %v6832
    %v6847 = vpack.c.b16 %v6835, %v6834
    %v6848 = vpack.c.b16 %v6837, %v6836
    %v6849 = vpack.c.b16 %v6839, %v6838
    %v6850 = vpack.c.b16 %v6841, %v6840
    %v6851 = vpack.c.b16 %v6843, %v6842
    %6860 = vmatpush.bf16.msra.mxu0 %v6851
    %6861 = vmatpush.bf16.msra.mxu0 %v6850
    %6862 = vmatpush.bf16.msra.mxu0 %v6849
    %6863 = vmatpush.bf16.msra.mxu0 %v6848
    %6864 = vmatpush.bf16.msra.mxu0 %v6847
    %6865 = vmatpush.bf16.msra.mxu0 %v6846
    %6866 = vmatpush.bf16.msra.mxu0 %v6845
    %6867 = vmatpush.bf16.msra.mxu0 %v6844
    %6868 = vmatmul.bf16.gmra.mxu0 %v6811
    %v6869 = vpop.f32.mrf.mxu0
    %v6870 = vadd.f32 0.0, %v6869
    %v6871 = vpop.f32.mrf.mxu0
    %6872 = vdwg.mxu0
    %6873 = vmatpush.bf16.msra.mxu0 %v6851
    %6874 = vmatpush.bf16.msra.mxu0 %v6850
    %6875 = vmatpush.bf16.msra.mxu0 %v6849
    %6876 = vmatpush.bf16.msra.mxu0 %v6848
    %6877 = vmatpush.bf16.msra.mxu0 %v6847
    %6878 = vmatpush.bf16.msra.mxu0 %v6846
    %6879 = vmatpush.bf16.msra.mxu0 %v6845
    %6880 = vmatpush.bf16.msra.mxu0 %v6844
    %6881 = vmatmul.bf16.gmra.mxu0 %v6808
    %v6882 = vpop.f32.mrf.mxu0
    %v6883 = vadd.f32 %v6870, %v6882
    %v6884 = vpop.f32.mrf.mxu0
    %6885 = vdwg.mxu0
    %v6886 = vmul.f32 %v6883, 0.25
    %v6887 = vsel %vm717, %v6886, 0.0
    %v6888 = vsel %vm1002, %v6887, 0.0
    %v6889 = vrot.slane %v6888, 4
    %v6890 = vadd.f32 %v6888, %v6889
    %v6891 = vrot.slane %v6890, 2
    %v6892 = vadd.f32 %v6890, %v6891
    %v6893 = vrot.slane %v6892, 1
    %v6894 = vadd.f32 %v6892, %v6893
    %v6895 = vsel %vm717, 0.0, %v6886
    %v6896 = vsel %vm1002, %v6895, 0.0
    %v6897 = vrot.slane %v6896, 4
    %v6898 = vadd.f32 %v6896, %v6897
    %v6899 = vrot.slane %v6898, 2
    %v6900 = vadd.f32 %v6898, %v6899
    %v6901 = vrot.slane %v6900, 1
    %v6902 = vadd.f32 %v6900, %v6901
    %v6903 = vmul.f32 %v6894, %v6894
    %v6904 = vsub.f32 %v6902, %v6903
    %v6905 = vsub.f32 %v6792, %v6894
    %v6906 = vadd.f32 %v6904, 1e-05
    %v6907 = vrsqrt.pop %v6906
    %v6908 = vmul.f32 %v6907, %v6906
    %v6909 = vmul.f32 %v6908, %v6907
    %v6910 = vmul.f32 0.5, %v6909
    %v6911 = vsub.f32 1.5, %v6910
    %v6912 = vmul.f32 %v6907, %v6911
    %vm6913 = vweird.f32 %v6906
    %vm6914 = vweird.f32 %v6907
    %vm6915 = vmor %vm6913, %vm6914
    %v6916 = vsel %vm6915, %v6907, %v6912
    %v6917 = vmul.f32 %v6905, %v6916
    %6918 = vst [vmem:[%s7] sm:$0xff] %v6917
    // Predicated region
    $region30: #{_lambda_.1} parent=1 // pred_check
      _
    $region31: #{_lambda_.1} parent=1 // pred_check_branch
      %6920 = sbr.rel (0) target = $region33
    $region32: #{_lambda_.1} parent=1 // pred_region
      _
    $region33: #{_lambda_.1} parent=1 // pred_fallthru
      _
    // Predicated region
    $region34: #{_lambda_.1} parent=1 // pred_check
      _
    $region35: #{_lambda_.1} parent=1 // pred_check_branch
      %6922 = sbr.rel (0) target = $region37
    $region36: #{_lambda_.1} parent=1 // pred_region
      _
    $region37: #{_lambda_.1} parent=1 // pred_fallthru
      _
    // Predicated region
    $region38: #{_lambda_.1} parent=1 // pred_check
      _
    $region39: #{_lambda_.1} parent=1 // pred_check_branch
      %6924 = sbr.rel (0) target = $region41
    $region40: #{_lambda_.1} parent=1 // pred_region
      _
    $region41: #{_lambda_.1} parent=1 // pred_fallthru
      _
    // Predicated region
    $region42: #{_lambda_.1} parent=1 // pred_check
      _
    $region43: #{_lambda_.1} parent=1 // pred_check_branch
      %6926 = sbr.rel (0) target = $region45
    $region44: #{_lambda_.1} parent=1 // pred_region
      _
    $region45: #{_lambda_.1} parent=1 // pred_fallthru
      _
    // Predicated region
    $region46: #{_lambda_.1} parent=1 // pred_check
      _
    $region47: #{_lambda_.1} parent=1 // pred_check_branch
      %6928 = sbr.rel (0) target = $region49
    $region48: #{_lambda_.1} parent=1 // pred_region
      _
    $region49: #{_lambda_.1} parent=1 // pred_fallthru
      _
    // Predicated region
    $region50: #{_lambda_.1} parent=1 // pred_check
      _
    $region51: #{_lambda_.1} parent=1 // pred_check_branch
      %6930 = sbr.rel (0) target = $region53
    $region52: #{_lambda_.1} parent=1 // pred_region
      _
    $region53: #{_lambda_.1} parent=1 // pred_fallthru
      _
    %6931 = vsyncpa [#allocation6], 1
    %6932 = vsyncpa [#allocation8], 1
  %6933 = vsyncmov [#allocation4]
  %s6934 = vpop.sfrf %6933
  %p6935 = scmp.eq.s32.totalorder %s6934, 0
  %p6936 = pneg %p6935
  %6938 = shalt.err (%p6936)
  %s6939 = scalar_lea.sflag [#allocation4], 1
  %6940 = vsyncmov %s6939
  %s6941 = vpop.sfrf %6940
  %p6942 = scmp.eq.s32.totalorder %s6941, 0
  %p6943 = pneg %p6942
  %6945 = shalt.err (%p6943)

</llo_original>
